<compile_context>
chip_gen: v7x
topology: tpu7x:2x2x1
jax: 0.10.0
libtpu: 0.0.40
codegen_flags: <defaults>
</compile_context>

<pallas_src>
import functools

import jax
import jax.numpy as jnp
import numpy as np
from jax.experimental import pallas as pl
from jax.experimental.pallas import tpu as pltpu

OUT_CHANNELS = 256
BN_EPS = 1e-5


def _aspp_kernel(xp_ref, pbias_ref, w1_ref, w3_ref, wp_ref, scale_ref,
                 shift_ref, o_ref, *, tile_rows, width, cin, rates, rmax):
    """One (batch, row-tile) grid step.

    xp_ref    : (Hp, Wp, Cin) bf16   zero-padded input, resident per batch elem
    pbias_ref : (1, 256)      f32    image-pool branch, already projected
    w1_ref    : (Cin, 256)    bf16   1x1-branch weight
    w3_ref    : (27, Cin, 256) bf16  3 dilated branches x 9 taps
    wp_ref    : (4, 256, 256) bf16   projection chunks for branches 2..5
    scale_ref : (5, 256)      f32    folded BN scales [1x1, c1, c2, c3, proj]
    shift_ref : (5, 256)      f32    folded BN shifts
    o_ref     : (TH, W, 256)  f32
    """
    t = pl.program_id(1)
    row0 = pl.multiple_of(t * tile_rows, tile_rows)
    rows = tile_rows * width

    def bn_relu(y, k):
        return jnp.maximum(y * scale_ref[k][None, :] + shift_ref[k][None, :], 0.0)

    def mm(a, b):
        return jnp.dot(a, b, preferred_element_type=jnp.float32)

    def slab(dy, dx):
        # (TH, W, Cin) window of the padded input shifted by (dy, dx) taps.
        s = xp_ref[pl.ds(row0 + rmax + dy, tile_rows),
                   rmax + dx:rmax + dx + width, :]
        return s.reshape(rows, cin)

    # branch 2: 1x1 conv -> BN -> ReLU, projected immediately (running acc).
    f = bn_relu(mm(slab(0, 0), w1_ref[...]), 0)
    acc = mm(f.astype(jnp.bfloat16), wp_ref[0])

    # branches 3-5: dilated 3x3 convs as 9 shifted (rows,Cin)@(Cin,256) matmuls.
    for b, r in enumerate(rates):
        conv = jnp.zeros((rows, OUT_CHANNELS), jnp.float32)
        for ky in range(3):
            for kx in range(3):
                conv = conv + mm(slab((ky - 1) * r, (kx - 1) * r),
                                 w3_ref[b * 9 + ky * 3 + kx])
        f = bn_relu(conv, 1 + b)
        acc = acc + mm(f.astype(jnp.bfloat16), wp_ref[1 + b])

    # branch 1 (image pool) enters as a per-image broadcast bias, then the
    # projection BN + ReLU.
    out = bn_relu(acc + pbias_ref[...], 4)
    o_ref[...] = out.reshape(tile_rows, width, OUT_CHANNELS).astype(o_ref.dtype)


def aspp_pallas(x_nchw, params, atrous_rates, row_tile=8):
    N, C, H, W = x_nchw.shape
    rmax = int(max(atrous_rates))
    TH = row_tile if H % row_tile == 0 else H
    Hp, Wp = H + 2 * rmax, W + 2 * rmax

    x_nhwc = jnp.transpose(x_nchw, (0, 2, 3, 1)).astype(jnp.float32)
    xp = jnp.pad(x_nhwc, ((0, 0), (rmax, rmax), (rmax, rmax), (0, 0))
                 ).astype(jnp.bfloat16)

    def fold_bn(name):
        g = params[f'bn_{name}_gamma']
        b = params[f'bn_{name}_beta']
        m = params[f'bn_{name}_mean']
        v = params[f'bn_{name}_var']
        s = g / jnp.sqrt(v + BN_EPS)
        return s, b - m * s

    # ---- glue: fold weights into channels-last matmul layouts (bf16) ----
    w_pool_k = params['w_pool'][:, :, 0, 0].T                        # (C,256) f32
    w_1x1_k = params['w_1x1'][:, :, 0, 0].T.astype(jnp.bfloat16)     # (C,256)
    w3_all = jnp.concatenate(
        [jnp.transpose(params[f'w3_{i}'], (2, 3, 1, 0)).reshape(9, C, OUT_CHANNELS)
         for i in range(3)], axis=0).astype(jnp.bfloat16)            # (27,C,256)
    wproj_full = params['w_proj'][:, :, 0, 0].T.reshape(
        5, OUT_CHANNELS, OUT_CHANNELS)                               # f32
    wproj_k = wproj_full[1:].astype(jnp.bfloat16)                    # (4,256,256)

    # ---- glue: image-pool branch (mean -> 1x1 -> BN -> ReLU) and its
    # projection chunk, precomputed as a tiny per-image bias (f32) ----
    s_pool, t_pool = fold_bn('pool')
    pooled = jnp.mean(x_nhwc, axis=(1, 2))                           # (N, C)
    f1_vec = jax.nn.relu(pooled @ w_pool_k * s_pool[None, :] + t_pool[None, :])
    pool_bias = (f1_vec @ wproj_full[0]).reshape(N, 1, OUT_CHANNELS)

    scales, shifts = zip(*(fold_bn(n) for n in ('1x1', 'c1', 'c2', 'c3', 'proj')))
    scale = jnp.stack(scales)                                        # (5, 256)
    shift = jnp.stack(shifts)

    kernel = functools.partial(
        _aspp_kernel, tile_rows=TH, width=W, cin=C,
        rates=tuple(int(r) for r in atrous_rates), rmax=rmax)

    const2 = lambda n, t: (0, 0)
    const3 = lambda n, t: (0, 0, 0)

    out_nhwc = pl.pallas_call(
        kernel,
        out_shape=jax.ShapeDtypeStruct((N, H, W, OUT_CHANNELS), jnp.float32),
        grid_spec=pltpu.PrefetchScalarGridSpec(
            num_scalar_prefetch=0,
            grid=(N, H // TH),
            in_specs=[
                # padded input: constant block index along the row-tile axis,
                # so it stays resident in VMEM across all tiles of one image.
                pl.BlockSpec((None, Hp, Wp, C), lambda n, t: (n, 0, 0, 0)),
                pl.BlockSpec((None, 1, OUT_CHANNELS), lambda n, t: (n, 0, 0)),
                pl.BlockSpec((C, OUT_CHANNELS), const2),
                pl.BlockSpec((27, C, OUT_CHANNELS), const3),
                pl.BlockSpec((4, OUT_CHANNELS, OUT_CHANNELS), const3),
                pl.BlockSpec((5, OUT_CHANNELS), const2),
                pl.BlockSpec((5, OUT_CHANNELS), const2),
            ],
            out_specs=pl.BlockSpec((None, TH, W, OUT_CHANNELS),
                                   lambda n, t: (n, t, 0, 0)),
        ),
        compiler_params=pltpu.CompilerParams(
            dimension_semantics=("parallel", "parallel")),
    )(xp, pool_bias, w_1x1_k, w3_all, wproj_k, scale, shift)

    # back to NCHW to match the PyTorch output convention
    return jnp.transpose(out_nhwc, (0, 3, 1, 2))


def init_params(key, in_channels, atrous_rates):
    params = {}
    ks = iter(jax.random.split(key, 40))

    def w(shape, s=0.1):
        return s * jax.random.normal(next(ks), shape, jnp.float32)

    params['w_pool'] = w((OUT_CHANNELS, in_channels, 1, 1))
    params['w_1x1'] = w((OUT_CHANNELS, in_channels, 1, 1))
    for i, _ in enumerate(atrous_rates):
        params[f'w3_{i}'] = w((OUT_CHANNELS, in_channels, 3, 3))
    params['w_proj'] = w((OUT_CHANNELS, 5 * OUT_CHANNELS, 1, 1))
    for name in ('pool', '1x1', 'c1', 'c2', 'c3', 'proj'):
        params[f'bn_{name}_gamma'] = 1.0 + 0.1 * jax.random.normal(
            next(ks), (OUT_CHANNELS,), jnp.float32)
        params[f'bn_{name}_beta'] = 0.1 * jax.random.normal(
            next(ks), (OUT_CHANNELS,), jnp.float32)
        params[f'bn_{name}_mean'] = 0.1 * jax.random.normal(
            next(ks), (OUT_CHANNELS,), jnp.float32)
        params[f'bn_{name}_var'] = jax.random.uniform(
            next(ks), (OUT_CHANNELS,), jnp.float32, 0.5, 1.5)
    return params


def aspp_reference(x, params, atrous_rates):
    """Plain-JAX NCHW reference mirroring the PyTorch forward (inference BN)."""
    def conv(z, w, dilation=1, padding=0):
        return jax.lax.conv_general_dilated(
            z, w, window_strides=(1, 1),
            padding=[(padding, padding), (padding, padding)],
            rhs_dilation=(dilation, dilation),
            dimension_numbers=('NCHW', 'OIHW', 'NCHW'))

    def bn_relu(y, name):
        g = params[f'bn_{name}_gamma']
        b = params[f'bn_{name}_beta']
        m = params[f'bn_{name}_mean']
        v = params[f'bn_{name}_var']
        inv = g / jnp.sqrt(v + BN_EPS)
        return jax.nn.relu(y * inv[None, :, None, None]
                           + (b - m * inv)[None, :, None, None])

    N, C, H, W = x.shape
    pooled = jnp.mean(x, axis=(2, 3), keepdims=True)
    f1 = bn_relu(conv(pooled, params['w_pool']), 'pool')
    # bilinear(align_corners=True) upsample of a 1x1 map == broadcast
    f1 = jnp.broadcast_to(f1, (N, OUT_CHANNELS, H, W))
    f2 = bn_relu(conv(x, params['w_1x1']), '1x1')
    r1, r2, r3 = atrous_rates
    f3 = bn_relu(conv(x, params['w3_0'], r1, r1), 'c1')
    f4 = bn_relu(conv(x, params['w3_1'], r2, r2), 'c2')
    f5 = bn_relu(conv(x, params['w3_2'], r3, r3), 'c3')
    cat = jnp.concatenate([f1, f2, f3, f4, f5], axis=1)
    return bn_relu(conv(cat, params['w_proj']), 'proj')


if __name__ == "__main__":
    in_channels = 4
    atrous_rates = (1, 2, 3)
    N, H, W = 2, 16, 16

    key = jax.random.PRNGKey(0)
    kx, kp = jax.random.split(key)
    x = jax.random.normal(kx, (N, in_channels, H, W), jnp.float32)  # NCHW
    params = init_params(kp, in_channels, atrous_rates)

    out = aspp_pallas(x, params, atrous_rates)
    out = jax.block_until_ready(out)

    ref = aspp_reference(x, params, atrous_rates)
    assert out.shape == (N, OUT_CHANNELS, H, W)
    np.testing.assert_allclose(np.asarray(out), np.asarray(ref),
                               atol=5e-2, rtol=5e-2)
    print("KERNEL_OK")
</pallas_src>

<mosaic_0001>
module attributes {stable_mosaic.version = 11 : i64} {
  func.func @_aspp_kernel(%arg0: i32, %arg1: i32, %arg2: memref<1x22x22x4xbf16, #tpu.memory_space<vmem>>, %arg3: memref<1x1x256xf32, #tpu.memory_space<vmem>>, %arg4: memref<4x256xbf16, #tpu.memory_space<vmem>>, %arg5: memref<27x4x256xbf16, #tpu.memory_space<vmem>>, %arg6: memref<4x256x256xbf16, #tpu.memory_space<vmem>>, %arg7: memref<5x256xf32, #tpu.memory_space<vmem>>, %arg8: memref<5x256xf32, #tpu.memory_space<vmem>>, %arg9: memref<1x8x16x256xf32, #tpu.memory_space<vmem>>) attributes {dimension_semantics = [#tpu.dimension_semantics<parallel>, #tpu.dimension_semantics<parallel>], iteration_bounds = array<i64: 2, 2>, scalar_prefetch = 0 : i64, scratch_operands = 0 : i64, tpu.core_type = #tpu.core_type<tc>, window_params = [{transform_indices = @transform_0, window_bounds = array<i64: 1, 22, 22, 4>}, {transform_indices = @transform_1, window_bounds = array<i64: 1, 1, 256>}, {pipeline_mode = #tpu.pipeline_mode<synchronous>, transform_indices = @transform_2, window_bounds = array<i64: 4, 256>}, {pipeline_mode = #tpu.pipeline_mode<synchronous>, transform_indices = @transform_3, window_bounds = array<i64: 27, 4, 256>}, {pipeline_mode = #tpu.pipeline_mode<synchronous>, transform_indices = @transform_4, window_bounds = array<i64: 4, 256, 256>}, {pipeline_mode = #tpu.pipeline_mode<synchronous>, transform_indices = @transform_5, window_bounds = array<i64: 5, 256>}, {pipeline_mode = #tpu.pipeline_mode<synchronous>, transform_indices = @transform_6, window_bounds = array<i64: 5, 256>}, {transform_indices = @transform_7, window_bounds = array<i64: 1, 8, 16, 256>}]} {
    %c8_i32 = arith.constant 8 : i32
    %0 = arith.muli %arg1, %c8_i32 : i32
    %1 = tpu.assume_multiple %0, 8 : i32
    %c3_i32 = arith.constant 3 : i32
    %2 = arith.addi %1, %c3_i32 : i32
    %c0_i32 = arith.constant 0 : i32
    %3 = arith.addi %2, %c0_i32 : i32
    %c0 = arith.constant 0 : index
    %4 = arith.index_cast %3 : i32 to index
    %c3 = arith.constant 3 : index
    %c0_0 = arith.constant 0 : index
    %5 = vector.load %arg2[%c0, %4, %c3, %c0_0] : memref<1x22x22x4xbf16, #tpu.memory_space<vmem>>, vector<1x8x16x4xbf16>
    %6 = vector.shape_cast %5 : vector<1x8x16x4xbf16> to vector<8x16x4xbf16>
    %7 = vector.shape_cast %6 : vector<8x16x4xbf16> to vector<128x4xbf16>
    %c0_1 = arith.constant 0 : index
    %c0_2 = arith.constant 0 : index
    %8 = vector.load %arg4[%c0_1, %c0_2] : memref<4x256xbf16, #tpu.memory_space<vmem>>, vector<4x256xbf16>
    %cst = arith.constant dense<0.000000e+00> : vector<128x256xf32>
    %9 = tpu.matmul %7, %8, %cst {dimension_numbers = #tpu.dot_dimension_numbers<[1], [0], [0], [1], [0, 0, 1, 1], [], []>} : vector<128x4xbf16>, vector<4x256xbf16>, vector<128x256xf32> -> vector<128x256xf32>
    %c0_3 = arith.constant 0 : index
    %c0_4 = arith.constant 0 : index
    %10 = vector.load %arg7[%c0_3, %c0_4] : memref<5x256xf32, #tpu.memory_space<vmem>>, vector<1x256xf32>
    %11 = vector.shape_cast %10 : vector<1x256xf32> to vector<256xf32>
    %12 = vector.shape_cast %11 : vector<256xf32> to vector<1x256xf32>
    %13 = vector.broadcast %12 : vector<1x256xf32> to vector<128x256xf32>
    %14 = arith.mulf %9, %13 : vector<128x256xf32>
    %c0_5 = arith.constant 0 : index
    %c0_6 = arith.constant 0 : index
    %15 = vector.load %arg8[%c0_5, %c0_6] : memref<5x256xf32, #tpu.memory_space<vmem>>, vector<1x256xf32>
    %16 = vector.shape_cast %15 : vector<1x256xf32> to vector<256xf32>
    %17 = vector.shape_cast %16 : vector<256xf32> to vector<1x256xf32>
    %18 = vector.broadcast %17 : vector<1x256xf32> to vector<128x256xf32>
    %19 = arith.addf %14, %18 : vector<128x256xf32>
    %cst_7 = arith.constant 0.000000e+00 : f32
    %20 = vector.broadcast %cst_7 : f32 to vector<128x256xf32>
    %21 = arith.maximumf %19, %20 : vector<128x256xf32>
    %22 = arith.truncf %21 : vector<128x256xf32> to vector<128x256xbf16>
    %c0_8 = arith.constant 0 : index
    %c0_9 = arith.constant 0 : index
    %c0_10 = arith.constant 0 : index
    %23 = vector.load %arg6[%c0_8, %c0_9, %c0_10] : memref<4x256x256xbf16, #tpu.memory_space<vmem>>, vector<1x256x256xbf16>
    %24 = vector.shape_cast %23 : vector<1x256x256xbf16> to vector<256x256xbf16>
    %cst_11 = arith.constant dense<0.000000e+00> : vector<128x256xf32>
    %25 = tpu.matmul %22, %24, %cst_11 {dimension_numbers = #tpu.dot_dimension_numbers<[1], [0], [0], [1], [0, 0, 1, 1], [], []>} : vector<128x256xbf16>, vector<256x256xbf16>, vector<128x256xf32> -> vector<128x256xf32>
    %cst_12 = arith.constant 0.000000e+00 : f32
    %26 = vector.broadcast %cst_12 : f32 to vector<128x256xf32>
    %c3_i32_13 = arith.constant 3 : i32
    %27 = arith.addi %1, %c3_i32_13 : i32
    %c-1_i32 = arith.constant -1 : i32
    %28 = arith.addi %27, %c-1_i32 : i32
    %c0_14 = arith.constant 0 : index
    %29 = arith.index_cast %28 : i32 to index
    %c2 = arith.constant 2 : index
    %c0_15 = arith.constant 0 : index
    %30 = vector.load %arg2[%c0_14, %29, %c2, %c0_15] : memref<1x22x22x4xbf16, #tpu.memory_space<vmem>>, vector<1x8x16x4xbf16>
    %31 = vector.shape_cast %30 : vector<1x8x16x4xbf16> to vector<8x16x4xbf16>
    %32 = vector.shape_cast %31 : vector<8x16x4xbf16> to vector<128x4xbf16>
    %c0_16 = arith.constant 0 : index
    %c0_17 = arith.constant 0 : index
    %c0_18 = arith.constant 0 : index
    %33 = vector.load %arg5[%c0_16, %c0_17, %c0_18] : memref<27x4x256xbf16, #tpu.memory_space<vmem>>, vector<1x4x256xbf16>
    %34 = vector.shape_cast %33 : vector<1x4x256xbf16> to vector<4x256xbf16>
    %cst_19 = arith.constant dense<0.000000e+00> : vector<128x256xf32>
    %35 = tpu.matmul %32, %34, %cst_19 {dimension_numbers = #tpu.dot_dimension_numbers<[1], [0], [0], [1], [0, 0, 1, 1], [], []>} : vector<128x4xbf16>, vector<4x256xbf16>, vector<128x256xf32> -> vector<128x256xf32>
    %36 = arith.addf %26, %35 : vector<128x256xf32>
    %c3_i32_20 = arith.constant 3 : i32
    %37 = arith.addi %1, %c3_i32_20 : i32
    %c-1_i32_21 = arith.constant -1 : i32
    %38 = arith.addi %37, %c-1_i32_21 : i32
    %c0_22 = arith.constant 0 : index
    %39 = arith.index_cast %38 : i32 to index
    %c3_23 = arith.constant 3 : index
    %c0_24 = arith.constant 0 : index
    %40 = vector.load %arg2[%c0_22, %39, %c3_23, %c0_24] : memref<1x22x22x4xbf16, #tpu.memory_space<vmem>>, vector<1x8x16x4xbf16>
    %41 = vector.shape_cast %40 : vector<1x8x16x4xbf16> to vector<8x16x4xbf16>
    %42 = vector.shape_cast %41 : vector<8x16x4xbf16> to vector<128x4xbf16>
    %c1 = arith.constant 1 : index
    %c0_25 = arith.constant 0 : index
    %c0_26 = arith.constant 0 : index
    %43 = vector.load %arg5[%c1, %c0_25, %c0_26] : memref<27x4x256xbf16, #tpu.memory_space<vmem>>, vector<1x4x256xbf16>
    %44 = vector.shape_cast %43 : vector<1x4x256xbf16> to vector<4x256xbf16>
    %cst_27 = arith.constant dense<0.000000e+00> : vector<128x256xf32>
    %45 = tpu.matmul %42, %44, %cst_27 {dimension_numbers = #tpu.dot_dimension_numbers<[1], [0], [0], [1], [0, 0, 1, 1], [], []>} : vector<128x4xbf16>, vector<4x256xbf16>, vector<128x256xf32> -> vector<128x256xf32>
    %46 = arith.addf %36, %45 : vector<128x256xf32>
    %c3_i32_28 = arith.constant 3 : i32
    %47 = arith.addi %1, %c3_i32_28 : i32
    %c-1_i32_29 = arith.constant -1 : i32
    %48 = arith.addi %47, %c-1_i32_29 : i32
    %c0_30 = arith.constant 0 : index
    %49 = arith.index_cast %48 : i32 to index
    %c4 = arith.constant 4 : index
    %c0_31 = arith.constant 0 : index
    %50 = vector.load %arg2[%c0_30, %49, %c4, %c0_31] : memref<1x22x22x4xbf16, #tpu.memory_space<vmem>>, vector<1x8x16x4xbf16>
    %51 = vector.shape_cast %50 : vector<1x8x16x4xbf16> to vector<8x16x4xbf16>
    %52 = vector.shape_cast %51 : vector<8x16x4xbf16> to vector<128x4xbf16>
    %c2_32 = arith.constant 2 : index
    %c0_33 = arith.constant 0 : index
    %c0_34 = arith.constant 0 : index
    %53 = vector.load %arg5[%c2_32, %c0_33, %c0_34] : memref<27x4x256xbf16, #tpu.memory_space<vmem>>, vector<1x4x256xbf16>
    %54 = vector.shape_cast %53 : vector<1x4x256xbf16> to vector<4x256xbf16>
    %cst_35 = arith.constant dense<0.000000e+00> : vector<128x256xf32>
    %55 = tpu.matmul %52, %54, %cst_35 {dimension_numbers = #tpu.dot_dimension_numbers<[1], [0], [0], [1], [0, 0, 1, 1], [], []>} : vector<128x4xbf16>, vector<4x256xbf16>, vector<128x256xf32> -> vector<128x256xf32>
    %56 = arith.addf %46, %55 : vector<128x256xf32>
    %c3_i32_36 = arith.constant 3 : i32
    %57 = arith.addi %1, %c3_i32_36 : i32
    %c0_i32_37 = arith.constant 0 : i32
    %58 = arith.addi %57, %c0_i32_37 : i32
    %c0_38 = arith.constant 0 : index
    %59 = arith.index_cast %58 : i32 to index
    %c2_39 = arith.constant 2 : index
    %c0_40 = arith.constant 0 : index
    %60 = vector.load %arg2[%c0_38, %59, %c2_39, %c0_40] : memref<1x22x22x4xbf16, #tpu.memory_space<vmem>>, vector<1x8x16x4xbf16>
    %61 = vector.shape_cast %60 : vector<1x8x16x4xbf16> to vector<8x16x4xbf16>
    %62 = vector.shape_cast %61 : vector<8x16x4xbf16> to vector<128x4xbf16>
    %c3_41 = arith.constant 3 : index
    %c0_42 = arith.constant 0 : index
    %c0_43 = arith.constant 0 : index
    %63 = vector.load %arg5[%c3_41, %c0_42, %c0_43] : memref<27x4x256xbf16, #tpu.memory_space<vmem>>, vector<1x4x256xbf16>
    %64 = vector.shape_cast %63 : vector<1x4x256xbf16> to vector<4x256xbf16>
    %cst_44 = arith.constant dense<0.000000e+00> : vector<128x256xf32>
    %65 = tpu.matmul %62, %64, %cst_44 {dimension_numbers = #tpu.dot_dimension_numbers<[1], [0], [0], [1], [0, 0, 1, 1], [], []>} : vector<128x4xbf16>, vector<4x256xbf16>, vector<128x256xf32> -> vector<128x256xf32>
    %66 = arith.addf %56, %65 : vector<128x256xf32>
    %c3_i32_45 = arith.constant 3 : i32
    %67 = arith.addi %1, %c3_i32_45 : i32
    %c0_i32_46 = arith.constant 0 : i32
    %68 = arith.addi %67, %c0_i32_46 : i32
    %c0_47 = arith.constant 0 : index
    %69 = arith.index_cast %68 : i32 to index
    %c3_48 = arith.constant 3 : index
    %c0_49 = arith.constant 0 : index
    %70 = vector.load %arg2[%c0_47, %69, %c3_48, %c0_49] : memref<1x22x22x4xbf16, #tpu.memory_space<vmem>>, vector<1x8x16x4xbf16>
    %71 = vector.shape_cast %70 : vector<1x8x16x4xbf16> to vector<8x16x4xbf16>
    %72 = vector.shape_cast %71 : vector<8x16x4xbf16> to vector<128x4xbf16>
    %c4_50 = arith.constant 4 : index
    %c0_51 = arith.constant 0 : index
    %c0_52 = arith.constant 0 : index
    %73 = vector.load %arg5[%c4_50, %c0_51, %c0_52] : memref<27x4x256xbf16, #tpu.memory_space<vmem>>, vector<1x4x256xbf16>
    %74 = vector.shape_cast %73 : vector<1x4x256xbf16> to vector<4x256xbf16>
    %cst_53 = arith.constant dense<0.000000e+00> : vector<128x256xf32>
    %75 = tpu.matmul %72, %74, %cst_53 {dimension_numbers = #tpu.dot_dimension_numbers<[1], [0], [0], [1], [0, 0, 1, 1], [], []>} : vector<128x4xbf16>, vector<4x256xbf16>, vector<128x256xf32> -> vector<128x256xf32>
    %76 = arith.addf %66, %75 : vector<128x256xf32>
    %c3_i32_54 = arith.constant 3 : i32
    %77 = arith.addi %1, %c3_i32_54 : i32
    %c0_i32_55 = arith.constant 0 : i32
    %78 = arith.addi %77, %c0_i32_55 : i32
    %c0_56 = arith.constant 0 : index
    %79 = arith.index_cast %78 : i32 to index
    %c4_57 = arith.constant 4 : index
    %c0_58 = arith.constant 0 : index
    %80 = vector.load %arg2[%c0_56, %79, %c4_57, %c0_58] : memref<1x22x22x4xbf16, #tpu.memory_space<vmem>>, vector<1x8x16x4xbf16>
    %81 = vector.shape_cast %80 : vector<1x8x16x4xbf16> to vector<8x16x4xbf16>
    %82 = vector.shape_cast %81 : vector<8x16x4xbf16> to vector<128x4xbf16>
    %c5 = arith.constant 5 : index
    %c0_59 = arith.constant 0 : index
    %c0_60 = arith.constant 0 : index
    %83 = vector.load %arg5[%c5, %c0_59, %c0_60] : memref<27x4x256xbf16, #tpu.memory_space<vmem>>, vector<1x4x256xbf16>
    %84 = vector.shape_cast %83 : vector<1x4x256xbf16> to vector<4x256xbf16>
    %cst_61 = arith.constant dense<0.000000e+00> : vector<128x256xf32>
    %85 = tpu.matmul %82, %84, %cst_61 {dimension_numbers = #tpu.dot_dimension_numbers<[1], [0], [0], [1], [0, 0, 1, 1], [], []>} : vector<128x4xbf16>, vector<4x256xbf16>, vector<128x256xf32> -> vector<128x256xf32>
    %86 = arith.addf %76, %85 : vector<128x256xf32>
    %c3_i32_62 = arith.constant 3 : i32
    %87 = arith.addi %1, %c3_i32_62 : i32
    %c1_i32 = arith.constant 1 : i32
    %88 = arith.addi %87, %c1_i32 : i32
    %c0_63 = arith.constant 0 : index
    %89 = arith.index_cast %88 : i32 to index
    %c2_64 = arith.constant 2 : index
    %c0_65 = arith.constant 0 : index
    %90 = vector.load %arg2[%c0_63, %89, %c2_64, %c0_65] : memref<1x22x22x4xbf16, #tpu.memory_space<vmem>>, vector<1x8x16x4xbf16>
    %91 = vector.shape_cast %90 : vector<1x8x16x4xbf16> to vector<8x16x4xbf16>
    %92 = vector.shape_cast %91 : vector<8x16x4xbf16> to vector<128x4xbf16>
    %c6 = arith.constant 6 : index
    %c0_66 = arith.constant 0 : index
    %c0_67 = arith.constant 0 : index
    %93 = vector.load %arg5[%c6, %c0_66, %c0_67] : memref<27x4x256xbf16, #tpu.memory_space<vmem>>, vector<1x4x256xbf16>
    %94 = vector.shape_cast %93 : vector<1x4x256xbf16> to vector<4x256xbf16>
    %cst_68 = arith.constant dense<0.000000e+00> : vector<128x256xf32>
    %95 = tpu.matmul %92, %94, %cst_68 {dimension_numbers = #tpu.dot_dimension_numbers<[1], [0], [0], [1], [0, 0, 1, 1], [], []>} : vector<128x4xbf16>, vector<4x256xbf16>, vector<128x256xf32> -> vector<128x256xf32>
    %96 = arith.addf %86, %95 : vector<128x256xf32>
    %c3_i32_69 = arith.constant 3 : i32
    %97 = arith.addi %1, %c3_i32_69 : i32
    %c1_i32_70 = arith.constant 1 : i32
    %98 = arith.addi %97, %c1_i32_70 : i32
    %c0_71 = arith.constant 0 : index
    %99 = arith.index_cast %98 : i32 to index
    %c3_72 = arith.constant 3 : index
    %c0_73 = arith.constant 0 : index
    %100 = vector.load %arg2[%c0_71, %99, %c3_72, %c0_73] : memref<1x22x22x4xbf16, #tpu.memory_space<vmem>>, vector<1x8x16x4xbf16>
    %101 = vector.shape_cast %100 : vector<1x8x16x4xbf16> to vector<8x16x4xbf16>
    %102 = vector.shape_cast %101 : vector<8x16x4xbf16> to vector<128x4xbf16>
    %c7 = arith.constant 7 : index
    %c0_74 = arith.constant 0 : index
    %c0_75 = arith.constant 0 : index
    %103 = vector.load %arg5[%c7, %c0_74, %c0_75] : memref<27x4x256xbf16, #tpu.memory_space<vmem>>, vector<1x4x256xbf16>
    %104 = vector.shape_cast %103 : vector<1x4x256xbf16> to vector<4x256xbf16>
    %cst_76 = arith.constant dense<0.000000e+00> : vector<128x256xf32>
    %105 = tpu.matmul %102, %104, %cst_76 {dimension_numbers = #tpu.dot_dimension_numbers<[1], [0], [0], [1], [0, 0, 1, 1], [], []>} : vector<128x4xbf16>, vector<4x256xbf16>, vector<128x256xf32> -> vector<128x256xf32>
    %106 = arith.addf %96, %105 : vector<128x256xf32>
    %c3_i32_77 = arith.constant 3 : i32
    %107 = arith.addi %1, %c3_i32_77 : i32
    %c1_i32_78 = arith.constant 1 : i32
    %108 = arith.addi %107, %c1_i32_78 : i32
    %c0_79 = arith.constant 0 : index
    %109 = arith.index_cast %108 : i32 to index
    %c4_80 = arith.constant 4 : index
    %c0_81 = arith.constant 0 : index
    %110 = vector.load %arg2[%c0_79, %109, %c4_80, %c0_81] : memref<1x22x22x4xbf16, #tpu.memory_space<vmem>>, vector<1x8x16x4xbf16>
    %111 = vector.shape_cast %110 : vector<1x8x16x4xbf16> to vector<8x16x4xbf16>
    %112 = vector.shape_cast %111 : vector<8x16x4xbf16> to vector<128x4xbf16>
    %c8 = arith.constant 8 : index
    %c0_82 = arith.constant 0 : index
    %c0_83 = arith.constant 0 : index
    %113 = vector.load %arg5[%c8, %c0_82, %c0_83] : memref<27x4x256xbf16, #tpu.memory_space<vmem>>, vector<1x4x256xbf16>
    %114 = vector.shape_cast %113 : vector<1x4x256xbf16> to vector<4x256xbf16>
    %cst_84 = arith.constant dense<0.000000e+00> : vector<128x256xf32>
    %115 = tpu.matmul %112, %114, %cst_84 {dimension_numbers = #tpu.dot_dimension_numbers<[1], [0], [0], [1], [0, 0, 1, 1], [], []>} : vector<128x4xbf16>, vector<4x256xbf16>, vector<128x256xf32> -> vector<128x256xf32>
    %116 = arith.addf %106, %115 : vector<128x256xf32>
    %c1_85 = arith.constant 1 : index
    %c0_86 = arith.constant 0 : index
    %117 = vector.load %arg7[%c1_85, %c0_86] : memref<5x256xf32, #tpu.memory_space<vmem>>, vector<1x256xf32>
    %118 = vector.shape_cast %117 : vector<1x256xf32> to vector<256xf32>
    %119 = vector.shape_cast %118 : vector<256xf32> to vector<1x256xf32>
    %120 = vector.broadcast %119 : vector<1x256xf32> to vector<128x256xf32>
    %121 = arith.mulf %116, %120 : vector<128x256xf32>
    %c1_87 = arith.constant 1 : index
    %c0_88 = arith.constant 0 : index
    %122 = vector.load %arg8[%c1_87, %c0_88] : memref<5x256xf32, #tpu.memory_space<vmem>>, vector<1x256xf32>
    %123 = vector.shape_cast %122 : vector<1x256xf32> to vector<256xf32>
    %124 = vector.shape_cast %123 : vector<256xf32> to vector<1x256xf32>
    %125 = vector.broadcast %124 : vector<1x256xf32> to vector<128x256xf32>
    %126 = arith.addf %121, %125 : vector<128x256xf32>
    %cst_89 = arith.constant 0.000000e+00 : f32
    %127 = vector.broadcast %cst_89 : f32 to vector<128x256xf32>
    %128 = arith.maximumf %126, %127 : vector<128x256xf32>
    %129 = arith.truncf %128 : vector<128x256xf32> to vector<128x256xbf16>
    %c1_90 = arith.constant 1 : index
    %c0_91 = arith.constant 0 : index
    %c0_92 = arith.constant 0 : index
    %130 = vector.load %arg6[%c1_90, %c0_91, %c0_92] : memref<4x256x256xbf16, #tpu.memory_space<vmem>>, vector<1x256x256xbf16>
    %131 = vector.shape_cast %130 : vector<1x256x256xbf16> to vector<256x256xbf16>
    %cst_93 = arith.constant dense<0.000000e+00> : vector<128x256xf32>
    %132 = tpu.matmul %129, %131, %cst_93 {dimension_numbers = #tpu.dot_dimension_numbers<[1], [0], [0], [1], [0, 0, 1, 1], [], []>} : vector<128x256xbf16>, vector<256x256xbf16>, vector<128x256xf32> -> vector<128x256xf32>
    %133 = arith.addf %25, %132 : vector<128x256xf32>
    %cst_94 = arith.constant 0.000000e+00 : f32
    %134 = vector.broadcast %cst_94 : f32 to vector<128x256xf32>
    %c3_i32_95 = arith.constant 3 : i32
    %135 = arith.addi %1, %c3_i32_95 : i32
    %c-2_i32 = arith.constant -2 : i32
    %136 = arith.addi %135, %c-2_i32 : i32
    %c0_96 = arith.constant 0 : index
    %137 = arith.index_cast %136 : i32 to index
    %c1_97 = arith.constant 1 : index
    %c0_98 = arith.constant 0 : index
    %138 = vector.load %arg2[%c0_96, %137, %c1_97, %c0_98] : memref<1x22x22x4xbf16, #tpu.memory_space<vmem>>, vector<1x8x16x4xbf16>
    %139 = vector.shape_cast %138 : vector<1x8x16x4xbf16> to vector<8x16x4xbf16>
    %140 = vector.shape_cast %139 : vector<8x16x4xbf16> to vector<128x4xbf16>
    %c9 = arith.constant 9 : index
    %c0_99 = arith.constant 0 : index
    %c0_100 = arith.constant 0 : index
    %141 = vector.load %arg5[%c9, %c0_99, %c0_100] : memref<27x4x256xbf16, #tpu.memory_space<vmem>>, vector<1x4x256xbf16>
    %142 = vector.shape_cast %141 : vector<1x4x256xbf16> to vector<4x256xbf16>
    %cst_101 = arith.constant dense<0.000000e+00> : vector<128x256xf32>
    %143 = tpu.matmul %140, %142, %cst_101 {dimension_numbers = #tpu.dot_dimension_numbers<[1], [0], [0], [1], [0, 0, 1, 1], [], []>} : vector<128x4xbf16>, vector<4x256xbf16>, vector<128x256xf32> -> vector<128x256xf32>
    %144 = arith.addf %134, %143 : vector<128x256xf32>
    %c3_i32_102 = arith.constant 3 : i32
    %145 = arith.addi %1, %c3_i32_102 : i32
    %c-2_i32_103 = arith.constant -2 : i32
    %146 = arith.addi %145, %c-2_i32_103 : i32
    %c0_104 = arith.constant 0 : index
    %147 = arith.index_cast %146 : i32 to index
    %c3_105 = arith.constant 3 : index
    %c0_106 = arith.constant 0 : index
    %148 = vector.load %arg2[%c0_104, %147, %c3_105, %c0_106] : memref<1x22x22x4xbf16, #tpu.memory_space<vmem>>, vector<1x8x16x4xbf16>
    %149 = vector.shape_cast %148 : vector<1x8x16x4xbf16> to vector<8x16x4xbf16>
    %150 = vector.shape_cast %149 : vector<8x16x4xbf16> to vector<128x4xbf16>
    %c10 = arith.constant 10 : index
    %c0_107 = arith.constant 0 : index
    %c0_108 = arith.constant 0 : index
    %151 = vector.load %arg5[%c10, %c0_107, %c0_108] : memref<27x4x256xbf16, #tpu.memory_space<vmem>>, vector<1x4x256xbf16>
    %152 = vector.shape_cast %151 : vector<1x4x256xbf16> to vector<4x256xbf16>
    %cst_109 = arith.constant dense<0.000000e+00> : vector<128x256xf32>
    %153 = tpu.matmul %150, %152, %cst_109 {dimension_numbers = #tpu.dot_dimension_numbers<[1], [0], [0], [1], [0, 0, 1, 1], [], []>} : vector<128x4xbf16>, vector<4x256xbf16>, vector<128x256xf32> -> vector<128x256xf32>
    %154 = arith.addf %144, %153 : vector<128x256xf32>
    %c3_i32_110 = arith.constant 3 : i32
    %155 = arith.addi %1, %c3_i32_110 : i32
    %c-2_i32_111 = arith.constant -2 : i32
    %156 = arith.addi %155, %c-2_i32_111 : i32
    %c0_112 = arith.constant 0 : index
    %157 = arith.index_cast %156 : i32 to index
    %c5_113 = arith.constant 5 : index
    %c0_114 = arith.constant 0 : index
    %158 = vector.load %arg2[%c0_112, %157, %c5_113, %c0_114] : memref<1x22x22x4xbf16, #tpu.memory_space<vmem>>, vector<1x8x16x4xbf16>
    %159 = vector.shape_cast %158 : vector<1x8x16x4xbf16> to vector<8x16x4xbf16>
    %160 = vector.shape_cast %159 : vector<8x16x4xbf16> to vector<128x4xbf16>
    %c11 = arith.constant 11 : index
    %c0_115 = arith.constant 0 : index
    %c0_116 = arith.constant 0 : index
    %161 = vector.load %arg5[%c11, %c0_115, %c0_116] : memref<27x4x256xbf16, #tpu.memory_space<vmem>>, vector<1x4x256xbf16>
    %162 = vector.shape_cast %161 : vector<1x4x256xbf16> to vector<4x256xbf16>
    %cst_117 = arith.constant dense<0.000000e+00> : vector<128x256xf32>
    %163 = tpu.matmul %160, %162, %cst_117 {dimension_numbers = #tpu.dot_dimension_numbers<[1], [0], [0], [1], [0, 0, 1, 1], [], []>} : vector<128x4xbf16>, vector<4x256xbf16>, vector<128x256xf32> -> vector<128x256xf32>
    %164 = arith.addf %154, %163 : vector<128x256xf32>
    %c3_i32_118 = arith.constant 3 : i32
    %165 = arith.addi %1, %c3_i32_118 : i32
    %c0_i32_119 = arith.constant 0 : i32
    %166 = arith.addi %165, %c0_i32_119 : i32
    %c0_120 = arith.constant 0 : index
    %167 = arith.index_cast %166 : i32 to index
    %c1_121 = arith.constant 1 : index
    %c0_122 = arith.constant 0 : index
    %168 = vector.load %arg2[%c0_120, %167, %c1_121, %c0_122] : memref<1x22x22x4xbf16, #tpu.memory_space<vmem>>, vector<1x8x16x4xbf16>
    %169 = vector.shape_cast %168 : vector<1x8x16x4xbf16> to vector<8x16x4xbf16>
    %170 = vector.shape_cast %169 : vector<8x16x4xbf16> to vector<128x4xbf16>
    %c12 = arith.constant 12 : index
    %c0_123 = arith.constant 0 : index
    %c0_124 = arith.constant 0 : index
    %171 = vector.load %arg5[%c12, %c0_123, %c0_124] : memref<27x4x256xbf16, #tpu.memory_space<vmem>>, vector<1x4x256xbf16>
    %172 = vector.shape_cast %171 : vector<1x4x256xbf16> to vector<4x256xbf16>
    %cst_125 = arith.constant dense<0.000000e+00> : vector<128x256xf32>
    %173 = tpu.matmul %170, %172, %cst_125 {dimension_numbers = #tpu.dot_dimension_numbers<[1], [0], [0], [1], [0, 0, 1, 1], [], []>} : vector<128x4xbf16>, vector<4x256xbf16>, vector<128x256xf32> -> vector<128x256xf32>
    %174 = arith.addf %164, %173 : vector<128x256xf32>
    %c3_i32_126 = arith.constant 3 : i32
    %175 = arith.addi %1, %c3_i32_126 : i32
    %c0_i32_127 = arith.constant 0 : i32
    %176 = arith.addi %175, %c0_i32_127 : i32
    %c0_128 = arith.constant 0 : index
    %177 = arith.index_cast %176 : i32 to index
    %c3_129 = arith.constant 3 : index
    %c0_130 = arith.constant 0 : index
    %178 = vector.load %arg2[%c0_128, %177, %c3_129, %c0_130] : memref<1x22x22x4xbf16, #tpu.memory_space<vmem>>, vector<1x8x16x4xbf16>
    %179 = vector.shape_cast %178 : vector<1x8x16x4xbf16> to vector<8x16x4xbf16>
    %180 = vector.shape_cast %179 : vector<8x16x4xbf16> to vector<128x4xbf16>
    %c13 = arith.constant 13 : index
    %c0_131 = arith.constant 0 : index
    %c0_132 = arith.constant 0 : index
    %181 = vector.load %arg5[%c13, %c0_131, %c0_132] : memref<27x4x256xbf16, #tpu.memory_space<vmem>>, vector<1x4x256xbf16>
    %182 = vector.shape_cast %181 : vector<1x4x256xbf16> to vector<4x256xbf16>
    %cst_133 = arith.constant dense<0.000000e+00> : vector<128x256xf32>
    %183 = tpu.matmul %180, %182, %cst_133 {dimension_numbers = #tpu.dot_dimension_numbers<[1], [0], [0], [1], [0, 0, 1, 1], [], []>} : vector<128x4xbf16>, vector<4x256xbf16>, vector<128x256xf32> -> vector<128x256xf32>
    %184 = arith.addf %174, %183 : vector<128x256xf32>
    %c3_i32_134 = arith.constant 3 : i32
    %185 = arith.addi %1, %c3_i32_134 : i32
    %c0_i32_135 = arith.constant 0 : i32
    %186 = arith.addi %185, %c0_i32_135 : i32
    %c0_136 = arith.constant 0 : index
    %187 = arith.index_cast %186 : i32 to index
    %c5_137 = arith.constant 5 : index
    %c0_138 = arith.constant 0 : index
    %188 = vector.load %arg2[%c0_136, %187, %c5_137, %c0_138] : memref<1x22x22x4xbf16, #tpu.memory_space<vmem>>, vector<1x8x16x4xbf16>
    %189 = vector.shape_cast %188 : vector<1x8x16x4xbf16> to vector<8x16x4xbf16>
    %190 = vector.shape_cast %189 : vector<8x16x4xbf16> to vector<128x4xbf16>
    %c14 = arith.constant 14 : index
    %c0_139 = arith.constant 0 : index
    %c0_140 = arith.constant 0 : index
    %191 = vector.load %arg5[%c14, %c0_139, %c0_140] : memref<27x4x256xbf16, #tpu.memory_space<vmem>>, vector<1x4x256xbf16>
    %192 = vector.shape_cast %191 : vector<1x4x256xbf16> to vector<4x256xbf16>
    %cst_141 = arith.constant dense<0.000000e+00> : vector<128x256xf32>
    %193 = tpu.matmul %190, %192, %cst_141 {dimension_numbers = #tpu.dot_dimension_numbers<[1], [0], [0], [1], [0, 0, 1, 1], [], []>} : vector<128x4xbf16>, vector<4x256xbf16>, vector<128x256xf32> -> vector<128x256xf32>
    %194 = arith.addf %184, %193 : vector<128x256xf32>
    %c3_i32_142 = arith.constant 3 : i32
    %195 = arith.addi %1, %c3_i32_142 : i32
    %c2_i32 = arith.constant 2 : i32
    %196 = arith.addi %195, %c2_i32 : i32
    %c0_143 = arith.constant 0 : index
    %197 = arith.index_cast %196 : i32 to index
    %c1_144 = arith.constant 1 : index
    %c0_145 = arith.constant 0 : index
    %198 = vector.load %arg2[%c0_143, %197, %c1_144, %c0_145] : memref<1x22x22x4xbf16, #tpu.memory_space<vmem>>, vector<1x8x16x4xbf16>
    %199 = vector.shape_cast %198 : vector<1x8x16x4xbf16> to vector<8x16x4xbf16>
    %200 = vector.shape_cast %199 : vector<8x16x4xbf16> to vector<128x4xbf16>
    %c15 = arith.constant 15 : index
    %c0_146 = arith.constant 0 : index
    %c0_147 = arith.constant 0 : index
    %201 = vector.load %arg5[%c15, %c0_146, %c0_147] : memref<27x4x256xbf16, #tpu.memory_space<vmem>>, vector<1x4x256xbf16>
    %202 = vector.shape_cast %201 : vector<1x4x256xbf16> to vector<4x256xbf16>
    %cst_148 = arith.constant dense<0.000000e+00> : vector<128x256xf32>
    %203 = tpu.matmul %200, %202, %cst_148 {dimension_numbers = #tpu.dot_dimension_numbers<[1], [0], [0], [1], [0, 0, 1, 1], [], []>} : vector<128x4xbf16>, vector<4x256xbf16>, vector<128x256xf32> -> vector<128x256xf32>
    %204 = arith.addf %194, %203 : vector<128x256xf32>
    %c3_i32_149 = arith.constant 3 : i32
    %205 = arith.addi %1, %c3_i32_149 : i32
    %c2_i32_150 = arith.constant 2 : i32
    %206 = arith.addi %205, %c2_i32_150 : i32
    %c0_151 = arith.constant 0 : index
    %207 = arith.index_cast %206 : i32 to index
    %c3_152 = arith.constant 3 : index
    %c0_153 = arith.constant 0 : index
    %208 = vector.load %arg2[%c0_151, %207, %c3_152, %c0_153] : memref<1x22x22x4xbf16, #tpu.memory_space<vmem>>, vector<1x8x16x4xbf16>
    %209 = vector.shape_cast %208 : vector<1x8x16x4xbf16> to vector<8x16x4xbf16>
    %210 = vector.shape_cast %209 : vector<8x16x4xbf16> to vector<128x4xbf16>
    %c16 = arith.constant 16 : index
    %c0_154 = arith.constant 0 : index
    %c0_155 = arith.constant 0 : index
    %211 = vector.load %arg5[%c16, %c0_154, %c0_155] : memref<27x4x256xbf16, #tpu.memory_space<vmem>>, vector<1x4x256xbf16>
    %212 = vector.shape_cast %211 : vector<1x4x256xbf16> to vector<4x256xbf16>
    %cst_156 = arith.constant dense<0.000000e+00> : vector<128x256xf32>
    %213 = tpu.matmul %210, %212, %cst_156 {dimension_numbers = #tpu.dot_dimension_numbers<[1], [0], [0], [1], [0, 0, 1, 1], [], []>} : vector<128x4xbf16>, vector<4x256xbf16>, vector<128x256xf32> -> vector<128x256xf32>
    %214 = arith.addf %204, %213 : vector<128x256xf32>
    %c3_i32_157 = arith.constant 3 : i32
    %215 = arith.addi %1, %c3_i32_157 : i32
    %c2_i32_158 = arith.constant 2 : i32
    %216 = arith.addi %215, %c2_i32_158 : i32
    %c0_159 = arith.constant 0 : index
    %217 = arith.index_cast %216 : i32 to index
    %c5_160 = arith.constant 5 : index
    %c0_161 = arith.constant 0 : index
    %218 = vector.load %arg2[%c0_159, %217, %c5_160, %c0_161] : memref<1x22x22x4xbf16, #tpu.memory_space<vmem>>, vector<1x8x16x4xbf16>
    %219 = vector.shape_cast %218 : vector<1x8x16x4xbf16> to vector<8x16x4xbf16>
    %220 = vector.shape_cast %219 : vector<8x16x4xbf16> to vector<128x4xbf16>
    %c17 = arith.constant 17 : index
    %c0_162 = arith.constant 0 : index
    %c0_163 = arith.constant 0 : index
    %221 = vector.load %arg5[%c17, %c0_162, %c0_163] : memref<27x4x256xbf16, #tpu.memory_space<vmem>>, vector<1x4x256xbf16>
    %222 = vector.shape_cast %221 : vector<1x4x256xbf16> to vector<4x256xbf16>
    %cst_164 = arith.constant dense<0.000000e+00> : vector<128x256xf32>
    %223 = tpu.matmul %220, %222, %cst_164 {dimension_numbers = #tpu.dot_dimension_numbers<[1], [0], [0], [1], [0, 0, 1, 1], [], []>} : vector<128x4xbf16>, vector<4x256xbf16>, vector<128x256xf32> -> vector<128x256xf32>
    %224 = arith.addf %214, %223 : vector<128x256xf32>
    %c2_165 = arith.constant 2 : index
    %c0_166 = arith.constant 0 : index
    %225 = vector.load %arg7[%c2_165, %c0_166] : memref<5x256xf32, #tpu.memory_space<vmem>>, vector<1x256xf32>
    %226 = vector.shape_cast %225 : vector<1x256xf32> to vector<256xf32>
    %227 = vector.shape_cast %226 : vector<256xf32> to vector<1x256xf32>
    %228 = vector.broadcast %227 : vector<1x256xf32> to vector<128x256xf32>
    %229 = arith.mulf %224, %228 : vector<128x256xf32>
    %c2_167 = arith.constant 2 : index
    %c0_168 = arith.constant 0 : index
    %230 = vector.load %arg8[%c2_167, %c0_168] : memref<5x256xf32, #tpu.memory_space<vmem>>, vector<1x256xf32>
    %231 = vector.shape_cast %230 : vector<1x256xf32> to vector<256xf32>
    %232 = vector.shape_cast %231 : vector<256xf32> to vector<1x256xf32>
    %233 = vector.broadcast %232 : vector<1x256xf32> to vector<128x256xf32>
    %234 = arith.addf %229, %233 : vector<128x256xf32>
    %cst_169 = arith.constant 0.000000e+00 : f32
    %235 = vector.broadcast %cst_169 : f32 to vector<128x256xf32>
    %236 = arith.maximumf %234, %235 : vector<128x256xf32>
    %237 = arith.truncf %236 : vector<128x256xf32> to vector<128x256xbf16>
    %c2_170 = arith.constant 2 : index
    %c0_171 = arith.constant 0 : index
    %c0_172 = arith.constant 0 : index
    %238 = vector.load %arg6[%c2_170, %c0_171, %c0_172] : memref<4x256x256xbf16, #tpu.memory_space<vmem>>, vector<1x256x256xbf16>
    %239 = vector.shape_cast %238 : vector<1x256x256xbf16> to vector<256x256xbf16>
    %cst_173 = arith.constant dense<0.000000e+00> : vector<128x256xf32>
    %240 = tpu.matmul %237, %239, %cst_173 {dimension_numbers = #tpu.dot_dimension_numbers<[1], [0], [0], [1], [0, 0, 1, 1], [], []>} : vector<128x256xbf16>, vector<256x256xbf16>, vector<128x256xf32> -> vector<128x256xf32>
    %241 = arith.addf %133, %240 : vector<128x256xf32>
    %cst_174 = arith.constant 0.000000e+00 : f32
    %242 = vector.broadcast %cst_174 : f32 to vector<128x256xf32>
    %c3_i32_175 = arith.constant 3 : i32
    %243 = arith.addi %1, %c3_i32_175 : i32
    %c-3_i32 = arith.constant -3 : i32
    %244 = arith.addi %243, %c-3_i32 : i32
    %c0_176 = arith.constant 0 : index
    %245 = arith.index_cast %244 : i32 to index
    %c0_177 = arith.constant 0 : index
    %c0_178 = arith.constant 0 : index
    %246 = vector.load %arg2[%c0_176, %245, %c0_177, %c0_178] : memref<1x22x22x4xbf16, #tpu.memory_space<vmem>>, vector<1x8x16x4xbf16>
    %247 = vector.shape_cast %246 : vector<1x8x16x4xbf16> to vector<8x16x4xbf16>
    %248 = vector.shape_cast %247 : vector<8x16x4xbf16> to vector<128x4xbf16>
    %c18 = arith.constant 18 : index
    %c0_179 = arith.constant 0 : index
    %c0_180 = arith.constant 0 : index
    %249 = vector.load %arg5[%c18, %c0_179, %c0_180] : memref<27x4x256xbf16, #tpu.memory_space<vmem>>, vector<1x4x256xbf16>
    %250 = vector.shape_cast %249 : vector<1x4x256xbf16> to vector<4x256xbf16>
    %cst_181 = arith.constant dense<0.000000e+00> : vector<128x256xf32>
    %251 = tpu.matmul %248, %250, %cst_181 {dimension_numbers = #tpu.dot_dimension_numbers<[1], [0], [0], [1], [0, 0, 1, 1], [], []>} : vector<128x4xbf16>, vector<4x256xbf16>, vector<128x256xf32> -> vector<128x256xf32>
    %252 = arith.addf %242, %251 : vector<128x256xf32>
    %c3_i32_182 = arith.constant 3 : i32
    %253 = arith.addi %1, %c3_i32_182 : i32
    %c-3_i32_183 = arith.constant -3 : i32
    %254 = arith.addi %253, %c-3_i32_183 : i32
    %c0_184 = arith.constant 0 : index
    %255 = arith.index_cast %254 : i32 to index
    %c3_185 = arith.constant 3 : index
    %c0_186 = arith.constant 0 : index
    %256 = vector.load %arg2[%c0_184, %255, %c3_185, %c0_186] : memref<1x22x22x4xbf16, #tpu.memory_space<vmem>>, vector<1x8x16x4xbf16>
    %257 = vector.shape_cast %256 : vector<1x8x16x4xbf16> to vector<8x16x4xbf16>
    %258 = vector.shape_cast %257 : vector<8x16x4xbf16> to vector<128x4xbf16>
    %c19 = arith.constant 19 : index
    %c0_187 = arith.constant 0 : index
    %c0_188 = arith.constant 0 : index
    %259 = vector.load %arg5[%c19, %c0_187, %c0_188] : memref<27x4x256xbf16, #tpu.memory_space<vmem>>, vector<1x4x256xbf16>
    %260 = vector.shape_cast %259 : vector<1x4x256xbf16> to vector<4x256xbf16>
    %cst_189 = arith.constant dense<0.000000e+00> : vector<128x256xf32>
    %261 = tpu.matmul %258, %260, %cst_189 {dimension_numbers = #tpu.dot_dimension_numbers<[1], [0], [0], [1], [0, 0, 1, 1], [], []>} : vector<128x4xbf16>, vector<4x256xbf16>, vector<128x256xf32> -> vector<128x256xf32>
    %262 = arith.addf %252, %261 : vector<128x256xf32>
    %c3_i32_190 = arith.constant 3 : i32
    %263 = arith.addi %1, %c3_i32_190 : i32
    %c-3_i32_191 = arith.constant -3 : i32
    %264 = arith.addi %263, %c-3_i32_191 : i32
    %c0_192 = arith.constant 0 : index
    %265 = arith.index_cast %264 : i32 to index
    %c6_193 = arith.constant 6 : index
    %c0_194 = arith.constant 0 : index
    %266 = vector.load %arg2[%c0_192, %265, %c6_193, %c0_194] : memref<1x22x22x4xbf16, #tpu.memory_space<vmem>>, vector<1x8x16x4xbf16>
    %267 = vector.shape_cast %266 : vector<1x8x16x4xbf16> to vector<8x16x4xbf16>
    %268 = vector.shape_cast %267 : vector<8x16x4xbf16> to vector<128x4xbf16>
    %c20 = arith.constant 20 : index
    %c0_195 = arith.constant 0 : index
    %c0_196 = arith.constant 0 : index
    %269 = vector.load %arg5[%c20, %c0_195, %c0_196] : memref<27x4x256xbf16, #tpu.memory_space<vmem>>, vector<1x4x256xbf16>
    %270 = vector.shape_cast %269 : vector<1x4x256xbf16> to vector<4x256xbf16>
    %cst_197 = arith.constant dense<0.000000e+00> : vector<128x256xf32>
    %271 = tpu.matmul %268, %270, %cst_197 {dimension_numbers = #tpu.dot_dimension_numbers<[1], [0], [0], [1], [0, 0, 1, 1], [], []>} : vector<128x4xbf16>, vector<4x256xbf16>, vector<128x256xf32> -> vector<128x256xf32>
    %272 = arith.addf %262, %271 : vector<128x256xf32>
    %c3_i32_198 = arith.constant 3 : i32
    %273 = arith.addi %1, %c3_i32_198 : i32
    %c0_i32_199 = arith.constant 0 : i32
    %274 = arith.addi %273, %c0_i32_199 : i32
    %c0_200 = arith.constant 0 : index
    %275 = arith.index_cast %274 : i32 to index
    %c0_201 = arith.constant 0 : index
    %c0_202 = arith.constant 0 : index
    %276 = vector.load %arg2[%c0_200, %275, %c0_201, %c0_202] : memref<1x22x22x4xbf16, #tpu.memory_space<vmem>>, vector<1x8x16x4xbf16>
    %277 = vector.shape_cast %276 : vector<1x8x16x4xbf16> to vector<8x16x4xbf16>
    %278 = vector.shape_cast %277 : vector<8x16x4xbf16> to vector<128x4xbf16>
    %c21 = arith.constant 21 : index
    %c0_203 = arith.constant 0 : index
    %c0_204 = arith.constant 0 : index
    %279 = vector.load %arg5[%c21, %c0_203, %c0_204] : memref<27x4x256xbf16, #tpu.memory_space<vmem>>, vector<1x4x256xbf16>
    %280 = vector.shape_cast %279 : vector<1x4x256xbf16> to vector<4x256xbf16>
    %cst_205 = arith.constant dense<0.000000e+00> : vector<128x256xf32>
    %281 = tpu.matmul %278, %280, %cst_205 {dimension_numbers = #tpu.dot_dimension_numbers<[1], [0], [0], [1], [0, 0, 1, 1], [], []>} : vector<128x4xbf16>, vector<4x256xbf16>, vector<128x256xf32> -> vector<128x256xf32>
    %282 = arith.addf %272, %281 : vector<128x256xf32>
    %c3_i32_206 = arith.constant 3 : i32
    %283 = arith.addi %1, %c3_i32_206 : i32
    %c0_i32_207 = arith.constant 0 : i32
    %284 = arith.addi %283, %c0_i32_207 : i32
    %c0_208 = arith.constant 0 : index
    %285 = arith.index_cast %284 : i32 to index
    %c3_209 = arith.constant 3 : index
    %c0_210 = arith.constant 0 : index
    %286 = vector.load %arg2[%c0_208, %285, %c3_209, %c0_210] : memref<1x22x22x4xbf16, #tpu.memory_space<vmem>>, vector<1x8x16x4xbf16>
    %287 = vector.shape_cast %286 : vector<1x8x16x4xbf16> to vector<8x16x4xbf16>
    %288 = vector.shape_cast %287 : vector<8x16x4xbf16> to vector<128x4xbf16>
    %c22 = arith.constant 22 : index
    %c0_211 = arith.constant 0 : index
    %c0_212 = arith.constant 0 : index
    %289 = vector.load %arg5[%c22, %c0_211, %c0_212] : memref<27x4x256xbf16, #tpu.memory_space<vmem>>, vector<1x4x256xbf16>
    %290 = vector.shape_cast %289 : vector<1x4x256xbf16> to vector<4x256xbf16>
    %cst_213 = arith.constant dense<0.000000e+00> : vector<128x256xf32>
    %291 = tpu.matmul %288, %290, %cst_213 {dimension_numbers = #tpu.dot_dimension_numbers<[1], [0], [0], [1], [0, 0, 1, 1], [], []>} : vector<128x4xbf16>, vector<4x256xbf16>, vector<128x256xf32> -> vector<128x256xf32>
    %292 = arith.addf %282, %291 : vector<128x256xf32>
    %c3_i32_214 = arith.constant 3 : i32
    %293 = arith.addi %1, %c3_i32_214 : i32
    %c0_i32_215 = arith.constant 0 : i32
    %294 = arith.addi %293, %c0_i32_215 : i32
    %c0_216 = arith.constant 0 : index
    %295 = arith.index_cast %294 : i32 to index
    %c6_217 = arith.constant 6 : index
    %c0_218 = arith.constant 0 : index
    %296 = vector.load %arg2[%c0_216, %295, %c6_217, %c0_218] : memref<1x22x22x4xbf16, #tpu.memory_space<vmem>>, vector<1x8x16x4xbf16>
    %297 = vector.shape_cast %296 : vector<1x8x16x4xbf16> to vector<8x16x4xbf16>
    %298 = vector.shape_cast %297 : vector<8x16x4xbf16> to vector<128x4xbf16>
    %c23 = arith.constant 23 : index
    %c0_219 = arith.constant 0 : index
    %c0_220 = arith.constant 0 : index
    %299 = vector.load %arg5[%c23, %c0_219, %c0_220] : memref<27x4x256xbf16, #tpu.memory_space<vmem>>, vector<1x4x256xbf16>
    %300 = vector.shape_cast %299 : vector<1x4x256xbf16> to vector<4x256xbf16>
    %cst_221 = arith.constant dense<0.000000e+00> : vector<128x256xf32>
    %301 = tpu.matmul %298, %300, %cst_221 {dimension_numbers = #tpu.dot_dimension_numbers<[1], [0], [0], [1], [0, 0, 1, 1], [], []>} : vector<128x4xbf16>, vector<4x256xbf16>, vector<128x256xf32> -> vector<128x256xf32>
    %302 = arith.addf %292, %301 : vector<128x256xf32>
    %c3_i32_222 = arith.constant 3 : i32
    %303 = arith.addi %1, %c3_i32_222 : i32
    %c3_i32_223 = arith.constant 3 : i32
    %304 = arith.addi %303, %c3_i32_223 : i32
    %c0_224 = arith.constant 0 : index
    %305 = arith.index_cast %304 : i32 to index
    %c0_225 = arith.constant 0 : index
    %c0_226 = arith.constant 0 : index
    %306 = vector.load %arg2[%c0_224, %305, %c0_225, %c0_226] : memref<1x22x22x4xbf16, #tpu.memory_space<vmem>>, vector<1x8x16x4xbf16>
    %307 = vector.shape_cast %306 : vector<1x8x16x4xbf16> to vector<8x16x4xbf16>
    %308 = vector.shape_cast %307 : vector<8x16x4xbf16> to vector<128x4xbf16>
    %c24 = arith.constant 24 : index
    %c0_227 = arith.constant 0 : index
    %c0_228 = arith.constant 0 : index
    %309 = vector.load %arg5[%c24, %c0_227, %c0_228] : memref<27x4x256xbf16, #tpu.memory_space<vmem>>, vector<1x4x256xbf16>
    %310 = vector.shape_cast %309 : vector<1x4x256xbf16> to vector<4x256xbf16>
    %cst_229 = arith.constant dense<0.000000e+00> : vector<128x256xf32>
    %311 = tpu.matmul %308, %310, %cst_229 {dimension_numbers = #tpu.dot_dimension_numbers<[1], [0], [0], [1], [0, 0, 1, 1], [], []>} : vector<128x4xbf16>, vector<4x256xbf16>, vector<128x256xf32> -> vector<128x256xf32>
    %312 = arith.addf %302, %311 : vector<128x256xf32>
    %c3_i32_230 = arith.constant 3 : i32
    %313 = arith.addi %1, %c3_i32_230 : i32
    %c3_i32_231 = arith.constant 3 : i32
    %314 = arith.addi %313, %c3_i32_231 : i32
    %c0_232 = arith.constant 0 : index
    %315 = arith.index_cast %314 : i32 to index
    %c3_233 = arith.constant 3 : index
    %c0_234 = arith.constant 0 : index
    %316 = vector.load %arg2[%c0_232, %315, %c3_233, %c0_234] : memref<1x22x22x4xbf16, #tpu.memory_space<vmem>>, vector<1x8x16x4xbf16>
    %317 = vector.shape_cast %316 : vector<1x8x16x4xbf16> to vector<8x16x4xbf16>
    %318 = vector.shape_cast %317 : vector<8x16x4xbf16> to vector<128x4xbf16>
    %c25 = arith.constant 25 : index
    %c0_235 = arith.constant 0 : index
    %c0_236 = arith.constant 0 : index
    %319 = vector.load %arg5[%c25, %c0_235, %c0_236] : memref<27x4x256xbf16, #tpu.memory_space<vmem>>, vector<1x4x256xbf16>
    %320 = vector.shape_cast %319 : vector<1x4x256xbf16> to vector<4x256xbf16>
    %cst_237 = arith.constant dense<0.000000e+00> : vector<128x256xf32>
    %321 = tpu.matmul %318, %320, %cst_237 {dimension_numbers = #tpu.dot_dimension_numbers<[1], [0], [0], [1], [0, 0, 1, 1], [], []>} : vector<128x4xbf16>, vector<4x256xbf16>, vector<128x256xf32> -> vector<128x256xf32>
    %322 = arith.addf %312, %321 : vector<128x256xf32>
    %c3_i32_238 = arith.constant 3 : i32
    %323 = arith.addi %1, %c3_i32_238 : i32
    %c3_i32_239 = arith.constant 3 : i32
    %324 = arith.addi %323, %c3_i32_239 : i32
    %c0_240 = arith.constant 0 : index
    %325 = arith.index_cast %324 : i32 to index
    %c6_241 = arith.constant 6 : index
    %c0_242 = arith.constant 0 : index
    %326 = vector.load %arg2[%c0_240, %325, %c6_241, %c0_242] : memref<1x22x22x4xbf16, #tpu.memory_space<vmem>>, vector<1x8x16x4xbf16>
    %327 = vector.shape_cast %326 : vector<1x8x16x4xbf16> to vector<8x16x4xbf16>
    %328 = vector.shape_cast %327 : vector<8x16x4xbf16> to vector<128x4xbf16>
    %c26 = arith.constant 26 : index
    %c0_243 = arith.constant 0 : index
    %c0_244 = arith.constant 0 : index
    %329 = vector.load %arg5[%c26, %c0_243, %c0_244] : memref<27x4x256xbf16, #tpu.memory_space<vmem>>, vector<1x4x256xbf16>
    %330 = vector.shape_cast %329 : vector<1x4x256xbf16> to vector<4x256xbf16>
    %cst_245 = arith.constant dense<0.000000e+00> : vector<128x256xf32>
    %331 = tpu.matmul %328, %330, %cst_245 {dimension_numbers = #tpu.dot_dimension_numbers<[1], [0], [0], [1], [0, 0, 1, 1], [], []>} : vector<128x4xbf16>, vector<4x256xbf16>, vector<128x256xf32> -> vector<128x256xf32>
    %332 = arith.addf %322, %331 : vector<128x256xf32>
    %c3_246 = arith.constant 3 : index
    %c0_247 = arith.constant 0 : index
    %333 = vector.load %arg7[%c3_246, %c0_247] : memref<5x256xf32, #tpu.memory_space<vmem>>, vector<1x256xf32>
    %334 = vector.shape_cast %333 : vector<1x256xf32> to vector<256xf32>
    %335 = vector.shape_cast %334 : vector<256xf32> to vector<1x256xf32>
    %336 = vector.broadcast %335 : vector<1x256xf32> to vector<128x256xf32>
    %337 = arith.mulf %332, %336 : vector<128x256xf32>
    %c3_248 = arith.constant 3 : index
    %c0_249 = arith.constant 0 : index
    %338 = vector.load %arg8[%c3_248, %c0_249] : memref<5x256xf32, #tpu.memory_space<vmem>>, vector<1x256xf32>
    %339 = vector.shape_cast %338 : vector<1x256xf32> to vector<256xf32>
    %340 = vector.shape_cast %339 : vector<256xf32> to vector<1x256xf32>
    %341 = vector.broadcast %340 : vector<1x256xf32> to vector<128x256xf32>
    %342 = arith.addf %337, %341 : vector<128x256xf32>
    %cst_250 = arith.constant 0.000000e+00 : f32
    %343 = vector.broadcast %cst_250 : f32 to vector<128x256xf32>
    %344 = arith.maximumf %342, %343 : vector<128x256xf32>
    %345 = arith.truncf %344 : vector<128x256xf32> to vector<128x256xbf16>
    %c3_251 = arith.constant 3 : index
    %c0_252 = arith.constant 0 : index
    %c0_253 = arith.constant 0 : index
    %346 = vector.load %arg6[%c3_251, %c0_252, %c0_253] : memref<4x256x256xbf16, #tpu.memory_space<vmem>>, vector<1x256x256xbf16>
    %347 = vector.shape_cast %346 : vector<1x256x256xbf16> to vector<256x256xbf16>
    %cst_254 = arith.constant dense<0.000000e+00> : vector<128x256xf32>
    %348 = tpu.matmul %345, %347, %cst_254 {dimension_numbers = #tpu.dot_dimension_numbers<[1], [0], [0], [1], [0, 0, 1, 1], [], []>} : vector<128x256xbf16>, vector<256x256xbf16>, vector<128x256xf32> -> vector<128x256xf32>
    %349 = arith.addf %241, %348 : vector<128x256xf32>
    %c0_255 = arith.constant 0 : index
    %c0_256 = arith.constant 0 : index
    %c0_257 = arith.constant 0 : index
    %350 = vector.load %arg3[%c0_255, %c0_256, %c0_257] : memref<1x1x256xf32, #tpu.memory_space<vmem>>, vector<1x1x256xf32>
    %351 = vector.shape_cast %350 : vector<1x1x256xf32> to vector<1x256xf32>
    %352 = vector.broadcast %351 : vector<1x256xf32> to vector<128x256xf32>
    %353 = arith.addf %349, %352 : vector<128x256xf32>
    %c4_258 = arith.constant 4 : index
    %c0_259 = arith.constant 0 : index
    %354 = vector.load %arg7[%c4_258, %c0_259] : memref<5x256xf32, #tpu.memory_space<vmem>>, vector<1x256xf32>
    %355 = vector.shape_cast %354 : vector<1x256xf32> to vector<256xf32>
    %356 = vector.shape_cast %355 : vector<256xf32> to vector<1x256xf32>
    %357 = vector.broadcast %356 : vector<1x256xf32> to vector<128x256xf32>
    %358 = arith.mulf %353, %357 : vector<128x256xf32>
    %c4_260 = arith.constant 4 : index
    %c0_261 = arith.constant 0 : index
    %359 = vector.load %arg8[%c4_260, %c0_261] : memref<5x256xf32, #tpu.memory_space<vmem>>, vector<1x256xf32>
    %360 = vector.shape_cast %359 : vector<1x256xf32> to vector<256xf32>
    %361 = vector.shape_cast %360 : vector<256xf32> to vector<1x256xf32>
    %362 = vector.broadcast %361 : vector<1x256xf32> to vector<128x256xf32>
    %363 = arith.addf %358, %362 : vector<128x256xf32>
    %cst_262 = arith.constant 0.000000e+00 : f32
    %364 = vector.broadcast %cst_262 : f32 to vector<128x256xf32>
    %365 = arith.maximumf %363, %364 : vector<128x256xf32>
    %366 = vector.shape_cast %365 : vector<128x256xf32> to vector<8x16x256xf32>
    %c0_263 = arith.constant 0 : index
    %c0_264 = arith.constant 0 : index
    %c0_265 = arith.constant 0 : index
    %c0_266 = arith.constant 0 : index
    %367 = vector.load %arg9[%c0_263, %c0_264, %c0_265, %c0_266] : memref<1x8x16x256xf32, #tpu.memory_space<vmem>>, vector<1x8x16x256xf32>
    %368 = vector.shape_cast %367 : vector<1x8x16x256xf32> to vector<8x16x256xf32>
    %369 = vector.shape_cast %366 : vector<8x16x256xf32> to vector<1x8x16x256xf32>
    tpu.vector_store %arg9[%c0_263, %c0_264, %c0_265, %c0_266], %369 {strides = array<i32>} : memref<1x8x16x256xf32, #tpu.memory_space<vmem>>, vector<1x8x16x256xf32>,
    return
  }
  func.func @transform_0(%arg0: i32, %arg1: i32) -> (i32, i32, i32, i32) {
    %c0_i32 = arith.constant 0 : i32
    %c0_i32_0 = arith.constant 0 : i32
    %c0_i32_1 = arith.constant 0 : i32
    %c0_i32_2 = arith.constant 0 : i32
    return %arg0, %c0_i32, %c0_i32_0, %c0_i32_1 : i32, i32, i32, i32
  }
  func.func @transform_1(%arg0: i32, %arg1: i32) -> (i32, i32, i32) {
    %c0_i32 = arith.constant 0 : i32
    %c0_i32_0 = arith.constant 0 : i32
    %c0_i32_1 = arith.constant 0 : i32
    return %arg0, %c0_i32, %c0_i32_0 : i32, i32, i32
  }
  func.func @transform_2(%arg0: i32, %arg1: i32) -> (i32, i32) {
    %c0_i32 = arith.constant 0 : i32
    %c0_i32_0 = arith.constant 0 : i32
    %c0_i32_1 = arith.constant 0 : i32
    return %c0_i32, %c0_i32_0 : i32, i32
  }
  func.func @transform_3(%arg0: i32, %arg1: i32) -> (i32, i32, i32) {
    %c0_i32 = arith.constant 0 : i32
    %c0_i32_0 = arith.constant 0 : i32
    %c0_i32_1 = arith.constant 0 : i32
    %c0_i32_2 = arith.constant 0 : i32
    return %c0_i32, %c0_i32_0, %c0_i32_1 : i32, i32, i32
  }
  func.func @transform_4(%arg0: i32, %arg1: i32) -> (i32, i32, i32) {
    %c0_i32 = arith.constant 0 : i32
    %c0_i32_0 = arith.constant 0 : i32
    %c0_i32_1 = arith.constant 0 : i32
    %c0_i32_2 = arith.constant 0 : i32
    return %c0_i32, %c0_i32_0, %c0_i32_1 : i32, i32, i32
  }
  func.func @transform_5(%arg0: i32, %arg1: i32) -> (i32, i32) {
    %c0_i32 = arith.constant 0 : i32
    %c0_i32_0 = arith.constant 0 : i32
    %c0_i32_1 = arith.constant 0 : i32
    return %c0_i32, %c0_i32_0 : i32, i32
  }
  func.func @transform_6(%arg0: i32, %arg1: i32) -> (i32, i32) {
    %c0_i32 = arith.constant 0 : i32
    %c0_i32_0 = arith.constant 0 : i32
    %c0_i32_1 = arith.constant 0 : i32
    return %c0_i32, %c0_i32_0 : i32, i32
  }
  func.func @transform_7(%arg0: i32, %arg1: i32) -> (i32, i32, i32, i32) {
    %c0_i32 = arith.constant 0 : i32
    %c0_i32_0 = arith.constant 0 : i32
    %c0_i32_1 = arith.constant 0 : i32
    return %arg0, %arg1, %c0_i32, %c0_i32_0 : i32, i32, i32, i32
  }
}

</mosaic_0001>

<llo_original>
// kernel: tpu_custom_call.1
$region0: #{tpu_custom_call.1}
  #allocation0 [shape = 'u32[]', space=smem, size = 0x4, offset = 0x4, fixed_abs, tag = 'smem constant byte address 0x4 - core index']
  #allocation1 [shape = 'u32[144,128]{1,0:T(1,128)}', space=vmem, size = 0x12000, scoped, tag = 'internal scratch']
  %s0 = inlined_call_operand.vmem [shape: bf16[2,22,22,4], index: 0, kind: input, shape index: {}]
  %s1 = inlined_call_operand.vmem [shape: f32[2,1,256], index: 1, kind: input, shape index: {}]
  %s2 = inlined_call_operand.vmem [shape: bf16[4,256], index: 2, kind: input, shape index: {}]
  %s3 = inlined_call_operand.vmem [shape: bf16[27,4,256], index: 3, kind: input, shape index: {}]
  %s4 = inlined_call_operand.hbm [shape: bf16[4,256,256], index: 4, kind: input, shape index: {}]
  %s5 = inlined_call_operand.vmem [shape: f32[5,256], index: 5, kind: input, shape index: {}]
  %s6 = inlined_call_operand.vmem [shape: f32[5,256], index: 6, kind: input, shape index: {}]
  %s7 = inlined_call_operand.hbm [shape: f32[2,16,16,256], index: 7, kind: output, shape index: {}]
  %s8 = sld [smem:[#allocation0]]
  $region65: #{tpu_custom_call.1} parent=0
    _
  %s10 = ssub.s32 1, %s8
  %s11 = scalar_select 0, %s10, %s8
  $region1: #{tpu_custom_call.1} parent=0
    #allocation2 [shape = 'u8[524288]{0}', space=vmem, size = 0x80000, scoped, tag = 'input window, operand 4, single buffered']
    #allocation3 [shape = 's32[2]{0}', space=sflag, size = 0x8, scoped, tag = 'scoped memory for tpu_custom_call.1']
    #allocation4 [shape = 's32[2]{0}', space=sflag, size = 0x8, scoped, tag = 'scoped memory for tpu_custom_call.1']
    #allocation5 [shape = 'u8[262144]{0}', space=vmem, size = 0x40000, scoped, tag = 'output window, operand 0']
    %12 = vsyncpa [#allocation3], 0
    %13 = vsyncpa [#allocation4], 0
    %s14 = scalar_lea.sflag [#allocation4], 1
    %15 = vsyncpa %s14, 0
    loop: start=0, step=1, limit=6
    $region2: #{tpu_custom_call.1} parent=1 // loop_pre_header
      _
    $region3: #{tpu_custom_call.1} parent=1 // loop_header
      %s17 = sphi 0, %s21
      %p18 = scmp.ge.s32.totalorder %s17, 6
      %s24 = sphi 0, %s36
      %s25 = sphi 0, %s32
      %s26 = sphi 0, %s24
      %s27 = sphi 0, %s25
      %s28 = sphi 0, %s26
      %s29 = sphi 0, %s27
      %s39 = sphi 0, %s41
      %s42 = sphi 0, %s39
      %s43 = sphi 0, %s42
      %s59 = sphi 0, %s43
      %s65 = sphi 0, %s67
      %s68 = sphi 0, %s65
      %s69 = sphi 0, %s68
      %s85 = sphi 0, %s69
      %s89 = sphi 0, %s89
      %s91 = sphi 0, %s89
      %s92 = sphi 0, %s91
      %s106 = sphi 0, %s92
      %s110 = sphi 0, %s110
      %s112 = sphi 0, %s110
      %s113 = sphi 0, %s112
      %s127 = sphi 0, %s113
      %s131 = sphi 0, %s131
      %s133 = sphi 0, %s131
      %s134 = sphi 0, %s133
      %s148 = sphi 0, %s134
      %s152 = sphi 0, %s152
      %s154 = sphi 0, %s152
      %s155 = sphi 0, %s154
      %s169 = sphi 0, %s155
      %s173 = sphi 0, %s173
      %s175 = sphi 0, %s173
      %s176 = sphi 0, %s175
      %s190 = sphi 0, %s176
      %s198 = sphi 0, %s200
      %s201 = sphi 0, %s198
      %s202 = sphi 0, %s201
      %s218 = sphi 0, %s202
    $region4: #{tpu_custom_call.1} parent=1 // loop_header_branch
      %20 = sbr.rel (%p18) target = $region8
    $region5: #{tpu_custom_call.1} parent=1 // loop_body
      %s22 = ssub.s32 %s17, 1
      %s23 = ssub.s32 %s17, 2
      %s30 = sadd.s32 1, %s25
      %p31 = scmp.ge.s32.totalorder %s30, 2
      %s32 = scalar_select %p31, 0, %s30
      %s33 = sadd.s32 1, %s24
      %s34 = scalar_select %p31, %s33, %s24
      %p35 = scmp.ge.s32.totalorder %s34, 2
      %s36 = scalar_select %p35, 0, %s34
      %s37 = ssub.s32 %s24, %s36
      %p38 = scmp.eq.s32.totalorder %s37, 0
      %s40 = sadd.s32 %s39, 1
      %s41 = scalar_select %p38, %s39, %s40
      %p44 = pneg %p38
      %p45 = scmp.eq.s32.totalorder %s17, 3
      %p46 = por %p44, %p45
      %p47 = scmp.ne.s32.totalorder %s39, %s42
      %p48 = scmp.eq.s32.totalorder %s17, 0
      %p49 = por %p47, %p48
      %p50 = scmp.ne.s32.totalorder %s39, %s42
      %p51 = scmp.eq.s32.totalorder %s22, 3
      %p52 = por %p50, %p51
      %p53 = scmp.ne.s32.totalorder %s42, %s43
      %p54 = scmp.eq.s32.totalorder %s22, 0
      %p55 = por %p53, %p54
      %p56 = scmp.ne.s32.totalorder %s42, %s43
      %p57 = scmp.eq.s32.totalorder %s23, 3
      %p58 = por %p56, %p57
      %p60 = scmp.ne.s32.totalorder %s43, %s59
      %p61 = scmp.eq.s32.totalorder %s23, 0
      %p62 = por %p60, %p61
      %s63 = ssub.s32 %s24, %s36
      %p64 = scmp.eq.s32.totalorder %s63, 0
      %s66 = sadd.s32 %s65, 1
      %s67 = scalar_select %p64, %s65, %s66
      %p70 = pneg %p64
      %p71 = scmp.eq.s32.totalorder %s17, 3
      %p72 = por %p70, %p71
      %p73 = scmp.ne.s32.totalorder %s65, %s68
      %p74 = scmp.eq.s32.totalorder %s17, 0
      %p75 = por %p73, %p74
      %p76 = scmp.ne.s32.totalorder %s65, %s68
      %p77 = scmp.eq.s32.totalorder %s22, 3
      %p78 = por %p76, %p77
      %p79 = scmp.ne.s32.totalorder %s68, %s69
      %p80 = scmp.eq.s32.totalorder %s22, 0
      %p81 = por %p79, %p80
      %p82 = scmp.ne.s32.totalorder %s68, %s69
      %p83 = scmp.eq.s32.totalorder %s23, 3
      %p84 = por %p82, %p83
      %p86 = scmp.ne.s32.totalorder %s69, %s85
      %p87 = scmp.eq.s32.totalorder %s23, 0
      %p88 = por %p86, %p87
      %s90 = sadd.s32 %s89, 1
      %p93 = scmp.eq.s32.totalorder %s17, 3
      %p94 = scmp.ne.s32.totalorder %s89, %s91
      %p95 = scmp.eq.s32.totalorder %s17, 0
      %p96 = por %p94, %p95
      %p97 = scmp.ne.s32.totalorder %s89, %s91
      %p98 = scmp.eq.s32.totalorder %s22, 3
      %p99 = por %p97, %p98
      %p100 = scmp.ne.s32.totalorder %s91, %s92
      %p101 = scmp.eq.s32.totalorder %s22, 0
      %p102 = por %p100, %p101
      %p103 = scmp.ne.s32.totalorder %s91, %s92
      %p104 = scmp.eq.s32.totalorder %s23, 3
      %p105 = por %p103, %p104
      %p107 = scmp.ne.s32.totalorder %s92, %s106
      %p108 = scmp.eq.s32.totalorder %s23, 0
      %p109 = por %p107, %p108
      %s111 = sadd.s32 %s110, 1
      %p114 = scmp.eq.s32.totalorder %s17, 3
      %p115 = scmp.ne.s32.totalorder %s110, %s112
      %p116 = scmp.eq.s32.totalorder %s17, 0
      %p117 = por %p115, %p116
      %p118 = scmp.ne.s32.totalorder %s110, %s112
      %p119 = scmp.eq.s32.totalorder %s22, 3
      %p120 = por %p118, %p119
      %p121 = scmp.ne.s32.totalorder %s112, %s113
      %p122 = scmp.eq.s32.totalorder %s22, 0
      %p123 = por %p121, %p122
      %p124 = scmp.ne.s32.totalorder %s112, %s113
      %p125 = scmp.eq.s32.totalorder %s23, 3
      %p126 = por %p124, %p125
      %p128 = scmp.ne.s32.totalorder %s113, %s127
      %p129 = scmp.eq.s32.totalorder %s23, 0
      %p130 = por %p128, %p129
      %s132 = sadd.s32 %s131, 1
      %p135 = scmp.eq.s32.totalorder %s17, 3
      %p136 = scmp.ne.s32.totalorder %s131, %s133
      %p137 = scmp.eq.s32.totalorder %s17, 0
      %p138 = por %p136, %p137
      %p139 = scmp.ne.s32.totalorder %s131, %s133
      %p140 = scmp.eq.s32.totalorder %s22, 3
      %p141 = por %p139, %p140
      %p142 = scmp.ne.s32.totalorder %s133, %s134
      %p143 = scmp.eq.s32.totalorder %s22, 0
      %p144 = por %p142, %p143
      %p145 = scmp.ne.s32.totalorder %s133, %s134
      %p146 = scmp.eq.s32.totalorder %s23, 3
      %p147 = por %p145, %p146
      %p149 = scmp.ne.s32.totalorder %s134, %s148
      %p150 = scmp.eq.s32.totalorder %s23, 0
      %p151 = por %p149, %p150
      %s153 = sadd.s32 %s152, 1
      %p156 = scmp.eq.s32.totalorder %s17, 3
      %p157 = scmp.ne.s32.totalorder %s152, %s154
      %p158 = scmp.eq.s32.totalorder %s17, 0
      %p159 = por %p157, %p158
      %p160 = scmp.ne.s32.totalorder %s152, %s154
      %p161 = scmp.eq.s32.totalorder %s22, 3
      %p162 = por %p160, %p161
      %p163 = scmp.ne.s32.totalorder %s154, %s155
      %p164 = scmp.eq.s32.totalorder %s22, 0
      %p165 = por %p163, %p164
      %p166 = scmp.ne.s32.totalorder %s154, %s155
      %p167 = scmp.eq.s32.totalorder %s23, 3
      %p168 = por %p166, %p167
      %p170 = scmp.ne.s32.totalorder %s155, %s169
      %p171 = scmp.eq.s32.totalorder %s23, 0
      %p172 = por %p170, %p171
      %s174 = sadd.s32 %s173, 1
      %p177 = scmp.eq.s32.totalorder %s17, 3
      %p178 = scmp.ne.s32.totalorder %s173, %s175
      %p179 = scmp.eq.s32.totalorder %s17, 0
      %p180 = por %p178, %p179
      %p181 = scmp.ne.s32.totalorder %s173, %s175
      %p182 = scmp.eq.s32.totalorder %s22, 3
      %p183 = por %p181, %p182
      %p184 = scmp.ne.s32.totalorder %s175, %s176
      %p185 = scmp.eq.s32.totalorder %s22, 0
      %p186 = por %p184, %p185
      %p187 = scmp.ne.s32.totalorder %s175, %s176
      %p188 = scmp.eq.s32.totalorder %s23, 3
      %p189 = por %p187, %p188
      %p191 = scmp.ne.s32.totalorder %s176, %s190
      %p192 = scmp.eq.s32.totalorder %s23, 0
      %p193 = por %p191, %p192
      %s194 = ssub.s32 %s24, %s36
      %s195 = ssub.s32 %s25, %s32
      %s196 = sor.u32 %s194, %s195
      %p197 = scmp.eq.s32.totalorder %s196, 0
      %s199 = sadd.s32 %s198, 1
      %s200 = scalar_select %p197, %s198, %s199
      %p203 = pneg %p197
      %p204 = scmp.eq.s32.totalorder %s17, 3
      %p205 = por %p203, %p204
      %p206 = scmp.ne.s32.totalorder %s198, %s201
      %p207 = scmp.eq.s32.totalorder %s17, 0
      %p208 = por %p206, %p207
      %p209 = scmp.ne.s32.totalorder %s198, %s201
      %p210 = scmp.eq.s32.totalorder %s22, 3
      %p211 = por %p209, %p210
      %p212 = scmp.ne.s32.totalorder %s201, %s202
      %p213 = scmp.eq.s32.totalorder %s22, 0
      %p214 = por %p212, %p213
      %p215 = scmp.ne.s32.totalorder %s201, %s202
      %p216 = scmp.eq.s32.totalorder %s23, 3
      %p217 = por %p215, %p216
      %p219 = scmp.ne.s32.totalorder %s202, %s218
      %p220 = scmp.eq.s32.totalorder %s23, 0
      %p221 = por %p219, %p220
      %p222 = scmp.le.s32.totalorder 1, %s17
      %p223 = scmp.lt.s32.totalorder %s17, 5
      %p224 = pnand %p222, %p223
      %p225 = pneg %p224
      // Predicated region
      $region9: #{tpu_custom_call.1} parent=5 // pred_check
        _
      $region10: #{tpu_custom_call.1} parent=5 // pred_check_branch
        %227 = sbr.rel (%p224) target = $region12
      $region11: #{tpu_custom_call.1} parent=5 // pred_region
        %s228 = ssub.s32 %s17, 1
        // Predicated region
        $region13: #{tpu_custom_call.1} parent=11 // pred_check
          %p229 = pneg %p102
        $region14: #{tpu_custom_call.1} parent=11 // pred_check_branch
          %231 = sbr.rel (%p229) target = $region16
        $region15: #{tpu_custom_call.1} parent=11 // pred_region
          _
        $region16: #{tpu_custom_call.1} parent=11 // pred_fallthru
          _
        // Predicated region
        $region17: #{tpu_custom_call.1} parent=11 // pred_check
          %p232 = pneg %p123
        $region18: #{tpu_custom_call.1} parent=11 // pred_check_branch
          %234 = sbr.rel (%p232) target = $region20
        $region19: #{tpu_custom_call.1} parent=11 // pred_region
          _
        $region20: #{tpu_custom_call.1} parent=11 // pred_fallthru
          _
        // Predicated region
        $region21: #{tpu_custom_call.1} parent=11 // pred_check
          %p235 = pneg %p144
        $region22: #{tpu_custom_call.1} parent=11 // pred_check_branch
          %237 = sbr.rel (%p235) target = $region24
        $region23: #{tpu_custom_call.1} parent=11 // pred_region
          %s239 = ssub.s32 16384, 16384
          %240 = vsyncadd [#allocation3], %s239
          %s241 = sshll.u32 [#allocation2], 4
          %s242 = int_to_ptr.vmem [resolvable:$true] %s241
          %247 = dma.hbm_to_vmem [thread:$0]  %s4, 16384, %s242, [#allocation3], 128, 128, 8
        $region24: #{tpu_custom_call.1} parent=11 // pred_fallthru
          _
        // Predicated region
        $region25: #{tpu_custom_call.1} parent=11 // pred_check
          %p248 = pneg %p165
        $region26: #{tpu_custom_call.1} parent=11 // pred_check_branch
          %250 = sbr.rel (%p248) target = $region28
        $region27: #{tpu_custom_call.1} parent=11 // pred_region
          _
        $region28: #{tpu_custom_call.1} parent=11 // pred_fallthru
          _
        // Predicated region
        $region29: #{tpu_custom_call.1} parent=11 // pred_check
          %p251 = pneg %p186
        $region30: #{tpu_custom_call.1} parent=11 // pred_check_branch
          %253 = sbr.rel (%p251) target = $region32
        $region31: #{tpu_custom_call.1} parent=11 // pred_region
          _
        $region32: #{tpu_custom_call.1} parent=11 // pred_fallthru
          _
      $region12: #{tpu_custom_call.1} parent=5 // pred_fallthru
        _
      %p254 = scmp.lt.s32.totalorder %s17, 4
      // Predicated region
      $region33: #{tpu_custom_call.1} parent=5 // pred_check
        %p255 = pneg %p254
      $region34: #{tpu_custom_call.1} parent=5 // pred_check_branch
        %257 = sbr.rel (%p255) target = $region36
      $region35: #{tpu_custom_call.1} parent=5 // pred_region
        // Predicated region
        $region37: #{tpu_custom_call.1} parent=35 // pred_check
          %p258 = pneg %p49
        $region38: #{tpu_custom_call.1} parent=35 // pred_check_branch
          %260 = sbr.rel (%p258) target = $region40
        $region39: #{tpu_custom_call.1} parent=35 // pred_region
          %p261 = scmp.lt.s32.totalorder %s24, 1
          %s262 = scalar_select %p261, %s24, 1
          %s263 = smul.addr %s262, 66
          %s264 = smul.addr %s263, 4
          %s265 = scalar_lea.vmem %s0, %s264
        $region40: #{tpu_custom_call.1} parent=35 // pred_fallthru
          _
        // Predicated region
        $region41: #{tpu_custom_call.1} parent=35 // pred_check
          %p266 = pneg %p75
        $region42: #{tpu_custom_call.1} parent=35 // pred_check_branch
          %268 = sbr.rel (%p266) target = $region44
        $region43: #{tpu_custom_call.1} parent=35 // pred_region
          %p269 = scmp.lt.s32.totalorder %s24, 1
          %s270 = scalar_select %p269, %s24, 1
          %s271 = smul.addr %s270, 2
          %s272 = scalar_lea.vmem %s1, %s271
        $region44: #{tpu_custom_call.1} parent=35 // pred_fallthru
          _
      $region36: #{tpu_custom_call.1} parent=5 // pred_fallthru
        _
      %p273 = scmp.le.s32.totalorder 1, %s17
      %p274 = scmp.lt.s32.totalorder %s17, 5
      %p275 = pnand %p273, %p274
      %p276 = pneg %p275
      // Predicated region
      $region45: #{tpu_custom_call.1} parent=5 // pred_check
        _
      $region46: #{tpu_custom_call.1} parent=5 // pred_check_branch
        %278 = sbr.rel (%p275) target = $region48
      $region47: #{tpu_custom_call.1} parent=5 // pred_region
        %s279 = ssub.s32 %s17, 1
        // Predicated region
        $region49: #{tpu_custom_call.1} parent=47 // pred_check
          %p280 = pneg %p144
        $region50: #{tpu_custom_call.1} parent=47 // pred_check_branch
          %282 = sbr.rel (%p280) target = $region52
        $region51: #{tpu_custom_call.1} parent=47 // pred_region
          %283 = dma.done [#allocation3], 16384
        $region52: #{tpu_custom_call.1} parent=47 // pred_fallthru
          _
        %p284 = scmp.lt.s32.totalorder %s26, 1
        %s285 = scalar_select %p284, %s26, 1
        %s286 = smul.addr %s285, 66
        %s287 = smul.addr %s286, 4
        %s288 = scalar_lea.vmem %s0, %s287
        %p289 = pneg %p55
        %p290 = pneg %p52
        %p291 = scmp.lt.s32.totalorder %s26, 1
        %s292 = scalar_select %p291, %s26, 1
        %s293 = smul.addr %s292, 2
        %s294 = scalar_lea.vmem %s1, %s293
        %p295 = pneg %p81
        %p296 = pneg %p78
        %p297 = pneg %p102
        %p298 = pneg %p99
        %p299 = pneg %p123
        %p300 = pneg %p120
        %p301 = pneg %p144
        %p302 = pneg %p141
        %p303 = pneg %p165
        %p304 = pneg %p162
        %p305 = pneg %p186
        %p306 = pneg %p183
        %p307 = pneg %p214
        %p308 = pneg %p211
        %s309 = sand.u32 %s201, 1
        %s310 = scalar_lea.sflag [#allocation4], %s309
        %s311 = sand.u32 %s201, 1
        %s312 = smul.addr %s311, 256
        %s313 = scalar_lea.vmem [#allocation5], %s312
        %p314 = scmp.lt.s32.totalorder %s26, 1
        %s315 = scalar_select %p314, %s26, 1
        %s316 = smul.addr %s315, 66
        %s317 = smul.addr %s316, 4
        %s318 = scalar_lea.vmem %s0, %s317
        %p319 = scmp.lt.s32.totalorder %s26, 1
        %s320 = scalar_select %p319, %s26, 1
        %s321 = smul.addr %s320, 2
        %s322 = scalar_lea.vmem %s1, %s321
        %s323 = smul.u32 8, %s27
        %s325 = smul.u32 %s27, 8
        %s326 = sadd.s32 %s325, 3
        %s327 = smul.u32 %s326, 3
        %s328 = smul.addr %s327, 4
        %s329 = scalar_lea.vmem %s318, %s328
        %v330 = vld [vmem:[%s329] sm:$0xe]
        %v331 = vld [vmem:[%s329 + $0x4] sm:$0xf]
        %v332 = vld [vmem:[%s329 + $0x8] sm:$0x3]
        %v333 = vld [vmem:[%s329 + $0xc] sm:$0xe]
        %v334 = vld [vmem:[%s329 + $0x10] sm:$0xf]
        %v335 = vld [vmem:[%s329 + $0x14] sm:$0x3]
        %v336 = vld [vmem:[%s329 + $0x18] sm:$0xe]
        %v337 = vld [vmem:[%s329 + $0x1c] sm:$0xf]
        %v338 = vld [vmem:[%s329 + $0x20] sm:$0x3]
        %v339 = vld [vmem:[%s329 + $0x24] sm:$0xe]
        %v340 = vld [vmem:[%s329 + $0x28] sm:$0xf]
        %v341 = vld [vmem:[%s329 + $0x2c] sm:$0x3]
        %v342 = vld [vmem:[%s329 + $0x30] sm:$0xe]
        %v343 = vld [vmem:[%s329 + $0x34] sm:$0xf]
        %v344 = vld [vmem:[%s329 + $0x38] sm:$0x3]
        %v345 = vld [vmem:[%s329 + $0x3c] sm:$0xe]
        %v346 = vld [vmem:[%s329 + $0x40] sm:$0xf]
        %v347 = vld [vmem:[%s329 + $0x44] sm:$0x3]
        %v348 = vld [vmem:[%s329 + $0x48] sm:$0xe]
        %v349 = vld [vmem:[%s329 + $0x4c] sm:$0xf]
        %v350 = vld [vmem:[%s329 + $0x50] sm:$0x3]
        %v351 = vld [vmem:[%s329 + $0x54] sm:$0xe]
        %v352 = vld [vmem:[%s329 + $0x58] sm:$0xf]
        %v353 = vld [vmem:[%s329 + $0x5c] sm:$0x3]
        %vm354 = vsmask.f32 2304
        %vm355 = vsmask.f32 6416
        %vm356 = vmor %vm354, %vm355
        %v358 = vshrl.u32 %v330, 16
        %v360 = vrot.slane %v358, 5
        %v361 = vshll.u32 %v330, 16
        %v363 = vrot.slane %v361, 6
        %v364 = vor.u32 %v360, %v363
        %v365 = vrot.slane %v364, 4
        %v367 = vshrl.u32 %v331, 16
        %v369 = vrot.slane %v367, 5
        %v370 = vshll.u32 %v331, 16
        %v372 = vrot.slane %v370, 6
        %v373 = vor.u32 %v369, %v372
        %v374 = vsel %vm356, %v365, %v373
        %v375 = vrot.slane %v373, 4
        %v377 = vshrl.u32 %v332, 16
        %v379 = vrot.slane %v377, 5
        %v380 = vshll.u32 %v332, 16
        %v382 = vrot.slane %v380, 6
        %v383 = vor.u32 %v379, %v382
        %v384 = vsel %vm356, %v375, %v383
        %v386 = vshrl.u32 %v333, 16
        %v388 = vrot.slane %v386, 5
        %v389 = vshll.u32 %v333, 16
        %v391 = vrot.slane %v389, 6
        %v392 = vor.u32 %v388, %v391
        %v393 = vrot.slane %v392, 4
        %v395 = vshrl.u32 %v334, 16
        %v397 = vrot.slane %v395, 5
        %v398 = vshll.u32 %v334, 16
        %v400 = vrot.slane %v398, 6
        %v401 = vor.u32 %v397, %v400
        %v402 = vsel %vm356, %v393, %v401
        %v403 = vrot.slane %v401, 4
        %v405 = vshrl.u32 %v335, 16
        %v407 = vrot.slane %v405, 5
        %v408 = vshll.u32 %v335, 16
        %v410 = vrot.slane %v408, 6
        %v411 = vor.u32 %v407, %v410
        %v412 = vsel %vm356, %v403, %v411
        %v414 = vshrl.u32 %v336, 16
        %v416 = vrot.slane %v414, 5
        %v417 = vshll.u32 %v336, 16
        %v419 = vrot.slane %v417, 6
        %v420 = vor.u32 %v416, %v419
        %v421 = vrot.slane %v420, 4
        %v423 = vshrl.u32 %v337, 16
        %v425 = vrot.slane %v423, 5
        %v426 = vshll.u32 %v337, 16
        %v428 = vrot.slane %v426, 6
        %v429 = vor.u32 %v425, %v428
        %v430 = vsel %vm356, %v421, %v429
        %v431 = vrot.slane %v429, 4
        %v433 = vshrl.u32 %v338, 16
        %v435 = vrot.slane %v433, 5
        %v436 = vshll.u32 %v338, 16
        %v438 = vrot.slane %v436, 6
        %v439 = vor.u32 %v435, %v438
        %v440 = vsel %vm356, %v431, %v439
        %v442 = vshrl.u32 %v339, 16
        %v444 = vrot.slane %v442, 5
        %v445 = vshll.u32 %v339, 16
        %v447 = vrot.slane %v445, 6
        %v448 = vor.u32 %v444, %v447
        %v449 = vrot.slane %v448, 4
        %v451 = vshrl.u32 %v340, 16
        %v453 = vrot.slane %v451, 5
        %v454 = vshll.u32 %v340, 16
        %v456 = vrot.slane %v454, 6
        %v457 = vor.u32 %v453, %v456
        %v458 = vsel %vm356, %v449, %v457
        %v459 = vrot.slane %v457, 4
        %v461 = vshrl.u32 %v341, 16
        %v463 = vrot.slane %v461, 5
        %v464 = vshll.u32 %v341, 16
        %v466 = vrot.slane %v464, 6
        %v467 = vor.u32 %v463, %v466
        %v468 = vsel %vm356, %v459, %v467
        %v470 = vshrl.u32 %v342, 16
        %v472 = vrot.slane %v470, 5
        %v473 = vshll.u32 %v342, 16
        %v475 = vrot.slane %v473, 6
        %v476 = vor.u32 %v472, %v475
        %v477 = vrot.slane %v476, 4
        %v479 = vshrl.u32 %v343, 16
        %v481 = vrot.slane %v479, 5
        %v482 = vshll.u32 %v343, 16
        %v484 = vrot.slane %v482, 6
        %v485 = vor.u32 %v481, %v484
        %v486 = vsel %vm356, %v477, %v485
        %v487 = vrot.slane %v485, 4
        %v489 = vshrl.u32 %v344, 16
        %v491 = vrot.slane %v489, 5
        %v492 = vshll.u32 %v344, 16
        %v494 = vrot.slane %v492, 6
        %v495 = vor.u32 %v491, %v494
        %v496 = vsel %vm356, %v487, %v495
        %v498 = vshrl.u32 %v345, 16
        %v500 = vrot.slane %v498, 5
        %v501 = vshll.u32 %v345, 16
        %v503 = vrot.slane %v501, 6
        %v504 = vor.u32 %v500, %v503
        %v505 = vrot.slane %v504, 4
        %v507 = vshrl.u32 %v346, 16
        %v509 = vrot.slane %v507, 5
        %v510 = vshll.u32 %v346, 16
        %v512 = vrot.slane %v510, 6
        %v513 = vor.u32 %v509, %v512
        %v514 = vsel %vm356, %v505, %v513
        %v515 = vrot.slane %v513, 4
        %v517 = vshrl.u32 %v347, 16
        %v519 = vrot.slane %v517, 5
        %v520 = vshll.u32 %v347, 16
        %v522 = vrot.slane %v520, 6
        %v523 = vor.u32 %v519, %v522
        %v524 = vsel %vm356, %v515, %v523
        %v526 = vshrl.u32 %v348, 16
        %v528 = vrot.slane %v526, 5
        %v529 = vshll.u32 %v348, 16
        %v531 = vrot.slane %v529, 6
        %v532 = vor.u32 %v528, %v531
        %v533 = vrot.slane %v532, 4
        %v535 = vshrl.u32 %v349, 16
        %v537 = vrot.slane %v535, 5
        %v538 = vshll.u32 %v349, 16
        %v540 = vrot.slane %v538, 6
        %v541 = vor.u32 %v537, %v540
        %v542 = vsel %vm356, %v533, %v541
        %v543 = vrot.slane %v541, 4
        %v545 = vshrl.u32 %v350, 16
        %v547 = vrot.slane %v545, 5
        %v548 = vshll.u32 %v350, 16
        %v550 = vrot.slane %v548, 6
        %v551 = vor.u32 %v547, %v550
        %v552 = vsel %vm356, %v543, %v551
        %v554 = vshrl.u32 %v351, 16
        %v556 = vrot.slane %v554, 5
        %v557 = vshll.u32 %v351, 16
        %v559 = vrot.slane %v557, 6
        %v560 = vor.u32 %v556, %v559
        %v561 = vrot.slane %v560, 4
        %v563 = vshrl.u32 %v352, 16
        %v565 = vrot.slane %v563, 5
        %v566 = vshll.u32 %v352, 16
        %v568 = vrot.slane %v566, 6
        %v569 = vor.u32 %v565, %v568
        %v570 = vsel %vm356, %v561, %v569
        %v571 = vrot.slane %v569, 4
        %v573 = vshrl.u32 %v353, 16
        %v575 = vrot.slane %v573, 5
        %v576 = vshll.u32 %v353, 16
        %v578 = vrot.slane %v576, 6
        %v579 = vor.u32 %v575, %v578
        %v580 = vsel %vm356, %v571, %v579
        %v581 = vld [vmem:[%s2] sm:$0xf]
        %v582 = vunpack.c.l.b16 %v374
        %v583 = vunpack.c.l.b16 %v384
        %v584 = vunpack.c.l.b16 %v402
        %v585 = vunpack.c.l.b16 %v412
        %v586 = vunpack.c.l.b16 %v430
        %v587 = vunpack.c.l.b16 %v440
        %v588 = vunpack.c.l.b16 %v458
        %v589 = vunpack.c.l.b16 %v468
        %v590 = vunpack.c.l.b16 %v486
        %v591 = vunpack.c.l.b16 %v496
        %v592 = vunpack.c.l.b16 %v514
        %v593 = vunpack.c.l.b16 %v524
        %v594 = vunpack.c.l.b16 %v542
        %v595 = vunpack.c.l.b16 %v552
        %v596 = vunpack.c.l.b16 %v570
        %v597 = vunpack.c.l.b16 %v580
        %v598 = vpack.c.b16 %v583, %v582
        %v599 = vpack.c.b16 %v585, %v584
        %v600 = vpack.c.b16 %v587, %v586
        %v601 = vpack.c.b16 %v589, %v588
        %v602 = vpack.c.b16 %v591, %v590
        %v603 = vpack.c.b16 %v593, %v592
        %v604 = vpack.c.b16 %v595, %v594
        %v605 = vpack.c.b16 %v597, %v596
        %v608 = vunpack.c.l.s4 1983009808
        %v609 = vunpack.c.0.s8 %v608
        %v610 = vlaneseq
        %v611 = vshrl.u32 %v610, 7
        %v612 = vsub.s32 %v609, %v611
        %v613 = vrot.slane %v581, %v612
        %v614 = vcombine.high %v613, %v613
        %vm615 = vcmask 31744
        %v617 = vsel %vm615, %v598, 0
        %v620 = vsel %vm615, %v599, 0
        %v623 = vsel %vm615, %v600, 0
        %v626 = vsel %vm615, %v601, 0
        %v629 = vsel %vm615, %v602, 0
        %v632 = vsel %vm615, %v603, 0
        %v635 = vsel %vm615, %v604, 0
        %v638 = vsel %vm615, %v605, 0
        %vm640 = vcmask 1041408
        %v642 = vsel %vm640, %v613, 0
        %v645 = vsel %vm640, %v614, 0
        %647 = vmatprep.subr.bf16.mxu0 %v645
        %648 = vmatpush1.bf16.msra.mxu0 %v642
        %649 = vmatprep.subr.bf16.mxu0 0
        %650 = vmatpush1.bf16.msra.mxu0 0
        %651 = vmatprep.subr.bf16.mxu0 0
        %652 = vmatpush1.bf16.msra.mxu0 0
        %653 = vmatprep.subr.bf16.mxu0 0
        %654 = vmatpush1.bf16.msra.mxu0 0
        %655 = vmatprep.subr.bf16.mxu0 0
        %656 = vmatpush1.bf16.msra.mxu0 0
        %657 = vmatprep.subr.bf16.mxu0 0
        %658 = vmatpush1.bf16.msra.mxu0 0
        %659 = vmatprep.subr.bf16.mxu0 0
        %660 = vmatpush1.bf16.msra.mxu0 0
        %661 = vmatprep.subr.bf16.mxu0 0
        %662 = vmatpush1.bf16.msra.mxu0 0
        %663 = vmatprep.subr.bf16.mxu0 0
        %664 = vmatpush1.bf16.msra.mxu0 0
        %665 = vmatprep.subr.bf16.mxu0 0
        %666 = vmatpush1.bf16.msra.mxu0 0
        %667 = vmatprep.subr.bf16.mxu0 0
        %668 = vmatpush1.bf16.msra.mxu0 0
        %669 = vmatprep.subr.bf16.mxu0 0
        %670 = vmatpush1.bf16.msra.mxu0 0
        %671 = vmatprep.subr.bf16.mxu0 0
        %672 = vmatpush1.bf16.msra.mxu0 0
        %673 = vmatprep.subr.bf16.mxu0 0
        %674 = vmatpush1.bf16.msra.mxu0 0
        %675 = vmatprep.subr.bf16.mxu0 0
        %676 = vmatpush1.bf16.msra.mxu0 0
        %677 = vmatprep.subr.bf16.mxu0 0
        %678 = vmatpush1.bf16.msra.mxu0 0
        %679 = vmatprep.mubr.bf16.mxu0 0
        %680 = vmatmul.mubr.bf16.gmra.mrb[0].mxu0 %v617
        %v681 = vpop.f32.mrb[0].mxu0
        %v682 = vadd.f32 0.0, %v681
        %v683 = vpop.f32.mrb[0].mxu0
        %v684 = vadd.f32 0.0, %v683
        %v685 = vpop.f32.mrb[0].mxu0
        %v686 = vadd.f32 0.0, %v685
        %v687 = vpop.f32.mrb[0].mxu0
        %v688 = vadd.f32 0.0, %v687
        %689 = vmatprep.mubr.bf16.mxu0 0
        %690 = vmatmul.mubr.bf16.gmra.mrb[0].mxu0 %v620
        %v691 = vpop.f32.mrb[0].mxu0
        %v692 = vadd.f32 0.0, %v691
        %v693 = vpop.f32.mrb[0].mxu0
        %v694 = vadd.f32 0.0, %v693
        %v695 = vpop.f32.mrb[0].mxu0
        %v696 = vadd.f32 0.0, %v695
        %v697 = vpop.f32.mrb[0].mxu0
        %v698 = vadd.f32 0.0, %v697
        %699 = vmatprep.mubr.bf16.mxu0 0
        %700 = vmatmul.mubr.bf16.gmra.mrb[0].mxu0 %v623
        %v701 = vpop.f32.mrb[0].mxu0
        %v702 = vadd.f32 0.0, %v701
        %v703 = vpop.f32.mrb[0].mxu0
        %v704 = vadd.f32 0.0, %v703
        %v705 = vpop.f32.mrb[0].mxu0
        %v706 = vadd.f32 0.0, %v705
        %v707 = vpop.f32.mrb[0].mxu0
        %v708 = vadd.f32 0.0, %v707
        %709 = vmatprep.mubr.bf16.mxu0 0
        %710 = vmatmul.mubr.bf16.gmra.mrb[0].mxu0 %v626
        %v711 = vpop.f32.mrb[0].mxu0
        %v712 = vadd.f32 0.0, %v711
        %v713 = vpop.f32.mrb[0].mxu0
        %v714 = vadd.f32 0.0, %v713
        %v715 = vpop.f32.mrb[0].mxu0
        %v716 = vadd.f32 0.0, %v715
        %v717 = vpop.f32.mrb[0].mxu0
        %v718 = vadd.f32 0.0, %v717
        %719 = vmatprep.mubr.bf16.mxu0 0
        %720 = vmatmul.mubr.bf16.gmra.mrb[0].mxu0 %v629
        %v721 = vpop.f32.mrb[0].mxu0
        %v722 = vadd.f32 0.0, %v721
        %v723 = vpop.f32.mrb[0].mxu0
        %v724 = vadd.f32 0.0, %v723
        %v725 = vpop.f32.mrb[0].mxu0
        %v726 = vadd.f32 0.0, %v725
        %v727 = vpop.f32.mrb[0].mxu0
        %v728 = vadd.f32 0.0, %v727
        %729 = vmatprep.mubr.bf16.mxu0 0
        %730 = vmatmul.mubr.bf16.gmra.mrb[0].mxu0 %v632
        %v731 = vpop.f32.mrb[0].mxu0
        %v732 = vadd.f32 0.0, %v731
        %v733 = vpop.f32.mrb[0].mxu0
        %v734 = vadd.f32 0.0, %v733
        %v735 = vpop.f32.mrb[0].mxu0
        %v736 = vadd.f32 0.0, %v735
        %v737 = vpop.f32.mrb[0].mxu0
        %v738 = vadd.f32 0.0, %v737
        %739 = vmatprep.mubr.bf16.mxu0 0
        %740 = vmatmul.mubr.bf16.gmra.mrb[0].mxu0 %v635
        %v741 = vpop.f32.mrb[0].mxu0
        %v742 = vadd.f32 0.0, %v741
        %v743 = vpop.f32.mrb[0].mxu0
        %v744 = vadd.f32 0.0, %v743
        %v745 = vpop.f32.mrb[0].mxu0
        %v746 = vadd.f32 0.0, %v745
        %v747 = vpop.f32.mrb[0].mxu0
        %v748 = vadd.f32 0.0, %v747
        %749 = vmatprep.mubr.bf16.mxu0 0
        %750 = vmatmul.mubr.bf16.gmra.mrb[0].mxu0 %v638
        %v751 = vpop.f32.mrb[0].mxu0
        %v752 = vadd.f32 0.0, %v751
        %v753 = vpop.f32.mrb[0].mxu0
        %v754 = vadd.f32 0.0, %v753
        %v755 = vpop.f32.mrb[0].mxu0
        %v756 = vadd.f32 0.0, %v755
        %v757 = vpop.f32.mrb[0].mxu0
        %v758 = vadd.f32 0.0, %v757
        %759 = vdwg.mxu0
        %v760 = vld [vmem:[%s5] ss:$8 sm:$0x3]
        %v762 = vlaneseq
        %v763 = vshrl.u32 %v762, 7
        %v764 = vsub.s32 0, %v763
        %v765 = vrot.slane %v760, %v764
        %v766 = vlaneseq
        %v767 = vshrl.u32 %v766, 7
        %v768 = vsub.s32 1, %v767
        %v769 = vrot.slane %v760, %v768
        %v772 = vmul.f32 %v682, %v765
        %v773 = vmul.f32 %v684, %v769
        %v774 = vmul.f32 %v686, %v765
        %v775 = vmul.f32 %v688, %v769
        %v776 = vmul.f32 %v692, %v765
        %v777 = vmul.f32 %v694, %v769
        %v778 = vmul.f32 %v696, %v765
        %v779 = vmul.f32 %v698, %v769
        %v780 = vmul.f32 %v702, %v765
        %v781 = vmul.f32 %v704, %v769
        %v782 = vmul.f32 %v706, %v765
        %v783 = vmul.f32 %v708, %v769
        %v784 = vmul.f32 %v712, %v765
        %v785 = vmul.f32 %v714, %v769
        %v786 = vmul.f32 %v716, %v765
        %v787 = vmul.f32 %v718, %v769
        %v788 = vmul.f32 %v722, %v765
        %v789 = vmul.f32 %v724, %v769
        %v790 = vmul.f32 %v726, %v765
        %v791 = vmul.f32 %v728, %v769
        %v792 = vmul.f32 %v732, %v765
        %v793 = vmul.f32 %v734, %v769
        %v794 = vmul.f32 %v736, %v765
        %v795 = vmul.f32 %v738, %v769
        %v796 = vmul.f32 %v742, %v765
        %v797 = vmul.f32 %v744, %v769
        %v798 = vmul.f32 %v746, %v765
        %v799 = vmul.f32 %v748, %v769
        %v800 = vmul.f32 %v752, %v765
        %v801 = vmul.f32 %v754, %v769
        %v802 = vmul.f32 %v756, %v765
        %v803 = vmul.f32 %v758, %v769
        %v804 = vld [vmem:[%s6] ss:$8 sm:$0x3]
        %v806 = vlaneseq
        %v807 = vshrl.u32 %v806, 7
        %v808 = vsub.s32 0, %v807
        %v809 = vrot.slane %v804, %v808
        %v810 = vlaneseq
        %v811 = vshrl.u32 %v810, 7
        %v812 = vsub.s32 1, %v811
        %v813 = vrot.slane %v804, %v812
        %v816 = vadd.f32 %v772, %v809
        %v817 = vadd.f32 %v773, %v813
        %v818 = vadd.f32 %v774, %v809
        %v819 = vadd.f32 %v775, %v813
        %v820 = vadd.f32 %v776, %v809
        %v821 = vadd.f32 %v777, %v813
        %v822 = vadd.f32 %v778, %v809
        %v823 = vadd.f32 %v779, %v813
        %v824 = vadd.f32 %v780, %v809
        %v825 = vadd.f32 %v781, %v813
        %v826 = vadd.f32 %v782, %v809
        %v827 = vadd.f32 %v783, %v813
        %v828 = vadd.f32 %v784, %v809
        %v829 = vadd.f32 %v785, %v813
        %v830 = vadd.f32 %v786, %v809
        %v831 = vadd.f32 %v787, %v813
        %v832 = vadd.f32 %v788, %v809
        %v833 = vadd.f32 %v789, %v813
        %v834 = vadd.f32 %v790, %v809
        %v835 = vadd.f32 %v791, %v813
        %v836 = vadd.f32 %v792, %v809
        %v837 = vadd.f32 %v793, %v813
        %v838 = vadd.f32 %v794, %v809
        %v839 = vadd.f32 %v795, %v813
        %v840 = vadd.f32 %v796, %v809
        %v841 = vadd.f32 %v797, %v813
        %v842 = vadd.f32 %v798, %v809
        %v843 = vadd.f32 %v799, %v813
        %v844 = vadd.f32 %v800, %v809
        %v845 = vadd.f32 %v801, %v813
        %v846 = vadd.f32 %v802, %v809
        %v847 = vadd.f32 %v803, %v813
        %v848 = vmax.f32 %v816, 0.0
        %v849 = vmax.f32 %v817, 0.0
        %v850 = vmax.f32 %v818, 0.0
        %v851 = vmax.f32 %v819, 0.0
        %v852 = vmax.f32 %v820, 0.0
        %v853 = vmax.f32 %v821, 0.0
        %v854 = vmax.f32 %v822, 0.0
        %v855 = vmax.f32 %v823, 0.0
        %v856 = vmax.f32 %v824, 0.0
        %v857 = vmax.f32 %v825, 0.0
        %v858 = vmax.f32 %v826, 0.0
        %v859 = vmax.f32 %v827, 0.0
        %v860 = vmax.f32 %v828, 0.0
        %v861 = vmax.f32 %v829, 0.0
        %v862 = vmax.f32 %v830, 0.0
        %v863 = vmax.f32 %v831, 0.0
        %v864 = vmax.f32 %v832, 0.0
        %v865 = vmax.f32 %v833, 0.0
        %v866 = vmax.f32 %v834, 0.0
        %v867 = vmax.f32 %v835, 0.0
        %v868 = vmax.f32 %v836, 0.0
        %v869 = vmax.f32 %v837, 0.0
        %v870 = vmax.f32 %v838, 0.0
        %v871 = vmax.f32 %v839, 0.0
        %v872 = vmax.f32 %v840, 0.0
        %v873 = vmax.f32 %v841, 0.0
        %v874 = vmax.f32 %v842, 0.0
        %v875 = vmax.f32 %v843, 0.0
        %v876 = vmax.f32 %v844, 0.0
        %v877 = vmax.f32 %v845, 0.0
        %v878 = vmax.f32 %v846, 0.0
        %v879 = vmax.f32 %v847, 0.0
        %v880 = vpack.c.bf16 %v850, %v848
        %v881 = vpack.c.bf16 %v851, %v849
        %v882 = vpack.c.bf16 %v854, %v852
        %v883 = vpack.c.bf16 %v855, %v853
        %v884 = vpack.c.bf16 %v858, %v856
        %v885 = vpack.c.bf16 %v859, %v857
        %v886 = vpack.c.bf16 %v862, %v860
        %v887 = vpack.c.bf16 %v863, %v861
        %v888 = vpack.c.bf16 %v866, %v864
        %v889 = vpack.c.bf16 %v867, %v865
        %v890 = vpack.c.bf16 %v870, %v868
        %v891 = vpack.c.bf16 %v871, %v869
        %v892 = vpack.c.bf16 %v874, %v872
        %v893 = vpack.c.bf16 %v875, %v873
        %v894 = vpack.c.bf16 %v878, %v876
        %v895 = vpack.c.bf16 %v879, %v877
        %v896 = vld [vmem:[#allocation2] sm:$0xff]
        %v897 = vld [vmem:[#allocation2 + $0x8] sm:$0xff]
        %v898 = vld [vmem:[#allocation2 + $0x10] sm:$0xff]
        %v899 = vld [vmem:[#allocation2 + $0x18] sm:$0xff]
        %v900 = vld [vmem:[#allocation2 + $0x20] sm:$0xff]
        %v901 = vld [vmem:[#allocation2 + $0x28] sm:$0xff]
        %v902 = vld [vmem:[#allocation2 + $0x30] sm:$0xff]
        %v903 = vld [vmem:[#allocation2 + $0x38] sm:$0xff]
        %v904 = vld [vmem:[#allocation2 + $0x40] sm:$0xff]
        %v905 = vld [vmem:[#allocation2 + $0x48] sm:$0xff]
        %v906 = vld [vmem:[#allocation2 + $0x50] sm:$0xff]
        %v907 = vld [vmem:[#allocation2 + $0x58] sm:$0xff]
        %v908 = vld [vmem:[#allocation2 + $0x60] sm:$0xff]
        %v909 = vld [vmem:[#allocation2 + $0x68] sm:$0xff]
        %v910 = vld [vmem:[#allocation2 + $0x70] sm:$0xff]
        %v911 = vld [vmem:[#allocation2 + $0x78] sm:$0xff]
        %v912 = vld [vmem:[#allocation2 + $0x80] sm:$0xff]
        %v913 = vld [vmem:[#allocation2 + $0x88] sm:$0xff]
        %v914 = vld [vmem:[#allocation2 + $0x90] sm:$0xff]
        %v915 = vld [vmem:[#allocation2 + $0x98] sm:$0xff]
        %v916 = vld [vmem:[#allocation2 + $0xa0] sm:$0xff]
        %v917 = vld [vmem:[#allocation2 + $0xa8] sm:$0xff]
        %v918 = vld [vmem:[#allocation2 + $0xb0] sm:$0xff]
        %v919 = vld [vmem:[#allocation2 + $0xb8] sm:$0xff]
        %v920 = vld [vmem:[#allocation2 + $0xc0] sm:$0xff]
        %v921 = vld [vmem:[#allocation2 + $0xc8] sm:$0xff]
        %v922 = vld [vmem:[#allocation2 + $0xd0] sm:$0xff]
        %v923 = vld [vmem:[#allocation2 + $0xd8] sm:$0xff]
        %v924 = vld [vmem:[#allocation2 + $0xe0] sm:$0xff]
        %v925 = vld [vmem:[#allocation2 + $0xe8] sm:$0xff]
        %v926 = vld [vmem:[#allocation2 + $0xf0] sm:$0xff]
        %v927 = vld [vmem:[#allocation2 + $0xf8] sm:$0xff]
        %s928 = sadd.s32 %s325, 2
        %s929 = smul.u32 %s928, 3
        %s930 = smul.addr %s929, 4
        %s931 = scalar_lea.vmem %s318, %s930
        %v932 = vld [vmem:[%s931] sm:$0xe]
        %v933 = vld [vmem:[%s931 + $0x4] sm:$0xf]
        %v934 = vld [vmem:[%s931 + $0x8] sm:$0x1]
        %v935 = vld [vmem:[%s931 + $0xc] sm:$0xe]
        %v936 = vld [vmem:[%s931 + $0x10] sm:$0xf]
        %v937 = vld [vmem:[%s931 + $0x14] sm:$0x1]
        %v938 = vld [vmem:[%s931 + $0x18] sm:$0xe]
        %v939 = vld [vmem:[%s931 + $0x1c] sm:$0xf]
        %v940 = vld [vmem:[%s931 + $0x20] sm:$0x1]
        %v941 = vld [vmem:[%s931 + $0x24] sm:$0xe]
        %v942 = vld [vmem:[%s931 + $0x28] sm:$0xf]
        %v943 = vld [vmem:[%s931 + $0x2c] sm:$0x1]
        %v944 = vld [vmem:[%s931 + $0x30] sm:$0xe]
        %v945 = vld [vmem:[%s931 + $0x34] sm:$0xf]
        %v946 = vld [vmem:[%s931 + $0x38] sm:$0x1]
        %v947 = vld [vmem:[%s931 + $0x3c] sm:$0xe]
        %v948 = vld [vmem:[%s931 + $0x40] sm:$0xf]
        %v949 = vld [vmem:[%s931 + $0x44] sm:$0x1]
        %v950 = vld [vmem:[%s931 + $0x48] sm:$0xe]
        %v951 = vld [vmem:[%s931 + $0x4c] sm:$0xf]
        %v952 = vld [vmem:[%s931 + $0x50] sm:$0x1]
        %v953 = vld [vmem:[%s931 + $0x54] sm:$0xe]
        %v954 = vld [vmem:[%s931 + $0x58] sm:$0xf]
        %v955 = vld [vmem:[%s931 + $0x5c] sm:$0x1]
        %vm980 = vcmask 1042432
        %vm981 = vcmask 1046532
        %vm982 = vmor %vm980, %vm981
        %v983 = vrot.slane %v932, 5
        %v984 = vrot.slane %v983, 4
        %v985 = vrot.slane %v933, 5
        %v986 = vsel %vm982, %v984, %v985
        %v987 = vrot.slane %v985, 4
        %v988 = vrot.slane %v934, 5
        %v989 = vsel %vm982, %v987, %v988
        %v990 = vrot.slane %v935, 5
        %v991 = vrot.slane %v990, 4
        %v992 = vrot.slane %v936, 5
        %v993 = vsel %vm982, %v991, %v992
        %v994 = vrot.slane %v992, 4
        %v995 = vrot.slane %v937, 5
        %v996 = vsel %vm982, %v994, %v995
        %v997 = vrot.slane %v938, 5
        %v998 = vrot.slane %v997, 4
        %v999 = vrot.slane %v939, 5
        %v1000 = vsel %vm982, %v998, %v999
        %v1001 = vrot.slane %v999, 4
        %v1002 = vrot.slane %v940, 5
        %v1003 = vsel %vm982, %v1001, %v1002
        %v1004 = vrot.slane %v941, 5
        %v1005 = vrot.slane %v1004, 4
        %v1006 = vrot.slane %v942, 5
        %v1007 = vsel %vm982, %v1005, %v1006
        %v1008 = vrot.slane %v1006, 4
        %v1009 = vrot.slane %v943, 5
        %v1010 = vsel %vm982, %v1008, %v1009
        %v1011 = vrot.slane %v944, 5
        %v1012 = vrot.slane %v1011, 4
        %v1013 = vrot.slane %v945, 5
        %v1014 = vsel %vm982, %v1012, %v1013
        %v1015 = vrot.slane %v1013, 4
        %v1016 = vrot.slane %v946, 5
        %v1017 = vsel %vm982, %v1015, %v1016
        %v1018 = vrot.slane %v947, 5
        %v1019 = vrot.slane %v1018, 4
        %v1020 = vrot.slane %v948, 5
        %v1021 = vsel %vm982, %v1019, %v1020
        %v1022 = vrot.slane %v1020, 4
        %v1023 = vrot.slane %v949, 5
        %v1024 = vsel %vm982, %v1022, %v1023
        %v1025 = vrot.slane %v950, 5
        %v1026 = vrot.slane %v1025, 4
        %v1027 = vrot.slane %v951, 5
        %v1028 = vsel %vm982, %v1026, %v1027
        %v1029 = vrot.slane %v1027, 4
        %v1030 = vrot.slane %v952, 5
        %v1031 = vsel %vm982, %v1029, %v1030
        %v1032 = vrot.slane %v953, 5
        %v1033 = vrot.slane %v1032, 4
        %v1034 = vrot.slane %v954, 5
        %v1035 = vsel %vm982, %v1033, %v1034
        %v1036 = vrot.slane %v1034, 4
        %v1037 = vrot.slane %v955, 5
        %v1038 = vsel %vm982, %v1036, %v1037
        %v1039 = vld [vmem:[%s3] sm:$0xf]
        %v1040 = vld [vmem:[%s931 + $0x8] sm:$0x3]
        %v1041 = vld [vmem:[%s931 + $0x14] sm:$0x3]
        %v1042 = vld [vmem:[%s931 + $0x20] sm:$0x3]
        %v1043 = vld [vmem:[%s931 + $0x2c] sm:$0x3]
        %v1044 = vld [vmem:[%s931 + $0x38] sm:$0x3]
        %v1045 = vld [vmem:[%s931 + $0x44] sm:$0x3]
        %v1046 = vld [vmem:[%s931 + $0x50] sm:$0x3]
        %v1047 = vld [vmem:[%s931 + $0x5c] sm:$0x3]
        %v1049 = vshrl.u32 %v932, 16
        %v1051 = vrot.slane %v1049, 5
        %v1052 = vshll.u32 %v932, 16
        %v1054 = vrot.slane %v1052, 6
        %v1055 = vor.u32 %v1051, %v1054
        %v1056 = vrot.slane %v1055, 4
        %v1058 = vshrl.u32 %v933, 16
        %v1060 = vrot.slane %v1058, 5
        %v1061 = vshll.u32 %v933, 16
        %v1063 = vrot.slane %v1061, 6
        %v1064 = vor.u32 %v1060, %v1063
        %v1065 = vsel %vm356, %v1056, %v1064
        %v1066 = vrot.slane %v1064, 4
        %v1068 = vshrl.u32 %v1040, 16
        %v1070 = vrot.slane %v1068, 5
        %v1071 = vshll.u32 %v1040, 16
        %v1073 = vrot.slane %v1071, 6
        %v1074 = vor.u32 %v1070, %v1073
        %v1075 = vsel %vm356, %v1066, %v1074
        %v1077 = vshrl.u32 %v935, 16
        %v1079 = vrot.slane %v1077, 5
        %v1080 = vshll.u32 %v935, 16
        %v1082 = vrot.slane %v1080, 6
        %v1083 = vor.u32 %v1079, %v1082
        %v1084 = vrot.slane %v1083, 4
        %v1086 = vshrl.u32 %v936, 16
        %v1088 = vrot.slane %v1086, 5
        %v1089 = vshll.u32 %v936, 16
        %v1091 = vrot.slane %v1089, 6
        %v1092 = vor.u32 %v1088, %v1091
        %v1093 = vsel %vm356, %v1084, %v1092
        %v1094 = vrot.slane %v1092, 4
        %v1096 = vshrl.u32 %v1041, 16
        %v1098 = vrot.slane %v1096, 5
        %v1099 = vshll.u32 %v1041, 16
        %v1101 = vrot.slane %v1099, 6
        %v1102 = vor.u32 %v1098, %v1101
        %v1103 = vsel %vm356, %v1094, %v1102
        %v1105 = vshrl.u32 %v938, 16
        %v1107 = vrot.slane %v1105, 5
        %v1108 = vshll.u32 %v938, 16
        %v1110 = vrot.slane %v1108, 6
        %v1111 = vor.u32 %v1107, %v1110
        %v1112 = vrot.slane %v1111, 4
        %v1114 = vshrl.u32 %v939, 16
        %v1116 = vrot.slane %v1114, 5
        %v1117 = vshll.u32 %v939, 16
        %v1119 = vrot.slane %v1117, 6
        %v1120 = vor.u32 %v1116, %v1119
        %v1121 = vsel %vm356, %v1112, %v1120
        %v1122 = vrot.slane %v1120, 4
        %v1124 = vshrl.u32 %v1042, 16
        %v1126 = vrot.slane %v1124, 5
        %v1127 = vshll.u32 %v1042, 16
        %v1129 = vrot.slane %v1127, 6
        %v1130 = vor.u32 %v1126, %v1129
        %v1131 = vsel %vm356, %v1122, %v1130
        %v1133 = vshrl.u32 %v941, 16
        %v1135 = vrot.slane %v1133, 5
        %v1136 = vshll.u32 %v941, 16
        %v1138 = vrot.slane %v1136, 6
        %v1139 = vor.u32 %v1135, %v1138
        %v1140 = vrot.slane %v1139, 4
        %v1142 = vshrl.u32 %v942, 16
        %v1144 = vrot.slane %v1142, 5
        %v1145 = vshll.u32 %v942, 16
        %v1147 = vrot.slane %v1145, 6
        %v1148 = vor.u32 %v1144, %v1147
        %v1149 = vsel %vm356, %v1140, %v1148
        %v1150 = vrot.slane %v1148, 4
        %v1152 = vshrl.u32 %v1043, 16
        %v1154 = vrot.slane %v1152, 5
        %v1155 = vshll.u32 %v1043, 16
        %v1157 = vrot.slane %v1155, 6
        %v1158 = vor.u32 %v1154, %v1157
        %v1159 = vsel %vm356, %v1150, %v1158
        %v1161 = vshrl.u32 %v944, 16
        %v1163 = vrot.slane %v1161, 5
        %v1164 = vshll.u32 %v944, 16
        %v1166 = vrot.slane %v1164, 6
        %v1167 = vor.u32 %v1163, %v1166
        %v1168 = vrot.slane %v1167, 4
        %v1170 = vshrl.u32 %v945, 16
        %v1172 = vrot.slane %v1170, 5
        %v1173 = vshll.u32 %v945, 16
        %v1175 = vrot.slane %v1173, 6
        %v1176 = vor.u32 %v1172, %v1175
        %v1177 = vsel %vm356, %v1168, %v1176
        %v1178 = vrot.slane %v1176, 4
        %v1180 = vshrl.u32 %v1044, 16
        %v1182 = vrot.slane %v1180, 5
        %v1183 = vshll.u32 %v1044, 16
        %v1185 = vrot.slane %v1183, 6
        %v1186 = vor.u32 %v1182, %v1185
        %v1187 = vsel %vm356, %v1178, %v1186
        %v1189 = vshrl.u32 %v947, 16
        %v1191 = vrot.slane %v1189, 5
        %v1192 = vshll.u32 %v947, 16
        %v1194 = vrot.slane %v1192, 6
        %v1195 = vor.u32 %v1191, %v1194
        %v1196 = vrot.slane %v1195, 4
        %v1198 = vshrl.u32 %v948, 16
        %v1200 = vrot.slane %v1198, 5
        %v1201 = vshll.u32 %v948, 16
        %v1203 = vrot.slane %v1201, 6
        %v1204 = vor.u32 %v1200, %v1203
        %v1205 = vsel %vm356, %v1196, %v1204
        %v1206 = vrot.slane %v1204, 4
        %v1208 = vshrl.u32 %v1045, 16
        %v1210 = vrot.slane %v1208, 5
        %v1211 = vshll.u32 %v1045, 16
        %v1213 = vrot.slane %v1211, 6
        %v1214 = vor.u32 %v1210, %v1213
        %v1215 = vsel %vm356, %v1206, %v1214
        %v1217 = vshrl.u32 %v950, 16
        %v1219 = vrot.slane %v1217, 5
        %v1220 = vshll.u32 %v950, 16
        %v1222 = vrot.slane %v1220, 6
        %v1223 = vor.u32 %v1219, %v1222
        %v1224 = vrot.slane %v1223, 4
        %v1226 = vshrl.u32 %v951, 16
        %v1228 = vrot.slane %v1226, 5
        %v1229 = vshll.u32 %v951, 16
        %v1231 = vrot.slane %v1229, 6
        %v1232 = vor.u32 %v1228, %v1231
        %v1233 = vsel %vm356, %v1224, %v1232
        %v1234 = vrot.slane %v1232, 4
        %v1236 = vshrl.u32 %v1046, 16
        %v1238 = vrot.slane %v1236, 5
        %v1239 = vshll.u32 %v1046, 16
        %v1241 = vrot.slane %v1239, 6
        %v1242 = vor.u32 %v1238, %v1241
        %v1243 = vsel %vm356, %v1234, %v1242
        %v1245 = vshrl.u32 %v953, 16
        %v1247 = vrot.slane %v1245, 5
        %v1248 = vshll.u32 %v953, 16
        %v1250 = vrot.slane %v1248, 6
        %v1251 = vor.u32 %v1247, %v1250
        %v1252 = vrot.slane %v1251, 4
        %v1254 = vshrl.u32 %v954, 16
        %v1256 = vrot.slane %v1254, 5
        %v1257 = vshll.u32 %v954, 16
        %v1259 = vrot.slane %v1257, 6
        %v1260 = vor.u32 %v1256, %v1259
        %v1261 = vsel %vm356, %v1252, %v1260
        %v1262 = vrot.slane %v1260, 4
        %v1264 = vshrl.u32 %v1047, 16
        %v1266 = vrot.slane %v1264, 5
        %v1267 = vshll.u32 %v1047, 16
        %v1269 = vrot.slane %v1267, 6
        %v1270 = vor.u32 %v1266, %v1269
        %v1271 = vsel %vm356, %v1262, %v1270
        %s1272 = scalar_lea.vmem %s3, 4
        %v1273 = vld [vmem:[%s1272] sm:$0xf]
        %v1274 = vunpack.c.l.b16 %v1065
        %v1275 = vunpack.c.l.b16 %v1075
        %v1276 = vunpack.c.l.b16 %v1093
        %v1277 = vunpack.c.l.b16 %v1103
        %v1278 = vunpack.c.l.b16 %v1121
        %v1279 = vunpack.c.l.b16 %v1131
        %v1280 = vunpack.c.l.b16 %v1149
        %v1281 = vunpack.c.l.b16 %v1159
        %v1282 = vunpack.c.l.b16 %v1177
        %v1283 = vunpack.c.l.b16 %v1187
        %v1284 = vunpack.c.l.b16 %v1205
        %v1285 = vunpack.c.l.b16 %v1215
        %v1286 = vunpack.c.l.b16 %v1233
        %v1287 = vunpack.c.l.b16 %v1243
        %v1288 = vunpack.c.l.b16 %v1261
        %v1289 = vunpack.c.l.b16 %v1271
        %v1290 = vpack.c.b16 %v1275, %v1274
        %v1291 = vpack.c.b16 %v1277, %v1276
        %v1292 = vpack.c.b16 %v1279, %v1278
        %v1293 = vpack.c.b16 %v1281, %v1280
        %v1294 = vpack.c.b16 %v1283, %v1282
        %v1295 = vpack.c.b16 %v1285, %v1284
        %v1296 = vpack.c.b16 %v1287, %v1286
        %v1297 = vpack.c.b16 %v1289, %v1288
        %v1300 = vunpack.c.l.s4 1983009808
        %v1301 = vunpack.c.0.s8 %v1300
        %v1302 = vlaneseq
        %v1303 = vshrl.u32 %v1302, 7
        %v1304 = vsub.s32 %v1301, %v1303
        %v1305 = vrot.slane %v1273, %v1304
        %v1306 = vcombine.high %v1305, %v1305
        %v1308 = vsel %vm615, %v1290, 0
        %v1311 = vsel %vm615, %v1291, 0
        %v1314 = vsel %vm615, %v1292, 0
        %v1317 = vsel %vm615, %v1293, 0
        %v1320 = vsel %vm615, %v1294, 0
        %v1323 = vsel %vm615, %v1295, 0
        %v1326 = vsel %vm615, %v1296, 0
        %v1329 = vsel %vm615, %v1297, 0
        %v1332 = vsel %vm640, %v1305, 0
        %v1335 = vsel %vm640, %v1306, 0
        %1337 = vmatprep.subr.bf16.mxu0 %v1335
        %1338 = vmatpush1.bf16.msra.mxu0 %v1332
        %1339 = vmatprep.subr.bf16.mxu0 0
        %1340 = vmatpush1.bf16.msra.mxu0 0
        %1341 = vmatprep.subr.bf16.mxu0 0
        %1342 = vmatpush1.bf16.msra.mxu0 0
        %1343 = vmatprep.subr.bf16.mxu0 0
        %1344 = vmatpush1.bf16.msra.mxu0 0
        %1345 = vmatprep.subr.bf16.mxu0 0
        %1346 = vmatpush1.bf16.msra.mxu0 0
        %1347 = vmatprep.subr.bf16.mxu0 0
        %1348 = vmatpush1.bf16.msra.mxu0 0
        %1349 = vmatprep.subr.bf16.mxu0 0
        %1350 = vmatpush1.bf16.msra.mxu0 0
        %1351 = vmatprep.subr.bf16.mxu0 0
        %1352 = vmatpush1.bf16.msra.mxu0 0
        %1353 = vmatprep.subr.bf16.mxu0 0
        %1354 = vmatpush1.bf16.msra.mxu0 0
        %1355 = vmatprep.subr.bf16.mxu0 0
        %1356 = vmatpush1.bf16.msra.mxu0 0
        %1357 = vmatprep.subr.bf16.mxu0 0
        %1358 = vmatpush1.bf16.msra.mxu0 0
        %1359 = vmatprep.subr.bf16.mxu0 0
        %1360 = vmatpush1.bf16.msra.mxu0 0
        %1361 = vmatprep.subr.bf16.mxu0 0
        %1362 = vmatpush1.bf16.msra.mxu0 0
        %1363 = vmatprep.subr.bf16.mxu0 0
        %1364 = vmatpush1.bf16.msra.mxu0 0
        %1365 = vmatprep.subr.bf16.mxu0 0
        %1366 = vmatpush1.bf16.msra.mxu0 0
        %1367 = vmatprep.subr.bf16.mxu0 0
        %1368 = vmatpush1.bf16.msra.mxu0 0
        %1369 = vmatprep.mubr.bf16.mxu0 0
        %1370 = vmatmul.mubr.bf16.gmra.mrb[0].mxu0 %v1308
        %v1371 = vpop.f32.mrb[0].mxu0
        %v1372 = vadd.f32 0.0, %v1371
        %v1373 = vpop.f32.mrb[0].mxu0
        %v1374 = vadd.f32 0.0, %v1373
        %v1375 = vpop.f32.mrb[0].mxu0
        %v1376 = vadd.f32 0.0, %v1375
        %v1377 = vpop.f32.mrb[0].mxu0
        %v1378 = vadd.f32 0.0, %v1377
        %1379 = vmatprep.mubr.bf16.mxu0 0
        %1380 = vmatmul.mubr.bf16.gmra.mrb[0].mxu0 %v1311
        %v1381 = vpop.f32.mrb[0].mxu0
        %v1382 = vadd.f32 0.0, %v1381
        %v1383 = vpop.f32.mrb[0].mxu0
        %v1384 = vadd.f32 0.0, %v1383
        %v1385 = vpop.f32.mrb[0].mxu0
        %v1386 = vadd.f32 0.0, %v1385
        %v1387 = vpop.f32.mrb[0].mxu0
        %v1388 = vadd.f32 0.0, %v1387
        %1389 = vmatprep.mubr.bf16.mxu0 0
        %1390 = vmatmul.mubr.bf16.gmra.mrb[0].mxu0 %v1314
        %v1391 = vpop.f32.mrb[0].mxu0
        %v1392 = vadd.f32 0.0, %v1391
        %v1393 = vpop.f32.mrb[0].mxu0
        %v1394 = vadd.f32 0.0, %v1393
        %v1395 = vpop.f32.mrb[0].mxu0
        %v1396 = vadd.f32 0.0, %v1395
        %v1397 = vpop.f32.mrb[0].mxu0
        %v1398 = vadd.f32 0.0, %v1397
        %1399 = vmatprep.mubr.bf16.mxu0 0
        %1400 = vmatmul.mubr.bf16.gmra.mrb[0].mxu0 %v1317
        %v1401 = vpop.f32.mrb[0].mxu0
        %v1402 = vadd.f32 0.0, %v1401
        %v1403 = vpop.f32.mrb[0].mxu0
        %v1404 = vadd.f32 0.0, %v1403
        %v1405 = vpop.f32.mrb[0].mxu0
        %v1406 = vadd.f32 0.0, %v1405
        %v1407 = vpop.f32.mrb[0].mxu0
        %v1408 = vadd.f32 0.0, %v1407
        %1409 = vmatprep.mubr.bf16.mxu0 0
        %1410 = vmatmul.mubr.bf16.gmra.mrb[0].mxu0 %v1320
        %v1411 = vpop.f32.mrb[0].mxu0
        %v1412 = vadd.f32 0.0, %v1411
        %v1413 = vpop.f32.mrb[0].mxu0
        %v1414 = vadd.f32 0.0, %v1413
        %v1415 = vpop.f32.mrb[0].mxu0
        %v1416 = vadd.f32 0.0, %v1415
        %v1417 = vpop.f32.mrb[0].mxu0
        %v1418 = vadd.f32 0.0, %v1417
        %1419 = vmatprep.mubr.bf16.mxu0 0
        %1420 = vmatmul.mubr.bf16.gmra.mrb[0].mxu0 %v1323
        %v1421 = vpop.f32.mrb[0].mxu0
        %v1422 = vadd.f32 0.0, %v1421
        %v1423 = vpop.f32.mrb[0].mxu0
        %v1424 = vadd.f32 0.0, %v1423
        %v1425 = vpop.f32.mrb[0].mxu0
        %v1426 = vadd.f32 0.0, %v1425
        %v1427 = vpop.f32.mrb[0].mxu0
        %v1428 = vadd.f32 0.0, %v1427
        %1429 = vmatprep.mubr.bf16.mxu0 0
        %1430 = vmatmul.mubr.bf16.gmra.mrb[0].mxu0 %v1326
        %v1431 = vpop.f32.mrb[0].mxu0
        %v1432 = vadd.f32 0.0, %v1431
        %v1433 = vpop.f32.mrb[0].mxu0
        %v1434 = vadd.f32 0.0, %v1433
        %v1435 = vpop.f32.mrb[0].mxu0
        %v1436 = vadd.f32 0.0, %v1435
        %v1437 = vpop.f32.mrb[0].mxu0
        %v1438 = vadd.f32 0.0, %v1437
        %1439 = vmatprep.mubr.bf16.mxu0 0
        %1440 = vmatmul.mubr.bf16.gmra.mrb[0].mxu0 %v1329
        %v1441 = vpop.f32.mrb[0].mxu0
        %v1442 = vadd.f32 0.0, %v1441
        %v1443 = vpop.f32.mrb[0].mxu0
        %v1444 = vadd.f32 0.0, %v1443
        %v1445 = vpop.f32.mrb[0].mxu0
        %v1446 = vadd.f32 0.0, %v1445
        %v1447 = vpop.f32.mrb[0].mxu0
        %v1448 = vadd.f32 0.0, %v1447
        %1449 = vdwg.mxu0
        %v1450 = vunpack.c.l.b16 %v986
        %v1451 = vunpack.c.l.b16 %v989
        %v1452 = vunpack.c.l.b16 %v993
        %v1453 = vunpack.c.l.b16 %v996
        %v1454 = vunpack.c.l.b16 %v1000
        %v1455 = vunpack.c.l.b16 %v1003
        %v1456 = vunpack.c.l.b16 %v1007
        %v1457 = vunpack.c.l.b16 %v1010
        %v1458 = vunpack.c.l.b16 %v1014
        %v1459 = vunpack.c.l.b16 %v1017
        %v1460 = vunpack.c.l.b16 %v1021
        %v1461 = vunpack.c.l.b16 %v1024
        %v1462 = vunpack.c.l.b16 %v1028
        %v1463 = vunpack.c.l.b16 %v1031
        %v1464 = vunpack.c.l.b16 %v1035
        %v1465 = vunpack.c.l.b16 %v1038
        %v1466 = vpack.c.b16 %v1451, %v1450
        %v1467 = vpack.c.b16 %v1453, %v1452
        %v1468 = vpack.c.b16 %v1455, %v1454
        %v1469 = vpack.c.b16 %v1457, %v1456
        %v1470 = vpack.c.b16 %v1459, %v1458
        %v1471 = vpack.c.b16 %v1461, %v1460
        %v1472 = vpack.c.b16 %v1463, %v1462
        %v1473 = vpack.c.b16 %v1465, %v1464
        %v1476 = vunpack.c.l.s4 1983009808
        %v1477 = vunpack.c.0.s8 %v1476
        %v1478 = vlaneseq
        %v1479 = vshrl.u32 %v1478, 7
        %v1480 = vsub.s32 %v1477, %v1479
        %v1481 = vrot.slane %v1039, %v1480
        %v1482 = vcombine.high %v1481, %v1481
        %v1484 = vsel %vm615, %v1466, 0
        %v1487 = vsel %vm615, %v1467, 0
        %v1490 = vsel %vm615, %v1468, 0
        %v1493 = vsel %vm615, %v1469, 0
        %v1496 = vsel %vm615, %v1470, 0
        %v1499 = vsel %vm615, %v1471, 0
        %v1502 = vsel %vm615, %v1472, 0
        %v1505 = vsel %vm615, %v1473, 0
        %v1508 = vsel %vm640, %v1481, 0
        %v1511 = vsel %vm640, %v1482, 0
        %1513 = vmatprep.subr.bf16.mxu0 %v1511
        %1514 = vmatpush1.bf16.msra.mxu0 %v1508
        %1515 = vmatprep.subr.bf16.mxu0 0
        %1516 = vmatpush1.bf16.msra.mxu0 0
        %1517 = vmatprep.subr.bf16.mxu0 0
        %1518 = vmatpush1.bf16.msra.mxu0 0
        %1519 = vmatprep.subr.bf16.mxu0 0
        %1520 = vmatpush1.bf16.msra.mxu0 0
        %1521 = vmatprep.subr.bf16.mxu0 0
        %1522 = vmatpush1.bf16.msra.mxu0 0
        %1523 = vmatprep.subr.bf16.mxu0 0
        %1524 = vmatpush1.bf16.msra.mxu0 0
        %1525 = vmatprep.subr.bf16.mxu0 0
        %1526 = vmatpush1.bf16.msra.mxu0 0
        %1527 = vmatprep.subr.bf16.mxu0 0
        %1528 = vmatpush1.bf16.msra.mxu0 0
        %1529 = vmatprep.subr.bf16.mxu0 0
        %1530 = vmatpush1.bf16.msra.mxu0 0
        %1531 = vmatprep.subr.bf16.mxu0 0
        %1532 = vmatpush1.bf16.msra.mxu0 0
        %1533 = vmatprep.subr.bf16.mxu0 0
        %1534 = vmatpush1.bf16.msra.mxu0 0
        %1535 = vmatprep.subr.bf16.mxu0 0
        %1536 = vmatpush1.bf16.msra.mxu0 0
        %1537 = vmatprep.subr.bf16.mxu0 0
        %1538 = vmatpush1.bf16.msra.mxu0 0
        %1539 = vmatprep.subr.bf16.mxu0 0
        %1540 = vmatpush1.bf16.msra.mxu0 0
        %1541 = vmatprep.subr.bf16.mxu0 0
        %1542 = vmatpush1.bf16.msra.mxu0 0
        %1543 = vmatprep.subr.bf16.mxu0 0
        %1544 = vmatpush1.bf16.msra.mxu0 0
        %1545 = vmatprep.mubr.bf16.mxu0 0
        %1546 = vmatmul.mubr.bf16.gmra.mrb[0].mxu0 %v1484
        %v1547 = vpop.f32.mrb[0].mxu0
        %v1548 = vadd.f32 %v1372, %v1547
        %v1549 = vpop.f32.mrb[0].mxu0
        %v1550 = vadd.f32 %v1374, %v1549
        %v1551 = vpop.f32.mrb[0].mxu0
        %v1552 = vadd.f32 %v1376, %v1551
        %v1553 = vpop.f32.mrb[0].mxu0
        %v1554 = vadd.f32 %v1378, %v1553
        %1555 = vmatprep.mubr.bf16.mxu0 0
        %1556 = vmatmul.mubr.bf16.gmra.mrb[0].mxu0 %v1487
        %v1557 = vpop.f32.mrb[0].mxu0
        %v1558 = vadd.f32 %v1382, %v1557
        %v1559 = vpop.f32.mrb[0].mxu0
        %v1560 = vadd.f32 %v1384, %v1559
        %v1561 = vpop.f32.mrb[0].mxu0
        %v1562 = vadd.f32 %v1386, %v1561
        %v1563 = vpop.f32.mrb[0].mxu0
        %v1564 = vadd.f32 %v1388, %v1563
        %1565 = vmatprep.mubr.bf16.mxu0 0
        %1566 = vmatmul.mubr.bf16.gmra.mrb[0].mxu0 %v1490
        %v1567 = vpop.f32.mrb[0].mxu0
        %v1568 = vadd.f32 %v1392, %v1567
        %v1569 = vpop.f32.mrb[0].mxu0
        %v1570 = vadd.f32 %v1394, %v1569
        %v1571 = vpop.f32.mrb[0].mxu0
        %v1572 = vadd.f32 %v1396, %v1571
        %v1573 = vpop.f32.mrb[0].mxu0
        %v1574 = vadd.f32 %v1398, %v1573
        %1575 = vmatprep.mubr.bf16.mxu0 0
        %1576 = vmatmul.mubr.bf16.gmra.mrb[0].mxu0 %v1493
        %v1577 = vpop.f32.mrb[0].mxu0
        %v1578 = vadd.f32 %v1402, %v1577
        %v1579 = vpop.f32.mrb[0].mxu0
        %v1580 = vadd.f32 %v1404, %v1579
        %v1581 = vpop.f32.mrb[0].mxu0
        %v1582 = vadd.f32 %v1406, %v1581
        %v1583 = vpop.f32.mrb[0].mxu0
        %v1584 = vadd.f32 %v1408, %v1583
        %1585 = vmatprep.mubr.bf16.mxu0 0
        %1586 = vmatmul.mubr.bf16.gmra.mrb[0].mxu0 %v1496
        %v1587 = vpop.f32.mrb[0].mxu0
        %v1588 = vadd.f32 %v1412, %v1587
        %v1589 = vpop.f32.mrb[0].mxu0
        %v1590 = vadd.f32 %v1414, %v1589
        %v1591 = vpop.f32.mrb[0].mxu0
        %v1592 = vadd.f32 %v1416, %v1591
        %v1593 = vpop.f32.mrb[0].mxu0
        %v1594 = vadd.f32 %v1418, %v1593
        %1595 = vmatprep.mubr.bf16.mxu0 0
        %1596 = vmatmul.mubr.bf16.gmra.mrb[0].mxu0 %v1499
        %v1597 = vpop.f32.mrb[0].mxu0
        %v1598 = vadd.f32 %v1422, %v1597
        %v1599 = vpop.f32.mrb[0].mxu0
        %v1600 = vadd.f32 %v1424, %v1599
        %v1601 = vpop.f32.mrb[0].mxu0
        %v1602 = vadd.f32 %v1426, %v1601
        %v1603 = vpop.f32.mrb[0].mxu0
        %v1604 = vadd.f32 %v1428, %v1603
        %1605 = vmatprep.mubr.bf16.mxu0 0
        %1606 = vmatmul.mubr.bf16.gmra.mrb[0].mxu0 %v1502
        %v1607 = vpop.f32.mrb[0].mxu0
        %v1608 = vadd.f32 %v1432, %v1607
        %v1609 = vpop.f32.mrb[0].mxu0
        %v1610 = vadd.f32 %v1434, %v1609
        %v1611 = vpop.f32.mrb[0].mxu0
        %v1612 = vadd.f32 %v1436, %v1611
        %v1613 = vpop.f32.mrb[0].mxu0
        %v1614 = vadd.f32 %v1438, %v1613
        %1615 = vmatprep.mubr.bf16.mxu0 0
        %1616 = vmatmul.mubr.bf16.gmra.mrb[0].mxu0 %v1505
        %v1617 = vpop.f32.mrb[0].mxu0
        %v1618 = vadd.f32 %v1442, %v1617
        %v1619 = vpop.f32.mrb[0].mxu0
        %v1620 = vadd.f32 %v1444, %v1619
        %v1621 = vpop.f32.mrb[0].mxu0
        %v1622 = vadd.f32 %v1446, %v1621
        %v1623 = vpop.f32.mrb[0].mxu0
        %v1624 = vadd.f32 %v1448, %v1623
        %1625 = vdwg.mxu0
        %v1626 = vld [vmem:[%s931] sm:$0xc]
        %v1627 = vld [vmem:[%s931 + $0x4] sm:$0xf]
        %v1628 = vld [vmem:[%s931 + $0x8] sm:$0x3]
        %v1629 = vld [vmem:[%s931 + $0xc] sm:$0xc]
        %v1630 = vld [vmem:[%s931 + $0x10] sm:$0xf]
        %v1631 = vld [vmem:[%s931 + $0x14] sm:$0x3]
        %v1632 = vld [vmem:[%s931 + $0x18] sm:$0xc]
        %v1633 = vld [vmem:[%s931 + $0x1c] sm:$0xf]
        %v1634 = vld [vmem:[%s931 + $0x20] sm:$0x3]
        %v1635 = vld [vmem:[%s931 + $0x24] sm:$0xc]
        %v1636 = vld [vmem:[%s931 + $0x28] sm:$0xf]
        %v1637 = vld [vmem:[%s931 + $0x2c] sm:$0x3]
        %v1638 = vld [vmem:[%s931 + $0x30] sm:$0xc]
        %v1639 = vld [vmem:[%s931 + $0x34] sm:$0xf]
        %v1640 = vld [vmem:[%s931 + $0x38] sm:$0x3]
        %v1641 = vld [vmem:[%s931 + $0x3c] sm:$0xc]
        %v1642 = vld [vmem:[%s931 + $0x40] sm:$0xf]
        %v1643 = vld [vmem:[%s931 + $0x44] sm:$0x3]
        %v1644 = vld [vmem:[%s931 + $0x48] sm:$0xc]
        %v1645 = vld [vmem:[%s931 + $0x4c] sm:$0xf]
        %v1646 = vld [vmem:[%s931 + $0x50] sm:$0x3]
        %v1647 = vld [vmem:[%s931 + $0x54] sm:$0xc]
        %v1648 = vld [vmem:[%s931 + $0x58] sm:$0xf]
        %v1649 = vld [vmem:[%s931 + $0x5c] sm:$0x3]
        %vm1674 = vcmask 1041408
        %vm1675 = vcmask 1045508
        %vm1676 = vmor %vm1674, %vm1675
        %v1677 = vrot.slane %v1626, 6
        %v1678 = vrot.slane %v1677, 4
        %v1679 = vrot.slane %v1627, 6
        %v1680 = vsel %vm1676, %v1678, %v1679
        %v1681 = vrot.slane %v1679, 4
        %v1682 = vrot.slane %v1628, 6
        %v1683 = vsel %vm1676, %v1681, %v1682
        %v1684 = vrot.slane %v1629, 6
        %v1685 = vrot.slane %v1684, 4
        %v1686 = vrot.slane %v1630, 6
        %v1687 = vsel %vm1676, %v1685, %v1686
        %v1688 = vrot.slane %v1686, 4
        %v1689 = vrot.slane %v1631, 6
        %v1690 = vsel %vm1676, %v1688, %v1689
        %v1691 = vrot.slane %v1632, 6
        %v1692 = vrot.slane %v1691, 4
        %v1693 = vrot.slane %v1633, 6
        %v1694 = vsel %vm1676, %v1692, %v1693
        %v1695 = vrot.slane %v1693, 4
        %v1696 = vrot.slane %v1634, 6
        %v1697 = vsel %vm1676, %v1695, %v1696
        %v1698 = vrot.slane %v1635, 6
        %v1699 = vrot.slane %v1698, 4
        %v1700 = vrot.slane %v1636, 6
        %v1701 = vsel %vm1676, %v1699, %v1700
        %v1702 = vrot.slane %v1700, 4
        %v1703 = vrot.slane %v1637, 6
        %v1704 = vsel %vm1676, %v1702, %v1703
        %v1705 = vrot.slane %v1638, 6
        %v1706 = vrot.slane %v1705, 4
        %v1707 = vrot.slane %v1639, 6
        %v1708 = vsel %vm1676, %v1706, %v1707
        %v1709 = vrot.slane %v1707, 4
        %v1710 = vrot.slane %v1640, 6
        %v1711 = vsel %vm1676, %v1709, %v1710
        %v1712 = vrot.slane %v1641, 6
        %v1713 = vrot.slane %v1712, 4
        %v1714 = vrot.slane %v1642, 6
        %v1715 = vsel %vm1676, %v1713, %v1714
        %v1716 = vrot.slane %v1714, 4
        %v1717 = vrot.slane %v1643, 6
        %v1718 = vsel %vm1676, %v1716, %v1717
        %v1719 = vrot.slane %v1644, 6
        %v1720 = vrot.slane %v1719, 4
        %v1721 = vrot.slane %v1645, 6
        %v1722 = vsel %vm1676, %v1720, %v1721
        %v1723 = vrot.slane %v1721, 4
        %v1724 = vrot.slane %v1646, 6
        %v1725 = vsel %vm1676, %v1723, %v1724
        %v1726 = vrot.slane %v1647, 6
        %v1727 = vrot.slane %v1726, 4
        %v1728 = vrot.slane %v1648, 6
        %v1729 = vsel %vm1676, %v1727, %v1728
        %v1730 = vrot.slane %v1728, 4
        %v1731 = vrot.slane %v1649, 6
        %v1732 = vsel %vm1676, %v1730, %v1731
        %s1733 = scalar_lea.vmem %s3, 8
        %v1734 = vld [vmem:[%s1733] sm:$0xf]
        %v1735 = vunpack.c.l.b16 %v1680
        %v1736 = vunpack.c.l.b16 %v1683
        %v1737 = vunpack.c.l.b16 %v1687
        %v1738 = vunpack.c.l.b16 %v1690
        %v1739 = vunpack.c.l.b16 %v1694
        %v1740 = vunpack.c.l.b16 %v1697
        %v1741 = vunpack.c.l.b16 %v1701
        %v1742 = vunpack.c.l.b16 %v1704
        %v1743 = vunpack.c.l.b16 %v1708
        %v1744 = vunpack.c.l.b16 %v1711
        %v1745 = vunpack.c.l.b16 %v1715
        %v1746 = vunpack.c.l.b16 %v1718
        %v1747 = vunpack.c.l.b16 %v1722
        %v1748 = vunpack.c.l.b16 %v1725
        %v1749 = vunpack.c.l.b16 %v1729
        %v1750 = vunpack.c.l.b16 %v1732
        %v1751 = vpack.c.b16 %v1736, %v1735
        %v1752 = vpack.c.b16 %v1738, %v1737
        %v1753 = vpack.c.b16 %v1740, %v1739
        %v1754 = vpack.c.b16 %v1742, %v1741
        %v1755 = vpack.c.b16 %v1744, %v1743
        %v1756 = vpack.c.b16 %v1746, %v1745
        %v1757 = vpack.c.b16 %v1748, %v1747
        %v1758 = vpack.c.b16 %v1750, %v1749
        %v1761 = vunpack.c.l.s4 1983009808
        %v1762 = vunpack.c.0.s8 %v1761
        %v1763 = vlaneseq
        %v1764 = vshrl.u32 %v1763, 7
        %v1765 = vsub.s32 %v1762, %v1764
        %v1766 = vrot.slane %v1734, %v1765
        %v1767 = vcombine.high %v1766, %v1766
        %v1769 = vsel %vm615, %v1751, 0
        %v1772 = vsel %vm615, %v1752, 0
        %v1775 = vsel %vm615, %v1753, 0
        %v1778 = vsel %vm615, %v1754, 0
        %v1781 = vsel %vm615, %v1755, 0
        %v1784 = vsel %vm615, %v1756, 0
        %v1787 = vsel %vm615, %v1757, 0
        %v1790 = vsel %vm615, %v1758, 0
        %v1793 = vsel %vm640, %v1766, 0
        %v1796 = vsel %vm640, %v1767, 0
        %1798 = vmatprep.subr.bf16.mxu0 %v1796
        %1799 = vmatpush1.bf16.msra.mxu0 %v1793
        %1800 = vmatprep.subr.bf16.mxu0 0
        %1801 = vmatpush1.bf16.msra.mxu0 0
        %1802 = vmatprep.subr.bf16.mxu0 0
        %1803 = vmatpush1.bf16.msra.mxu0 0
        %1804 = vmatprep.subr.bf16.mxu0 0
        %1805 = vmatpush1.bf16.msra.mxu0 0
        %1806 = vmatprep.subr.bf16.mxu0 0
        %1807 = vmatpush1.bf16.msra.mxu0 0
        %1808 = vmatprep.subr.bf16.mxu0 0
        %1809 = vmatpush1.bf16.msra.mxu0 0
        %1810 = vmatprep.subr.bf16.mxu0 0
        %1811 = vmatpush1.bf16.msra.mxu0 0
        %1812 = vmatprep.subr.bf16.mxu0 0
        %1813 = vmatpush1.bf16.msra.mxu0 0
        %1814 = vmatprep.subr.bf16.mxu0 0
        %1815 = vmatpush1.bf16.msra.mxu0 0
        %1816 = vmatprep.subr.bf16.mxu0 0
        %1817 = vmatpush1.bf16.msra.mxu0 0
        %1818 = vmatprep.subr.bf16.mxu0 0
        %1819 = vmatpush1.bf16.msra.mxu0 0
        %1820 = vmatprep.subr.bf16.mxu0 0
        %1821 = vmatpush1.bf16.msra.mxu0 0
        %1822 = vmatprep.subr.bf16.mxu0 0
        %1823 = vmatpush1.bf16.msra.mxu0 0
        %1824 = vmatprep.subr.bf16.mxu0 0
        %1825 = vmatpush1.bf16.msra.mxu0 0
        %1826 = vmatprep.subr.bf16.mxu0 0
        %1827 = vmatpush1.bf16.msra.mxu0 0
        %1828 = vmatprep.subr.bf16.mxu0 0
        %1829 = vmatpush1.bf16.msra.mxu0 0
        %1830 = vmatprep.mubr.bf16.mxu0 0
        %1831 = vmatmul.mubr.bf16.gmra.mrb[0].mxu0 %v1769
        %v1832 = vpop.f32.mrb[0].mxu0
        %v1833 = vadd.f32 0.0, %v1832
        %v1834 = vpop.f32.mrb[0].mxu0
        %v1835 = vadd.f32 0.0, %v1834
        %v1836 = vpop.f32.mrb[0].mxu0
        %v1837 = vadd.f32 0.0, %v1836
        %v1838 = vpop.f32.mrb[0].mxu0
        %v1839 = vadd.f32 0.0, %v1838
        %1840 = vmatprep.mubr.bf16.mxu0 0
        %1841 = vmatmul.mubr.bf16.gmra.mrb[0].mxu0 %v1772
        %v1842 = vpop.f32.mrb[0].mxu0
        %v1843 = vadd.f32 0.0, %v1842
        %v1844 = vpop.f32.mrb[0].mxu0
        %v1845 = vadd.f32 0.0, %v1844
        %v1846 = vpop.f32.mrb[0].mxu0
        %v1847 = vadd.f32 0.0, %v1846
        %v1848 = vpop.f32.mrb[0].mxu0
        %v1849 = vadd.f32 0.0, %v1848
        %1850 = vmatprep.mubr.bf16.mxu0 0
        %1851 = vmatmul.mubr.bf16.gmra.mrb[0].mxu0 %v1775
        %v1852 = vpop.f32.mrb[0].mxu0
        %v1853 = vadd.f32 0.0, %v1852
        %v1854 = vpop.f32.mrb[0].mxu0
        %v1855 = vadd.f32 0.0, %v1854
        %v1856 = vpop.f32.mrb[0].mxu0
        %v1857 = vadd.f32 0.0, %v1856
        %v1858 = vpop.f32.mrb[0].mxu0
        %v1859 = vadd.f32 0.0, %v1858
        %1860 = vmatprep.mubr.bf16.mxu0 0
        %1861 = vmatmul.mubr.bf16.gmra.mrb[0].mxu0 %v1778
        %v1862 = vpop.f32.mrb[0].mxu0
        %v1863 = vadd.f32 0.0, %v1862
        %v1864 = vpop.f32.mrb[0].mxu0
        %v1865 = vadd.f32 0.0, %v1864
        %v1866 = vpop.f32.mrb[0].mxu0
        %v1867 = vadd.f32 0.0, %v1866
        %v1868 = vpop.f32.mrb[0].mxu0
        %v1869 = vadd.f32 0.0, %v1868
        %1870 = vmatprep.mubr.bf16.mxu0 0
        %1871 = vmatmul.mubr.bf16.gmra.mrb[0].mxu0 %v1781
        %v1872 = vpop.f32.mrb[0].mxu0
        %v1873 = vadd.f32 0.0, %v1872
        %v1874 = vpop.f32.mrb[0].mxu0
        %v1875 = vadd.f32 0.0, %v1874
        %v1876 = vpop.f32.mrb[0].mxu0
        %v1877 = vadd.f32 0.0, %v1876
        %v1878 = vpop.f32.mrb[0].mxu0
        %v1879 = vadd.f32 0.0, %v1878
        %1880 = vmatprep.mubr.bf16.mxu0 0
        %1881 = vmatmul.mubr.bf16.gmra.mrb[0].mxu0 %v1784
        %v1882 = vpop.f32.mrb[0].mxu0
        %v1883 = vadd.f32 0.0, %v1882
        %v1884 = vpop.f32.mrb[0].mxu0
        %v1885 = vadd.f32 0.0, %v1884
        %v1886 = vpop.f32.mrb[0].mxu0
        %v1887 = vadd.f32 0.0, %v1886
        %v1888 = vpop.f32.mrb[0].mxu0
        %v1889 = vadd.f32 0.0, %v1888
        %1890 = vmatprep.mubr.bf16.mxu0 0
        %1891 = vmatmul.mubr.bf16.gmra.mrb[0].mxu0 %v1787
        %v1892 = vpop.f32.mrb[0].mxu0
        %v1893 = vadd.f32 0.0, %v1892
        %v1894 = vpop.f32.mrb[0].mxu0
        %v1895 = vadd.f32 0.0, %v1894
        %v1896 = vpop.f32.mrb[0].mxu0
        %v1897 = vadd.f32 0.0, %v1896
        %v1898 = vpop.f32.mrb[0].mxu0
        %v1899 = vadd.f32 0.0, %v1898
        %1900 = vmatprep.mubr.bf16.mxu0 0
        %1901 = vmatmul.mubr.bf16.gmra.mrb[0].mxu0 %v1790
        %v1902 = vpop.f32.mrb[0].mxu0
        %v1903 = vadd.f32 0.0, %v1902
        %v1904 = vpop.f32.mrb[0].mxu0
        %v1905 = vadd.f32 0.0, %v1904
        %v1906 = vpop.f32.mrb[0].mxu0
        %v1907 = vadd.f32 0.0, %v1906
        %v1908 = vpop.f32.mrb[0].mxu0
        %v1909 = vadd.f32 0.0, %v1908
        %1910 = vdwg.mxu0
        %v1911 = vadd.f32 %v1548, %v1833
        %v1912 = vadd.f32 %v1550, %v1835
        %v1913 = vadd.f32 %v1552, %v1837
        %v1914 = vadd.f32 %v1554, %v1839
        %v1915 = vadd.f32 %v1558, %v1843
        %v1916 = vadd.f32 %v1560, %v1845
        %v1917 = vadd.f32 %v1562, %v1847
        %v1918 = vadd.f32 %v1564, %v1849
        %v1919 = vadd.f32 %v1568, %v1853
        %v1920 = vadd.f32 %v1570, %v1855
        %v1921 = vadd.f32 %v1572, %v1857
        %v1922 = vadd.f32 %v1574, %v1859
        %v1923 = vadd.f32 %v1578, %v1863
        %v1924 = vadd.f32 %v1580, %v1865
        %v1925 = vadd.f32 %v1582, %v1867
        %v1926 = vadd.f32 %v1584, %v1869
        %v1927 = vadd.f32 %v1588, %v1873
        %v1928 = vadd.f32 %v1590, %v1875
        %v1929 = vadd.f32 %v1592, %v1877
        %v1930 = vadd.f32 %v1594, %v1879
        %v1931 = vadd.f32 %v1598, %v1883
        %v1932 = vadd.f32 %v1600, %v1885
        %v1933 = vadd.f32 %v1602, %v1887
        %v1934 = vadd.f32 %v1604, %v1889
        %v1935 = vadd.f32 %v1608, %v1893
        %v1936 = vadd.f32 %v1610, %v1895
        %v1937 = vadd.f32 %v1612, %v1897
        %v1938 = vadd.f32 %v1614, %v1899
        %v1939 = vadd.f32 %v1618, %v1903
        %v1940 = vadd.f32 %v1620, %v1905
        %v1941 = vadd.f32 %v1622, %v1907
        %v1942 = vadd.f32 %v1624, %v1909
        %v1943 = vld [vmem:[%s329] sm:$0xe]
        %v1944 = vld [vmem:[%s329 + $0x4] sm:$0xf]
        %v1945 = vld [vmem:[%s329 + $0x8] sm:$0x1]
        %v1946 = vld [vmem:[%s329 + $0xc] sm:$0xe]
        %v1947 = vld [vmem:[%s329 + $0x10] sm:$0xf]
        %v1948 = vld [vmem:[%s329 + $0x14] sm:$0x1]
        %v1949 = vld [vmem:[%s329 + $0x18] sm:$0xe]
        %v1950 = vld [vmem:[%s329 + $0x1c] sm:$0xf]
        %v1951 = vld [vmem:[%s329 + $0x20] sm:$0x1]
        %v1952 = vld [vmem:[%s329 + $0x24] sm:$0xe]
        %v1953 = vld [vmem:[%s329 + $0x28] sm:$0xf]
        %v1954 = vld [vmem:[%s329 + $0x2c] sm:$0x1]
        %v1955 = vld [vmem:[%s329 + $0x30] sm:$0xe]
        %v1956 = vld [vmem:[%s329 + $0x34] sm:$0xf]
        %v1957 = vld [vmem:[%s329 + $0x38] sm:$0x1]
        %v1958 = vld [vmem:[%s329 + $0x3c] sm:$0xe]
        %v1959 = vld [vmem:[%s329 + $0x40] sm:$0xf]
        %v1960 = vld [vmem:[%s329 + $0x44] sm:$0x1]
        %v1961 = vld [vmem:[%s329 + $0x48] sm:$0xe]
        %v1962 = vld [vmem:[%s329 + $0x4c] sm:$0xf]
        %v1963 = vld [vmem:[%s329 + $0x50] sm:$0x1]
        %v1964 = vld [vmem:[%s329 + $0x54] sm:$0xe]
        %v1965 = vld [vmem:[%s329 + $0x58] sm:$0xf]
        %v1966 = vld [vmem:[%s329 + $0x5c] sm:$0x1]
        %v1991 = vrot.slane %v1943, 5
        %v1992 = vrot.slane %v1991, 4
        %v1993 = vrot.slane %v1944, 5
        %v1994 = vsel %vm982, %v1992, %v1993
        %v1995 = vrot.slane %v1993, 4
        %v1996 = vrot.slane %v1945, 5
        %v1997 = vsel %vm982, %v1995, %v1996
        %v1998 = vrot.slane %v1946, 5
        %v1999 = vrot.slane %v1998, 4
        %v2000 = vrot.slane %v1947, 5
        %v2001 = vsel %vm982, %v1999, %v2000
        %v2002 = vrot.slane %v2000, 4
        %v2003 = vrot.slane %v1948, 5
        %v2004 = vsel %vm982, %v2002, %v2003
        %v2005 = vrot.slane %v1949, 5
        %v2006 = vrot.slane %v2005, 4
        %v2007 = vrot.slane %v1950, 5
        %v2008 = vsel %vm982, %v2006, %v2007
        %v2009 = vrot.slane %v2007, 4
        %v2010 = vrot.slane %v1951, 5
        %v2011 = vsel %vm982, %v2009, %v2010
        %v2012 = vrot.slane %v1952, 5
        %v2013 = vrot.slane %v2012, 4
        %v2014 = vrot.slane %v1953, 5
        %v2015 = vsel %vm982, %v2013, %v2014
        %v2016 = vrot.slane %v2014, 4
        %v2017 = vrot.slane %v1954, 5
        %v2018 = vsel %vm982, %v2016, %v2017
        %v2019 = vrot.slane %v1955, 5
        %v2020 = vrot.slane %v2019, 4
        %v2021 = vrot.slane %v1956, 5
        %v2022 = vsel %vm982, %v2020, %v2021
        %v2023 = vrot.slane %v2021, 4
        %v2024 = vrot.slane %v1957, 5
        %v2025 = vsel %vm982, %v2023, %v2024
        %v2026 = vrot.slane %v1958, 5
        %v2027 = vrot.slane %v2026, 4
        %v2028 = vrot.slane %v1959, 5
        %v2029 = vsel %vm982, %v2027, %v2028
        %v2030 = vrot.slane %v2028, 4
        %v2031 = vrot.slane %v1960, 5
        %v2032 = vsel %vm982, %v2030, %v2031
        %v2033 = vrot.slane %v1961, 5
        %v2034 = vrot.slane %v2033, 4
        %v2035 = vrot.slane %v1962, 5
        %v2036 = vsel %vm982, %v2034, %v2035
        %v2037 = vrot.slane %v2035, 4
        %v2038 = vrot.slane %v1963, 5
        %v2039 = vsel %vm982, %v2037, %v2038
        %v2040 = vrot.slane %v1964, 5
        %v2041 = vrot.slane %v2040, 4
        %v2042 = vrot.slane %v1965, 5
        %v2043 = vsel %vm982, %v2041, %v2042
        %v2044 = vrot.slane %v2042, 4
        %v2045 = vrot.slane %v1966, 5
        %v2046 = vsel %vm982, %v2044, %v2045
        %s2047 = scalar_lea.vmem %s3, 12
        %v2048 = vld [vmem:[%s2047] sm:$0xf]
        %v2049 = vunpack.c.l.b16 %v1994
        %v2050 = vunpack.c.l.b16 %v1997
        %v2051 = vunpack.c.l.b16 %v2001
        %v2052 = vunpack.c.l.b16 %v2004
        %v2053 = vunpack.c.l.b16 %v2008
        %v2054 = vunpack.c.l.b16 %v2011
        %v2055 = vunpack.c.l.b16 %v2015
        %v2056 = vunpack.c.l.b16 %v2018
        %v2057 = vunpack.c.l.b16 %v2022
        %v2058 = vunpack.c.l.b16 %v2025
        %v2059 = vunpack.c.l.b16 %v2029
        %v2060 = vunpack.c.l.b16 %v2032
        %v2061 = vunpack.c.l.b16 %v2036
        %v2062 = vunpack.c.l.b16 %v2039
        %v2063 = vunpack.c.l.b16 %v2043
        %v2064 = vunpack.c.l.b16 %v2046
        %v2065 = vpack.c.b16 %v2050, %v2049
        %v2066 = vpack.c.b16 %v2052, %v2051
        %v2067 = vpack.c.b16 %v2054, %v2053
        %v2068 = vpack.c.b16 %v2056, %v2055
        %v2069 = vpack.c.b16 %v2058, %v2057
        %v2070 = vpack.c.b16 %v2060, %v2059
        %v2071 = vpack.c.b16 %v2062, %v2061
        %v2072 = vpack.c.b16 %v2064, %v2063
        %v2075 = vunpack.c.l.s4 1983009808
        %v2076 = vunpack.c.0.s8 %v2075
        %v2077 = vlaneseq
        %v2078 = vshrl.u32 %v2077, 7
        %v2079 = vsub.s32 %v2076, %v2078
        %v2080 = vrot.slane %v2048, %v2079
        %v2081 = vcombine.high %v2080, %v2080
        %v2083 = vsel %vm615, %v2065, 0
        %v2086 = vsel %vm615, %v2066, 0
        %v2089 = vsel %vm615, %v2067, 0
        %v2092 = vsel %vm615, %v2068, 0
        %v2095 = vsel %vm615, %v2069, 0
        %v2098 = vsel %vm615, %v2070, 0
        %v2101 = vsel %vm615, %v2071, 0
        %v2104 = vsel %vm615, %v2072, 0
        %v2107 = vsel %vm640, %v2080, 0
        %v2110 = vsel %vm640, %v2081, 0
        %2112 = vmatprep.subr.bf16.mxu0 %v2110
        %2113 = vmatpush1.bf16.msra.mxu0 %v2107
        %2114 = vmatprep.subr.bf16.mxu0 0
        %2115 = vmatpush1.bf16.msra.mxu0 0
        %2116 = vmatprep.subr.bf16.mxu0 0
        %2117 = vmatpush1.bf16.msra.mxu0 0
        %2118 = vmatprep.subr.bf16.mxu0 0
        %2119 = vmatpush1.bf16.msra.mxu0 0
        %2120 = vmatprep.subr.bf16.mxu0 0
        %2121 = vmatpush1.bf16.msra.mxu0 0
        %2122 = vmatprep.subr.bf16.mxu0 0
        %2123 = vmatpush1.bf16.msra.mxu0 0
        %2124 = vmatprep.subr.bf16.mxu0 0
        %2125 = vmatpush1.bf16.msra.mxu0 0
        %2126 = vmatprep.subr.bf16.mxu0 0
        %2127 = vmatpush1.bf16.msra.mxu0 0
        %2128 = vmatprep.subr.bf16.mxu0 0
        %2129 = vmatpush1.bf16.msra.mxu0 0
        %2130 = vmatprep.subr.bf16.mxu0 0
        %2131 = vmatpush1.bf16.msra.mxu0 0
        %2132 = vmatprep.subr.bf16.mxu0 0
        %2133 = vmatpush1.bf16.msra.mxu0 0
        %2134 = vmatprep.subr.bf16.mxu0 0
        %2135 = vmatpush1.bf16.msra.mxu0 0
        %2136 = vmatprep.subr.bf16.mxu0 0
        %2137 = vmatpush1.bf16.msra.mxu0 0
        %2138 = vmatprep.subr.bf16.mxu0 0
        %2139 = vmatpush1.bf16.msra.mxu0 0
        %2140 = vmatprep.subr.bf16.mxu0 0
        %2141 = vmatpush1.bf16.msra.mxu0 0
        %2142 = vmatprep.subr.bf16.mxu0 0
        %2143 = vmatpush1.bf16.msra.mxu0 0
        %2144 = vmatprep.mubr.bf16.mxu0 0
        %2145 = vmatmul.mubr.bf16.gmra.mrb[0].mxu0 %v2083
        %v2146 = vpop.f32.mrb[0].mxu0
        %v2147 = vadd.f32 0.0, %v2146
        %v2148 = vpop.f32.mrb[0].mxu0
        %v2149 = vadd.f32 0.0, %v2148
        %v2150 = vpop.f32.mrb[0].mxu0
        %v2151 = vadd.f32 0.0, %v2150
        %v2152 = vpop.f32.mrb[0].mxu0
        %v2153 = vadd.f32 0.0, %v2152
        %2154 = vmatprep.mubr.bf16.mxu0 0
        %2155 = vmatmul.mubr.bf16.gmra.mrb[0].mxu0 %v2086
        %v2156 = vpop.f32.mrb[0].mxu0
        %v2157 = vadd.f32 0.0, %v2156
        %v2158 = vpop.f32.mrb[0].mxu0
        %v2159 = vadd.f32 0.0, %v2158
        %v2160 = vpop.f32.mrb[0].mxu0
        %v2161 = vadd.f32 0.0, %v2160
        %v2162 = vpop.f32.mrb[0].mxu0
        %v2163 = vadd.f32 0.0, %v2162
        %2164 = vmatprep.mubr.bf16.mxu0 0
        %2165 = vmatmul.mubr.bf16.gmra.mrb[0].mxu0 %v2089
        %v2166 = vpop.f32.mrb[0].mxu0
        %v2167 = vadd.f32 0.0, %v2166
        %v2168 = vpop.f32.mrb[0].mxu0
        %v2169 = vadd.f32 0.0, %v2168
        %v2170 = vpop.f32.mrb[0].mxu0
        %v2171 = vadd.f32 0.0, %v2170
        %v2172 = vpop.f32.mrb[0].mxu0
        %v2173 = vadd.f32 0.0, %v2172
        %2174 = vmatprep.mubr.bf16.mxu0 0
        %2175 = vmatmul.mubr.bf16.gmra.mrb[0].mxu0 %v2092
        %v2176 = vpop.f32.mrb[0].mxu0
        %v2177 = vadd.f32 0.0, %v2176
        %v2178 = vpop.f32.mrb[0].mxu0
        %v2179 = vadd.f32 0.0, %v2178
        %v2180 = vpop.f32.mrb[0].mxu0
        %v2181 = vadd.f32 0.0, %v2180
        %v2182 = vpop.f32.mrb[0].mxu0
        %v2183 = vadd.f32 0.0, %v2182
        %2184 = vmatprep.mubr.bf16.mxu0 0
        %2185 = vmatmul.mubr.bf16.gmra.mrb[0].mxu0 %v2095
        %v2186 = vpop.f32.mrb[0].mxu0
        %v2187 = vadd.f32 0.0, %v2186
        %v2188 = vpop.f32.mrb[0].mxu0
        %v2189 = vadd.f32 0.0, %v2188
        %v2190 = vpop.f32.mrb[0].mxu0
        %v2191 = vadd.f32 0.0, %v2190
        %v2192 = vpop.f32.mrb[0].mxu0
        %v2193 = vadd.f32 0.0, %v2192
        %2194 = vmatprep.mubr.bf16.mxu0 0
        %2195 = vmatmul.mubr.bf16.gmra.mrb[0].mxu0 %v2098
        %v2196 = vpop.f32.mrb[0].mxu0
        %v2197 = vadd.f32 0.0, %v2196
        %v2198 = vpop.f32.mrb[0].mxu0
        %v2199 = vadd.f32 0.0, %v2198
        %v2200 = vpop.f32.mrb[0].mxu0
        %v2201 = vadd.f32 0.0, %v2200
        %v2202 = vpop.f32.mrb[0].mxu0
        %v2203 = vadd.f32 0.0, %v2202
        %2204 = vmatprep.mubr.bf16.mxu0 0
        %2205 = vmatmul.mubr.bf16.gmra.mrb[0].mxu0 %v2101
        %v2206 = vpop.f32.mrb[0].mxu0
        %v2207 = vadd.f32 0.0, %v2206
        %v2208 = vpop.f32.mrb[0].mxu0
        %v2209 = vadd.f32 0.0, %v2208
        %v2210 = vpop.f32.mrb[0].mxu0
        %v2211 = vadd.f32 0.0, %v2210
        %v2212 = vpop.f32.mrb[0].mxu0
        %v2213 = vadd.f32 0.0, %v2212
        %2214 = vmatprep.mubr.bf16.mxu0 0
        %2215 = vmatmul.mubr.bf16.gmra.mrb[0].mxu0 %v2104
        %v2216 = vpop.f32.mrb[0].mxu0
        %v2217 = vadd.f32 0.0, %v2216
        %v2218 = vpop.f32.mrb[0].mxu0
        %v2219 = vadd.f32 0.0, %v2218
        %v2220 = vpop.f32.mrb[0].mxu0
        %v2221 = vadd.f32 0.0, %v2220
        %v2222 = vpop.f32.mrb[0].mxu0
        %v2223 = vadd.f32 0.0, %v2222
        %2224 = vdwg.mxu0
        %v2225 = vadd.f32 %v1911, %v2147
        %v2226 = vadd.f32 %v1912, %v2149
        %v2227 = vadd.f32 %v1913, %v2151
        %v2228 = vadd.f32 %v1914, %v2153
        %v2229 = vadd.f32 %v1915, %v2157
        %v2230 = vadd.f32 %v1916, %v2159
        %v2231 = vadd.f32 %v1917, %v2161
        %v2232 = vadd.f32 %v1918, %v2163
        %v2233 = vadd.f32 %v1919, %v2167
        %v2234 = vadd.f32 %v1920, %v2169
        %v2235 = vadd.f32 %v1921, %v2171
        %v2236 = vadd.f32 %v1922, %v2173
        %v2237 = vadd.f32 %v1923, %v2177
        %v2238 = vadd.f32 %v1924, %v2179
        %v2239 = vadd.f32 %v1925, %v2181
        %v2240 = vadd.f32 %v1926, %v2183
        %v2241 = vadd.f32 %v1927, %v2187
        %v2242 = vadd.f32 %v1928, %v2189
        %v2243 = vadd.f32 %v1929, %v2191
        %v2244 = vadd.f32 %v1930, %v2193
        %v2245 = vadd.f32 %v1931, %v2197
        %v2246 = vadd.f32 %v1932, %v2199
        %v2247 = vadd.f32 %v1933, %v2201
        %v2248 = vadd.f32 %v1934, %v2203
        %v2249 = vadd.f32 %v1935, %v2207
        %v2250 = vadd.f32 %v1936, %v2209
        %v2251 = vadd.f32 %v1937, %v2211
        %v2252 = vadd.f32 %v1938, %v2213
        %v2253 = vadd.f32 %v1939, %v2217
        %v2254 = vadd.f32 %v1940, %v2219
        %v2255 = vadd.f32 %v1941, %v2221
        %v2256 = vadd.f32 %v1942, %v2223
        %s2257 = scalar_lea.vmem %s3, 16
        %v2258 = vld [vmem:[%s2257] sm:$0xf]
        %v2261 = vunpack.c.l.s4 1983009808
        %v2262 = vunpack.c.0.s8 %v2261
        %v2263 = vlaneseq
        %v2264 = vshrl.u32 %v2263, 7
        %v2265 = vsub.s32 %v2262, %v2264
        %v2266 = vrot.slane %v2258, %v2265
        %v2267 = vcombine.high %v2266, %v2266
        %v2269 = vsel %vm640, %v2266, 0
        %v2272 = vsel %vm640, %v2267, 0
        %2274 = vmatprep.subr.bf16.mxu0 %v2272
        %2275 = vmatpush1.bf16.msra.mxu0 %v2269
        %2276 = vmatprep.subr.bf16.mxu0 0
        %2277 = vmatpush1.bf16.msra.mxu0 0
        %2278 = vmatprep.subr.bf16.mxu0 0
        %2279 = vmatpush1.bf16.msra.mxu0 0
        %2280 = vmatprep.subr.bf16.mxu0 0
        %2281 = vmatpush1.bf16.msra.mxu0 0
        %2282 = vmatprep.subr.bf16.mxu0 0
        %2283 = vmatpush1.bf16.msra.mxu0 0
        %2284 = vmatprep.subr.bf16.mxu0 0
        %2285 = vmatpush1.bf16.msra.mxu0 0
        %2286 = vmatprep.subr.bf16.mxu0 0
        %2287 = vmatpush1.bf16.msra.mxu0 0
        %2288 = vmatprep.subr.bf16.mxu0 0
        %2289 = vmatpush1.bf16.msra.mxu0 0
        %2290 = vmatprep.subr.bf16.mxu0 0
        %2291 = vmatpush1.bf16.msra.mxu0 0
        %2292 = vmatprep.subr.bf16.mxu0 0
        %2293 = vmatpush1.bf16.msra.mxu0 0
        %2294 = vmatprep.subr.bf16.mxu0 0
        %2295 = vmatpush1.bf16.msra.mxu0 0
        %2296 = vmatprep.subr.bf16.mxu0 0
        %2297 = vmatpush1.bf16.msra.mxu0 0
        %2298 = vmatprep.subr.bf16.mxu0 0
        %2299 = vmatpush1.bf16.msra.mxu0 0
        %2300 = vmatprep.subr.bf16.mxu0 0
        %2301 = vmatpush1.bf16.msra.mxu0 0
        %2302 = vmatprep.subr.bf16.mxu0 0
        %2303 = vmatpush1.bf16.msra.mxu0 0
        %2304 = vmatprep.subr.bf16.mxu0 0
        %2305 = vmatpush1.bf16.msra.mxu0 0
        %2306 = vmatprep.mubr.bf16.mxu0 0
        %2307 = vmatmul.mubr.bf16.gmra.mrb[0].mxu0 %v617
        %v2308 = vpop.f32.mrb[0].mxu0
        %v2309 = vadd.f32 0.0, %v2308
        %v2310 = vpop.f32.mrb[0].mxu0
        %v2311 = vadd.f32 0.0, %v2310
        %v2312 = vpop.f32.mrb[0].mxu0
        %v2313 = vadd.f32 0.0, %v2312
        %v2314 = vpop.f32.mrb[0].mxu0
        %v2315 = vadd.f32 0.0, %v2314
        %2316 = vmatprep.mubr.bf16.mxu0 0
        %2317 = vmatmul.mubr.bf16.gmra.mrb[0].mxu0 %v620
        %v2318 = vpop.f32.mrb[0].mxu0
        %v2319 = vadd.f32 0.0, %v2318
        %v2320 = vpop.f32.mrb[0].mxu0
        %v2321 = vadd.f32 0.0, %v2320
        %v2322 = vpop.f32.mrb[0].mxu0
        %v2323 = vadd.f32 0.0, %v2322
        %v2324 = vpop.f32.mrb[0].mxu0
        %v2325 = vadd.f32 0.0, %v2324
        %2326 = vmatprep.mubr.bf16.mxu0 0
        %2327 = vmatmul.mubr.bf16.gmra.mrb[0].mxu0 %v623
        %v2328 = vpop.f32.mrb[0].mxu0
        %v2329 = vadd.f32 0.0, %v2328
        %v2330 = vpop.f32.mrb[0].mxu0
        %v2331 = vadd.f32 0.0, %v2330
        %v2332 = vpop.f32.mrb[0].mxu0
        %v2333 = vadd.f32 0.0, %v2332
        %v2334 = vpop.f32.mrb[0].mxu0
        %v2335 = vadd.f32 0.0, %v2334
        %2336 = vmatprep.mubr.bf16.mxu0 0
        %2337 = vmatmul.mubr.bf16.gmra.mrb[0].mxu0 %v626
        %v2338 = vpop.f32.mrb[0].mxu0
        %v2339 = vadd.f32 0.0, %v2338
        %v2340 = vpop.f32.mrb[0].mxu0
        %v2341 = vadd.f32 0.0, %v2340
        %v2342 = vpop.f32.mrb[0].mxu0
        %v2343 = vadd.f32 0.0, %v2342
        %v2344 = vpop.f32.mrb[0].mxu0
        %v2345 = vadd.f32 0.0, %v2344
        %2346 = vmatprep.mubr.bf16.mxu0 0
        %2347 = vmatmul.mubr.bf16.gmra.mrb[0].mxu0 %v629
        %v2348 = vpop.f32.mrb[0].mxu0
        %v2349 = vadd.f32 0.0, %v2348
        %v2350 = vpop.f32.mrb[0].mxu0
        %v2351 = vadd.f32 0.0, %v2350
        %v2352 = vpop.f32.mrb[0].mxu0
        %v2353 = vadd.f32 0.0, %v2352
        %v2354 = vpop.f32.mrb[0].mxu0
        %v2355 = vadd.f32 0.0, %v2354
        %2356 = vmatprep.mubr.bf16.mxu0 0
        %2357 = vmatmul.mubr.bf16.gmra.mrb[0].mxu0 %v632
        %v2358 = vpop.f32.mrb[0].mxu0
        %v2359 = vadd.f32 0.0, %v2358
        %v2360 = vpop.f32.mrb[0].mxu0
        %v2361 = vadd.f32 0.0, %v2360
        %v2362 = vpop.f32.mrb[0].mxu0
        %v2363 = vadd.f32 0.0, %v2362
        %v2364 = vpop.f32.mrb[0].mxu0
        %v2365 = vadd.f32 0.0, %v2364
        %2366 = vmatprep.mubr.bf16.mxu0 0
        %2367 = vmatmul.mubr.bf16.gmra.mrb[0].mxu0 %v635
        %v2368 = vpop.f32.mrb[0].mxu0
        %v2369 = vadd.f32 0.0, %v2368
        %v2370 = vpop.f32.mrb[0].mxu0
        %v2371 = vadd.f32 0.0, %v2370
        %v2372 = vpop.f32.mrb[0].mxu0
        %v2373 = vadd.f32 0.0, %v2372
        %v2374 = vpop.f32.mrb[0].mxu0
        %v2375 = vadd.f32 0.0, %v2374
        %2376 = vmatprep.mubr.bf16.mxu0 0
        %2377 = vmatmul.mubr.bf16.gmra.mrb[0].mxu0 %v638
        %v2378 = vpop.f32.mrb[0].mxu0
        %v2379 = vadd.f32 0.0, %v2378
        %v2380 = vpop.f32.mrb[0].mxu0
        %v2381 = vadd.f32 0.0, %v2380
        %v2382 = vpop.f32.mrb[0].mxu0
        %v2383 = vadd.f32 0.0, %v2382
        %v2384 = vpop.f32.mrb[0].mxu0
        %v2385 = vadd.f32 0.0, %v2384
        %2386 = vdwg.mxu0
        %v2387 = vadd.f32 %v2225, %v2309
        %v2388 = vadd.f32 %v2226, %v2311
        %v2389 = vadd.f32 %v2227, %v2313
        %v2390 = vadd.f32 %v2228, %v2315
        %v2391 = vadd.f32 %v2229, %v2319
        %v2392 = vadd.f32 %v2230, %v2321
        %v2393 = vadd.f32 %v2231, %v2323
        %v2394 = vadd.f32 %v2232, %v2325
        %v2395 = vadd.f32 %v2233, %v2329
        %v2396 = vadd.f32 %v2234, %v2331
        %v2397 = vadd.f32 %v2235, %v2333
        %v2398 = vadd.f32 %v2236, %v2335
        %v2399 = vadd.f32 %v2237, %v2339
        %v2400 = vadd.f32 %v2238, %v2341
        %v2401 = vadd.f32 %v2239, %v2343
        %v2402 = vadd.f32 %v2240, %v2345
        %v2403 = vadd.f32 %v2241, %v2349
        %v2404 = vadd.f32 %v2242, %v2351
        %v2405 = vadd.f32 %v2243, %v2353
        %v2406 = vadd.f32 %v2244, %v2355
        %v2407 = vadd.f32 %v2245, %v2359
        %v2408 = vadd.f32 %v2246, %v2361
        %v2409 = vadd.f32 %v2247, %v2363
        %v2410 = vadd.f32 %v2248, %v2365
        %v2411 = vadd.f32 %v2249, %v2369
        %v2412 = vadd.f32 %v2250, %v2371
        %v2413 = vadd.f32 %v2251, %v2373
        %v2414 = vadd.f32 %v2252, %v2375
        %v2415 = vadd.f32 %v2253, %v2379
        %v2416 = vadd.f32 %v2254, %v2381
        %v2417 = vadd.f32 %v2255, %v2383
        %v2418 = vadd.f32 %v2256, %v2385
        %v2419 = vld [vmem:[%s329] sm:$0xc]
        %v2420 = vld [vmem:[%s329 + $0x4] sm:$0xf]
        %v2421 = vld [vmem:[%s329 + $0x8] sm:$0x3]
        %v2422 = vld [vmem:[%s329 + $0xc] sm:$0xc]
        %v2423 = vld [vmem:[%s329 + $0x10] sm:$0xf]
        %v2424 = vld [vmem:[%s329 + $0x14] sm:$0x3]
        %v2425 = vld [vmem:[%s329 + $0x18] sm:$0xc]
        %v2426 = vld [vmem:[%s329 + $0x1c] sm:$0xf]
        %v2427 = vld [vmem:[%s329 + $0x20] sm:$0x3]
        %v2428 = vld [vmem:[%s329 + $0x24] sm:$0xc]
        %v2429 = vld [vmem:[%s329 + $0x28] sm:$0xf]
        %v2430 = vld [vmem:[%s329 + $0x2c] sm:$0x3]
        %v2431 = vld [vmem:[%s329 + $0x30] sm:$0xc]
        %v2432 = vld [vmem:[%s329 + $0x34] sm:$0xf]
        %v2433 = vld [vmem:[%s329 + $0x38] sm:$0x3]
        %v2434 = vld [vmem:[%s329 + $0x3c] sm:$0xc]
        %v2435 = vld [vmem:[%s329 + $0x40] sm:$0xf]
        %v2436 = vld [vmem:[%s329 + $0x44] sm:$0x3]
        %v2437 = vld [vmem:[%s329 + $0x48] sm:$0xc]
        %v2438 = vld [vmem:[%s329 + $0x4c] sm:$0xf]
        %v2439 = vld [vmem:[%s329 + $0x50] sm:$0x3]
        %v2440 = vld [vmem:[%s329 + $0x54] sm:$0xc]
        %v2441 = vld [vmem:[%s329 + $0x58] sm:$0xf]
        %v2442 = vld [vmem:[%s329 + $0x5c] sm:$0x3]
        %v2467 = vrot.slane %v2419, 6
        %v2468 = vrot.slane %v2467, 4
        %v2469 = vrot.slane %v2420, 6
        %v2470 = vsel %vm1676, %v2468, %v2469
        %v2471 = vrot.slane %v2469, 4
        %v2472 = vrot.slane %v2421, 6
        %v2473 = vsel %vm1676, %v2471, %v2472
        %v2474 = vrot.slane %v2422, 6
        %v2475 = vrot.slane %v2474, 4
        %v2476 = vrot.slane %v2423, 6
        %v2477 = vsel %vm1676, %v2475, %v2476
        %v2478 = vrot.slane %v2476, 4
        %v2479 = vrot.slane %v2424, 6
        %v2480 = vsel %vm1676, %v2478, %v2479
        %v2481 = vrot.slane %v2425, 6
        %v2482 = vrot.slane %v2481, 4
        %v2483 = vrot.slane %v2426, 6
        %v2484 = vsel %vm1676, %v2482, %v2483
        %v2485 = vrot.slane %v2483, 4
        %v2486 = vrot.slane %v2427, 6
        %v2487 = vsel %vm1676, %v2485, %v2486
        %v2488 = vrot.slane %v2428, 6
        %v2489 = vrot.slane %v2488, 4
        %v2490 = vrot.slane %v2429, 6
        %v2491 = vsel %vm1676, %v2489, %v2490
        %v2492 = vrot.slane %v2490, 4
        %v2493 = vrot.slane %v2430, 6
        %v2494 = vsel %vm1676, %v2492, %v2493
        %v2495 = vrot.slane %v2431, 6
        %v2496 = vrot.slane %v2495, 4
        %v2497 = vrot.slane %v2432, 6
        %v2498 = vsel %vm1676, %v2496, %v2497
        %v2499 = vrot.slane %v2497, 4
        %v2500 = vrot.slane %v2433, 6
        %v2501 = vsel %vm1676, %v2499, %v2500
        %v2502 = vrot.slane %v2434, 6
        %v2503 = vrot.slane %v2502, 4
        %v2504 = vrot.slane %v2435, 6
        %v2505 = vsel %vm1676, %v2503, %v2504
        %v2506 = vrot.slane %v2504, 4
        %v2507 = vrot.slane %v2436, 6
        %v2508 = vsel %vm1676, %v2506, %v2507
        %v2509 = vrot.slane %v2437, 6
        %v2510 = vrot.slane %v2509, 4
        %v2511 = vrot.slane %v2438, 6
        %v2512 = vsel %vm1676, %v2510, %v2511
        %v2513 = vrot.slane %v2511, 4
        %v2514 = vrot.slane %v2439, 6
        %v2515 = vsel %vm1676, %v2513, %v2514
        %v2516 = vrot.slane %v2440, 6
        %v2517 = vrot.slane %v2516, 4
        %v2518 = vrot.slane %v2441, 6
        %v2519 = vsel %vm1676, %v2517, %v2518
        %v2520 = vrot.slane %v2518, 4
        %v2521 = vrot.slane %v2442, 6
        %v2522 = vsel %vm1676, %v2520, %v2521
        %s2523 = scalar_lea.vmem %s3, 20
        %v2524 = vld [vmem:[%s2523] sm:$0xf]
        %v2525 = vunpack.c.l.b16 %v2470
        %v2526 = vunpack.c.l.b16 %v2473
        %v2527 = vunpack.c.l.b16 %v2477
        %v2528 = vunpack.c.l.b16 %v2480
        %v2529 = vunpack.c.l.b16 %v2484
        %v2530 = vunpack.c.l.b16 %v2487
        %v2531 = vunpack.c.l.b16 %v2491
        %v2532 = vunpack.c.l.b16 %v2494
        %v2533 = vunpack.c.l.b16 %v2498
        %v2534 = vunpack.c.l.b16 %v2501
        %v2535 = vunpack.c.l.b16 %v2505
        %v2536 = vunpack.c.l.b16 %v2508
        %v2537 = vunpack.c.l.b16 %v2512
        %v2538 = vunpack.c.l.b16 %v2515
        %v2539 = vunpack.c.l.b16 %v2519
        %v2540 = vunpack.c.l.b16 %v2522
        %v2541 = vpack.c.b16 %v2526, %v2525
        %v2542 = vpack.c.b16 %v2528, %v2527
        %v2543 = vpack.c.b16 %v2530, %v2529
        %v2544 = vpack.c.b16 %v2532, %v2531
        %v2545 = vpack.c.b16 %v2534, %v2533
        %v2546 = vpack.c.b16 %v2536, %v2535
        %v2547 = vpack.c.b16 %v2538, %v2537
        %v2548 = vpack.c.b16 %v2540, %v2539
        %v2551 = vunpack.c.l.s4 1983009808
        %v2552 = vunpack.c.0.s8 %v2551
        %v2553 = vlaneseq
        %v2554 = vshrl.u32 %v2553, 7
        %v2555 = vsub.s32 %v2552, %v2554
        %v2556 = vrot.slane %v2524, %v2555
        %v2557 = vcombine.high %v2556, %v2556
        %v2559 = vsel %vm615, %v2541, 0
        %v2562 = vsel %vm615, %v2542, 0
        %v2565 = vsel %vm615, %v2543, 0
        %v2568 = vsel %vm615, %v2544, 0
        %v2571 = vsel %vm615, %v2545, 0
        %v2574 = vsel %vm615, %v2546, 0
        %v2577 = vsel %vm615, %v2547, 0
        %v2580 = vsel %vm615, %v2548, 0
        %v2583 = vsel %vm640, %v2556, 0
        %v2586 = vsel %vm640, %v2557, 0
        %2588 = vmatprep.subr.bf16.mxu0 %v2586
        %2589 = vmatpush1.bf16.msra.mxu0 %v2583
        %2590 = vmatprep.subr.bf16.mxu0 0
        %2591 = vmatpush1.bf16.msra.mxu0 0
        %2592 = vmatprep.subr.bf16.mxu0 0
        %2593 = vmatpush1.bf16.msra.mxu0 0
        %2594 = vmatprep.subr.bf16.mxu0 0
        %2595 = vmatpush1.bf16.msra.mxu0 0
        %2596 = vmatprep.subr.bf16.mxu0 0
        %2597 = vmatpush1.bf16.msra.mxu0 0
        %2598 = vmatprep.subr.bf16.mxu0 0
        %2599 = vmatpush1.bf16.msra.mxu0 0
        %2600 = vmatprep.subr.bf16.mxu0 0
        %2601 = vmatpush1.bf16.msra.mxu0 0
        %2602 = vmatprep.subr.bf16.mxu0 0
        %2603 = vmatpush1.bf16.msra.mxu0 0
        %2604 = vmatprep.subr.bf16.mxu0 0
        %2605 = vmatpush1.bf16.msra.mxu0 0
        %2606 = vmatprep.subr.bf16.mxu0 0
        %2607 = vmatpush1.bf16.msra.mxu0 0
        %2608 = vmatprep.subr.bf16.mxu0 0
        %2609 = vmatpush1.bf16.msra.mxu0 0
        %2610 = vmatprep.subr.bf16.mxu0 0
        %2611 = vmatpush1.bf16.msra.mxu0 0
        %2612 = vmatprep.subr.bf16.mxu0 0
        %2613 = vmatpush1.bf16.msra.mxu0 0
        %2614 = vmatprep.subr.bf16.mxu0 0
        %2615 = vmatpush1.bf16.msra.mxu0 0
        %2616 = vmatprep.subr.bf16.mxu0 0
        %2617 = vmatpush1.bf16.msra.mxu0 0
        %2618 = vmatprep.subr.bf16.mxu0 0
        %2619 = vmatpush1.bf16.msra.mxu0 0
        %2620 = vmatprep.mubr.bf16.mxu0 0
        %2621 = vmatmul.mubr.bf16.gmra.mrb[0].mxu0 %v2559
        %v2622 = vpop.f32.mrb[0].mxu0
        %v2623 = vadd.f32 0.0, %v2622
        %v2624 = vpop.f32.mrb[0].mxu0
        %v2625 = vadd.f32 0.0, %v2624
        %v2626 = vpop.f32.mrb[0].mxu0
        %v2627 = vadd.f32 0.0, %v2626
        %v2628 = vpop.f32.mrb[0].mxu0
        %v2629 = vadd.f32 0.0, %v2628
        %2630 = vmatprep.mubr.bf16.mxu0 0
        %2631 = vmatmul.mubr.bf16.gmra.mrb[0].mxu0 %v2562
        %v2632 = vpop.f32.mrb[0].mxu0
        %v2633 = vadd.f32 0.0, %v2632
        %v2634 = vpop.f32.mrb[0].mxu0
        %v2635 = vadd.f32 0.0, %v2634
        %v2636 = vpop.f32.mrb[0].mxu0
        %v2637 = vadd.f32 0.0, %v2636
        %v2638 = vpop.f32.mrb[0].mxu0
        %v2639 = vadd.f32 0.0, %v2638
        %2640 = vmatprep.mubr.bf16.mxu0 0
        %2641 = vmatmul.mubr.bf16.gmra.mrb[0].mxu0 %v2565
        %v2642 = vpop.f32.mrb[0].mxu0
        %v2643 = vadd.f32 0.0, %v2642
        %v2644 = vpop.f32.mrb[0].mxu0
        %v2645 = vadd.f32 0.0, %v2644
        %v2646 = vpop.f32.mrb[0].mxu0
        %v2647 = vadd.f32 0.0, %v2646
        %v2648 = vpop.f32.mrb[0].mxu0
        %v2649 = vadd.f32 0.0, %v2648
        %2650 = vmatprep.mubr.bf16.mxu0 0
        %2651 = vmatmul.mubr.bf16.gmra.mrb[0].mxu0 %v2568
        %v2652 = vpop.f32.mrb[0].mxu0
        %v2653 = vadd.f32 0.0, %v2652
        %v2654 = vpop.f32.mrb[0].mxu0
        %v2655 = vadd.f32 0.0, %v2654
        %v2656 = vpop.f32.mrb[0].mxu0
        %v2657 = vadd.f32 0.0, %v2656
        %v2658 = vpop.f32.mrb[0].mxu0
        %v2659 = vadd.f32 0.0, %v2658
        %2660 = vmatprep.mubr.bf16.mxu0 0
        %2661 = vmatmul.mubr.bf16.gmra.mrb[0].mxu0 %v2571
        %v2662 = vpop.f32.mrb[0].mxu0
        %v2663 = vadd.f32 0.0, %v2662
        %v2664 = vpop.f32.mrb[0].mxu0
        %v2665 = vadd.f32 0.0, %v2664
        %v2666 = vpop.f32.mrb[0].mxu0
        %v2667 = vadd.f32 0.0, %v2666
        %v2668 = vpop.f32.mrb[0].mxu0
        %v2669 = vadd.f32 0.0, %v2668
        %2670 = vmatprep.mubr.bf16.mxu0 0
        %2671 = vmatmul.mubr.bf16.gmra.mrb[0].mxu0 %v2574
        %v2672 = vpop.f32.mrb[0].mxu0
        %v2673 = vadd.f32 0.0, %v2672
        %v2674 = vpop.f32.mrb[0].mxu0
        %v2675 = vadd.f32 0.0, %v2674
        %v2676 = vpop.f32.mrb[0].mxu0
        %v2677 = vadd.f32 0.0, %v2676
        %v2678 = vpop.f32.mrb[0].mxu0
        %v2679 = vadd.f32 0.0, %v2678
        %2680 = vmatprep.mubr.bf16.mxu0 0
        %2681 = vmatmul.mubr.bf16.gmra.mrb[0].mxu0 %v2577
        %v2682 = vpop.f32.mrb[0].mxu0
        %v2683 = vadd.f32 0.0, %v2682
        %v2684 = vpop.f32.mrb[0].mxu0
        %v2685 = vadd.f32 0.0, %v2684
        %v2686 = vpop.f32.mrb[0].mxu0
        %v2687 = vadd.f32 0.0, %v2686
        %v2688 = vpop.f32.mrb[0].mxu0
        %v2689 = vadd.f32 0.0, %v2688
        %2690 = vmatprep.mubr.bf16.mxu0 0
        %2691 = vmatmul.mubr.bf16.gmra.mrb[0].mxu0 %v2580
        %v2692 = vpop.f32.mrb[0].mxu0
        %v2693 = vadd.f32 0.0, %v2692
        %v2694 = vpop.f32.mrb[0].mxu0
        %v2695 = vadd.f32 0.0, %v2694
        %v2696 = vpop.f32.mrb[0].mxu0
        %v2697 = vadd.f32 0.0, %v2696
        %v2698 = vpop.f32.mrb[0].mxu0
        %v2699 = vadd.f32 0.0, %v2698
        %2700 = vdwg.mxu0
        %v2701 = vadd.f32 %v2387, %v2623
        %v2702 = vadd.f32 %v2388, %v2625
        %v2703 = vadd.f32 %v2389, %v2627
        %v2704 = vadd.f32 %v2390, %v2629
        %v2705 = vadd.f32 %v2391, %v2633
        %v2706 = vadd.f32 %v2392, %v2635
        %v2707 = vadd.f32 %v2393, %v2637
        %v2708 = vadd.f32 %v2394, %v2639
        %v2709 = vadd.f32 %v2395, %v2643
        %v2710 = vadd.f32 %v2396, %v2645
        %v2711 = vadd.f32 %v2397, %v2647
        %v2712 = vadd.f32 %v2398, %v2649
        %v2713 = vadd.f32 %v2399, %v2653
        %v2714 = vadd.f32 %v2400, %v2655
        %v2715 = vadd.f32 %v2401, %v2657
        %v2716 = vadd.f32 %v2402, %v2659
        %v2717 = vadd.f32 %v2403, %v2663
        %v2718 = vadd.f32 %v2404, %v2665
        %v2719 = vadd.f32 %v2405, %v2667
        %v2720 = vadd.f32 %v2406, %v2669
        %v2721 = vadd.f32 %v2407, %v2673
        %v2722 = vadd.f32 %v2408, %v2675
        %v2723 = vadd.f32 %v2409, %v2677
        %v2724 = vadd.f32 %v2410, %v2679
        %v2725 = vadd.f32 %v2411, %v2683
        %v2726 = vadd.f32 %v2412, %v2685
        %v2727 = vadd.f32 %v2413, %v2687
        %v2728 = vadd.f32 %v2414, %v2689
        %v2729 = vadd.f32 %v2415, %v2693
        %v2730 = vadd.f32 %v2416, %v2695
        %v2731 = vadd.f32 %v2417, %v2697
        %v2732 = vadd.f32 %v2418, %v2699
        %s2733 = sadd.s32 %s325, 4
        %s2734 = smul.u32 %s2733, 3
        %s2735 = smul.addr %s2734, 4
        %s2736 = scalar_lea.vmem %s318, %s2735
        %v2737 = vld [vmem:[%s2736] sm:$0xe]
        %v2738 = vld [vmem:[%s2736 + $0x4] sm:$0xf]
        %v2739 = vld [vmem:[%s2736 + $0x8] sm:$0x1]
        %v2740 = vld [vmem:[%s2736 + $0xc] sm:$0xe]
        %v2741 = vld [vmem:[%s2736 + $0x10] sm:$0xf]
        %v2742 = vld [vmem:[%s2736 + $0x14] sm:$0x1]
        %v2743 = vld [vmem:[%s2736 + $0x18] sm:$0xe]
        %v2744 = vld [vmem:[%s2736 + $0x1c] sm:$0xf]
        %v2745 = vld [vmem:[%s2736 + $0x20] sm:$0x1]
        %v2746 = vld [vmem:[%s2736 + $0x24] sm:$0xe]
        %v2747 = vld [vmem:[%s2736 + $0x28] sm:$0xf]
        %v2748 = vld [vmem:[%s2736 + $0x2c] sm:$0x1]
        %v2749 = vld [vmem:[%s2736 + $0x30] sm:$0xe]
        %v2750 = vld [vmem:[%s2736 + $0x34] sm:$0xf]
        %v2751 = vld [vmem:[%s2736 + $0x38] sm:$0x1]
        %v2752 = vld [vmem:[%s2736 + $0x3c] sm:$0xe]
        %v2753 = vld [vmem:[%s2736 + $0x40] sm:$0xf]
        %v2754 = vld [vmem:[%s2736 + $0x44] sm:$0x1]
        %v2755 = vld [vmem:[%s2736 + $0x48] sm:$0xe]
        %v2756 = vld [vmem:[%s2736 + $0x4c] sm:$0xf]
        %v2757 = vld [vmem:[%s2736 + $0x50] sm:$0x1]
        %v2758 = vld [vmem:[%s2736 + $0x54] sm:$0xe]
        %v2759 = vld [vmem:[%s2736 + $0x58] sm:$0xf]
        %v2760 = vld [vmem:[%s2736 + $0x5c] sm:$0x1]
        %v2785 = vrot.slane %v2737, 5
        %v2786 = vrot.slane %v2785, 4
        %v2787 = vrot.slane %v2738, 5
        %v2788 = vsel %vm982, %v2786, %v2787
        %v2789 = vrot.slane %v2787, 4
        %v2790 = vrot.slane %v2739, 5
        %v2791 = vsel %vm982, %v2789, %v2790
        %v2792 = vrot.slane %v2740, 5
        %v2793 = vrot.slane %v2792, 4
        %v2794 = vrot.slane %v2741, 5
        %v2795 = vsel %vm982, %v2793, %v2794
        %v2796 = vrot.slane %v2794, 4
        %v2797 = vrot.slane %v2742, 5
        %v2798 = vsel %vm982, %v2796, %v2797
        %v2799 = vrot.slane %v2743, 5
        %v2800 = vrot.slane %v2799, 4
        %v2801 = vrot.slane %v2744, 5
        %v2802 = vsel %vm982, %v2800, %v2801
        %v2803 = vrot.slane %v2801, 4
        %v2804 = vrot.slane %v2745, 5
        %v2805 = vsel %vm982, %v2803, %v2804
        %v2806 = vrot.slane %v2746, 5
        %v2807 = vrot.slane %v2806, 4
        %v2808 = vrot.slane %v2747, 5
        %v2809 = vsel %vm982, %v2807, %v2808
        %v2810 = vrot.slane %v2808, 4
        %v2811 = vrot.slane %v2748, 5
        %v2812 = vsel %vm982, %v2810, %v2811
        %v2813 = vrot.slane %v2749, 5
        %v2814 = vrot.slane %v2813, 4
        %v2815 = vrot.slane %v2750, 5
        %v2816 = vsel %vm982, %v2814, %v2815
        %v2817 = vrot.slane %v2815, 4
        %v2818 = vrot.slane %v2751, 5
        %v2819 = vsel %vm982, %v2817, %v2818
        %v2820 = vrot.slane %v2752, 5
        %v2821 = vrot.slane %v2820, 4
        %v2822 = vrot.slane %v2753, 5
        %v2823 = vsel %vm982, %v2821, %v2822
        %v2824 = vrot.slane %v2822, 4
        %v2825 = vrot.slane %v2754, 5
        %v2826 = vsel %vm982, %v2824, %v2825
        %v2827 = vrot.slane %v2755, 5
        %v2828 = vrot.slane %v2827, 4
        %v2829 = vrot.slane %v2756, 5
        %v2830 = vsel %vm982, %v2828, %v2829
        %v2831 = vrot.slane %v2829, 4
        %v2832 = vrot.slane %v2757, 5
        %v2833 = vsel %vm982, %v2831, %v2832
        %v2834 = vrot.slane %v2758, 5
        %v2835 = vrot.slane %v2834, 4
        %v2836 = vrot.slane %v2759, 5
        %v2837 = vsel %vm982, %v2835, %v2836
        %v2838 = vrot.slane %v2836, 4
        %v2839 = vrot.slane %v2760, 5
        %v2840 = vsel %vm982, %v2838, %v2839
        %s2841 = scalar_lea.vmem %s3, 24
        %v2842 = vld [vmem:[%s2841] sm:$0xf]
        %v2843 = vunpack.c.l.b16 %v2788
        %v2844 = vunpack.c.l.b16 %v2791
        %v2845 = vunpack.c.l.b16 %v2795
        %v2846 = vunpack.c.l.b16 %v2798
        %v2847 = vunpack.c.l.b16 %v2802
        %v2848 = vunpack.c.l.b16 %v2805
        %v2849 = vunpack.c.l.b16 %v2809
        %v2850 = vunpack.c.l.b16 %v2812
        %v2851 = vunpack.c.l.b16 %v2816
        %v2852 = vunpack.c.l.b16 %v2819
        %v2853 = vunpack.c.l.b16 %v2823
        %v2854 = vunpack.c.l.b16 %v2826
        %v2855 = vunpack.c.l.b16 %v2830
        %v2856 = vunpack.c.l.b16 %v2833
        %v2857 = vunpack.c.l.b16 %v2837
        %v2858 = vunpack.c.l.b16 %v2840
        %v2859 = vpack.c.b16 %v2844, %v2843
        %v2860 = vpack.c.b16 %v2846, %v2845
        %v2861 = vpack.c.b16 %v2848, %v2847
        %v2862 = vpack.c.b16 %v2850, %v2849
        %v2863 = vpack.c.b16 %v2852, %v2851
        %v2864 = vpack.c.b16 %v2854, %v2853
        %v2865 = vpack.c.b16 %v2856, %v2855
        %v2866 = vpack.c.b16 %v2858, %v2857
        %v2869 = vunpack.c.l.s4 1983009808
        %v2870 = vunpack.c.0.s8 %v2869
        %v2871 = vlaneseq
        %v2872 = vshrl.u32 %v2871, 7
        %v2873 = vsub.s32 %v2870, %v2872
        %v2874 = vrot.slane %v2842, %v2873
        %v2875 = vcombine.high %v2874, %v2874
        %v2877 = vsel %vm615, %v2859, 0
        %v2880 = vsel %vm615, %v2860, 0
        %v2883 = vsel %vm615, %v2861, 0
        %v2886 = vsel %vm615, %v2862, 0
        %v2889 = vsel %vm615, %v2863, 0
        %v2892 = vsel %vm615, %v2864, 0
        %v2895 = vsel %vm615, %v2865, 0
        %v2898 = vsel %vm615, %v2866, 0
        %v2901 = vsel %vm640, %v2874, 0
        %v2904 = vsel %vm640, %v2875, 0
        %2906 = vmatprep.subr.bf16.mxu0 %v2904
        %2907 = vmatpush1.bf16.msra.mxu0 %v2901
        %2908 = vmatprep.subr.bf16.mxu0 0
        %2909 = vmatpush1.bf16.msra.mxu0 0
        %2910 = vmatprep.subr.bf16.mxu0 0
        %2911 = vmatpush1.bf16.msra.mxu0 0
        %2912 = vmatprep.subr.bf16.mxu0 0
        %2913 = vmatpush1.bf16.msra.mxu0 0
        %2914 = vmatprep.subr.bf16.mxu0 0
        %2915 = vmatpush1.bf16.msra.mxu0 0
        %2916 = vmatprep.subr.bf16.mxu0 0
        %2917 = vmatpush1.bf16.msra.mxu0 0
        %2918 = vmatprep.subr.bf16.mxu0 0
        %2919 = vmatpush1.bf16.msra.mxu0 0
        %2920 = vmatprep.subr.bf16.mxu0 0
        %2921 = vmatpush1.bf16.msra.mxu0 0
        %2922 = vmatprep.subr.bf16.mxu0 0
        %2923 = vmatpush1.bf16.msra.mxu0 0
        %2924 = vmatprep.subr.bf16.mxu0 0
        %2925 = vmatpush1.bf16.msra.mxu0 0
        %2926 = vmatprep.subr.bf16.mxu0 0
        %2927 = vmatpush1.bf16.msra.mxu0 0
        %2928 = vmatprep.subr.bf16.mxu0 0
        %2929 = vmatpush1.bf16.msra.mxu0 0
        %2930 = vmatprep.subr.bf16.mxu0 0
        %2931 = vmatpush1.bf16.msra.mxu0 0
        %2932 = vmatprep.subr.bf16.mxu0 0
        %2933 = vmatpush1.bf16.msra.mxu0 0
        %2934 = vmatprep.subr.bf16.mxu0 0
        %2935 = vmatpush1.bf16.msra.mxu0 0
        %2936 = vmatprep.subr.bf16.mxu0 0
        %2937 = vmatpush1.bf16.msra.mxu0 0
        %2938 = vmatprep.mubr.bf16.mxu0 0
        %2939 = vmatmul.mubr.bf16.gmra.mrb[0].mxu0 %v2877
        %v2940 = vpop.f32.mrb[0].mxu0
        %v2941 = vadd.f32 0.0, %v2940
        %v2942 = vpop.f32.mrb[0].mxu0
        %v2943 = vadd.f32 0.0, %v2942
        %v2944 = vpop.f32.mrb[0].mxu0
        %v2945 = vadd.f32 0.0, %v2944
        %v2946 = vpop.f32.mrb[0].mxu0
        %v2947 = vadd.f32 0.0, %v2946
        %2948 = vmatprep.mubr.bf16.mxu0 0
        %2949 = vmatmul.mubr.bf16.gmra.mrb[0].mxu0 %v2880
        %v2950 = vpop.f32.mrb[0].mxu0
        %v2951 = vadd.f32 0.0, %v2950
        %v2952 = vpop.f32.mrb[0].mxu0
        %v2953 = vadd.f32 0.0, %v2952
        %v2954 = vpop.f32.mrb[0].mxu0
        %v2955 = vadd.f32 0.0, %v2954
        %v2956 = vpop.f32.mrb[0].mxu0
        %v2957 = vadd.f32 0.0, %v2956
        %2958 = vmatprep.mubr.bf16.mxu0 0
        %2959 = vmatmul.mubr.bf16.gmra.mrb[0].mxu0 %v2883
        %v2960 = vpop.f32.mrb[0].mxu0
        %v2961 = vadd.f32 0.0, %v2960
        %v2962 = vpop.f32.mrb[0].mxu0
        %v2963 = vadd.f32 0.0, %v2962
        %v2964 = vpop.f32.mrb[0].mxu0
        %v2965 = vadd.f32 0.0, %v2964
        %v2966 = vpop.f32.mrb[0].mxu0
        %v2967 = vadd.f32 0.0, %v2966
        %2968 = vmatprep.mubr.bf16.mxu0 0
        %2969 = vmatmul.mubr.bf16.gmra.mrb[0].mxu0 %v2886
        %v2970 = vpop.f32.mrb[0].mxu0
        %v2971 = vadd.f32 0.0, %v2970
        %v2972 = vpop.f32.mrb[0].mxu0
        %v2973 = vadd.f32 0.0, %v2972
        %v2974 = vpop.f32.mrb[0].mxu0
        %v2975 = vadd.f32 0.0, %v2974
        %v2976 = vpop.f32.mrb[0].mxu0
        %v2977 = vadd.f32 0.0, %v2976
        %2978 = vmatprep.mubr.bf16.mxu0 0
        %2979 = vmatmul.mubr.bf16.gmra.mrb[0].mxu0 %v2889
        %v2980 = vpop.f32.mrb[0].mxu0
        %v2981 = vadd.f32 0.0, %v2980
        %v2982 = vpop.f32.mrb[0].mxu0
        %v2983 = vadd.f32 0.0, %v2982
        %v2984 = vpop.f32.mrb[0].mxu0
        %v2985 = vadd.f32 0.0, %v2984
        %v2986 = vpop.f32.mrb[0].mxu0
        %v2987 = vadd.f32 0.0, %v2986
        %2988 = vmatprep.mubr.bf16.mxu0 0
        %2989 = vmatmul.mubr.bf16.gmra.mrb[0].mxu0 %v2892
        %v2990 = vpop.f32.mrb[0].mxu0
        %v2991 = vadd.f32 0.0, %v2990
        %v2992 = vpop.f32.mrb[0].mxu0
        %v2993 = vadd.f32 0.0, %v2992
        %v2994 = vpop.f32.mrb[0].mxu0
        %v2995 = vadd.f32 0.0, %v2994
        %v2996 = vpop.f32.mrb[0].mxu0
        %v2997 = vadd.f32 0.0, %v2996
        %2998 = vmatprep.mubr.bf16.mxu0 0
        %2999 = vmatmul.mubr.bf16.gmra.mrb[0].mxu0 %v2895
        %v3000 = vpop.f32.mrb[0].mxu0
        %v3001 = vadd.f32 0.0, %v3000
        %v3002 = vpop.f32.mrb[0].mxu0
        %v3003 = vadd.f32 0.0, %v3002
        %v3004 = vpop.f32.mrb[0].mxu0
        %v3005 = vadd.f32 0.0, %v3004
        %v3006 = vpop.f32.mrb[0].mxu0
        %v3007 = vadd.f32 0.0, %v3006
        %3008 = vmatprep.mubr.bf16.mxu0 0
        %3009 = vmatmul.mubr.bf16.gmra.mrb[0].mxu0 %v2898
        %v3010 = vpop.f32.mrb[0].mxu0
        %v3011 = vadd.f32 0.0, %v3010
        %v3012 = vpop.f32.mrb[0].mxu0
        %v3013 = vadd.f32 0.0, %v3012
        %v3014 = vpop.f32.mrb[0].mxu0
        %v3015 = vadd.f32 0.0, %v3014
        %v3016 = vpop.f32.mrb[0].mxu0
        %v3017 = vadd.f32 0.0, %v3016
        %3018 = vdwg.mxu0
        %v3019 = vadd.f32 %v2701, %v2941
        %v3020 = vadd.f32 %v2702, %v2943
        %v3021 = vadd.f32 %v2703, %v2945
        %v3022 = vadd.f32 %v2704, %v2947
        %v3023 = vadd.f32 %v2705, %v2951
        %v3024 = vadd.f32 %v2706, %v2953
        %v3025 = vadd.f32 %v2707, %v2955
        %v3026 = vadd.f32 %v2708, %v2957
        %v3027 = vadd.f32 %v2709, %v2961
        %v3028 = vadd.f32 %v2710, %v2963
        %v3029 = vadd.f32 %v2711, %v2965
        %v3030 = vadd.f32 %v2712, %v2967
        %v3031 = vadd.f32 %v2713, %v2971
        %v3032 = vadd.f32 %v2714, %v2973
        %v3033 = vadd.f32 %v2715, %v2975
        %v3034 = vadd.f32 %v2716, %v2977
        %v3035 = vadd.f32 %v2717, %v2981
        %v3036 = vadd.f32 %v2718, %v2983
        %v3037 = vadd.f32 %v2719, %v2985
        %v3038 = vadd.f32 %v2720, %v2987
        %v3039 = vadd.f32 %v2721, %v2991
        %v3040 = vadd.f32 %v2722, %v2993
        %v3041 = vadd.f32 %v2723, %v2995
        %v3042 = vadd.f32 %v2724, %v2997
        %v3043 = vadd.f32 %v2725, %v3001
        %v3044 = vadd.f32 %v2726, %v3003
        %v3045 = vadd.f32 %v2727, %v3005
        %v3046 = vadd.f32 %v2728, %v3007
        %v3047 = vadd.f32 %v2729, %v3011
        %v3048 = vadd.f32 %v2730, %v3013
        %v3049 = vadd.f32 %v2731, %v3015
        %v3050 = vadd.f32 %v2732, %v3017
        %v3051 = vld [vmem:[%s2736] sm:$0xe]
        %v3052 = vld [vmem:[%s2736 + $0x4] sm:$0xf]
        %v3053 = vld [vmem:[%s2736 + $0x8] sm:$0x3]
        %v3054 = vld [vmem:[%s2736 + $0xc] sm:$0xe]
        %v3055 = vld [vmem:[%s2736 + $0x10] sm:$0xf]
        %v3056 = vld [vmem:[%s2736 + $0x14] sm:$0x3]
        %v3057 = vld [vmem:[%s2736 + $0x18] sm:$0xe]
        %v3058 = vld [vmem:[%s2736 + $0x1c] sm:$0xf]
        %v3059 = vld [vmem:[%s2736 + $0x20] sm:$0x3]
        %v3060 = vld [vmem:[%s2736 + $0x24] sm:$0xe]
        %v3061 = vld [vmem:[%s2736 + $0x28] sm:$0xf]
        %v3062 = vld [vmem:[%s2736 + $0x2c] sm:$0x3]
        %v3063 = vld [vmem:[%s2736 + $0x30] sm:$0xe]
        %v3064 = vld [vmem:[%s2736 + $0x34] sm:$0xf]
        %v3065 = vld [vmem:[%s2736 + $0x38] sm:$0x3]
        %v3066 = vld [vmem:[%s2736 + $0x3c] sm:$0xe]
        %v3067 = vld [vmem:[%s2736 + $0x40] sm:$0xf]
        %v3068 = vld [vmem:[%s2736 + $0x44] sm:$0x3]
        %v3069 = vld [vmem:[%s2736 + $0x48] sm:$0xe]
        %v3070 = vld [vmem:[%s2736 + $0x4c] sm:$0xf]
        %v3071 = vld [vmem:[%s2736 + $0x50] sm:$0x3]
        %v3072 = vld [vmem:[%s2736 + $0x54] sm:$0xe]
        %v3073 = vld [vmem:[%s2736 + $0x58] sm:$0xf]
        %v3074 = vld [vmem:[%s2736 + $0x5c] sm:$0x3]
        %v3076 = vshrl.u32 %v3051, 16
        %v3078 = vrot.slane %v3076, 5
        %v3079 = vshll.u32 %v3051, 16
        %v3081 = vrot.slane %v3079, 6
        %v3082 = vor.u32 %v3078, %v3081
        %v3083 = vrot.slane %v3082, 4
        %v3085 = vshrl.u32 %v3052, 16
        %v3087 = vrot.slane %v3085, 5
        %v3088 = vshll.u32 %v3052, 16
        %v3090 = vrot.slane %v3088, 6
        %v3091 = vor.u32 %v3087, %v3090
        %v3092 = vsel %vm356, %v3083, %v3091
        %v3093 = vrot.slane %v3091, 4
        %v3095 = vshrl.u32 %v3053, 16
        %v3097 = vrot.slane %v3095, 5
        %v3098 = vshll.u32 %v3053, 16
        %v3100 = vrot.slane %v3098, 6
        %v3101 = vor.u32 %v3097, %v3100
        %v3102 = vsel %vm356, %v3093, %v3101
        %v3104 = vshrl.u32 %v3054, 16
        %v3106 = vrot.slane %v3104, 5
        %v3107 = vshll.u32 %v3054, 16
        %v3109 = vrot.slane %v3107, 6
        %v3110 = vor.u32 %v3106, %v3109
        %v3111 = vrot.slane %v3110, 4
        %v3113 = vshrl.u32 %v3055, 16
        %v3115 = vrot.slane %v3113, 5
        %v3116 = vshll.u32 %v3055, 16
        %v3118 = vrot.slane %v3116, 6
        %v3119 = vor.u32 %v3115, %v3118
        %v3120 = vsel %vm356, %v3111, %v3119
        %v3121 = vrot.slane %v3119, 4
        %v3123 = vshrl.u32 %v3056, 16
        %v3125 = vrot.slane %v3123, 5
        %v3126 = vshll.u32 %v3056, 16
        %v3128 = vrot.slane %v3126, 6
        %v3129 = vor.u32 %v3125, %v3128
        %v3130 = vsel %vm356, %v3121, %v3129
        %v3132 = vshrl.u32 %v3057, 16
        %v3134 = vrot.slane %v3132, 5
        %v3135 = vshll.u32 %v3057, 16
        %v3137 = vrot.slane %v3135, 6
        %v3138 = vor.u32 %v3134, %v3137
        %v3139 = vrot.slane %v3138, 4
        %v3141 = vshrl.u32 %v3058, 16
        %v3143 = vrot.slane %v3141, 5
        %v3144 = vshll.u32 %v3058, 16
        %v3146 = vrot.slane %v3144, 6
        %v3147 = vor.u32 %v3143, %v3146
        %v3148 = vsel %vm356, %v3139, %v3147
        %v3149 = vrot.slane %v3147, 4
        %v3151 = vshrl.u32 %v3059, 16
        %v3153 = vrot.slane %v3151, 5
        %v3154 = vshll.u32 %v3059, 16
        %v3156 = vrot.slane %v3154, 6
        %v3157 = vor.u32 %v3153, %v3156
        %v3158 = vsel %vm356, %v3149, %v3157
        %v3160 = vshrl.u32 %v3060, 16
        %v3162 = vrot.slane %v3160, 5
        %v3163 = vshll.u32 %v3060, 16
        %v3165 = vrot.slane %v3163, 6
        %v3166 = vor.u32 %v3162, %v3165
        %v3167 = vrot.slane %v3166, 4
        %v3169 = vshrl.u32 %v3061, 16
        %v3171 = vrot.slane %v3169, 5
        %v3172 = vshll.u32 %v3061, 16
        %v3174 = vrot.slane %v3172, 6
        %v3175 = vor.u32 %v3171, %v3174
        %v3176 = vsel %vm356, %v3167, %v3175
        %v3177 = vrot.slane %v3175, 4
        %v3179 = vshrl.u32 %v3062, 16
        %v3181 = vrot.slane %v3179, 5
        %v3182 = vshll.u32 %v3062, 16
        %v3184 = vrot.slane %v3182, 6
        %v3185 = vor.u32 %v3181, %v3184
        %v3186 = vsel %vm356, %v3177, %v3185
        %v3188 = vshrl.u32 %v3063, 16
        %v3190 = vrot.slane %v3188, 5
        %v3191 = vshll.u32 %v3063, 16
        %v3193 = vrot.slane %v3191, 6
        %v3194 = vor.u32 %v3190, %v3193
        %v3195 = vrot.slane %v3194, 4
        %v3197 = vshrl.u32 %v3064, 16
        %v3199 = vrot.slane %v3197, 5
        %v3200 = vshll.u32 %v3064, 16
        %v3202 = vrot.slane %v3200, 6
        %v3203 = vor.u32 %v3199, %v3202
        %v3204 = vsel %vm356, %v3195, %v3203
        %v3205 = vrot.slane %v3203, 4
        %v3207 = vshrl.u32 %v3065, 16
        %v3209 = vrot.slane %v3207, 5
        %v3210 = vshll.u32 %v3065, 16
        %v3212 = vrot.slane %v3210, 6
        %v3213 = vor.u32 %v3209, %v3212
        %v3214 = vsel %vm356, %v3205, %v3213
        %v3216 = vshrl.u32 %v3066, 16
        %v3218 = vrot.slane %v3216, 5
        %v3219 = vshll.u32 %v3066, 16
        %v3221 = vrot.slane %v3219, 6
        %v3222 = vor.u32 %v3218, %v3221
        %v3223 = vrot.slane %v3222, 4
        %v3225 = vshrl.u32 %v3067, 16
        %v3227 = vrot.slane %v3225, 5
        %v3228 = vshll.u32 %v3067, 16
        %v3230 = vrot.slane %v3228, 6
        %v3231 = vor.u32 %v3227, %v3230
        %v3232 = vsel %vm356, %v3223, %v3231
        %v3233 = vrot.slane %v3231, 4
        %v3235 = vshrl.u32 %v3068, 16
        %v3237 = vrot.slane %v3235, 5
        %v3238 = vshll.u32 %v3068, 16
        %v3240 = vrot.slane %v3238, 6
        %v3241 = vor.u32 %v3237, %v3240
        %v3242 = vsel %vm356, %v3233, %v3241
        %v3244 = vshrl.u32 %v3069, 16
        %v3246 = vrot.slane %v3244, 5
        %v3247 = vshll.u32 %v3069, 16
        %v3249 = vrot.slane %v3247, 6
        %v3250 = vor.u32 %v3246, %v3249
        %v3251 = vrot.slane %v3250, 4
        %v3253 = vshrl.u32 %v3070, 16
        %v3255 = vrot.slane %v3253, 5
        %v3256 = vshll.u32 %v3070, 16
        %v3258 = vrot.slane %v3256, 6
        %v3259 = vor.u32 %v3255, %v3258
        %v3260 = vsel %vm356, %v3251, %v3259
        %v3261 = vrot.slane %v3259, 4
        %v3263 = vshrl.u32 %v3071, 16
        %v3265 = vrot.slane %v3263, 5
        %v3266 = vshll.u32 %v3071, 16
        %v3268 = vrot.slane %v3266, 6
        %v3269 = vor.u32 %v3265, %v3268
        %v3270 = vsel %vm356, %v3261, %v3269
        %v3272 = vshrl.u32 %v3072, 16
        %v3274 = vrot.slane %v3272, 5
        %v3275 = vshll.u32 %v3072, 16
        %v3277 = vrot.slane %v3275, 6
        %v3278 = vor.u32 %v3274, %v3277
        %v3279 = vrot.slane %v3278, 4
        %v3281 = vshrl.u32 %v3073, 16
        %v3283 = vrot.slane %v3281, 5
        %v3284 = vshll.u32 %v3073, 16
        %v3286 = vrot.slane %v3284, 6
        %v3287 = vor.u32 %v3283, %v3286
        %v3288 = vsel %vm356, %v3279, %v3287
        %v3289 = vrot.slane %v3287, 4
        %v3291 = vshrl.u32 %v3074, 16
        %v3293 = vrot.slane %v3291, 5
        %v3294 = vshll.u32 %v3074, 16
        %v3296 = vrot.slane %v3294, 6
        %v3297 = vor.u32 %v3293, %v3296
        %v3298 = vsel %vm356, %v3289, %v3297
        %s3299 = scalar_lea.vmem %s3, 28
        %v3300 = vld [vmem:[%s3299] sm:$0xf]
        %v3301 = vunpack.c.l.b16 %v3092
        %v3302 = vunpack.c.l.b16 %v3102
        %v3303 = vunpack.c.l.b16 %v3120
        %v3304 = vunpack.c.l.b16 %v3130
        %v3305 = vunpack.c.l.b16 %v3148
        %v3306 = vunpack.c.l.b16 %v3158
        %v3307 = vunpack.c.l.b16 %v3176
        %v3308 = vunpack.c.l.b16 %v3186
        %v3309 = vunpack.c.l.b16 %v3204
        %v3310 = vunpack.c.l.b16 %v3214
        %v3311 = vunpack.c.l.b16 %v3232
        %v3312 = vunpack.c.l.b16 %v3242
        %v3313 = vunpack.c.l.b16 %v3260
        %v3314 = vunpack.c.l.b16 %v3270
        %v3315 = vunpack.c.l.b16 %v3288
        %v3316 = vunpack.c.l.b16 %v3298
        %v3317 = vpack.c.b16 %v3302, %v3301
        %v3318 = vpack.c.b16 %v3304, %v3303
        %v3319 = vpack.c.b16 %v3306, %v3305
        %v3320 = vpack.c.b16 %v3308, %v3307
        %v3321 = vpack.c.b16 %v3310, %v3309
        %v3322 = vpack.c.b16 %v3312, %v3311
        %v3323 = vpack.c.b16 %v3314, %v3313
        %v3324 = vpack.c.b16 %v3316, %v3315
        %v3327 = vunpack.c.l.s4 1983009808
        %v3328 = vunpack.c.0.s8 %v3327
        %v3329 = vlaneseq
        %v3330 = vshrl.u32 %v3329, 7
        %v3331 = vsub.s32 %v3328, %v3330
        %v3332 = vrot.slane %v3300, %v3331
        %v3333 = vcombine.high %v3332, %v3332
        %v3335 = vsel %vm615, %v3317, 0
        %v3338 = vsel %vm615, %v3318, 0
        %v3341 = vsel %vm615, %v3319, 0
        %v3344 = vsel %vm615, %v3320, 0
        %v3347 = vsel %vm615, %v3321, 0
        %v3350 = vsel %vm615, %v3322, 0
        %v3353 = vsel %vm615, %v3323, 0
        %v3356 = vsel %vm615, %v3324, 0
        %v3359 = vsel %vm640, %v3332, 0
        %v3362 = vsel %vm640, %v3333, 0
        %3364 = vmatprep.subr.bf16.mxu0 %v3362
        %3365 = vmatpush1.bf16.msra.mxu0 %v3359
        %3366 = vmatprep.subr.bf16.mxu0 0
        %3367 = vmatpush1.bf16.msra.mxu0 0
        %3368 = vmatprep.subr.bf16.mxu0 0
        %3369 = vmatpush1.bf16.msra.mxu0 0
        %3370 = vmatprep.subr.bf16.mxu0 0
        %3371 = vmatpush1.bf16.msra.mxu0 0
        %3372 = vmatprep.subr.bf16.mxu0 0
        %3373 = vmatpush1.bf16.msra.mxu0 0
        %3374 = vmatprep.subr.bf16.mxu0 0
        %3375 = vmatpush1.bf16.msra.mxu0 0
        %3376 = vmatprep.subr.bf16.mxu0 0
        %3377 = vmatpush1.bf16.msra.mxu0 0
        %3378 = vmatprep.subr.bf16.mxu0 0
        %3379 = vmatpush1.bf16.msra.mxu0 0
        %3380 = vmatprep.subr.bf16.mxu0 0
        %3381 = vmatpush1.bf16.msra.mxu0 0
        %3382 = vmatprep.subr.bf16.mxu0 0
        %3383 = vmatpush1.bf16.msra.mxu0 0
        %3384 = vmatprep.subr.bf16.mxu0 0
        %3385 = vmatpush1.bf16.msra.mxu0 0
        %3386 = vmatprep.subr.bf16.mxu0 0
        %3387 = vmatpush1.bf16.msra.mxu0 0
        %3388 = vmatprep.subr.bf16.mxu0 0
        %3389 = vmatpush1.bf16.msra.mxu0 0
        %3390 = vmatprep.subr.bf16.mxu0 0
        %3391 = vmatpush1.bf16.msra.mxu0 0
        %3392 = vmatprep.subr.bf16.mxu0 0
        %3393 = vmatpush1.bf16.msra.mxu0 0
        %3394 = vmatprep.subr.bf16.mxu0 0
        %3395 = vmatpush1.bf16.msra.mxu0 0
        %3396 = vmatprep.mubr.bf16.mxu0 0
        %3397 = vmatmul.mubr.bf16.gmra.mrb[0].mxu0 %v3335
        %v3398 = vpop.f32.mrb[0].mxu0
        %v3399 = vadd.f32 0.0, %v3398
        %v3400 = vpop.f32.mrb[0].mxu0
        %v3401 = vadd.f32 0.0, %v3400
        %v3402 = vpop.f32.mrb[0].mxu0
        %v3403 = vadd.f32 0.0, %v3402
        %v3404 = vpop.f32.mrb[0].mxu0
        %v3405 = vadd.f32 0.0, %v3404
        %3406 = vmatprep.mubr.bf16.mxu0 0
        %3407 = vmatmul.mubr.bf16.gmra.mrb[0].mxu0 %v3338
        %v3408 = vpop.f32.mrb[0].mxu0
        %v3409 = vadd.f32 0.0, %v3408
        %v3410 = vpop.f32.mrb[0].mxu0
        %v3411 = vadd.f32 0.0, %v3410
        %v3412 = vpop.f32.mrb[0].mxu0
        %v3413 = vadd.f32 0.0, %v3412
        %v3414 = vpop.f32.mrb[0].mxu0
        %v3415 = vadd.f32 0.0, %v3414
        %3416 = vmatprep.mubr.bf16.mxu0 0
        %3417 = vmatmul.mubr.bf16.gmra.mrb[0].mxu0 %v3341
        %v3418 = vpop.f32.mrb[0].mxu0
        %v3419 = vadd.f32 0.0, %v3418
        %v3420 = vpop.f32.mrb[0].mxu0
        %v3421 = vadd.f32 0.0, %v3420
        %v3422 = vpop.f32.mrb[0].mxu0
        %v3423 = vadd.f32 0.0, %v3422
        %v3424 = vpop.f32.mrb[0].mxu0
        %v3425 = vadd.f32 0.0, %v3424
        %3426 = vmatprep.mubr.bf16.mxu0 0
        %3427 = vmatmul.mubr.bf16.gmra.mrb[0].mxu0 %v3344
        %v3428 = vpop.f32.mrb[0].mxu0
        %v3429 = vadd.f32 0.0, %v3428
        %v3430 = vpop.f32.mrb[0].mxu0
        %v3431 = vadd.f32 0.0, %v3430
        %v3432 = vpop.f32.mrb[0].mxu0
        %v3433 = vadd.f32 0.0, %v3432
        %v3434 = vpop.f32.mrb[0].mxu0
        %v3435 = vadd.f32 0.0, %v3434
        %3436 = vmatprep.mubr.bf16.mxu0 0
        %3437 = vmatmul.mubr.bf16.gmra.mrb[0].mxu0 %v3347
        %v3438 = vpop.f32.mrb[0].mxu0
        %v3439 = vadd.f32 0.0, %v3438
        %v3440 = vpop.f32.mrb[0].mxu0
        %v3441 = vadd.f32 0.0, %v3440
        %v3442 = vpop.f32.mrb[0].mxu0
        %v3443 = vadd.f32 0.0, %v3442
        %v3444 = vpop.f32.mrb[0].mxu0
        %v3445 = vadd.f32 0.0, %v3444
        %3446 = vmatprep.mubr.bf16.mxu0 0
        %3447 = vmatmul.mubr.bf16.gmra.mrb[0].mxu0 %v3350
        %v3448 = vpop.f32.mrb[0].mxu0
        %v3449 = vadd.f32 0.0, %v3448
        %v3450 = vpop.f32.mrb[0].mxu0
        %v3451 = vadd.f32 0.0, %v3450
        %v3452 = vpop.f32.mrb[0].mxu0
        %v3453 = vadd.f32 0.0, %v3452
        %v3454 = vpop.f32.mrb[0].mxu0
        %v3455 = vadd.f32 0.0, %v3454
        %3456 = vmatprep.mubr.bf16.mxu0 0
        %3457 = vmatmul.mubr.bf16.gmra.mrb[0].mxu0 %v3353
        %v3458 = vpop.f32.mrb[0].mxu0
        %v3459 = vadd.f32 0.0, %v3458
        %v3460 = vpop.f32.mrb[0].mxu0
        %v3461 = vadd.f32 0.0, %v3460
        %v3462 = vpop.f32.mrb[0].mxu0
        %v3463 = vadd.f32 0.0, %v3462
        %v3464 = vpop.f32.mrb[0].mxu0
        %v3465 = vadd.f32 0.0, %v3464
        %3466 = vmatprep.mubr.bf16.mxu0 0
        %3467 = vmatmul.mubr.bf16.gmra.mrb[0].mxu0 %v3356
        %v3468 = vpop.f32.mrb[0].mxu0
        %v3469 = vadd.f32 0.0, %v3468
        %v3470 = vpop.f32.mrb[0].mxu0
        %v3471 = vadd.f32 0.0, %v3470
        %v3472 = vpop.f32.mrb[0].mxu0
        %v3473 = vadd.f32 0.0, %v3472
        %v3474 = vpop.f32.mrb[0].mxu0
        %v3475 = vadd.f32 0.0, %v3474
        %3476 = vdwg.mxu0
        %v3477 = vadd.f32 %v3019, %v3399
        %v3478 = vadd.f32 %v3020, %v3401
        %v3479 = vadd.f32 %v3021, %v3403
        %v3480 = vadd.f32 %v3022, %v3405
        %v3481 = vadd.f32 %v3023, %v3409
        %v3482 = vadd.f32 %v3024, %v3411
        %v3483 = vadd.f32 %v3025, %v3413
        %v3484 = vadd.f32 %v3026, %v3415
        %v3485 = vadd.f32 %v3027, %v3419
        %v3486 = vadd.f32 %v3028, %v3421
        %v3487 = vadd.f32 %v3029, %v3423
        %v3488 = vadd.f32 %v3030, %v3425
        %v3489 = vadd.f32 %v3031, %v3429
        %v3490 = vadd.f32 %v3032, %v3431
        %v3491 = vadd.f32 %v3033, %v3433
        %v3492 = vadd.f32 %v3034, %v3435
        %v3493 = vadd.f32 %v3035, %v3439
        %v3494 = vadd.f32 %v3036, %v3441
        %v3495 = vadd.f32 %v3037, %v3443
        %v3496 = vadd.f32 %v3038, %v3445
        %v3497 = vadd.f32 %v3039, %v3449
        %v3498 = vadd.f32 %v3040, %v3451
        %v3499 = vadd.f32 %v3041, %v3453
        %v3500 = vadd.f32 %v3042, %v3455
        %v3501 = vadd.f32 %v3043, %v3459
        %v3502 = vadd.f32 %v3044, %v3461
        %v3503 = vadd.f32 %v3045, %v3463
        %v3504 = vadd.f32 %v3046, %v3465
        %v3505 = vadd.f32 %v3047, %v3469
        %v3506 = vadd.f32 %v3048, %v3471
        %v3507 = vadd.f32 %v3049, %v3473
        %v3508 = vadd.f32 %v3050, %v3475
        %v3509 = vld [vmem:[%s2736] sm:$0xc]
        %v3510 = vld [vmem:[%s2736 + $0x4] sm:$0xf]
        %v3511 = vld [vmem:[%s2736 + $0x8] sm:$0x3]
        %v3512 = vld [vmem:[%s2736 + $0xc] sm:$0xc]
        %v3513 = vld [vmem:[%s2736 + $0x10] sm:$0xf]
        %v3514 = vld [vmem:[%s2736 + $0x14] sm:$0x3]
        %v3515 = vld [vmem:[%s2736 + $0x18] sm:$0xc]
        %v3516 = vld [vmem:[%s2736 + $0x1c] sm:$0xf]
        %v3517 = vld [vmem:[%s2736 + $0x20] sm:$0x3]
        %v3518 = vld [vmem:[%s2736 + $0x24] sm:$0xc]
        %v3519 = vld [vmem:[%s2736 + $0x28] sm:$0xf]
        %v3520 = vld [vmem:[%s2736 + $0x2c] sm:$0x3]
        %v3521 = vld [vmem:[%s2736 + $0x30] sm:$0xc]
        %v3522 = vld [vmem:[%s2736 + $0x34] sm:$0xf]
        %v3523 = vld [vmem:[%s2736 + $0x38] sm:$0x3]
        %v3524 = vld [vmem:[%s2736 + $0x3c] sm:$0xc]
        %v3525 = vld [vmem:[%s2736 + $0x40] sm:$0xf]
        %v3526 = vld [vmem:[%s2736 + $0x44] sm:$0x3]
        %v3527 = vld [vmem:[%s2736 + $0x48] sm:$0xc]
        %v3528 = vld [vmem:[%s2736 + $0x4c] sm:$0xf]
        %v3529 = vld [vmem:[%s2736 + $0x50] sm:$0x3]
        %v3530 = vld [vmem:[%s2736 + $0x54] sm:$0xc]
        %v3531 = vld [vmem:[%s2736 + $0x58] sm:$0xf]
        %v3532 = vld [vmem:[%s2736 + $0x5c] sm:$0x3]
        %v3557 = vrot.slane %v3509, 6
        %v3558 = vrot.slane %v3557, 4
        %v3559 = vrot.slane %v3510, 6
        %v3560 = vsel %vm1676, %v3558, %v3559
        %v3561 = vrot.slane %v3559, 4
        %v3562 = vrot.slane %v3511, 6
        %v3563 = vsel %vm1676, %v3561, %v3562
        %v3564 = vrot.slane %v3512, 6
        %v3565 = vrot.slane %v3564, 4
        %v3566 = vrot.slane %v3513, 6
        %v3567 = vsel %vm1676, %v3565, %v3566
        %v3568 = vrot.slane %v3566, 4
        %v3569 = vrot.slane %v3514, 6
        %v3570 = vsel %vm1676, %v3568, %v3569
        %v3571 = vrot.slane %v3515, 6
        %v3572 = vrot.slane %v3571, 4
        %v3573 = vrot.slane %v3516, 6
        %v3574 = vsel %vm1676, %v3572, %v3573
        %v3575 = vrot.slane %v3573, 4
        %v3576 = vrot.slane %v3517, 6
        %v3577 = vsel %vm1676, %v3575, %v3576
        %v3578 = vrot.slane %v3518, 6
        %v3579 = vrot.slane %v3578, 4
        %v3580 = vrot.slane %v3519, 6
        %v3581 = vsel %vm1676, %v3579, %v3580
        %v3582 = vrot.slane %v3580, 4
        %v3583 = vrot.slane %v3520, 6
        %v3584 = vsel %vm1676, %v3582, %v3583
        %v3585 = vrot.slane %v3521, 6
        %v3586 = vrot.slane %v3585, 4
        %v3587 = vrot.slane %v3522, 6
        %v3588 = vsel %vm1676, %v3586, %v3587
        %v3589 = vrot.slane %v3587, 4
        %v3590 = vrot.slane %v3523, 6
        %v3591 = vsel %vm1676, %v3589, %v3590
        %v3592 = vrot.slane %v3524, 6
        %v3593 = vrot.slane %v3592, 4
        %v3594 = vrot.slane %v3525, 6
        %v3595 = vsel %vm1676, %v3593, %v3594
        %v3596 = vrot.slane %v3594, 4
        %v3597 = vrot.slane %v3526, 6
        %v3598 = vsel %vm1676, %v3596, %v3597
        %v3599 = vrot.slane %v3527, 6
        %v3600 = vrot.slane %v3599, 4
        %v3601 = vrot.slane %v3528, 6
        %v3602 = vsel %vm1676, %v3600, %v3601
        %v3603 = vrot.slane %v3601, 4
        %v3604 = vrot.slane %v3529, 6
        %v3605 = vsel %vm1676, %v3603, %v3604
        %v3606 = vrot.slane %v3530, 6
        %v3607 = vrot.slane %v3606, 4
        %v3608 = vrot.slane %v3531, 6
        %v3609 = vsel %vm1676, %v3607, %v3608
        %v3610 = vrot.slane %v3608, 4
        %v3611 = vrot.slane %v3532, 6
        %v3612 = vsel %vm1676, %v3610, %v3611
        %s3613 = scalar_lea.vmem %s3, 32
        %v3614 = vld [vmem:[%s3613] sm:$0xf]
        %v3615 = vunpack.c.l.b16 %v3560
        %v3616 = vunpack.c.l.b16 %v3563
        %v3617 = vunpack.c.l.b16 %v3567
        %v3618 = vunpack.c.l.b16 %v3570
        %v3619 = vunpack.c.l.b16 %v3574
        %v3620 = vunpack.c.l.b16 %v3577
        %v3621 = vunpack.c.l.b16 %v3581
        %v3622 = vunpack.c.l.b16 %v3584
        %v3623 = vunpack.c.l.b16 %v3588
        %v3624 = vunpack.c.l.b16 %v3591
        %v3625 = vunpack.c.l.b16 %v3595
        %v3626 = vunpack.c.l.b16 %v3598
        %v3627 = vunpack.c.l.b16 %v3602
        %v3628 = vunpack.c.l.b16 %v3605
        %v3629 = vunpack.c.l.b16 %v3609
        %v3630 = vunpack.c.l.b16 %v3612
        %v3631 = vpack.c.b16 %v3616, %v3615
        %v3632 = vpack.c.b16 %v3618, %v3617
        %v3633 = vpack.c.b16 %v3620, %v3619
        %v3634 = vpack.c.b16 %v3622, %v3621
        %v3635 = vpack.c.b16 %v3624, %v3623
        %v3636 = vpack.c.b16 %v3626, %v3625
        %v3637 = vpack.c.b16 %v3628, %v3627
        %v3638 = vpack.c.b16 %v3630, %v3629
        %v3641 = vunpack.c.l.s4 1983009808
        %v3642 = vunpack.c.0.s8 %v3641
        %v3643 = vlaneseq
        %v3644 = vshrl.u32 %v3643, 7
        %v3645 = vsub.s32 %v3642, %v3644
        %v3646 = vrot.slane %v3614, %v3645
        %v3647 = vcombine.high %v3646, %v3646
        %v3649 = vsel %vm615, %v3631, 0
        %v3652 = vsel %vm615, %v3632, 0
        %v3655 = vsel %vm615, %v3633, 0
        %v3658 = vsel %vm615, %v3634, 0
        %v3661 = vsel %vm615, %v3635, 0
        %v3664 = vsel %vm615, %v3636, 0
        %v3667 = vsel %vm615, %v3637, 0
        %v3670 = vsel %vm615, %v3638, 0
        %v3673 = vsel %vm640, %v3646, 0
        %v3676 = vsel %vm640, %v3647, 0
        %3678 = vmatprep.subr.bf16.mxu0 %v3676
        %3679 = vmatpush1.bf16.msra.mxu0 %v3673
        %3680 = vmatprep.subr.bf16.mxu0 0
        %3681 = vmatpush1.bf16.msra.mxu0 0
        %3682 = vmatprep.subr.bf16.mxu0 0
        %3683 = vmatpush1.bf16.msra.mxu0 0
        %3684 = vmatprep.subr.bf16.mxu0 0
        %3685 = vmatpush1.bf16.msra.mxu0 0
        %3686 = vmatprep.subr.bf16.mxu0 0
        %3687 = vmatpush1.bf16.msra.mxu0 0
        %3688 = vmatprep.subr.bf16.mxu0 0
        %3689 = vmatpush1.bf16.msra.mxu0 0
        %3690 = vmatprep.subr.bf16.mxu0 0
        %3691 = vmatpush1.bf16.msra.mxu0 0
        %3692 = vmatprep.subr.bf16.mxu0 0
        %3693 = vmatpush1.bf16.msra.mxu0 0
        %3694 = vmatprep.subr.bf16.mxu0 0
        %3695 = vmatpush1.bf16.msra.mxu0 0
        %3696 = vmatprep.subr.bf16.mxu0 0
        %3697 = vmatpush1.bf16.msra.mxu0 0
        %3698 = vmatprep.subr.bf16.mxu0 0
        %3699 = vmatpush1.bf16.msra.mxu0 0
        %3700 = vmatprep.subr.bf16.mxu0 0
        %3701 = vmatpush1.bf16.msra.mxu0 0
        %3702 = vmatprep.subr.bf16.mxu0 0
        %3703 = vmatpush1.bf16.msra.mxu0 0
        %3704 = vmatprep.subr.bf16.mxu0 0
        %3705 = vmatpush1.bf16.msra.mxu0 0
        %3706 = vmatprep.subr.bf16.mxu0 0
        %3707 = vmatpush1.bf16.msra.mxu0 0
        %3708 = vmatprep.subr.bf16.mxu0 0
        %3709 = vmatpush1.bf16.msra.mxu0 0
        %3710 = vmatprep.mubr.bf16.mxu0 0
        %3711 = vmatmul.mubr.bf16.gmra.mrb[0].mxu0 %v3649
        %v3712 = vpop.f32.mrb[0].mxu0
        %v3713 = vadd.f32 0.0, %v3712
        %v3714 = vpop.f32.mrb[0].mxu0
        %v3715 = vadd.f32 0.0, %v3714
        %v3716 = vpop.f32.mrb[0].mxu0
        %v3717 = vadd.f32 0.0, %v3716
        %v3718 = vpop.f32.mrb[0].mxu0
        %v3719 = vadd.f32 0.0, %v3718
        %3720 = vmatprep.mubr.bf16.mxu0 0
        %3721 = vmatmul.mubr.bf16.gmra.mrb[0].mxu0 %v3652
        %v3722 = vpop.f32.mrb[0].mxu0
        %v3723 = vadd.f32 0.0, %v3722
        %v3724 = vpop.f32.mrb[0].mxu0
        %v3725 = vadd.f32 0.0, %v3724
        %v3726 = vpop.f32.mrb[0].mxu0
        %v3727 = vadd.f32 0.0, %v3726
        %v3728 = vpop.f32.mrb[0].mxu0
        %v3729 = vadd.f32 0.0, %v3728
        %3730 = vmatprep.mubr.bf16.mxu0 0
        %3731 = vmatmul.mubr.bf16.gmra.mrb[0].mxu0 %v3655
        %v3732 = vpop.f32.mrb[0].mxu0
        %v3733 = vadd.f32 0.0, %v3732
        %v3734 = vpop.f32.mrb[0].mxu0
        %v3735 = vadd.f32 0.0, %v3734
        %v3736 = vpop.f32.mrb[0].mxu0
        %v3737 = vadd.f32 0.0, %v3736
        %v3738 = vpop.f32.mrb[0].mxu0
        %v3739 = vadd.f32 0.0, %v3738
        %3740 = vmatprep.mubr.bf16.mxu0 0
        %3741 = vmatmul.mubr.bf16.gmra.mrb[0].mxu0 %v3658
        %v3742 = vpop.f32.mrb[0].mxu0
        %v3743 = vadd.f32 0.0, %v3742
        %v3744 = vpop.f32.mrb[0].mxu0
        %v3745 = vadd.f32 0.0, %v3744
        %v3746 = vpop.f32.mrb[0].mxu0
        %v3747 = vadd.f32 0.0, %v3746
        %v3748 = vpop.f32.mrb[0].mxu0
        %v3749 = vadd.f32 0.0, %v3748
        %3750 = vmatprep.mubr.bf16.mxu0 0
        %3751 = vmatmul.mubr.bf16.gmra.mrb[0].mxu0 %v3661
        %v3752 = vpop.f32.mrb[0].mxu0
        %v3753 = vadd.f32 0.0, %v3752
        %v3754 = vpop.f32.mrb[0].mxu0
        %v3755 = vadd.f32 0.0, %v3754
        %v3756 = vpop.f32.mrb[0].mxu0
        %v3757 = vadd.f32 0.0, %v3756
        %v3758 = vpop.f32.mrb[0].mxu0
        %v3759 = vadd.f32 0.0, %v3758
        %3760 = vmatprep.mubr.bf16.mxu0 0
        %3761 = vmatmul.mubr.bf16.gmra.mrb[0].mxu0 %v3664
        %v3762 = vpop.f32.mrb[0].mxu0
        %v3763 = vadd.f32 0.0, %v3762
        %v3764 = vpop.f32.mrb[0].mxu0
        %v3765 = vadd.f32 0.0, %v3764
        %v3766 = vpop.f32.mrb[0].mxu0
        %v3767 = vadd.f32 0.0, %v3766
        %v3768 = vpop.f32.mrb[0].mxu0
        %v3769 = vadd.f32 0.0, %v3768
        %3770 = vmatprep.mubr.bf16.mxu0 0
        %3771 = vmatmul.mubr.bf16.gmra.mrb[0].mxu0 %v3667
        %v3772 = vpop.f32.mrb[0].mxu0
        %v3773 = vadd.f32 0.0, %v3772
        %v3774 = vpop.f32.mrb[0].mxu0
        %v3775 = vadd.f32 0.0, %v3774
        %v3776 = vpop.f32.mrb[0].mxu0
        %v3777 = vadd.f32 0.0, %v3776
        %v3778 = vpop.f32.mrb[0].mxu0
        %v3779 = vadd.f32 0.0, %v3778
        %3780 = vmatprep.mubr.bf16.mxu0 0
        %3781 = vmatmul.mubr.bf16.gmra.mrb[0].mxu0 %v3670
        %v3782 = vpop.f32.mrb[0].mxu0
        %v3783 = vadd.f32 0.0, %v3782
        %v3784 = vpop.f32.mrb[0].mxu0
        %v3785 = vadd.f32 0.0, %v3784
        %v3786 = vpop.f32.mrb[0].mxu0
        %v3787 = vadd.f32 0.0, %v3786
        %v3788 = vpop.f32.mrb[0].mxu0
        %v3789 = vadd.f32 0.0, %v3788
        %3790 = vdwg.mxu0
        %v3791 = vadd.f32 %v3477, %v3713
        %v3792 = vadd.f32 %v3478, %v3715
        %v3793 = vadd.f32 %v3479, %v3717
        %v3794 = vadd.f32 %v3480, %v3719
        %v3795 = vadd.f32 %v3481, %v3723
        %v3796 = vadd.f32 %v3482, %v3725
        %v3797 = vadd.f32 %v3483, %v3727
        %v3798 = vadd.f32 %v3484, %v3729
        %v3799 = vadd.f32 %v3485, %v3733
        %v3800 = vadd.f32 %v3486, %v3735
        %v3801 = vadd.f32 %v3487, %v3737
        %v3802 = vadd.f32 %v3488, %v3739
        %v3803 = vadd.f32 %v3489, %v3743
        %v3804 = vadd.f32 %v3490, %v3745
        %v3805 = vadd.f32 %v3491, %v3747
        %v3806 = vadd.f32 %v3492, %v3749
        %v3807 = vadd.f32 %v3493, %v3753
        %v3808 = vadd.f32 %v3494, %v3755
        %v3809 = vadd.f32 %v3495, %v3757
        %v3810 = vadd.f32 %v3496, %v3759
        %v3811 = vadd.f32 %v3497, %v3763
        %v3812 = vadd.f32 %v3498, %v3765
        %v3813 = vadd.f32 %v3499, %v3767
        %v3814 = vadd.f32 %v3500, %v3769
        %v3815 = vadd.f32 %v3501, %v3773
        %v3816 = vadd.f32 %v3502, %v3775
        %v3817 = vadd.f32 %v3503, %v3777
        %v3818 = vadd.f32 %v3504, %v3779
        %v3819 = vadd.f32 %v3505, %v3783
        %v3820 = vadd.f32 %v3506, %v3785
        %v3821 = vadd.f32 %v3507, %v3787
        %v3822 = vadd.f32 %v3508, %v3789
        %s3823 = scalar_lea.vmem %s5, 1
        %v3824 = vld [vmem:[%s3823] ss:$8 sm:$0x3]
        %v3826 = vlaneseq
        %v3827 = vshrl.u32 %v3826, 7
        %v3828 = vsub.s32 0, %v3827
        %v3829 = vrot.slane %v3824, %v3828
        %v3830 = vlaneseq
        %v3831 = vshrl.u32 %v3830, 7
        %v3832 = vsub.s32 1, %v3831
        %v3833 = vrot.slane %v3824, %v3832
        %v3836 = vmul.f32 %v3791, %v3829
        %v3837 = vmul.f32 %v3792, %v3833
        %v3838 = vmul.f32 %v3793, %v3829
        %v3839 = vmul.f32 %v3794, %v3833
        %v3840 = vmul.f32 %v3795, %v3829
        %v3841 = vmul.f32 %v3796, %v3833
        %v3842 = vmul.f32 %v3797, %v3829
        %v3843 = vmul.f32 %v3798, %v3833
        %v3844 = vmul.f32 %v3799, %v3829
        %v3845 = vmul.f32 %v3800, %v3833
        %v3846 = vmul.f32 %v3801, %v3829
        %v3847 = vmul.f32 %v3802, %v3833
        %v3848 = vmul.f32 %v3803, %v3829
        %v3849 = vmul.f32 %v3804, %v3833
        %v3850 = vmul.f32 %v3805, %v3829
        %v3851 = vmul.f32 %v3806, %v3833
        %v3852 = vmul.f32 %v3807, %v3829
        %v3853 = vmul.f32 %v3808, %v3833
        %v3854 = vmul.f32 %v3809, %v3829
        %v3855 = vmul.f32 %v3810, %v3833
        %v3856 = vmul.f32 %v3811, %v3829
        %v3857 = vmul.f32 %v3812, %v3833
        %v3858 = vmul.f32 %v3813, %v3829
        %v3859 = vmul.f32 %v3814, %v3833
        %v3860 = vmul.f32 %v3815, %v3829
        %v3861 = vmul.f32 %v3816, %v3833
        %v3862 = vmul.f32 %v3817, %v3829
        %v3863 = vmul.f32 %v3818, %v3833
        %v3864 = vmul.f32 %v3819, %v3829
        %v3865 = vmul.f32 %v3820, %v3833
        %v3866 = vmul.f32 %v3821, %v3829
        %v3867 = vmul.f32 %v3822, %v3833
        %s3868 = scalar_lea.vmem %s6, 1
        %v3869 = vld [vmem:[%s3868] ss:$8 sm:$0x3]
        %v3871 = vlaneseq
        %v3872 = vshrl.u32 %v3871, 7
        %v3873 = vsub.s32 0, %v3872
        %v3874 = vrot.slane %v3869, %v3873
        %v3875 = vlaneseq
        %v3876 = vshrl.u32 %v3875, 7
        %v3877 = vsub.s32 1, %v3876
        %v3878 = vrot.slane %v3869, %v3877
        %v3881 = vadd.f32 %v3836, %v3874
        %v3882 = vadd.f32 %v3837, %v3878
        %v3883 = vadd.f32 %v3838, %v3874
        %v3884 = vadd.f32 %v3839, %v3878
        %v3885 = vadd.f32 %v3840, %v3874
        %v3886 = vadd.f32 %v3841, %v3878
        %v3887 = vadd.f32 %v3842, %v3874
        %v3888 = vadd.f32 %v3843, %v3878
        %v3889 = vadd.f32 %v3844, %v3874
        %v3890 = vadd.f32 %v3845, %v3878
        %v3891 = vadd.f32 %v3846, %v3874
        %v3892 = vadd.f32 %v3847, %v3878
        %v3893 = vadd.f32 %v3848, %v3874
        %v3894 = vadd.f32 %v3849, %v3878
        %v3895 = vadd.f32 %v3850, %v3874
        %v3896 = vadd.f32 %v3851, %v3878
        %v3897 = vadd.f32 %v3852, %v3874
        %v3898 = vadd.f32 %v3853, %v3878
        %v3899 = vadd.f32 %v3854, %v3874
        %v3900 = vadd.f32 %v3855, %v3878
        %v3901 = vadd.f32 %v3856, %v3874
        %v3902 = vadd.f32 %v3857, %v3878
        %v3903 = vadd.f32 %v3858, %v3874
        %v3904 = vadd.f32 %v3859, %v3878
        %v3905 = vadd.f32 %v3860, %v3874
        %v3906 = vadd.f32 %v3861, %v3878
        %v3907 = vadd.f32 %v3862, %v3874
        %v3908 = vadd.f32 %v3863, %v3878
        %v3909 = vadd.f32 %v3864, %v3874
        %v3910 = vadd.f32 %v3865, %v3878
        %v3911 = vadd.f32 %v3866, %v3874
        %v3912 = vadd.f32 %v3867, %v3878
        %v3913 = vmax.f32 %v3881, 0.0
        %v3914 = vmax.f32 %v3882, 0.0
        %v3915 = vmax.f32 %v3883, 0.0
        %v3916 = vmax.f32 %v3884, 0.0
        %v3917 = vmax.f32 %v3885, 0.0
        %v3918 = vmax.f32 %v3886, 0.0
        %v3919 = vmax.f32 %v3887, 0.0
        %v3920 = vmax.f32 %v3888, 0.0
        %v3921 = vmax.f32 %v3889, 0.0
        %v3922 = vmax.f32 %v3890, 0.0
        %v3923 = vmax.f32 %v3891, 0.0
        %v3924 = vmax.f32 %v3892, 0.0
        %v3925 = vmax.f32 %v3893, 0.0
        %v3926 = vmax.f32 %v3894, 0.0
        %v3927 = vmax.f32 %v3895, 0.0
        %v3928 = vmax.f32 %v3896, 0.0
        %v3929 = vmax.f32 %v3897, 0.0
        %v3930 = vmax.f32 %v3898, 0.0
        %v3931 = vmax.f32 %v3899, 0.0
        %v3932 = vmax.f32 %v3900, 0.0
        %v3933 = vmax.f32 %v3901, 0.0
        %v3934 = vmax.f32 %v3902, 0.0
        %v3935 = vmax.f32 %v3903, 0.0
        %v3936 = vmax.f32 %v3904, 0.0
        %v3937 = vmax.f32 %v3905, 0.0
        %v3938 = vmax.f32 %v3906, 0.0
        %v3939 = vmax.f32 %v3907, 0.0
        %v3940 = vmax.f32 %v3908, 0.0
        %v3941 = vmax.f32 %v3909, 0.0
        %v3942 = vmax.f32 %v3910, 0.0
        %v3943 = vmax.f32 %v3911, 0.0
        %v3944 = vmax.f32 %v3912, 0.0
        %v3945 = vpack.c.bf16 %v3915, %v3913
        %v3946 = vpack.c.bf16 %v3916, %v3914
        %v3947 = vpack.c.bf16 %v3919, %v3917
        %v3948 = vpack.c.bf16 %v3920, %v3918
        %v3949 = vpack.c.bf16 %v3923, %v3921
        %v3950 = vpack.c.bf16 %v3924, %v3922
        %v3951 = vpack.c.bf16 %v3927, %v3925
        %v3952 = vpack.c.bf16 %v3928, %v3926
        %v3953 = vpack.c.bf16 %v3931, %v3929
        %v3954 = vpack.c.bf16 %v3932, %v3930
        %v3955 = vpack.c.bf16 %v3935, %v3933
        %v3956 = vpack.c.bf16 %v3936, %v3934
        %v3957 = vpack.c.bf16 %v3939, %v3937
        %v3958 = vpack.c.bf16 %v3940, %v3938
        %v3959 = vpack.c.bf16 %v3943, %v3941
        %v3960 = vpack.c.bf16 %v3944, %v3942
        %s3961 = scalar_lea.vmem [#allocation2], 256
        %v3962 = vld [vmem:[%s3961] sm:$0xff]
        %v3963 = vld [vmem:[%s3961 + $0x8] sm:$0xff]
        %v3964 = vld [vmem:[%s3961 + $0x10] sm:$0xff]
        %v3965 = vld [vmem:[%s3961 + $0x18] sm:$0xff]
        %v3966 = vld [vmem:[%s3961 + $0x20] sm:$0xff]
        %v3967 = vld [vmem:[%s3961 + $0x28] sm:$0xff]
        %v3968 = vld [vmem:[%s3961 + $0x30] sm:$0xff]
        %v3969 = vld [vmem:[%s3961 + $0x38] sm:$0xff]
        %v3970 = vld [vmem:[%s3961 + $0x40] sm:$0xff]
        %v3971 = vld [vmem:[%s3961 + $0x48] sm:$0xff]
        %v3972 = vld [vmem:[%s3961 + $0x50] sm:$0xff]
        %v3973 = vld [vmem:[%s3961 + $0x58] sm:$0xff]
        %v3974 = vld [vmem:[%s3961 + $0x60] sm:$0xff]
        %v3975 = vld [vmem:[%s3961 + $0x68] sm:$0xff]
        %v3976 = vld [vmem:[%s3961 + $0x70] sm:$0xff]
        %v3977 = vld [vmem:[%s3961 + $0x78] sm:$0xff]
        %v3978 = vld [vmem:[%s3961 + $0x80] sm:$0xff]
        %v3979 = vld [vmem:[%s3961 + $0x88] sm:$0xff]
        %v3980 = vld [vmem:[%s3961 + $0x90] sm:$0xff]
        %v3981 = vld [vmem:[%s3961 + $0x98] sm:$0xff]
        %v3982 = vld [vmem:[%s3961 + $0xa0] sm:$0xff]
        %v3983 = vld [vmem:[%s3961 + $0xa8] sm:$0xff]
        %v3984 = vld [vmem:[%s3961 + $0xb0] sm:$0xff]
        %v3985 = vld [vmem:[%s3961 + $0xb8] sm:$0xff]
        %v3986 = vld [vmem:[%s3961 + $0xc0] sm:$0xff]
        %v3987 = vld [vmem:[%s3961 + $0xc8] sm:$0xff]
        %v3988 = vld [vmem:[%s3961 + $0xd0] sm:$0xff]
        %v3989 = vld [vmem:[%s3961 + $0xd8] sm:$0xff]
        %v3990 = vld [vmem:[%s3961 + $0xe0] sm:$0xff]
        %v3991 = vld [vmem:[%s3961 + $0xe8] sm:$0xff]
        %v3992 = vld [vmem:[%s3961 + $0xf0] sm:$0xff]
        %v3993 = vld [vmem:[%s3961 + $0xf8] sm:$0xff]
        %v4026 = vunpack.c.l.b16 %v3962
        %v4027 = vunpack.c.h.b16 %v3962
        %v4028 = vunpack.c.l.b16 %v3963
        %v4029 = vunpack.c.h.b16 %v3963
        %v4030 = vunpack.c.l.b16 %v3964
        %v4031 = vunpack.c.h.b16 %v3964
        %v4032 = vunpack.c.l.b16 %v3965
        %v4033 = vunpack.c.h.b16 %v3965
        %v4034 = vunpack.c.l.b16 %v3966
        %v4035 = vunpack.c.h.b16 %v3966
        %v4036 = vunpack.c.l.b16 %v3967
        %v4037 = vunpack.c.h.b16 %v3967
        %v4038 = vunpack.c.l.b16 %v3968
        %v4039 = vunpack.c.h.b16 %v3968
        %v4040 = vunpack.c.l.b16 %v3969
        %v4041 = vunpack.c.h.b16 %v3969
        %v4042 = vunpack.c.l.b16 %v3970
        %v4043 = vunpack.c.h.b16 %v3970
        %v4044 = vunpack.c.l.b16 %v3971
        %v4045 = vunpack.c.h.b16 %v3971
        %v4046 = vunpack.c.l.b16 %v3972
        %v4047 = vunpack.c.h.b16 %v3972
        %v4048 = vunpack.c.l.b16 %v3973
        %v4049 = vunpack.c.h.b16 %v3973
        %v4050 = vunpack.c.l.b16 %v3974
        %v4051 = vunpack.c.h.b16 %v3974
        %v4052 = vunpack.c.l.b16 %v3975
        %v4053 = vunpack.c.h.b16 %v3975
        %v4054 = vunpack.c.l.b16 %v3976
        %v4055 = vunpack.c.h.b16 %v3976
        %v4056 = vunpack.c.l.b16 %v3977
        %v4057 = vunpack.c.h.b16 %v3977
        %v4058 = vunpack.c.l.b16 %v3978
        %v4059 = vunpack.c.h.b16 %v3978
        %v4060 = vunpack.c.l.b16 %v3979
        %v4061 = vunpack.c.h.b16 %v3979
        %v4062 = vunpack.c.l.b16 %v3980
        %v4063 = vunpack.c.h.b16 %v3980
        %v4064 = vunpack.c.l.b16 %v3981
        %v4065 = vunpack.c.h.b16 %v3981
        %v4066 = vunpack.c.l.b16 %v3982
        %v4067 = vunpack.c.h.b16 %v3982
        %v4068 = vunpack.c.l.b16 %v3983
        %v4069 = vunpack.c.h.b16 %v3983
        %v4070 = vunpack.c.l.b16 %v3984
        %v4071 = vunpack.c.h.b16 %v3984
        %v4072 = vunpack.c.l.b16 %v3985
        %v4073 = vunpack.c.h.b16 %v3985
        %v4074 = vunpack.c.l.b16 %v3986
        %v4075 = vunpack.c.h.b16 %v3986
        %v4076 = vunpack.c.l.b16 %v3987
        %v4077 = vunpack.c.h.b16 %v3987
        %v4078 = vunpack.c.l.b16 %v3988
        %v4079 = vunpack.c.h.b16 %v3988
        %v4080 = vunpack.c.l.b16 %v3989
        %v4081 = vunpack.c.h.b16 %v3989
        %v4082 = vunpack.c.l.b16 %v3990
        %v4083 = vunpack.c.h.b16 %v3990
        %v4084 = vunpack.c.l.b16 %v3991
        %v4085 = vunpack.c.h.b16 %v3991
        %v4086 = vunpack.c.l.b16 %v3992
        %v4087 = vunpack.c.h.b16 %v3992
        %v4088 = vunpack.c.l.b16 %v3993
        %v4089 = vunpack.c.h.b16 %v3993
        %v4090 = vpack.c.b16 %v4028, %v4026
        %v4091 = vpack.c.b16 %v4029, %v4027
        %v4092 = vpack.c.b16 %v4032, %v4030
        %v4093 = vpack.c.b16 %v4033, %v4031
        %v4094 = vpack.c.b16 %v4036, %v4034
        %v4095 = vpack.c.b16 %v4037, %v4035
        %v4096 = vpack.c.b16 %v4040, %v4038
        %v4097 = vpack.c.b16 %v4041, %v4039
        %v4098 = vpack.c.b16 %v4044, %v4042
        %v4099 = vpack.c.b16 %v4045, %v4043
        %v4100 = vpack.c.b16 %v4048, %v4046
        %v4101 = vpack.c.b16 %v4049, %v4047
        %v4102 = vpack.c.b16 %v4052, %v4050
        %v4103 = vpack.c.b16 %v4053, %v4051
        %v4104 = vpack.c.b16 %v4056, %v4054
        %v4105 = vpack.c.b16 %v4057, %v4055
        %v4106 = vpack.c.b16 %v4060, %v4058
        %v4107 = vpack.c.b16 %v4061, %v4059
        %v4108 = vpack.c.b16 %v4064, %v4062
        %v4109 = vpack.c.b16 %v4065, %v4063
        %v4110 = vpack.c.b16 %v4068, %v4066
        %v4111 = vpack.c.b16 %v4069, %v4067
        %v4112 = vpack.c.b16 %v4072, %v4070
        %v4113 = vpack.c.b16 %v4073, %v4071
        %v4114 = vpack.c.b16 %v4076, %v4074
        %v4115 = vpack.c.b16 %v4077, %v4075
        %v4116 = vpack.c.b16 %v4080, %v4078
        %v4117 = vpack.c.b16 %v4081, %v4079
        %v4118 = vpack.c.b16 %v4084, %v4082
        %v4119 = vpack.c.b16 %v4085, %v4083
        %v4120 = vpack.c.b16 %v4088, %v4086
        %v4121 = vpack.c.b16 %v4089, %v4087
        %4154 = vmatprep.subr.bf16.mxu0 %v4091
        %4155 = vmatpush1.bf16.msra.mxu0 %v4090
        %4156 = vmatprep.subr.bf16.mxu0 %v4093
        %4157 = vmatpush1.bf16.msra.mxu0 %v4092
        %4158 = vmatprep.subr.bf16.mxu0 %v4095
        %4159 = vmatpush1.bf16.msra.mxu0 %v4094
        %4160 = vmatprep.subr.bf16.mxu0 %v4097
        %4161 = vmatpush1.bf16.msra.mxu0 %v4096
        %4162 = vmatprep.subr.bf16.mxu0 %v4099
        %4163 = vmatpush1.bf16.msra.mxu0 %v4098
        %4164 = vmatprep.subr.bf16.mxu0 %v4101
        %4165 = vmatpush1.bf16.msra.mxu0 %v4100
        %4166 = vmatprep.subr.bf16.mxu0 %v4103
        %4167 = vmatpush1.bf16.msra.mxu0 %v4102
        %4168 = vmatprep.subr.bf16.mxu0 %v4105
        %4169 = vmatpush1.bf16.msra.mxu0 %v4104
        %4170 = vmatprep.subr.bf16.mxu0 %v4107
        %4171 = vmatpush1.bf16.msra.mxu0 %v4106
        %4172 = vmatprep.subr.bf16.mxu0 %v4109
        %4173 = vmatpush1.bf16.msra.mxu0 %v4108
        %4174 = vmatprep.subr.bf16.mxu0 %v4111
        %4175 = vmatpush1.bf16.msra.mxu0 %v4110
        %4176 = vmatprep.subr.bf16.mxu0 %v4113
        %4177 = vmatpush1.bf16.msra.mxu0 %v4112
        %4178 = vmatprep.subr.bf16.mxu0 %v4115
        %4179 = vmatpush1.bf16.msra.mxu0 %v4114
        %4180 = vmatprep.subr.bf16.mxu0 %v4117
        %4181 = vmatpush1.bf16.msra.mxu0 %v4116
        %4182 = vmatprep.subr.bf16.mxu0 %v4119
        %4183 = vmatpush1.bf16.msra.mxu0 %v4118
        %4184 = vmatprep.subr.bf16.mxu0 %v4121
        %4185 = vmatpush1.bf16.msra.mxu0 %v4120
        %4186 = vmatprep.mubr.bf16.mxu0 %v3946
        %4187 = vmatmul.mubr.bf16.gmra.mrb[0].mxu0 %v3945
        %v4188 = vpop.f32.mrb[0].mxu0
        %v4189 = vadd.f32 0.0, %v4188
        %v4190 = vpop.f32.mrb[0].mxu0
        %v4191 = vadd.f32 0.0, %v4190
        %v4192 = vpop.f32.mrb[0].mxu0
        %v4193 = vadd.f32 0.0, %v4192
        %v4194 = vpop.f32.mrb[0].mxu0
        %v4195 = vadd.f32 0.0, %v4194
        %4196 = vmatprep.mubr.bf16.mxu0 %v3948
        %4197 = vmatmul.mubr.bf16.gmra.mrb[0].mxu0 %v3947
        %v4198 = vpop.f32.mrb[0].mxu0
        %v4199 = vadd.f32 0.0, %v4198
        %v4200 = vpop.f32.mrb[0].mxu0
        %v4201 = vadd.f32 0.0, %v4200
        %v4202 = vpop.f32.mrb[0].mxu0
        %v4203 = vadd.f32 0.0, %v4202
        %v4204 = vpop.f32.mrb[0].mxu0
        %v4205 = vadd.f32 0.0, %v4204
        %4206 = vmatprep.mubr.bf16.mxu0 %v3950
        %4207 = vmatmul.mubr.bf16.gmra.mrb[0].mxu0 %v3949
        %v4208 = vpop.f32.mrb[0].mxu0
        %v4209 = vadd.f32 0.0, %v4208
        %v4210 = vpop.f32.mrb[0].mxu0
        %v4211 = vadd.f32 0.0, %v4210
        %v4212 = vpop.f32.mrb[0].mxu0
        %v4213 = vadd.f32 0.0, %v4212
        %v4214 = vpop.f32.mrb[0].mxu0
        %v4215 = vadd.f32 0.0, %v4214
        %4216 = vmatprep.mubr.bf16.mxu0 %v3952
        %4217 = vmatmul.mubr.bf16.gmra.mrb[0].mxu0 %v3951
        %v4218 = vpop.f32.mrb[0].mxu0
        %v4219 = vadd.f32 0.0, %v4218
        %v4220 = vpop.f32.mrb[0].mxu0
        %v4221 = vadd.f32 0.0, %v4220
        %v4222 = vpop.f32.mrb[0].mxu0
        %v4223 = vadd.f32 0.0, %v4222
        %v4224 = vpop.f32.mrb[0].mxu0
        %v4225 = vadd.f32 0.0, %v4224
        %4226 = vmatprep.mubr.bf16.mxu0 %v3954
        %4227 = vmatmul.mubr.bf16.gmra.mrb[0].mxu0 %v3953
        %v4228 = vpop.f32.mrb[0].mxu0
        %v4229 = vadd.f32 0.0, %v4228
        %v4230 = vpop.f32.mrb[0].mxu0
        %v4231 = vadd.f32 0.0, %v4230
        %v4232 = vpop.f32.mrb[0].mxu0
        %v4233 = vadd.f32 0.0, %v4232
        %v4234 = vpop.f32.mrb[0].mxu0
        %v4235 = vadd.f32 0.0, %v4234
        %4236 = vmatprep.mubr.bf16.mxu0 %v3956
        %4237 = vmatmul.mubr.bf16.gmra.mrb[0].mxu0 %v3955
        %v4238 = vpop.f32.mrb[0].mxu0
        %v4239 = vadd.f32 0.0, %v4238
        %v4240 = vpop.f32.mrb[0].mxu0
        %v4241 = vadd.f32 0.0, %v4240
        %v4242 = vpop.f32.mrb[0].mxu0
        %v4243 = vadd.f32 0.0, %v4242
        %v4244 = vpop.f32.mrb[0].mxu0
        %v4245 = vadd.f32 0.0, %v4244
        %4246 = vmatprep.mubr.bf16.mxu0 %v3958
        %4247 = vmatmul.mubr.bf16.gmra.mrb[0].mxu0 %v3957
        %v4248 = vpop.f32.mrb[0].mxu0
        %v4249 = vadd.f32 0.0, %v4248
        %v4250 = vpop.f32.mrb[0].mxu0
        %v4251 = vadd.f32 0.0, %v4250
        %v4252 = vpop.f32.mrb[0].mxu0
        %v4253 = vadd.f32 0.0, %v4252
        %v4254 = vpop.f32.mrb[0].mxu0
        %v4255 = vadd.f32 0.0, %v4254
        %4256 = vmatprep.mubr.bf16.mxu0 %v3960
        %4257 = vmatmul.mubr.bf16.gmra.mrb[0].mxu0 %v3959
        %v4258 = vpop.f32.mrb[0].mxu0
        %v4259 = vadd.f32 0.0, %v4258
        %v4260 = vpop.f32.mrb[0].mxu0
        %v4261 = vadd.f32 0.0, %v4260
        %v4262 = vpop.f32.mrb[0].mxu0
        %v4263 = vadd.f32 0.0, %v4262
        %v4264 = vpop.f32.mrb[0].mxu0
        %v4265 = vadd.f32 0.0, %v4264
        %4266 = vdwg.mxu0
        %v4299 = vunpack.c.l.b16 %v896
        %v4300 = vunpack.c.h.b16 %v896
        %v4301 = vunpack.c.l.b16 %v897
        %v4302 = vunpack.c.h.b16 %v897
        %v4303 = vunpack.c.l.b16 %v898
        %v4304 = vunpack.c.h.b16 %v898
        %v4305 = vunpack.c.l.b16 %v899
        %v4306 = vunpack.c.h.b16 %v899
        %v4307 = vunpack.c.l.b16 %v900
        %v4308 = vunpack.c.h.b16 %v900
        %v4309 = vunpack.c.l.b16 %v901
        %v4310 = vunpack.c.h.b16 %v901
        %v4311 = vunpack.c.l.b16 %v902
        %v4312 = vunpack.c.h.b16 %v902
        %v4313 = vunpack.c.l.b16 %v903
        %v4314 = vunpack.c.h.b16 %v903
        %v4315 = vunpack.c.l.b16 %v904
        %v4316 = vunpack.c.h.b16 %v904
        %v4317 = vunpack.c.l.b16 %v905
        %v4318 = vunpack.c.h.b16 %v905
        %v4319 = vunpack.c.l.b16 %v906
        %v4320 = vunpack.c.h.b16 %v906
        %v4321 = vunpack.c.l.b16 %v907
        %v4322 = vunpack.c.h.b16 %v907
        %v4323 = vunpack.c.l.b16 %v908
        %v4324 = vunpack.c.h.b16 %v908
        %v4325 = vunpack.c.l.b16 %v909
        %v4326 = vunpack.c.h.b16 %v909
        %v4327 = vunpack.c.l.b16 %v910
        %v4328 = vunpack.c.h.b16 %v910
        %v4329 = vunpack.c.l.b16 %v911
        %v4330 = vunpack.c.h.b16 %v911
        %v4331 = vunpack.c.l.b16 %v912
        %v4332 = vunpack.c.h.b16 %v912
        %v4333 = vunpack.c.l.b16 %v913
        %v4334 = vunpack.c.h.b16 %v913
        %v4335 = vunpack.c.l.b16 %v914
        %v4336 = vunpack.c.h.b16 %v914
        %v4337 = vunpack.c.l.b16 %v915
        %v4338 = vunpack.c.h.b16 %v915
        %v4339 = vunpack.c.l.b16 %v916
        %v4340 = vunpack.c.h.b16 %v916
        %v4341 = vunpack.c.l.b16 %v917
        %v4342 = vunpack.c.h.b16 %v917
        %v4343 = vunpack.c.l.b16 %v918
        %v4344 = vunpack.c.h.b16 %v918
        %v4345 = vunpack.c.l.b16 %v919
        %v4346 = vunpack.c.h.b16 %v919
        %v4347 = vunpack.c.l.b16 %v920
        %v4348 = vunpack.c.h.b16 %v920
        %v4349 = vunpack.c.l.b16 %v921
        %v4350 = vunpack.c.h.b16 %v921
        %v4351 = vunpack.c.l.b16 %v922
        %v4352 = vunpack.c.h.b16 %v922
        %v4353 = vunpack.c.l.b16 %v923
        %v4354 = vunpack.c.h.b16 %v923
        %v4355 = vunpack.c.l.b16 %v924
        %v4356 = vunpack.c.h.b16 %v924
        %v4357 = vunpack.c.l.b16 %v925
        %v4358 = vunpack.c.h.b16 %v925
        %v4359 = vunpack.c.l.b16 %v926
        %v4360 = vunpack.c.h.b16 %v926
        %v4361 = vunpack.c.l.b16 %v927
        %v4362 = vunpack.c.h.b16 %v927
        %v4363 = vpack.c.b16 %v4301, %v4299
        %v4364 = vpack.c.b16 %v4302, %v4300
        %v4365 = vpack.c.b16 %v4305, %v4303
        %v4366 = vpack.c.b16 %v4306, %v4304
        %v4367 = vpack.c.b16 %v4309, %v4307
        %v4368 = vpack.c.b16 %v4310, %v4308
        %v4369 = vpack.c.b16 %v4313, %v4311
        %v4370 = vpack.c.b16 %v4314, %v4312
        %v4371 = vpack.c.b16 %v4317, %v4315
        %v4372 = vpack.c.b16 %v4318, %v4316
        %v4373 = vpack.c.b16 %v4321, %v4319
        %v4374 = vpack.c.b16 %v4322, %v4320
        %v4375 = vpack.c.b16 %v4325, %v4323
        %v4376 = vpack.c.b16 %v4326, %v4324
        %v4377 = vpack.c.b16 %v4329, %v4327
        %v4378 = vpack.c.b16 %v4330, %v4328
        %v4379 = vpack.c.b16 %v4333, %v4331
        %v4380 = vpack.c.b16 %v4334, %v4332
        %v4381 = vpack.c.b16 %v4337, %v4335
        %v4382 = vpack.c.b16 %v4338, %v4336
        %v4383 = vpack.c.b16 %v4341, %v4339
        %v4384 = vpack.c.b16 %v4342, %v4340
        %v4385 = vpack.c.b16 %v4345, %v4343
        %v4386 = vpack.c.b16 %v4346, %v4344
        %v4387 = vpack.c.b16 %v4349, %v4347
        %v4388 = vpack.c.b16 %v4350, %v4348
        %v4389 = vpack.c.b16 %v4353, %v4351
        %v4390 = vpack.c.b16 %v4354, %v4352
        %v4391 = vpack.c.b16 %v4357, %v4355
        %v4392 = vpack.c.b16 %v4358, %v4356
        %v4393 = vpack.c.b16 %v4361, %v4359
        %v4394 = vpack.c.b16 %v4362, %v4360
        %4427 = vmatprep.subr.bf16.mxu0 %v4364
        %4428 = vmatpush1.bf16.msra.mxu0 %v4363
        %4429 = vmatprep.subr.bf16.mxu0 %v4366
        %4430 = vmatpush1.bf16.msra.mxu0 %v4365
        %4431 = vmatprep.subr.bf16.mxu0 %v4368
        %4432 = vmatpush1.bf16.msra.mxu0 %v4367
        %4433 = vmatprep.subr.bf16.mxu0 %v4370
        %4434 = vmatpush1.bf16.msra.mxu0 %v4369
        %4435 = vmatprep.subr.bf16.mxu0 %v4372
        %4436 = vmatpush1.bf16.msra.mxu0 %v4371
        %4437 = vmatprep.subr.bf16.mxu0 %v4374
        %4438 = vmatpush1.bf16.msra.mxu0 %v4373
        %4439 = vmatprep.subr.bf16.mxu0 %v4376
        %4440 = vmatpush1.bf16.msra.mxu0 %v4375
        %4441 = vmatprep.subr.bf16.mxu0 %v4378
        %4442 = vmatpush1.bf16.msra.mxu0 %v4377
        %4443 = vmatprep.subr.bf16.mxu0 %v4380
        %4444 = vmatpush1.bf16.msra.mxu0 %v4379
        %4445 = vmatprep.subr.bf16.mxu0 %v4382
        %4446 = vmatpush1.bf16.msra.mxu0 %v4381
        %4447 = vmatprep.subr.bf16.mxu0 %v4384
        %4448 = vmatpush1.bf16.msra.mxu0 %v4383
        %4449 = vmatprep.subr.bf16.mxu0 %v4386
        %4450 = vmatpush1.bf16.msra.mxu0 %v4385
        %4451 = vmatprep.subr.bf16.mxu0 %v4388
        %4452 = vmatpush1.bf16.msra.mxu0 %v4387
        %4453 = vmatprep.subr.bf16.mxu0 %v4390
        %4454 = vmatpush1.bf16.msra.mxu0 %v4389
        %4455 = vmatprep.subr.bf16.mxu0 %v4392
        %4456 = vmatpush1.bf16.msra.mxu0 %v4391
        %4457 = vmatprep.subr.bf16.mxu0 %v4394
        %4458 = vmatpush1.bf16.msra.mxu0 %v4393
        %4459 = vmatprep.mubr.bf16.mxu0 %v881
        %4460 = vmatmul.mubr.bf16.gmra.mrb[0].mxu0 %v880
        %v4461 = vpop.f32.mrb[0].mxu0
        %v4462 = vadd.f32 %v4189, %v4461
        %v4463 = vpop.f32.mrb[0].mxu0
        %v4464 = vadd.f32 %v4191, %v4463
        %v4465 = vpop.f32.mrb[0].mxu0
        %v4466 = vadd.f32 %v4193, %v4465
        %v4467 = vpop.f32.mrb[0].mxu0
        %v4468 = vadd.f32 %v4195, %v4467
        %4469 = vmatprep.mubr.bf16.mxu0 %v883
        %4470 = vmatmul.mubr.bf16.gmra.mrb[0].mxu0 %v882
        %v4471 = vpop.f32.mrb[0].mxu0
        %v4472 = vadd.f32 %v4199, %v4471
        %v4473 = vpop.f32.mrb[0].mxu0
        %v4474 = vadd.f32 %v4201, %v4473
        %v4475 = vpop.f32.mrb[0].mxu0
        %v4476 = vadd.f32 %v4203, %v4475
        %v4477 = vpop.f32.mrb[0].mxu0
        %v4478 = vadd.f32 %v4205, %v4477
        %4479 = vmatprep.mubr.bf16.mxu0 %v885
        %4480 = vmatmul.mubr.bf16.gmra.mrb[0].mxu0 %v884
        %v4481 = vpop.f32.mrb[0].mxu0
        %v4482 = vadd.f32 %v4209, %v4481
        %v4483 = vpop.f32.mrb[0].mxu0
        %v4484 = vadd.f32 %v4211, %v4483
        %v4485 = vpop.f32.mrb[0].mxu0
        %v4486 = vadd.f32 %v4213, %v4485
        %v4487 = vpop.f32.mrb[0].mxu0
        %v4488 = vadd.f32 %v4215, %v4487
        %4489 = vmatprep.mubr.bf16.mxu0 %v887
        %4490 = vmatmul.mubr.bf16.gmra.mrb[0].mxu0 %v886
        %v4491 = vpop.f32.mrb[0].mxu0
        %v4492 = vadd.f32 %v4219, %v4491
        %v4493 = vpop.f32.mrb[0].mxu0
        %v4494 = vadd.f32 %v4221, %v4493
        %v4495 = vpop.f32.mrb[0].mxu0
        %v4496 = vadd.f32 %v4223, %v4495
        %v4497 = vpop.f32.mrb[0].mxu0
        %v4498 = vadd.f32 %v4225, %v4497
        %4499 = vmatprep.mubr.bf16.mxu0 %v889
        %4500 = vmatmul.mubr.bf16.gmra.mrb[0].mxu0 %v888
        %v4501 = vpop.f32.mrb[0].mxu0
        %v4502 = vadd.f32 %v4229, %v4501
        %v4503 = vpop.f32.mrb[0].mxu0
        %v4504 = vadd.f32 %v4231, %v4503
        %v4505 = vpop.f32.mrb[0].mxu0
        %v4506 = vadd.f32 %v4233, %v4505
        %v4507 = vpop.f32.mrb[0].mxu0
        %v4508 = vadd.f32 %v4235, %v4507
        %4509 = vmatprep.mubr.bf16.mxu0 %v891
        %4510 = vmatmul.mubr.bf16.gmra.mrb[0].mxu0 %v890
        %v4511 = vpop.f32.mrb[0].mxu0
        %v4512 = vadd.f32 %v4239, %v4511
        %v4513 = vpop.f32.mrb[0].mxu0
        %v4514 = vadd.f32 %v4241, %v4513
        %v4515 = vpop.f32.mrb[0].mxu0
        %v4516 = vadd.f32 %v4243, %v4515
        %v4517 = vpop.f32.mrb[0].mxu0
        %v4518 = vadd.f32 %v4245, %v4517
        %4519 = vmatprep.mubr.bf16.mxu0 %v893
        %4520 = vmatmul.mubr.bf16.gmra.mrb[0].mxu0 %v892
        %v4521 = vpop.f32.mrb[0].mxu0
        %v4522 = vadd.f32 %v4249, %v4521
        %v4523 = vpop.f32.mrb[0].mxu0
        %v4524 = vadd.f32 %v4251, %v4523
        %v4525 = vpop.f32.mrb[0].mxu0
        %v4526 = vadd.f32 %v4253, %v4525
        %v4527 = vpop.f32.mrb[0].mxu0
        %v4528 = vadd.f32 %v4255, %v4527
        %4529 = vmatprep.mubr.bf16.mxu0 %v895
        %4530 = vmatmul.mubr.bf16.gmra.mrb[0].mxu0 %v894
        %v4531 = vpop.f32.mrb[0].mxu0
        %v4532 = vadd.f32 %v4259, %v4531
        %v4533 = vpop.f32.mrb[0].mxu0
        %v4534 = vadd.f32 %v4261, %v4533
        %v4535 = vpop.f32.mrb[0].mxu0
        %v4536 = vadd.f32 %v4263, %v4535
        %v4537 = vpop.f32.mrb[0].mxu0
        %v4538 = vadd.f32 %v4265, %v4537
        %4539 = vdwg.mxu0
        %s4540 = sadd.s32 %s325, 1
        %s4541 = smul.u32 %s4540, 3
        %s4542 = smul.addr %s4541, 4
        %s4543 = scalar_lea.vmem %s318, %s4542
        %v4544 = vld [vmem:[%s4543] sm:$0xf]
        %v4545 = vld [vmem:[%s4543 + $0x4] sm:$0xf]
        %v4546 = vld [vmem:[%s4543 + $0x8] sm:$0x1]
        %v4547 = vld [vmem:[%s4543 + $0xc] sm:$0xf]
        %v4548 = vld [vmem:[%s4543 + $0x10] sm:$0xf]
        %v4549 = vld [vmem:[%s4543 + $0x14] sm:$0x1]
        %v4550 = vld [vmem:[%s4543 + $0x18] sm:$0xf]
        %v4551 = vld [vmem:[%s4543 + $0x1c] sm:$0xf]
        %v4552 = vld [vmem:[%s4543 + $0x20] sm:$0x1]
        %v4553 = vld [vmem:[%s4543 + $0x24] sm:$0xf]
        %v4554 = vld [vmem:[%s4543 + $0x28] sm:$0xf]
        %v4555 = vld [vmem:[%s4543 + $0x2c] sm:$0x1]
        %v4556 = vld [vmem:[%s4543 + $0x30] sm:$0xf]
        %v4557 = vld [vmem:[%s4543 + $0x34] sm:$0xf]
        %v4558 = vld [vmem:[%s4543 + $0x38] sm:$0x1]
        %v4559 = vld [vmem:[%s4543 + $0x3c] sm:$0xf]
        %v4560 = vld [vmem:[%s4543 + $0x40] sm:$0xf]
        %v4561 = vld [vmem:[%s4543 + $0x44] sm:$0x1]
        %v4562 = vld [vmem:[%s4543 + $0x48] sm:$0xf]
        %v4563 = vld [vmem:[%s4543 + $0x4c] sm:$0xf]
        %v4564 = vld [vmem:[%s4543 + $0x50] sm:$0x1]
        %v4565 = vld [vmem:[%s4543 + $0x54] sm:$0xf]
        %v4566 = vld [vmem:[%s4543 + $0x58] sm:$0xf]
        %v4567 = vld [vmem:[%s4543 + $0x5c] sm:$0x1]
        %vm4568 = vsmask.f32 3328
        %vm4569 = vsmask.f32 7440
        %vm4570 = vmor %vm4568, %vm4569
        %v4572 = vshrl.u32 %v4544, 16
        %v4574 = vrot.slane %v4572, 4
        %v4575 = vshll.u32 %v4544, 16
        %v4577 = vrot.slane %v4575, 5
        %v4578 = vor.u32 %v4574, %v4577
        %v4579 = vrot.slane %v4578, 4
        %v4581 = vshll.u32 %v4545, 16
        %v4583 = vrot.slane %v4581, 5
        %v4584 = vsel %vm4570, %v4579, %v4583
        %v4585 = vshrl.u32 %v4545, 16
        %v4587 = vrot.slane %v4585, 4
        %v4588 = vor.u32 %v4587, %v4583
        %v4589 = vrot.slane %v4588, 4
        %v4591 = vshll.u32 %v4546, 16
        %v4593 = vrot.slane %v4591, 5
        %v4594 = vsel %vm4570, %v4589, %v4593
        %v4596 = vshrl.u32 %v4547, 16
        %v4598 = vrot.slane %v4596, 4
        %v4599 = vshll.u32 %v4547, 16
        %v4601 = vrot.slane %v4599, 5
        %v4602 = vor.u32 %v4598, %v4601
        %v4603 = vrot.slane %v4602, 4
        %v4605 = vshll.u32 %v4548, 16
        %v4607 = vrot.slane %v4605, 5
        %v4608 = vsel %vm4570, %v4603, %v4607
        %v4609 = vshrl.u32 %v4548, 16
        %v4611 = vrot.slane %v4609, 4
        %v4612 = vor.u32 %v4611, %v4607
        %v4613 = vrot.slane %v4612, 4
        %v4615 = vshll.u32 %v4549, 16
        %v4617 = vrot.slane %v4615, 5
        %v4618 = vsel %vm4570, %v4613, %v4617
        %v4620 = vshrl.u32 %v4550, 16
        %v4622 = vrot.slane %v4620, 4
        %v4623 = vshll.u32 %v4550, 16
        %v4625 = vrot.slane %v4623, 5
        %v4626 = vor.u32 %v4622, %v4625
        %v4627 = vrot.slane %v4626, 4
        %v4629 = vshll.u32 %v4551, 16
        %v4631 = vrot.slane %v4629, 5
        %v4632 = vsel %vm4570, %v4627, %v4631
        %v4633 = vshrl.u32 %v4551, 16
        %v4635 = vrot.slane %v4633, 4
        %v4636 = vor.u32 %v4635, %v4631
        %v4637 = vrot.slane %v4636, 4
        %v4639 = vshll.u32 %v4552, 16
        %v4641 = vrot.slane %v4639, 5
        %v4642 = vsel %vm4570, %v4637, %v4641
        %v4644 = vshrl.u32 %v4553, 16
        %v4646 = vrot.slane %v4644, 4
        %v4647 = vshll.u32 %v4553, 16
        %v4649 = vrot.slane %v4647, 5
        %v4650 = vor.u32 %v4646, %v4649
        %v4651 = vrot.slane %v4650, 4
        %v4653 = vshll.u32 %v4554, 16
        %v4655 = vrot.slane %v4653, 5
        %v4656 = vsel %vm4570, %v4651, %v4655
        %v4657 = vshrl.u32 %v4554, 16
        %v4659 = vrot.slane %v4657, 4
        %v4660 = vor.u32 %v4659, %v4655
        %v4661 = vrot.slane %v4660, 4
        %v4663 = vshll.u32 %v4555, 16
        %v4665 = vrot.slane %v4663, 5
        %v4666 = vsel %vm4570, %v4661, %v4665
        %v4668 = vshrl.u32 %v4556, 16
        %v4670 = vrot.slane %v4668, 4
        %v4671 = vshll.u32 %v4556, 16
        %v4673 = vrot.slane %v4671, 5
        %v4674 = vor.u32 %v4670, %v4673
        %v4675 = vrot.slane %v4674, 4
        %v4677 = vshll.u32 %v4557, 16
        %v4679 = vrot.slane %v4677, 5
        %v4680 = vsel %vm4570, %v4675, %v4679
        %v4681 = vshrl.u32 %v4557, 16
        %v4683 = vrot.slane %v4681, 4
        %v4684 = vor.u32 %v4683, %v4679
        %v4685 = vrot.slane %v4684, 4
        %v4687 = vshll.u32 %v4558, 16
        %v4689 = vrot.slane %v4687, 5
        %v4690 = vsel %vm4570, %v4685, %v4689
        %v4692 = vshrl.u32 %v4559, 16
        %v4694 = vrot.slane %v4692, 4
        %v4695 = vshll.u32 %v4559, 16
        %v4697 = vrot.slane %v4695, 5
        %v4698 = vor.u32 %v4694, %v4697
        %v4699 = vrot.slane %v4698, 4
        %v4701 = vshll.u32 %v4560, 16
        %v4703 = vrot.slane %v4701, 5
        %v4704 = vsel %vm4570, %v4699, %v4703
        %v4705 = vshrl.u32 %v4560, 16
        %v4707 = vrot.slane %v4705, 4
        %v4708 = vor.u32 %v4707, %v4703
        %v4709 = vrot.slane %v4708, 4
        %v4711 = vshll.u32 %v4561, 16
        %v4713 = vrot.slane %v4711, 5
        %v4714 = vsel %vm4570, %v4709, %v4713
        %v4716 = vshrl.u32 %v4562, 16
        %v4718 = vrot.slane %v4716, 4
        %v4719 = vshll.u32 %v4562, 16
        %v4721 = vrot.slane %v4719, 5
        %v4722 = vor.u32 %v4718, %v4721
        %v4723 = vrot.slane %v4722, 4
        %v4725 = vshll.u32 %v4563, 16
        %v4727 = vrot.slane %v4725, 5
        %v4728 = vsel %vm4570, %v4723, %v4727
        %v4729 = vshrl.u32 %v4563, 16
        %v4731 = vrot.slane %v4729, 4
        %v4732 = vor.u32 %v4731, %v4727
        %v4733 = vrot.slane %v4732, 4
        %v4735 = vshll.u32 %v4564, 16
        %v4737 = vrot.slane %v4735, 5
        %v4738 = vsel %vm4570, %v4733, %v4737
        %v4740 = vshrl.u32 %v4565, 16
        %v4742 = vrot.slane %v4740, 4
        %v4743 = vshll.u32 %v4565, 16
        %v4745 = vrot.slane %v4743, 5
        %v4746 = vor.u32 %v4742, %v4745
        %v4747 = vrot.slane %v4746, 4
        %v4749 = vshll.u32 %v4566, 16
        %v4751 = vrot.slane %v4749, 5
        %v4752 = vsel %vm4570, %v4747, %v4751
        %v4753 = vshrl.u32 %v4566, 16
        %v4755 = vrot.slane %v4753, 4
        %v4756 = vor.u32 %v4755, %v4751
        %v4757 = vrot.slane %v4756, 4
        %v4759 = vshll.u32 %v4567, 16
        %v4761 = vrot.slane %v4759, 5
        %v4762 = vsel %vm4570, %v4757, %v4761
        %s4763 = scalar_lea.vmem %s3, 36
        %v4764 = vld [vmem:[%s4763] sm:$0xf]
        %v4765 = vld [vmem:[%s4543] sm:$0xe]
        %v4766 = vld [vmem:[%s4543 + $0x8] sm:$0x3]
        %v4767 = vld [vmem:[%s4543 + $0xc] sm:$0xe]
        %v4768 = vld [vmem:[%s4543 + $0x14] sm:$0x3]
        %v4769 = vld [vmem:[%s4543 + $0x18] sm:$0xe]
        %v4770 = vld [vmem:[%s4543 + $0x20] sm:$0x3]
        %v4771 = vld [vmem:[%s4543 + $0x24] sm:$0xe]
        %v4772 = vld [vmem:[%s4543 + $0x2c] sm:$0x3]
        %v4773 = vld [vmem:[%s4543 + $0x30] sm:$0xe]
        %v4774 = vld [vmem:[%s4543 + $0x38] sm:$0x3]
        %v4775 = vld [vmem:[%s4543 + $0x3c] sm:$0xe]
        %v4776 = vld [vmem:[%s4543 + $0x44] sm:$0x3]
        %v4777 = vld [vmem:[%s4543 + $0x48] sm:$0xe]
        %v4778 = vld [vmem:[%s4543 + $0x50] sm:$0x3]
        %v4779 = vld [vmem:[%s4543 + $0x54] sm:$0xe]
        %v4780 = vld [vmem:[%s4543 + $0x5c] sm:$0x3]
        %v4782 = vshrl.u32 %v4765, 16
        %v4784 = vrot.slane %v4782, 5
        %v4785 = vshll.u32 %v4765, 16
        %v4787 = vrot.slane %v4785, 6
        %v4788 = vor.u32 %v4784, %v4787
        %v4789 = vrot.slane %v4788, 4
        %v4790 = vrot.slane %v4585, 5
        %v4791 = vrot.slane %v4581, 6
        %v4792 = vor.u32 %v4790, %v4791
        %v4793 = vsel %vm356, %v4789, %v4792
        %v4794 = vrot.slane %v4792, 4
        %v4796 = vshrl.u32 %v4766, 16
        %v4798 = vrot.slane %v4796, 5
        %v4799 = vshll.u32 %v4766, 16
        %v4801 = vrot.slane %v4799, 6
        %v4802 = vor.u32 %v4798, %v4801
        %v4803 = vsel %vm356, %v4794, %v4802
        %v4805 = vshrl.u32 %v4767, 16
        %v4807 = vrot.slane %v4805, 5
        %v4808 = vshll.u32 %v4767, 16
        %v4810 = vrot.slane %v4808, 6
        %v4811 = vor.u32 %v4807, %v4810
        %v4812 = vrot.slane %v4811, 4
        %v4813 = vrot.slane %v4609, 5
        %v4814 = vrot.slane %v4605, 6
        %v4815 = vor.u32 %v4813, %v4814
        %v4816 = vsel %vm356, %v4812, %v4815
        %v4817 = vrot.slane %v4815, 4
        %v4819 = vshrl.u32 %v4768, 16
        %v4821 = vrot.slane %v4819, 5
        %v4822 = vshll.u32 %v4768, 16
        %v4824 = vrot.slane %v4822, 6
        %v4825 = vor.u32 %v4821, %v4824
        %v4826 = vsel %vm356, %v4817, %v4825
        %v4828 = vshrl.u32 %v4769, 16
        %v4830 = vrot.slane %v4828, 5
        %v4831 = vshll.u32 %v4769, 16
        %v4833 = vrot.slane %v4831, 6
        %v4834 = vor.u32 %v4830, %v4833
        %v4835 = vrot.slane %v4834, 4
        %v4836 = vrot.slane %v4633, 5
        %v4837 = vrot.slane %v4629, 6
        %v4838 = vor.u32 %v4836, %v4837
        %v4839 = vsel %vm356, %v4835, %v4838
        %v4840 = vrot.slane %v4838, 4
        %v4842 = vshrl.u32 %v4770, 16
        %v4844 = vrot.slane %v4842, 5
        %v4845 = vshll.u32 %v4770, 16
        %v4847 = vrot.slane %v4845, 6
        %v4848 = vor.u32 %v4844, %v4847
        %v4849 = vsel %vm356, %v4840, %v4848
        %v4851 = vshrl.u32 %v4771, 16
        %v4853 = vrot.slane %v4851, 5
        %v4854 = vshll.u32 %v4771, 16
        %v4856 = vrot.slane %v4854, 6
        %v4857 = vor.u32 %v4853, %v4856
        %v4858 = vrot.slane %v4857, 4
        %v4859 = vrot.slane %v4657, 5
        %v4860 = vrot.slane %v4653, 6
        %v4861 = vor.u32 %v4859, %v4860
        %v4862 = vsel %vm356, %v4858, %v4861
        %v4863 = vrot.slane %v4861, 4
        %v4865 = vshrl.u32 %v4772, 16
        %v4867 = vrot.slane %v4865, 5
        %v4868 = vshll.u32 %v4772, 16
        %v4870 = vrot.slane %v4868, 6
        %v4871 = vor.u32 %v4867, %v4870
        %v4872 = vsel %vm356, %v4863, %v4871
        %v4874 = vshrl.u32 %v4773, 16
        %v4876 = vrot.slane %v4874, 5
        %v4877 = vshll.u32 %v4773, 16
        %v4879 = vrot.slane %v4877, 6
        %v4880 = vor.u32 %v4876, %v4879
        %v4881 = vrot.slane %v4880, 4
        %v4882 = vrot.slane %v4681, 5
        %v4883 = vrot.slane %v4677, 6
        %v4884 = vor.u32 %v4882, %v4883
        %v4885 = vsel %vm356, %v4881, %v4884
        %v4886 = vrot.slane %v4884, 4
        %v4888 = vshrl.u32 %v4774, 16
        %v4890 = vrot.slane %v4888, 5
        %v4891 = vshll.u32 %v4774, 16
        %v4893 = vrot.slane %v4891, 6
        %v4894 = vor.u32 %v4890, %v4893
        %v4895 = vsel %vm356, %v4886, %v4894
        %v4897 = vshrl.u32 %v4775, 16
        %v4899 = vrot.slane %v4897, 5
        %v4900 = vshll.u32 %v4775, 16
        %v4902 = vrot.slane %v4900, 6
        %v4903 = vor.u32 %v4899, %v4902
        %v4904 = vrot.slane %v4903, 4
        %v4905 = vrot.slane %v4705, 5
        %v4906 = vrot.slane %v4701, 6
        %v4907 = vor.u32 %v4905, %v4906
        %v4908 = vsel %vm356, %v4904, %v4907
        %v4909 = vrot.slane %v4907, 4
        %v4911 = vshrl.u32 %v4776, 16
        %v4913 = vrot.slane %v4911, 5
        %v4914 = vshll.u32 %v4776, 16
        %v4916 = vrot.slane %v4914, 6
        %v4917 = vor.u32 %v4913, %v4916
        %v4918 = vsel %vm356, %v4909, %v4917
        %v4920 = vshrl.u32 %v4777, 16
        %v4922 = vrot.slane %v4920, 5
        %v4923 = vshll.u32 %v4777, 16
        %v4925 = vrot.slane %v4923, 6
        %v4926 = vor.u32 %v4922, %v4925
        %v4927 = vrot.slane %v4926, 4
        %v4928 = vrot.slane %v4729, 5
        %v4929 = vrot.slane %v4725, 6
        %v4930 = vor.u32 %v4928, %v4929
        %v4931 = vsel %vm356, %v4927, %v4930
        %v4932 = vrot.slane %v4930, 4
        %v4934 = vshrl.u32 %v4778, 16
        %v4936 = vrot.slane %v4934, 5
        %v4937 = vshll.u32 %v4778, 16
        %v4939 = vrot.slane %v4937, 6
        %v4940 = vor.u32 %v4936, %v4939
        %v4941 = vsel %vm356, %v4932, %v4940
        %v4943 = vshrl.u32 %v4779, 16
        %v4945 = vrot.slane %v4943, 5
        %v4946 = vshll.u32 %v4779, 16
        %v4948 = vrot.slane %v4946, 6
        %v4949 = vor.u32 %v4945, %v4948
        %v4950 = vrot.slane %v4949, 4
        %v4951 = vrot.slane %v4753, 5
        %v4952 = vrot.slane %v4749, 6
        %v4953 = vor.u32 %v4951, %v4952
        %v4954 = vsel %vm356, %v4950, %v4953
        %v4955 = vrot.slane %v4953, 4
        %v4957 = vshrl.u32 %v4780, 16
        %v4959 = vrot.slane %v4957, 5
        %v4960 = vshll.u32 %v4780, 16
        %v4962 = vrot.slane %v4960, 6
        %v4963 = vor.u32 %v4959, %v4962
        %v4964 = vsel %vm356, %v4955, %v4963
        %s4965 = scalar_lea.vmem %s3, 40
        %v4966 = vld [vmem:[%s4965] sm:$0xf]
        %v4967 = vunpack.c.l.b16 %v4793
        %v4968 = vunpack.c.l.b16 %v4803
        %v4969 = vunpack.c.l.b16 %v4816
        %v4970 = vunpack.c.l.b16 %v4826
        %v4971 = vunpack.c.l.b16 %v4839
        %v4972 = vunpack.c.l.b16 %v4849
        %v4973 = vunpack.c.l.b16 %v4862
        %v4974 = vunpack.c.l.b16 %v4872
        %v4975 = vunpack.c.l.b16 %v4885
        %v4976 = vunpack.c.l.b16 %v4895
        %v4977 = vunpack.c.l.b16 %v4908
        %v4978 = vunpack.c.l.b16 %v4918
        %v4979 = vunpack.c.l.b16 %v4931
        %v4980 = vunpack.c.l.b16 %v4941
        %v4981 = vunpack.c.l.b16 %v4954
        %v4982 = vunpack.c.l.b16 %v4964
        %v4983 = vpack.c.b16 %v4968, %v4967
        %v4984 = vpack.c.b16 %v4970, %v4969
        %v4985 = vpack.c.b16 %v4972, %v4971
        %v4986 = vpack.c.b16 %v4974, %v4973
        %v4987 = vpack.c.b16 %v4976, %v4975
        %v4988 = vpack.c.b16 %v4978, %v4977
        %v4989 = vpack.c.b16 %v4980, %v4979
        %v4990 = vpack.c.b16 %v4982, %v4981
        %v4993 = vunpack.c.l.s4 1983009808
        %v4994 = vunpack.c.0.s8 %v4993
        %v4995 = vlaneseq
        %v4996 = vshrl.u32 %v4995, 7
        %v4997 = vsub.s32 %v4994, %v4996
        %v4998 = vrot.slane %v4966, %v4997
        %v4999 = vcombine.high %v4998, %v4998
        %v5001 = vsel %vm615, %v4983, 0
        %v5004 = vsel %vm615, %v4984, 0
        %v5007 = vsel %vm615, %v4985, 0
        %v5010 = vsel %vm615, %v4986, 0
        %v5013 = vsel %vm615, %v4987, 0
        %v5016 = vsel %vm615, %v4988, 0
        %v5019 = vsel %vm615, %v4989, 0
        %v5022 = vsel %vm615, %v4990, 0
        %v5025 = vsel %vm640, %v4998, 0
        %v5028 = vsel %vm640, %v4999, 0
        %5030 = vmatprep.subr.bf16.mxu0 %v5028
        %5031 = vmatpush1.bf16.msra.mxu0 %v5025
        %5032 = vmatprep.subr.bf16.mxu0 0
        %5033 = vmatpush1.bf16.msra.mxu0 0
        %5034 = vmatprep.subr.bf16.mxu0 0
        %5035 = vmatpush1.bf16.msra.mxu0 0
        %5036 = vmatprep.subr.bf16.mxu0 0
        %5037 = vmatpush1.bf16.msra.mxu0 0
        %5038 = vmatprep.subr.bf16.mxu0 0
        %5039 = vmatpush1.bf16.msra.mxu0 0
        %5040 = vmatprep.subr.bf16.mxu0 0
        %5041 = vmatpush1.bf16.msra.mxu0 0
        %5042 = vmatprep.subr.bf16.mxu0 0
        %5043 = vmatpush1.bf16.msra.mxu0 0
        %5044 = vmatprep.subr.bf16.mxu0 0
        %5045 = vmatpush1.bf16.msra.mxu0 0
        %5046 = vmatprep.subr.bf16.mxu0 0
        %5047 = vmatpush1.bf16.msra.mxu0 0
        %5048 = vmatprep.subr.bf16.mxu0 0
        %5049 = vmatpush1.bf16.msra.mxu0 0
        %5050 = vmatprep.subr.bf16.mxu0 0
        %5051 = vmatpush1.bf16.msra.mxu0 0
        %5052 = vmatprep.subr.bf16.mxu0 0
        %5053 = vmatpush1.bf16.msra.mxu0 0
        %5054 = vmatprep.subr.bf16.mxu0 0
        %5055 = vmatpush1.bf16.msra.mxu0 0
        %5056 = vmatprep.subr.bf16.mxu0 0
        %5057 = vmatpush1.bf16.msra.mxu0 0
        %5058 = vmatprep.subr.bf16.mxu0 0
        %5059 = vmatpush1.bf16.msra.mxu0 0
        %5060 = vmatprep.subr.bf16.mxu0 0
        %5061 = vmatpush1.bf16.msra.mxu0 0
        %5062 = vmatprep.mubr.bf16.mxu0 0
        %5063 = vmatmul.mubr.bf16.gmra.mrb[0].mxu0 %v5001
        %v5064 = vpop.f32.mrb[0].mxu0
        %v5065 = vadd.f32 0.0, %v5064
        %v5066 = vpop.f32.mrb[0].mxu0
        %v5067 = vadd.f32 0.0, %v5066
        %v5068 = vpop.f32.mrb[0].mxu0
        %v5069 = vadd.f32 0.0, %v5068
        %v5070 = vpop.f32.mrb[0].mxu0
        %v5071 = vadd.f32 0.0, %v5070
        %5072 = vmatprep.mubr.bf16.mxu0 0
        %5073 = vmatmul.mubr.bf16.gmra.mrb[0].mxu0 %v5004
        %v5074 = vpop.f32.mrb[0].mxu0
        %v5075 = vadd.f32 0.0, %v5074
        %v5076 = vpop.f32.mrb[0].mxu0
        %v5077 = vadd.f32 0.0, %v5076
        %v5078 = vpop.f32.mrb[0].mxu0
        %v5079 = vadd.f32 0.0, %v5078
        %v5080 = vpop.f32.mrb[0].mxu0
        %v5081 = vadd.f32 0.0, %v5080
        %5082 = vmatprep.mubr.bf16.mxu0 0
        %5083 = vmatmul.mubr.bf16.gmra.mrb[0].mxu0 %v5007
        %v5084 = vpop.f32.mrb[0].mxu0
        %v5085 = vadd.f32 0.0, %v5084
        %v5086 = vpop.f32.mrb[0].mxu0
        %v5087 = vadd.f32 0.0, %v5086
        %v5088 = vpop.f32.mrb[0].mxu0
        %v5089 = vadd.f32 0.0, %v5088
        %v5090 = vpop.f32.mrb[0].mxu0
        %v5091 = vadd.f32 0.0, %v5090
        %5092 = vmatprep.mubr.bf16.mxu0 0
        %5093 = vmatmul.mubr.bf16.gmra.mrb[0].mxu0 %v5010
        %v5094 = vpop.f32.mrb[0].mxu0
        %v5095 = vadd.f32 0.0, %v5094
        %v5096 = vpop.f32.mrb[0].mxu0
        %v5097 = vadd.f32 0.0, %v5096
        %v5098 = vpop.f32.mrb[0].mxu0
        %v5099 = vadd.f32 0.0, %v5098
        %v5100 = vpop.f32.mrb[0].mxu0
        %v5101 = vadd.f32 0.0, %v5100
        %5102 = vmatprep.mubr.bf16.mxu0 0
        %5103 = vmatmul.mubr.bf16.gmra.mrb[0].mxu0 %v5013
        %v5104 = vpop.f32.mrb[0].mxu0
        %v5105 = vadd.f32 0.0, %v5104
        %v5106 = vpop.f32.mrb[0].mxu0
        %v5107 = vadd.f32 0.0, %v5106
        %v5108 = vpop.f32.mrb[0].mxu0
        %v5109 = vadd.f32 0.0, %v5108
        %v5110 = vpop.f32.mrb[0].mxu0
        %v5111 = vadd.f32 0.0, %v5110
        %5112 = vmatprep.mubr.bf16.mxu0 0
        %5113 = vmatmul.mubr.bf16.gmra.mrb[0].mxu0 %v5016
        %v5114 = vpop.f32.mrb[0].mxu0
        %v5115 = vadd.f32 0.0, %v5114
        %v5116 = vpop.f32.mrb[0].mxu0
        %v5117 = vadd.f32 0.0, %v5116
        %v5118 = vpop.f32.mrb[0].mxu0
        %v5119 = vadd.f32 0.0, %v5118
        %v5120 = vpop.f32.mrb[0].mxu0
        %v5121 = vadd.f32 0.0, %v5120
        %5122 = vmatprep.mubr.bf16.mxu0 0
        %5123 = vmatmul.mubr.bf16.gmra.mrb[0].mxu0 %v5019
        %v5124 = vpop.f32.mrb[0].mxu0
        %v5125 = vadd.f32 0.0, %v5124
        %v5126 = vpop.f32.mrb[0].mxu0
        %v5127 = vadd.f32 0.0, %v5126
        %v5128 = vpop.f32.mrb[0].mxu0
        %v5129 = vadd.f32 0.0, %v5128
        %v5130 = vpop.f32.mrb[0].mxu0
        %v5131 = vadd.f32 0.0, %v5130
        %5132 = vmatprep.mubr.bf16.mxu0 0
        %5133 = vmatmul.mubr.bf16.gmra.mrb[0].mxu0 %v5022
        %v5134 = vpop.f32.mrb[0].mxu0
        %v5135 = vadd.f32 0.0, %v5134
        %v5136 = vpop.f32.mrb[0].mxu0
        %v5137 = vadd.f32 0.0, %v5136
        %v5138 = vpop.f32.mrb[0].mxu0
        %v5139 = vadd.f32 0.0, %v5138
        %v5140 = vpop.f32.mrb[0].mxu0
        %v5141 = vadd.f32 0.0, %v5140
        %5142 = vdwg.mxu0
        %v5143 = vunpack.c.l.b16 %v4584
        %v5144 = vunpack.c.l.b16 %v4594
        %v5145 = vunpack.c.l.b16 %v4608
        %v5146 = vunpack.c.l.b16 %v4618
        %v5147 = vunpack.c.l.b16 %v4632
        %v5148 = vunpack.c.l.b16 %v4642
        %v5149 = vunpack.c.l.b16 %v4656
        %v5150 = vunpack.c.l.b16 %v4666
        %v5151 = vunpack.c.l.b16 %v4680
        %v5152 = vunpack.c.l.b16 %v4690
        %v5153 = vunpack.c.l.b16 %v4704
        %v5154 = vunpack.c.l.b16 %v4714
        %v5155 = vunpack.c.l.b16 %v4728
        %v5156 = vunpack.c.l.b16 %v4738
        %v5157 = vunpack.c.l.b16 %v4752
        %v5158 = vunpack.c.l.b16 %v4762
        %v5159 = vpack.c.b16 %v5144, %v5143
        %v5160 = vpack.c.b16 %v5146, %v5145
        %v5161 = vpack.c.b16 %v5148, %v5147
        %v5162 = vpack.c.b16 %v5150, %v5149
        %v5163 = vpack.c.b16 %v5152, %v5151
        %v5164 = vpack.c.b16 %v5154, %v5153
        %v5165 = vpack.c.b16 %v5156, %v5155
        %v5166 = vpack.c.b16 %v5158, %v5157
        %v5169 = vunpack.c.l.s4 1983009808
        %v5170 = vunpack.c.0.s8 %v5169
        %v5171 = vlaneseq
        %v5172 = vshrl.u32 %v5171, 7
        %v5173 = vsub.s32 %v5170, %v5172
        %v5174 = vrot.slane %v4764, %v5173
        %v5175 = vcombine.high %v5174, %v5174
        %v5177 = vsel %vm615, %v5159, 0
        %v5180 = vsel %vm615, %v5160, 0
        %v5183 = vsel %vm615, %v5161, 0
        %v5186 = vsel %vm615, %v5162, 0
        %v5189 = vsel %vm615, %v5163, 0
        %v5192 = vsel %vm615, %v5164, 0
        %v5195 = vsel %vm615, %v5165, 0
        %v5198 = vsel %vm615, %v5166, 0
        %v5201 = vsel %vm640, %v5174, 0
        %v5204 = vsel %vm640, %v5175, 0
        %5206 = vmatprep.subr.bf16.mxu0 %v5204
        %5207 = vmatpush1.bf16.msra.mxu0 %v5201
        %5208 = vmatprep.subr.bf16.mxu0 0
        %5209 = vmatpush1.bf16.msra.mxu0 0
        %5210 = vmatprep.subr.bf16.mxu0 0
        %5211 = vmatpush1.bf16.msra.mxu0 0
        %5212 = vmatprep.subr.bf16.mxu0 0
        %5213 = vmatpush1.bf16.msra.mxu0 0
        %5214 = vmatprep.subr.bf16.mxu0 0
        %5215 = vmatpush1.bf16.msra.mxu0 0
        %5216 = vmatprep.subr.bf16.mxu0 0
        %5217 = vmatpush1.bf16.msra.mxu0 0
        %5218 = vmatprep.subr.bf16.mxu0 0
        %5219 = vmatpush1.bf16.msra.mxu0 0
        %5220 = vmatprep.subr.bf16.mxu0 0
        %5221 = vmatpush1.bf16.msra.mxu0 0
        %5222 = vmatprep.subr.bf16.mxu0 0
        %5223 = vmatpush1.bf16.msra.mxu0 0
        %5224 = vmatprep.subr.bf16.mxu0 0
        %5225 = vmatpush1.bf16.msra.mxu0 0
        %5226 = vmatprep.subr.bf16.mxu0 0
        %5227 = vmatpush1.bf16.msra.mxu0 0
        %5228 = vmatprep.subr.bf16.mxu0 0
        %5229 = vmatpush1.bf16.msra.mxu0 0
        %5230 = vmatprep.subr.bf16.mxu0 0
        %5231 = vmatpush1.bf16.msra.mxu0 0
        %5232 = vmatprep.subr.bf16.mxu0 0
        %5233 = vmatpush1.bf16.msra.mxu0 0
        %5234 = vmatprep.subr.bf16.mxu0 0
        %5235 = vmatpush1.bf16.msra.mxu0 0
        %5236 = vmatprep.subr.bf16.mxu0 0
        %5237 = vmatpush1.bf16.msra.mxu0 0
        %5238 = vmatprep.mubr.bf16.mxu0 0
        %5239 = vmatmul.mubr.bf16.gmra.mrb[0].mxu0 %v5177
        %v5240 = vpop.f32.mrb[0].mxu0
        %v5241 = vadd.f32 %v5065, %v5240
        %v5242 = vpop.f32.mrb[0].mxu0
        %v5243 = vadd.f32 %v5067, %v5242
        %v5244 = vpop.f32.mrb[0].mxu0
        %v5245 = vadd.f32 %v5069, %v5244
        %v5246 = vpop.f32.mrb[0].mxu0
        %v5247 = vadd.f32 %v5071, %v5246
        %5248 = vmatprep.mubr.bf16.mxu0 0
        %5249 = vmatmul.mubr.bf16.gmra.mrb[0].mxu0 %v5180
        %v5250 = vpop.f32.mrb[0].mxu0
        %v5251 = vadd.f32 %v5075, %v5250
        %v5252 = vpop.f32.mrb[0].mxu0
        %v5253 = vadd.f32 %v5077, %v5252
        %v5254 = vpop.f32.mrb[0].mxu0
        %v5255 = vadd.f32 %v5079, %v5254
        %v5256 = vpop.f32.mrb[0].mxu0
        %v5257 = vadd.f32 %v5081, %v5256
        %5258 = vmatprep.mubr.bf16.mxu0 0
        %5259 = vmatmul.mubr.bf16.gmra.mrb[0].mxu0 %v5183
        %v5260 = vpop.f32.mrb[0].mxu0
        %v5261 = vadd.f32 %v5085, %v5260
        %v5262 = vpop.f32.mrb[0].mxu0
        %v5263 = vadd.f32 %v5087, %v5262
        %v5264 = vpop.f32.mrb[0].mxu0
        %v5265 = vadd.f32 %v5089, %v5264
        %v5266 = vpop.f32.mrb[0].mxu0
        %v5267 = vadd.f32 %v5091, %v5266
        %5268 = vmatprep.mubr.bf16.mxu0 0
        %5269 = vmatmul.mubr.bf16.gmra.mrb[0].mxu0 %v5186
        %v5270 = vpop.f32.mrb[0].mxu0
        %v5271 = vadd.f32 %v5095, %v5270
        %v5272 = vpop.f32.mrb[0].mxu0
        %v5273 = vadd.f32 %v5097, %v5272
        %v5274 = vpop.f32.mrb[0].mxu0
        %v5275 = vadd.f32 %v5099, %v5274
        %v5276 = vpop.f32.mrb[0].mxu0
        %v5277 = vadd.f32 %v5101, %v5276
        %5278 = vmatprep.mubr.bf16.mxu0 0
        %5279 = vmatmul.mubr.bf16.gmra.mrb[0].mxu0 %v5189
        %v5280 = vpop.f32.mrb[0].mxu0
        %v5281 = vadd.f32 %v5105, %v5280
        %v5282 = vpop.f32.mrb[0].mxu0
        %v5283 = vadd.f32 %v5107, %v5282
        %v5284 = vpop.f32.mrb[0].mxu0
        %v5285 = vadd.f32 %v5109, %v5284
        %v5286 = vpop.f32.mrb[0].mxu0
        %v5287 = vadd.f32 %v5111, %v5286
        %5288 = vmatprep.mubr.bf16.mxu0 0
        %5289 = vmatmul.mubr.bf16.gmra.mrb[0].mxu0 %v5192
        %v5290 = vpop.f32.mrb[0].mxu0
        %v5291 = vadd.f32 %v5115, %v5290
        %v5292 = vpop.f32.mrb[0].mxu0
        %v5293 = vadd.f32 %v5117, %v5292
        %v5294 = vpop.f32.mrb[0].mxu0
        %v5295 = vadd.f32 %v5119, %v5294
        %v5296 = vpop.f32.mrb[0].mxu0
        %v5297 = vadd.f32 %v5121, %v5296
        %5298 = vmatprep.mubr.bf16.mxu0 0
        %5299 = vmatmul.mubr.bf16.gmra.mrb[0].mxu0 %v5195
        %v5300 = vpop.f32.mrb[0].mxu0
        %v5301 = vadd.f32 %v5125, %v5300
        %v5302 = vpop.f32.mrb[0].mxu0
        %v5303 = vadd.f32 %v5127, %v5302
        %v5304 = vpop.f32.mrb[0].mxu0
        %v5305 = vadd.f32 %v5129, %v5304
        %v5306 = vpop.f32.mrb[0].mxu0
        %v5307 = vadd.f32 %v5131, %v5306
        %5308 = vmatprep.mubr.bf16.mxu0 0
        %5309 = vmatmul.mubr.bf16.gmra.mrb[0].mxu0 %v5198
        %v5310 = vpop.f32.mrb[0].mxu0
        %v5311 = vadd.f32 %v5135, %v5310
        %v5312 = vpop.f32.mrb[0].mxu0
        %v5313 = vadd.f32 %v5137, %v5312
        %v5314 = vpop.f32.mrb[0].mxu0
        %v5315 = vadd.f32 %v5139, %v5314
        %v5316 = vpop.f32.mrb[0].mxu0
        %v5317 = vadd.f32 %v5141, %v5316
        %5318 = vdwg.mxu0
        %v5319 = vld [vmem:[%s4543] sm:$0xc]
        %v5320 = vld [vmem:[%s4543 + $0x4] sm:$0xf]
        %v5321 = vld [vmem:[%s4543 + $0x8] sm:$0x7]
        %v5322 = vld [vmem:[%s4543 + $0xc] sm:$0xc]
        %v5323 = vld [vmem:[%s4543 + $0x10] sm:$0xf]
        %v5324 = vld [vmem:[%s4543 + $0x14] sm:$0x7]
        %v5325 = vld [vmem:[%s4543 + $0x18] sm:$0xc]
        %v5326 = vld [vmem:[%s4543 + $0x1c] sm:$0xf]
        %v5327 = vld [vmem:[%s4543 + $0x20] sm:$0x7]
        %v5328 = vld [vmem:[%s4543 + $0x24] sm:$0xc]
        %v5329 = vld [vmem:[%s4543 + $0x28] sm:$0xf]
        %v5330 = vld [vmem:[%s4543 + $0x2c] sm:$0x7]
        %v5331 = vld [vmem:[%s4543 + $0x30] sm:$0xc]
        %v5332 = vld [vmem:[%s4543 + $0x34] sm:$0xf]
        %v5333 = vld [vmem:[%s4543 + $0x38] sm:$0x7]
        %v5334 = vld [vmem:[%s4543 + $0x3c] sm:$0xc]
        %v5335 = vld [vmem:[%s4543 + $0x40] sm:$0xf]
        %v5336 = vld [vmem:[%s4543 + $0x44] sm:$0x7]
        %v5337 = vld [vmem:[%s4543 + $0x48] sm:$0xc]
        %v5338 = vld [vmem:[%s4543 + $0x4c] sm:$0xf]
        %v5339 = vld [vmem:[%s4543 + $0x50] sm:$0x7]
        %v5340 = vld [vmem:[%s4543 + $0x54] sm:$0xc]
        %v5341 = vld [vmem:[%s4543 + $0x58] sm:$0xf]
        %v5342 = vld [vmem:[%s4543 + $0x5c] sm:$0x7]
        %vm5343 = vsmask.f32 1280
        %vm5344 = vsmask.f32 5392
        %vm5345 = vmor %vm5343, %vm5344
        %v5347 = vshrl.u32 %v5319, 16
        %v5349 = vrot.slane %v5347, 6
        %v5350 = vshll.u32 %v5319, 16
        %v5352 = vrot.slane %v5350, 7
        %v5353 = vor.u32 %v5349, %v5352
        %v5354 = vrot.slane %v5353, 4
        %v5356 = vshrl.u32 %v5320, 16
        %v5358 = vrot.slane %v5356, 6
        %v5359 = vshll.u32 %v5320, 16
        %v5361 = vrot.slane %v5359, 7
        %v5362 = vor.u32 %v5358, %v5361
        %v5363 = vsel %vm5345, %v5354, %v5362
        %v5364 = vrot.slane %v5362, 4
        %v5366 = vshrl.u32 %v5321, 16
        %v5368 = vrot.slane %v5366, 6
        %v5369 = vshll.u32 %v5321, 16
        %v5371 = vrot.slane %v5369, 7
        %v5372 = vor.u32 %v5368, %v5371
        %v5373 = vsel %vm5345, %v5364, %v5372
        %v5375 = vshrl.u32 %v5322, 16
        %v5377 = vrot.slane %v5375, 6
        %v5378 = vshll.u32 %v5322, 16
        %v5380 = vrot.slane %v5378, 7
        %v5381 = vor.u32 %v5377, %v5380
        %v5382 = vrot.slane %v5381, 4
        %v5384 = vshrl.u32 %v5323, 16
        %v5386 = vrot.slane %v5384, 6
        %v5387 = vshll.u32 %v5323, 16
        %v5389 = vrot.slane %v5387, 7
        %v5390 = vor.u32 %v5386, %v5389
        %v5391 = vsel %vm5345, %v5382, %v5390
        %v5392 = vrot.slane %v5390, 4
        %v5394 = vshrl.u32 %v5324, 16
        %v5396 = vrot.slane %v5394, 6
        %v5397 = vshll.u32 %v5324, 16
        %v5399 = vrot.slane %v5397, 7
        %v5400 = vor.u32 %v5396, %v5399
        %v5401 = vsel %vm5345, %v5392, %v5400
        %v5403 = vshrl.u32 %v5325, 16
        %v5405 = vrot.slane %v5403, 6
        %v5406 = vshll.u32 %v5325, 16
        %v5408 = vrot.slane %v5406, 7
        %v5409 = vor.u32 %v5405, %v5408
        %v5410 = vrot.slane %v5409, 4
        %v5412 = vshrl.u32 %v5326, 16
        %v5414 = vrot.slane %v5412, 6
        %v5415 = vshll.u32 %v5326, 16
        %v5417 = vrot.slane %v5415, 7
        %v5418 = vor.u32 %v5414, %v5417
        %v5419 = vsel %vm5345, %v5410, %v5418
        %v5420 = vrot.slane %v5418, 4
        %v5422 = vshrl.u32 %v5327, 16
        %v5424 = vrot.slane %v5422, 6
        %v5425 = vshll.u32 %v5327, 16
        %v5427 = vrot.slane %v5425, 7
        %v5428 = vor.u32 %v5424, %v5427
        %v5429 = vsel %vm5345, %v5420, %v5428
        %v5431 = vshrl.u32 %v5328, 16
        %v5433 = vrot.slane %v5431, 6
        %v5434 = vshll.u32 %v5328, 16
        %v5436 = vrot.slane %v5434, 7
        %v5437 = vor.u32 %v5433, %v5436
        %v5438 = vrot.slane %v5437, 4
        %v5440 = vshrl.u32 %v5329, 16
        %v5442 = vrot.slane %v5440, 6
        %v5443 = vshll.u32 %v5329, 16
        %v5445 = vrot.slane %v5443, 7
        %v5446 = vor.u32 %v5442, %v5445
        %v5447 = vsel %vm5345, %v5438, %v5446
        %v5448 = vrot.slane %v5446, 4
        %v5450 = vshrl.u32 %v5330, 16
        %v5452 = vrot.slane %v5450, 6
        %v5453 = vshll.u32 %v5330, 16
        %v5455 = vrot.slane %v5453, 7
        %v5456 = vor.u32 %v5452, %v5455
        %v5457 = vsel %vm5345, %v5448, %v5456
        %v5459 = vshrl.u32 %v5331, 16
        %v5461 = vrot.slane %v5459, 6
        %v5462 = vshll.u32 %v5331, 16
        %v5464 = vrot.slane %v5462, 7
        %v5465 = vor.u32 %v5461, %v5464
        %v5466 = vrot.slane %v5465, 4
        %v5468 = vshrl.u32 %v5332, 16
        %v5470 = vrot.slane %v5468, 6
        %v5471 = vshll.u32 %v5332, 16
        %v5473 = vrot.slane %v5471, 7
        %v5474 = vor.u32 %v5470, %v5473
        %v5475 = vsel %vm5345, %v5466, %v5474
        %v5476 = vrot.slane %v5474, 4
        %v5478 = vshrl.u32 %v5333, 16
        %v5480 = vrot.slane %v5478, 6
        %v5481 = vshll.u32 %v5333, 16
        %v5483 = vrot.slane %v5481, 7
        %v5484 = vor.u32 %v5480, %v5483
        %v5485 = vsel %vm5345, %v5476, %v5484
        %v5487 = vshrl.u32 %v5334, 16
        %v5489 = vrot.slane %v5487, 6
        %v5490 = vshll.u32 %v5334, 16
        %v5492 = vrot.slane %v5490, 7
        %v5493 = vor.u32 %v5489, %v5492
        %v5494 = vrot.slane %v5493, 4
        %v5496 = vshrl.u32 %v5335, 16
        %v5498 = vrot.slane %v5496, 6
        %v5499 = vshll.u32 %v5335, 16
        %v5501 = vrot.slane %v5499, 7
        %v5502 = vor.u32 %v5498, %v5501
        %v5503 = vsel %vm5345, %v5494, %v5502
        %v5504 = vrot.slane %v5502, 4
        %v5506 = vshrl.u32 %v5336, 16
        %v5508 = vrot.slane %v5506, 6
        %v5509 = vshll.u32 %v5336, 16
        %v5511 = vrot.slane %v5509, 7
        %v5512 = vor.u32 %v5508, %v5511
        %v5513 = vsel %vm5345, %v5504, %v5512
        %v5515 = vshrl.u32 %v5337, 16
        %v5517 = vrot.slane %v5515, 6
        %v5518 = vshll.u32 %v5337, 16
        %v5520 = vrot.slane %v5518, 7
        %v5521 = vor.u32 %v5517, %v5520
        %v5522 = vrot.slane %v5521, 4
        %v5524 = vshrl.u32 %v5338, 16
        %v5526 = vrot.slane %v5524, 6
        %v5527 = vshll.u32 %v5338, 16
        %v5529 = vrot.slane %v5527, 7
        %v5530 = vor.u32 %v5526, %v5529
        %v5531 = vsel %vm5345, %v5522, %v5530
        %v5532 = vrot.slane %v5530, 4
        %v5534 = vshrl.u32 %v5339, 16
        %v5536 = vrot.slane %v5534, 6
        %v5537 = vshll.u32 %v5339, 16
        %v5539 = vrot.slane %v5537, 7
        %v5540 = vor.u32 %v5536, %v5539
        %v5541 = vsel %vm5345, %v5532, %v5540
        %v5543 = vshrl.u32 %v5340, 16
        %v5545 = vrot.slane %v5543, 6
        %v5546 = vshll.u32 %v5340, 16
        %v5548 = vrot.slane %v5546, 7
        %v5549 = vor.u32 %v5545, %v5548
        %v5550 = vrot.slane %v5549, 4
        %v5552 = vshrl.u32 %v5341, 16
        %v5554 = vrot.slane %v5552, 6
        %v5555 = vshll.u32 %v5341, 16
        %v5557 = vrot.slane %v5555, 7
        %v5558 = vor.u32 %v5554, %v5557
        %v5559 = vsel %vm5345, %v5550, %v5558
        %v5560 = vrot.slane %v5558, 4
        %v5562 = vshrl.u32 %v5342, 16
        %v5564 = vrot.slane %v5562, 6
        %v5565 = vshll.u32 %v5342, 16
        %v5567 = vrot.slane %v5565, 7
        %v5568 = vor.u32 %v5564, %v5567
        %v5569 = vsel %vm5345, %v5560, %v5568
        %s5570 = scalar_lea.vmem %s3, 44
        %v5571 = vld [vmem:[%s5570] sm:$0xf]
        %v5572 = vunpack.c.l.b16 %v5363
        %v5573 = vunpack.c.l.b16 %v5373
        %v5574 = vunpack.c.l.b16 %v5391
        %v5575 = vunpack.c.l.b16 %v5401
        %v5576 = vunpack.c.l.b16 %v5419
        %v5577 = vunpack.c.l.b16 %v5429
        %v5578 = vunpack.c.l.b16 %v5447
        %v5579 = vunpack.c.l.b16 %v5457
        %v5580 = vunpack.c.l.b16 %v5475
        %v5581 = vunpack.c.l.b16 %v5485
        %v5582 = vunpack.c.l.b16 %v5503
        %v5583 = vunpack.c.l.b16 %v5513
        %v5584 = vunpack.c.l.b16 %v5531
        %v5585 = vunpack.c.l.b16 %v5541
        %v5586 = vunpack.c.l.b16 %v5559
        %v5587 = vunpack.c.l.b16 %v5569
        %v5588 = vpack.c.b16 %v5573, %v5572
        %v5589 = vpack.c.b16 %v5575, %v5574
        %v5590 = vpack.c.b16 %v5577, %v5576
        %v5591 = vpack.c.b16 %v5579, %v5578
        %v5592 = vpack.c.b16 %v5581, %v5580
        %v5593 = vpack.c.b16 %v5583, %v5582
        %v5594 = vpack.c.b16 %v5585, %v5584
        %v5595 = vpack.c.b16 %v5587, %v5586
        %v5598 = vunpack.c.l.s4 1983009808
        %v5599 = vunpack.c.0.s8 %v5598
        %v5600 = vlaneseq
        %v5601 = vshrl.u32 %v5600, 7
        %v5602 = vsub.s32 %v5599, %v5601
        %v5603 = vrot.slane %v5571, %v5602
        %v5604 = vcombine.high %v5603, %v5603
        %v5606 = vsel %vm615, %v5588, 0
        %v5609 = vsel %vm615, %v5589, 0
        %v5612 = vsel %vm615, %v5590, 0
        %v5615 = vsel %vm615, %v5591, 0
        %v5618 = vsel %vm615, %v5592, 0
        %v5621 = vsel %vm615, %v5593, 0
        %v5624 = vsel %vm615, %v5594, 0
        %v5627 = vsel %vm615, %v5595, 0
        %v5630 = vsel %vm640, %v5603, 0
        %v5633 = vsel %vm640, %v5604, 0
        %5635 = vmatprep.subr.bf16.mxu0 %v5633
        %5636 = vmatpush1.bf16.msra.mxu0 %v5630
        %5637 = vmatprep.subr.bf16.mxu0 0
        %5638 = vmatpush1.bf16.msra.mxu0 0
        %5639 = vmatprep.subr.bf16.mxu0 0
        %5640 = vmatpush1.bf16.msra.mxu0 0
        %5641 = vmatprep.subr.bf16.mxu0 0
        %5642 = vmatpush1.bf16.msra.mxu0 0
        %5643 = vmatprep.subr.bf16.mxu0 0
        %5644 = vmatpush1.bf16.msra.mxu0 0
        %5645 = vmatprep.subr.bf16.mxu0 0
        %5646 = vmatpush1.bf16.msra.mxu0 0
        %5647 = vmatprep.subr.bf16.mxu0 0
        %5648 = vmatpush1.bf16.msra.mxu0 0
        %5649 = vmatprep.subr.bf16.mxu0 0
        %5650 = vmatpush1.bf16.msra.mxu0 0
        %5651 = vmatprep.subr.bf16.mxu0 0
        %5652 = vmatpush1.bf16.msra.mxu0 0
        %5653 = vmatprep.subr.bf16.mxu0 0
        %5654 = vmatpush1.bf16.msra.mxu0 0
        %5655 = vmatprep.subr.bf16.mxu0 0
        %5656 = vmatpush1.bf16.msra.mxu0 0
        %5657 = vmatprep.subr.bf16.mxu0 0
        %5658 = vmatpush1.bf16.msra.mxu0 0
        %5659 = vmatprep.subr.bf16.mxu0 0
        %5660 = vmatpush1.bf16.msra.mxu0 0
        %5661 = vmatprep.subr.bf16.mxu0 0
        %5662 = vmatpush1.bf16.msra.mxu0 0
        %5663 = vmatprep.subr.bf16.mxu0 0
        %5664 = vmatpush1.bf16.msra.mxu0 0
        %5665 = vmatprep.subr.bf16.mxu0 0
        %5666 = vmatpush1.bf16.msra.mxu0 0
        %5667 = vmatprep.mubr.bf16.mxu0 0
        %5668 = vmatmul.mubr.bf16.gmra.mrb[0].mxu0 %v5606
        %v5669 = vpop.f32.mrb[0].mxu0
        %v5670 = vadd.f32 0.0, %v5669
        %v5671 = vpop.f32.mrb[0].mxu0
        %v5672 = vadd.f32 0.0, %v5671
        %v5673 = vpop.f32.mrb[0].mxu0
        %v5674 = vadd.f32 0.0, %v5673
        %v5675 = vpop.f32.mrb[0].mxu0
        %v5676 = vadd.f32 0.0, %v5675
        %5677 = vmatprep.mubr.bf16.mxu0 0
        %5678 = vmatmul.mubr.bf16.gmra.mrb[0].mxu0 %v5609
        %v5679 = vpop.f32.mrb[0].mxu0
        %v5680 = vadd.f32 0.0, %v5679
        %v5681 = vpop.f32.mrb[0].mxu0
        %v5682 = vadd.f32 0.0, %v5681
        %v5683 = vpop.f32.mrb[0].mxu0
        %v5684 = vadd.f32 0.0, %v5683
        %v5685 = vpop.f32.mrb[0].mxu0
        %v5686 = vadd.f32 0.0, %v5685
        %5687 = vmatprep.mubr.bf16.mxu0 0
        %5688 = vmatmul.mubr.bf16.gmra.mrb[0].mxu0 %v5612
        %v5689 = vpop.f32.mrb[0].mxu0
        %v5690 = vadd.f32 0.0, %v5689
        %v5691 = vpop.f32.mrb[0].mxu0
        %v5692 = vadd.f32 0.0, %v5691
        %v5693 = vpop.f32.mrb[0].mxu0
        %v5694 = vadd.f32 0.0, %v5693
        %v5695 = vpop.f32.mrb[0].mxu0
        %v5696 = vadd.f32 0.0, %v5695
        %5697 = vmatprep.mubr.bf16.mxu0 0
        %5698 = vmatmul.mubr.bf16.gmra.mrb[0].mxu0 %v5615
        %v5699 = vpop.f32.mrb[0].mxu0
        %v5700 = vadd.f32 0.0, %v5699
        %v5701 = vpop.f32.mrb[0].mxu0
        %v5702 = vadd.f32 0.0, %v5701
        %v5703 = vpop.f32.mrb[0].mxu0
        %v5704 = vadd.f32 0.0, %v5703
        %v5705 = vpop.f32.mrb[0].mxu0
        %v5706 = vadd.f32 0.0, %v5705
        %5707 = vmatprep.mubr.bf16.mxu0 0
        %5708 = vmatmul.mubr.bf16.gmra.mrb[0].mxu0 %v5618
        %v5709 = vpop.f32.mrb[0].mxu0
        %v5710 = vadd.f32 0.0, %v5709
        %v5711 = vpop.f32.mrb[0].mxu0
        %v5712 = vadd.f32 0.0, %v5711
        %v5713 = vpop.f32.mrb[0].mxu0
        %v5714 = vadd.f32 0.0, %v5713
        %v5715 = vpop.f32.mrb[0].mxu0
        %v5716 = vadd.f32 0.0, %v5715
        %5717 = vmatprep.mubr.bf16.mxu0 0
        %5718 = vmatmul.mubr.bf16.gmra.mrb[0].mxu0 %v5621
        %v5719 = vpop.f32.mrb[0].mxu0
        %v5720 = vadd.f32 0.0, %v5719
        %v5721 = vpop.f32.mrb[0].mxu0
        %v5722 = vadd.f32 0.0, %v5721
        %v5723 = vpop.f32.mrb[0].mxu0
        %v5724 = vadd.f32 0.0, %v5723
        %v5725 = vpop.f32.mrb[0].mxu0
        %v5726 = vadd.f32 0.0, %v5725
        %5727 = vmatprep.mubr.bf16.mxu0 0
        %5728 = vmatmul.mubr.bf16.gmra.mrb[0].mxu0 %v5624
        %v5729 = vpop.f32.mrb[0].mxu0
        %v5730 = vadd.f32 0.0, %v5729
        %v5731 = vpop.f32.mrb[0].mxu0
        %v5732 = vadd.f32 0.0, %v5731
        %v5733 = vpop.f32.mrb[0].mxu0
        %v5734 = vadd.f32 0.0, %v5733
        %v5735 = vpop.f32.mrb[0].mxu0
        %v5736 = vadd.f32 0.0, %v5735
        %5737 = vmatprep.mubr.bf16.mxu0 0
        %5738 = vmatmul.mubr.bf16.gmra.mrb[0].mxu0 %v5627
        %v5739 = vpop.f32.mrb[0].mxu0
        %v5740 = vadd.f32 0.0, %v5739
        %v5741 = vpop.f32.mrb[0].mxu0
        %v5742 = vadd.f32 0.0, %v5741
        %v5743 = vpop.f32.mrb[0].mxu0
        %v5744 = vadd.f32 0.0, %v5743
        %v5745 = vpop.f32.mrb[0].mxu0
        %v5746 = vadd.f32 0.0, %v5745
        %5747 = vdwg.mxu0
        %v5748 = vadd.f32 %v5241, %v5670
        %v5749 = vadd.f32 %v5243, %v5672
        %v5750 = vadd.f32 %v5245, %v5674
        %v5751 = vadd.f32 %v5247, %v5676
        %v5752 = vadd.f32 %v5251, %v5680
        %v5753 = vadd.f32 %v5253, %v5682
        %v5754 = vadd.f32 %v5255, %v5684
        %v5755 = vadd.f32 %v5257, %v5686
        %v5756 = vadd.f32 %v5261, %v5690
        %v5757 = vadd.f32 %v5263, %v5692
        %v5758 = vadd.f32 %v5265, %v5694
        %v5759 = vadd.f32 %v5267, %v5696
        %v5760 = vadd.f32 %v5271, %v5700
        %v5761 = vadd.f32 %v5273, %v5702
        %v5762 = vadd.f32 %v5275, %v5704
        %v5763 = vadd.f32 %v5277, %v5706
        %v5764 = vadd.f32 %v5281, %v5710
        %v5765 = vadd.f32 %v5283, %v5712
        %v5766 = vadd.f32 %v5285, %v5714
        %v5767 = vadd.f32 %v5287, %v5716
        %v5768 = vadd.f32 %v5291, %v5720
        %v5769 = vadd.f32 %v5293, %v5722
        %v5770 = vadd.f32 %v5295, %v5724
        %v5771 = vadd.f32 %v5297, %v5726
        %v5772 = vadd.f32 %v5301, %v5730
        %v5773 = vadd.f32 %v5303, %v5732
        %v5774 = vadd.f32 %v5305, %v5734
        %v5775 = vadd.f32 %v5307, %v5736
        %v5776 = vadd.f32 %v5311, %v5740
        %v5777 = vadd.f32 %v5313, %v5742
        %v5778 = vadd.f32 %v5315, %v5744
        %v5779 = vadd.f32 %v5317, %v5746
        %v5780 = vld [vmem:[%s329] sm:$0xf]
        %v5781 = vld [vmem:[%s329 + $0x4] sm:$0xf]
        %v5782 = vld [vmem:[%s329 + $0x8] sm:$0x1]
        %v5783 = vld [vmem:[%s329 + $0xc] sm:$0xf]
        %v5784 = vld [vmem:[%s329 + $0x10] sm:$0xf]
        %v5785 = vld [vmem:[%s329 + $0x14] sm:$0x1]
        %v5786 = vld [vmem:[%s329 + $0x18] sm:$0xf]
        %v5787 = vld [vmem:[%s329 + $0x1c] sm:$0xf]
        %v5788 = vld [vmem:[%s329 + $0x20] sm:$0x1]
        %v5789 = vld [vmem:[%s329 + $0x24] sm:$0xf]
        %v5790 = vld [vmem:[%s329 + $0x28] sm:$0xf]
        %v5791 = vld [vmem:[%s329 + $0x2c] sm:$0x1]
        %v5792 = vld [vmem:[%s329 + $0x30] sm:$0xf]
        %v5793 = vld [vmem:[%s329 + $0x34] sm:$0xf]
        %v5794 = vld [vmem:[%s329 + $0x38] sm:$0x1]
        %v5795 = vld [vmem:[%s329 + $0x3c] sm:$0xf]
        %v5796 = vld [vmem:[%s329 + $0x40] sm:$0xf]
        %v5797 = vld [vmem:[%s329 + $0x44] sm:$0x1]
        %v5798 = vld [vmem:[%s329 + $0x48] sm:$0xf]
        %v5799 = vld [vmem:[%s329 + $0x4c] sm:$0xf]
        %v5800 = vld [vmem:[%s329 + $0x50] sm:$0x1]
        %v5801 = vld [vmem:[%s329 + $0x54] sm:$0xf]
        %v5802 = vld [vmem:[%s329 + $0x58] sm:$0xf]
        %v5803 = vld [vmem:[%s329 + $0x5c] sm:$0x1]
        %v5805 = vshrl.u32 %v5780, 16
        %v5807 = vrot.slane %v5805, 4
        %v5808 = vshll.u32 %v5780, 16
        %v5810 = vrot.slane %v5808, 5
        %v5811 = vor.u32 %v5807, %v5810
        %v5812 = vrot.slane %v5811, 4
        %v5814 = vshll.u32 %v5781, 16
        %v5816 = vrot.slane %v5814, 5
        %v5817 = vsel %vm4570, %v5812, %v5816
        %v5818 = vshrl.u32 %v5781, 16
        %v5820 = vrot.slane %v5818, 4
        %v5821 = vor.u32 %v5820, %v5816
        %v5822 = vrot.slane %v5821, 4
        %v5824 = vshll.u32 %v5782, 16
        %v5826 = vrot.slane %v5824, 5
        %v5827 = vsel %vm4570, %v5822, %v5826
        %v5829 = vshrl.u32 %v5783, 16
        %v5831 = vrot.slane %v5829, 4
        %v5832 = vshll.u32 %v5783, 16
        %v5834 = vrot.slane %v5832, 5
        %v5835 = vor.u32 %v5831, %v5834
        %v5836 = vrot.slane %v5835, 4
        %v5838 = vshll.u32 %v5784, 16
        %v5840 = vrot.slane %v5838, 5
        %v5841 = vsel %vm4570, %v5836, %v5840
        %v5842 = vshrl.u32 %v5784, 16
        %v5844 = vrot.slane %v5842, 4
        %v5845 = vor.u32 %v5844, %v5840
        %v5846 = vrot.slane %v5845, 4
        %v5848 = vshll.u32 %v5785, 16
        %v5850 = vrot.slane %v5848, 5
        %v5851 = vsel %vm4570, %v5846, %v5850
        %v5853 = vshrl.u32 %v5786, 16
        %v5855 = vrot.slane %v5853, 4
        %v5856 = vshll.u32 %v5786, 16
        %v5858 = vrot.slane %v5856, 5
        %v5859 = vor.u32 %v5855, %v5858
        %v5860 = vrot.slane %v5859, 4
        %v5862 = vshll.u32 %v5787, 16
        %v5864 = vrot.slane %v5862, 5
        %v5865 = vsel %vm4570, %v5860, %v5864
        %v5866 = vshrl.u32 %v5787, 16
        %v5868 = vrot.slane %v5866, 4
        %v5869 = vor.u32 %v5868, %v5864
        %v5870 = vrot.slane %v5869, 4
        %v5872 = vshll.u32 %v5788, 16
        %v5874 = vrot.slane %v5872, 5
        %v5875 = vsel %vm4570, %v5870, %v5874
        %v5877 = vshrl.u32 %v5789, 16
        %v5879 = vrot.slane %v5877, 4
        %v5880 = vshll.u32 %v5789, 16
        %v5882 = vrot.slane %v5880, 5
        %v5883 = vor.u32 %v5879, %v5882
        %v5884 = vrot.slane %v5883, 4
        %v5886 = vshll.u32 %v5790, 16
        %v5888 = vrot.slane %v5886, 5
        %v5889 = vsel %vm4570, %v5884, %v5888
        %v5890 = vshrl.u32 %v5790, 16
        %v5892 = vrot.slane %v5890, 4
        %v5893 = vor.u32 %v5892, %v5888
        %v5894 = vrot.slane %v5893, 4
        %v5896 = vshll.u32 %v5791, 16
        %v5898 = vrot.slane %v5896, 5
        %v5899 = vsel %vm4570, %v5894, %v5898
        %v5901 = vshrl.u32 %v5792, 16
        %v5903 = vrot.slane %v5901, 4
        %v5904 = vshll.u32 %v5792, 16
        %v5906 = vrot.slane %v5904, 5
        %v5907 = vor.u32 %v5903, %v5906
        %v5908 = vrot.slane %v5907, 4
        %v5910 = vshll.u32 %v5793, 16
        %v5912 = vrot.slane %v5910, 5
        %v5913 = vsel %vm4570, %v5908, %v5912
        %v5914 = vshrl.u32 %v5793, 16
        %v5916 = vrot.slane %v5914, 4
        %v5917 = vor.u32 %v5916, %v5912
        %v5918 = vrot.slane %v5917, 4
        %v5920 = vshll.u32 %v5794, 16
        %v5922 = vrot.slane %v5920, 5
        %v5923 = vsel %vm4570, %v5918, %v5922
        %v5925 = vshrl.u32 %v5795, 16
        %v5927 = vrot.slane %v5925, 4
        %v5928 = vshll.u32 %v5795, 16
        %v5930 = vrot.slane %v5928, 5
        %v5931 = vor.u32 %v5927, %v5930
        %v5932 = vrot.slane %v5931, 4
        %v5934 = vshll.u32 %v5796, 16
        %v5936 = vrot.slane %v5934, 5
        %v5937 = vsel %vm4570, %v5932, %v5936
        %v5938 = vshrl.u32 %v5796, 16
        %v5940 = vrot.slane %v5938, 4
        %v5941 = vor.u32 %v5940, %v5936
        %v5942 = vrot.slane %v5941, 4
        %v5944 = vshll.u32 %v5797, 16
        %v5946 = vrot.slane %v5944, 5
        %v5947 = vsel %vm4570, %v5942, %v5946
        %v5949 = vshrl.u32 %v5798, 16
        %v5951 = vrot.slane %v5949, 4
        %v5952 = vshll.u32 %v5798, 16
        %v5954 = vrot.slane %v5952, 5
        %v5955 = vor.u32 %v5951, %v5954
        %v5956 = vrot.slane %v5955, 4
        %v5958 = vshll.u32 %v5799, 16
        %v5960 = vrot.slane %v5958, 5
        %v5961 = vsel %vm4570, %v5956, %v5960
        %v5962 = vshrl.u32 %v5799, 16
        %v5964 = vrot.slane %v5962, 4
        %v5965 = vor.u32 %v5964, %v5960
        %v5966 = vrot.slane %v5965, 4
        %v5968 = vshll.u32 %v5800, 16
        %v5970 = vrot.slane %v5968, 5
        %v5971 = vsel %vm4570, %v5966, %v5970
        %v5973 = vshrl.u32 %v5801, 16
        %v5975 = vrot.slane %v5973, 4
        %v5976 = vshll.u32 %v5801, 16
        %v5978 = vrot.slane %v5976, 5
        %v5979 = vor.u32 %v5975, %v5978
        %v5980 = vrot.slane %v5979, 4
        %v5982 = vshll.u32 %v5802, 16
        %v5984 = vrot.slane %v5982, 5
        %v5985 = vsel %vm4570, %v5980, %v5984
        %v5986 = vshrl.u32 %v5802, 16
        %v5988 = vrot.slane %v5986, 4
        %v5989 = vor.u32 %v5988, %v5984
        %v5990 = vrot.slane %v5989, 4
        %v5992 = vshll.u32 %v5803, 16
        %v5994 = vrot.slane %v5992, 5
        %v5995 = vsel %vm4570, %v5990, %v5994
        %s5996 = scalar_lea.vmem %s3, 48
        %v5997 = vld [vmem:[%s5996] sm:$0xf]
        %v5998 = vunpack.c.l.b16 %v5817
        %v5999 = vunpack.c.l.b16 %v5827
        %v6000 = vunpack.c.l.b16 %v5841
        %v6001 = vunpack.c.l.b16 %v5851
        %v6002 = vunpack.c.l.b16 %v5865
        %v6003 = vunpack.c.l.b16 %v5875
        %v6004 = vunpack.c.l.b16 %v5889
        %v6005 = vunpack.c.l.b16 %v5899
        %v6006 = vunpack.c.l.b16 %v5913
        %v6007 = vunpack.c.l.b16 %v5923
        %v6008 = vunpack.c.l.b16 %v5937
        %v6009 = vunpack.c.l.b16 %v5947
        %v6010 = vunpack.c.l.b16 %v5961
        %v6011 = vunpack.c.l.b16 %v5971
        %v6012 = vunpack.c.l.b16 %v5985
        %v6013 = vunpack.c.l.b16 %v5995
        %v6014 = vpack.c.b16 %v5999, %v5998
        %v6015 = vpack.c.b16 %v6001, %v6000
        %v6016 = vpack.c.b16 %v6003, %v6002
        %v6017 = vpack.c.b16 %v6005, %v6004
        %v6018 = vpack.c.b16 %v6007, %v6006
        %v6019 = vpack.c.b16 %v6009, %v6008
        %v6020 = vpack.c.b16 %v6011, %v6010
        %v6021 = vpack.c.b16 %v6013, %v6012
        %v6024 = vunpack.c.l.s4 1983009808
        %v6025 = vunpack.c.0.s8 %v6024
        %v6026 = vlaneseq
        %v6027 = vshrl.u32 %v6026, 7
        %v6028 = vsub.s32 %v6025, %v6027
        %v6029 = vrot.slane %v5997, %v6028
        %v6030 = vcombine.high %v6029, %v6029
        %v6032 = vsel %vm615, %v6014, 0
        %v6035 = vsel %vm615, %v6015, 0
        %v6038 = vsel %vm615, %v6016, 0
        %v6041 = vsel %vm615, %v6017, 0
        %v6044 = vsel %vm615, %v6018, 0
        %v6047 = vsel %vm615, %v6019, 0
        %v6050 = vsel %vm615, %v6020, 0
        %v6053 = vsel %vm615, %v6021, 0
        %v6056 = vsel %vm640, %v6029, 0
        %v6059 = vsel %vm640, %v6030, 0
        %6061 = vmatprep.subr.bf16.mxu0 %v6059
        %6062 = vmatpush1.bf16.msra.mxu0 %v6056
        %6063 = vmatprep.subr.bf16.mxu0 0
        %6064 = vmatpush1.bf16.msra.mxu0 0
        %6065 = vmatprep.subr.bf16.mxu0 0
        %6066 = vmatpush1.bf16.msra.mxu0 0
        %6067 = vmatprep.subr.bf16.mxu0 0
        %6068 = vmatpush1.bf16.msra.mxu0 0
        %6069 = vmatprep.subr.bf16.mxu0 0
        %6070 = vmatpush1.bf16.msra.mxu0 0
        %6071 = vmatprep.subr.bf16.mxu0 0
        %6072 = vmatpush1.bf16.msra.mxu0 0
        %6073 = vmatprep.subr.bf16.mxu0 0
        %6074 = vmatpush1.bf16.msra.mxu0 0
        %6075 = vmatprep.subr.bf16.mxu0 0
        %6076 = vmatpush1.bf16.msra.mxu0 0
        %6077 = vmatprep.subr.bf16.mxu0 0
        %6078 = vmatpush1.bf16.msra.mxu0 0
        %6079 = vmatprep.subr.bf16.mxu0 0
        %6080 = vmatpush1.bf16.msra.mxu0 0
        %6081 = vmatprep.subr.bf16.mxu0 0
        %6082 = vmatpush1.bf16.msra.mxu0 0
        %6083 = vmatprep.subr.bf16.mxu0 0
        %6084 = vmatpush1.bf16.msra.mxu0 0
        %6085 = vmatprep.subr.bf16.mxu0 0
        %6086 = vmatpush1.bf16.msra.mxu0 0
        %6087 = vmatprep.subr.bf16.mxu0 0
        %6088 = vmatpush1.bf16.msra.mxu0 0
        %6089 = vmatprep.subr.bf16.mxu0 0
        %6090 = vmatpush1.bf16.msra.mxu0 0
        %6091 = vmatprep.subr.bf16.mxu0 0
        %6092 = vmatpush1.bf16.msra.mxu0 0
        %6093 = vmatprep.mubr.bf16.mxu0 0
        %6094 = vmatmul.mubr.bf16.gmra.mrb[0].mxu0 %v6032
        %v6095 = vpop.f32.mrb[0].mxu0
        %v6096 = vadd.f32 0.0, %v6095
        %v6097 = vpop.f32.mrb[0].mxu0
        %v6098 = vadd.f32 0.0, %v6097
        %v6099 = vpop.f32.mrb[0].mxu0
        %v6100 = vadd.f32 0.0, %v6099
        %v6101 = vpop.f32.mrb[0].mxu0
        %v6102 = vadd.f32 0.0, %v6101
        %6103 = vmatprep.mubr.bf16.mxu0 0
        %6104 = vmatmul.mubr.bf16.gmra.mrb[0].mxu0 %v6035
        %v6105 = vpop.f32.mrb[0].mxu0
        %v6106 = vadd.f32 0.0, %v6105
        %v6107 = vpop.f32.mrb[0].mxu0
        %v6108 = vadd.f32 0.0, %v6107
        %v6109 = vpop.f32.mrb[0].mxu0
        %v6110 = vadd.f32 0.0, %v6109
        %v6111 = vpop.f32.mrb[0].mxu0
        %v6112 = vadd.f32 0.0, %v6111
        %6113 = vmatprep.mubr.bf16.mxu0 0
        %6114 = vmatmul.mubr.bf16.gmra.mrb[0].mxu0 %v6038
        %v6115 = vpop.f32.mrb[0].mxu0
        %v6116 = vadd.f32 0.0, %v6115
        %v6117 = vpop.f32.mrb[0].mxu0
        %v6118 = vadd.f32 0.0, %v6117
        %v6119 = vpop.f32.mrb[0].mxu0
        %v6120 = vadd.f32 0.0, %v6119
        %v6121 = vpop.f32.mrb[0].mxu0
        %v6122 = vadd.f32 0.0, %v6121
        %6123 = vmatprep.mubr.bf16.mxu0 0
        %6124 = vmatmul.mubr.bf16.gmra.mrb[0].mxu0 %v6041
        %v6125 = vpop.f32.mrb[0].mxu0
        %v6126 = vadd.f32 0.0, %v6125
        %v6127 = vpop.f32.mrb[0].mxu0
        %v6128 = vadd.f32 0.0, %v6127
        %v6129 = vpop.f32.mrb[0].mxu0
        %v6130 = vadd.f32 0.0, %v6129
        %v6131 = vpop.f32.mrb[0].mxu0
        %v6132 = vadd.f32 0.0, %v6131
        %6133 = vmatprep.mubr.bf16.mxu0 0
        %6134 = vmatmul.mubr.bf16.gmra.mrb[0].mxu0 %v6044
        %v6135 = vpop.f32.mrb[0].mxu0
        %v6136 = vadd.f32 0.0, %v6135
        %v6137 = vpop.f32.mrb[0].mxu0
        %v6138 = vadd.f32 0.0, %v6137
        %v6139 = vpop.f32.mrb[0].mxu0
        %v6140 = vadd.f32 0.0, %v6139
        %v6141 = vpop.f32.mrb[0].mxu0
        %v6142 = vadd.f32 0.0, %v6141
        %6143 = vmatprep.mubr.bf16.mxu0 0
        %6144 = vmatmul.mubr.bf16.gmra.mrb[0].mxu0 %v6047
        %v6145 = vpop.f32.mrb[0].mxu0
        %v6146 = vadd.f32 0.0, %v6145
        %v6147 = vpop.f32.mrb[0].mxu0
        %v6148 = vadd.f32 0.0, %v6147
        %v6149 = vpop.f32.mrb[0].mxu0
        %v6150 = vadd.f32 0.0, %v6149
        %v6151 = vpop.f32.mrb[0].mxu0
        %v6152 = vadd.f32 0.0, %v6151
        %6153 = vmatprep.mubr.bf16.mxu0 0
        %6154 = vmatmul.mubr.bf16.gmra.mrb[0].mxu0 %v6050
        %v6155 = vpop.f32.mrb[0].mxu0
        %v6156 = vadd.f32 0.0, %v6155
        %v6157 = vpop.f32.mrb[0].mxu0
        %v6158 = vadd.f32 0.0, %v6157
        %v6159 = vpop.f32.mrb[0].mxu0
        %v6160 = vadd.f32 0.0, %v6159
        %v6161 = vpop.f32.mrb[0].mxu0
        %v6162 = vadd.f32 0.0, %v6161
        %6163 = vmatprep.mubr.bf16.mxu0 0
        %6164 = vmatmul.mubr.bf16.gmra.mrb[0].mxu0 %v6053
        %v6165 = vpop.f32.mrb[0].mxu0
        %v6166 = vadd.f32 0.0, %v6165
        %v6167 = vpop.f32.mrb[0].mxu0
        %v6168 = vadd.f32 0.0, %v6167
        %v6169 = vpop.f32.mrb[0].mxu0
        %v6170 = vadd.f32 0.0, %v6169
        %v6171 = vpop.f32.mrb[0].mxu0
        %v6172 = vadd.f32 0.0, %v6171
        %6173 = vdwg.mxu0
        %v6174 = vadd.f32 %v5748, %v6096
        %v6175 = vadd.f32 %v5749, %v6098
        %v6176 = vadd.f32 %v5750, %v6100
        %v6177 = vadd.f32 %v5751, %v6102
        %v6178 = vadd.f32 %v5752, %v6106
        %v6179 = vadd.f32 %v5753, %v6108
        %v6180 = vadd.f32 %v5754, %v6110
        %v6181 = vadd.f32 %v5755, %v6112
        %v6182 = vadd.f32 %v5756, %v6116
        %v6183 = vadd.f32 %v5757, %v6118
        %v6184 = vadd.f32 %v5758, %v6120
        %v6185 = vadd.f32 %v5759, %v6122
        %v6186 = vadd.f32 %v5760, %v6126
        %v6187 = vadd.f32 %v5761, %v6128
        %v6188 = vadd.f32 %v5762, %v6130
        %v6189 = vadd.f32 %v5763, %v6132
        %v6190 = vadd.f32 %v5764, %v6136
        %v6191 = vadd.f32 %v5765, %v6138
        %v6192 = vadd.f32 %v5766, %v6140
        %v6193 = vadd.f32 %v5767, %v6142
        %v6194 = vadd.f32 %v5768, %v6146
        %v6195 = vadd.f32 %v5769, %v6148
        %v6196 = vadd.f32 %v5770, %v6150
        %v6197 = vadd.f32 %v5771, %v6152
        %v6198 = vadd.f32 %v5772, %v6156
        %v6199 = vadd.f32 %v5773, %v6158
        %v6200 = vadd.f32 %v5774, %v6160
        %v6201 = vadd.f32 %v5775, %v6162
        %v6202 = vadd.f32 %v5776, %v6166
        %v6203 = vadd.f32 %v5777, %v6168
        %v6204 = vadd.f32 %v5778, %v6170
        %v6205 = vadd.f32 %v5779, %v6172
        %s6206 = scalar_lea.vmem %s3, 52
        %v6207 = vld [vmem:[%s6206] sm:$0xf]
        %v6210 = vunpack.c.l.s4 1983009808
        %v6211 = vunpack.c.0.s8 %v6210
        %v6212 = vlaneseq
        %v6213 = vshrl.u32 %v6212, 7
        %v6214 = vsub.s32 %v6211, %v6213
        %v6215 = vrot.slane %v6207, %v6214
        %v6216 = vcombine.high %v6215, %v6215
        %v6218 = vsel %vm640, %v6215, 0
        %v6221 = vsel %vm640, %v6216, 0
        %6223 = vmatprep.subr.bf16.mxu0 %v6221
        %6224 = vmatpush1.bf16.msra.mxu0 %v6218
        %6225 = vmatprep.subr.bf16.mxu0 0
        %6226 = vmatpush1.bf16.msra.mxu0 0
        %6227 = vmatprep.subr.bf16.mxu0 0
        %6228 = vmatpush1.bf16.msra.mxu0 0
        %6229 = vmatprep.subr.bf16.mxu0 0
        %6230 = vmatpush1.bf16.msra.mxu0 0
        %6231 = vmatprep.subr.bf16.mxu0 0
        %6232 = vmatpush1.bf16.msra.mxu0 0
        %6233 = vmatprep.subr.bf16.mxu0 0
        %6234 = vmatpush1.bf16.msra.mxu0 0
        %6235 = vmatprep.subr.bf16.mxu0 0
        %6236 = vmatpush1.bf16.msra.mxu0 0
        %6237 = vmatprep.subr.bf16.mxu0 0
        %6238 = vmatpush1.bf16.msra.mxu0 0
        %6239 = vmatprep.subr.bf16.mxu0 0
        %6240 = vmatpush1.bf16.msra.mxu0 0
        %6241 = vmatprep.subr.bf16.mxu0 0
        %6242 = vmatpush1.bf16.msra.mxu0 0
        %6243 = vmatprep.subr.bf16.mxu0 0
        %6244 = vmatpush1.bf16.msra.mxu0 0
        %6245 = vmatprep.subr.bf16.mxu0 0
        %6246 = vmatpush1.bf16.msra.mxu0 0
        %6247 = vmatprep.subr.bf16.mxu0 0
        %6248 = vmatpush1.bf16.msra.mxu0 0
        %6249 = vmatprep.subr.bf16.mxu0 0
        %6250 = vmatpush1.bf16.msra.mxu0 0
        %6251 = vmatprep.subr.bf16.mxu0 0
        %6252 = vmatpush1.bf16.msra.mxu0 0
        %6253 = vmatprep.subr.bf16.mxu0 0
        %6254 = vmatpush1.bf16.msra.mxu0 0
        %6255 = vmatprep.mubr.bf16.mxu0 0
        %6256 = vmatmul.mubr.bf16.gmra.mrb[0].mxu0 %v617
        %v6257 = vpop.f32.mrb[0].mxu0
        %v6258 = vadd.f32 0.0, %v6257
        %v6259 = vpop.f32.mrb[0].mxu0
        %v6260 = vadd.f32 0.0, %v6259
        %v6261 = vpop.f32.mrb[0].mxu0
        %v6262 = vadd.f32 0.0, %v6261
        %v6263 = vpop.f32.mrb[0].mxu0
        %v6264 = vadd.f32 0.0, %v6263
        %6265 = vmatprep.mubr.bf16.mxu0 0
        %6266 = vmatmul.mubr.bf16.gmra.mrb[0].mxu0 %v620
        %v6267 = vpop.f32.mrb[0].mxu0
        %v6268 = vadd.f32 0.0, %v6267
        %v6269 = vpop.f32.mrb[0].mxu0
        %v6270 = vadd.f32 0.0, %v6269
        %v6271 = vpop.f32.mrb[0].mxu0
        %v6272 = vadd.f32 0.0, %v6271
        %v6273 = vpop.f32.mrb[0].mxu0
        %v6274 = vadd.f32 0.0, %v6273
        %6275 = vmatprep.mubr.bf16.mxu0 0
        %6276 = vmatmul.mubr.bf16.gmra.mrb[0].mxu0 %v623
        %v6277 = vpop.f32.mrb[0].mxu0
        %v6278 = vadd.f32 0.0, %v6277
        %v6279 = vpop.f32.mrb[0].mxu0
        %v6280 = vadd.f32 0.0, %v6279
        %v6281 = vpop.f32.mrb[0].mxu0
        %v6282 = vadd.f32 0.0, %v6281
        %v6283 = vpop.f32.mrb[0].mxu0
        %v6284 = vadd.f32 0.0, %v6283
        %6285 = vmatprep.mubr.bf16.mxu0 0
        %6286 = vmatmul.mubr.bf16.gmra.mrb[0].mxu0 %v626
        %v6287 = vpop.f32.mrb[0].mxu0
        %v6288 = vadd.f32 0.0, %v6287
        %v6289 = vpop.f32.mrb[0].mxu0
        %v6290 = vadd.f32 0.0, %v6289
        %v6291 = vpop.f32.mrb[0].mxu0
        %v6292 = vadd.f32 0.0, %v6291
        %v6293 = vpop.f32.mrb[0].mxu0
        %v6294 = vadd.f32 0.0, %v6293
        %6295 = vmatprep.mubr.bf16.mxu0 0
        %6296 = vmatmul.mubr.bf16.gmra.mrb[0].mxu0 %v629
        %v6297 = vpop.f32.mrb[0].mxu0
        %v6298 = vadd.f32 0.0, %v6297
        %v6299 = vpop.f32.mrb[0].mxu0
        %v6300 = vadd.f32 0.0, %v6299
        %v6301 = vpop.f32.mrb[0].mxu0
        %v6302 = vadd.f32 0.0, %v6301
        %v6303 = vpop.f32.mrb[0].mxu0
        %v6304 = vadd.f32 0.0, %v6303
        %6305 = vmatprep.mubr.bf16.mxu0 0
        %6306 = vmatmul.mubr.bf16.gmra.mrb[0].mxu0 %v632
        %v6307 = vpop.f32.mrb[0].mxu0
        %v6308 = vadd.f32 0.0, %v6307
        %v6309 = vpop.f32.mrb[0].mxu0
        %v6310 = vadd.f32 0.0, %v6309
        %v6311 = vpop.f32.mrb[0].mxu0
        %v6312 = vadd.f32 0.0, %v6311
        %v6313 = vpop.f32.mrb[0].mxu0
        %v6314 = vadd.f32 0.0, %v6313
        %6315 = vmatprep.mubr.bf16.mxu0 0
        %6316 = vmatmul.mubr.bf16.gmra.mrb[0].mxu0 %v635
        %v6317 = vpop.f32.mrb[0].mxu0
        %v6318 = vadd.f32 0.0, %v6317
        %v6319 = vpop.f32.mrb[0].mxu0
        %v6320 = vadd.f32 0.0, %v6319
        %v6321 = vpop.f32.mrb[0].mxu0
        %v6322 = vadd.f32 0.0, %v6321
        %v6323 = vpop.f32.mrb[0].mxu0
        %v6324 = vadd.f32 0.0, %v6323
        %6325 = vmatprep.mubr.bf16.mxu0 0
        %6326 = vmatmul.mubr.bf16.gmra.mrb[0].mxu0 %v638
        %v6327 = vpop.f32.mrb[0].mxu0
        %v6328 = vadd.f32 0.0, %v6327
        %v6329 = vpop.f32.mrb[0].mxu0
        %v6330 = vadd.f32 0.0, %v6329
        %v6331 = vpop.f32.mrb[0].mxu0
        %v6332 = vadd.f32 0.0, %v6331
        %v6333 = vpop.f32.mrb[0].mxu0
        %v6334 = vadd.f32 0.0, %v6333
        %6335 = vdwg.mxu0
        %v6336 = vadd.f32 %v6174, %v6258
        %v6337 = vadd.f32 %v6175, %v6260
        %v6338 = vadd.f32 %v6176, %v6262
        %v6339 = vadd.f32 %v6177, %v6264
        %v6340 = vadd.f32 %v6178, %v6268
        %v6341 = vadd.f32 %v6179, %v6270
        %v6342 = vadd.f32 %v6180, %v6272
        %v6343 = vadd.f32 %v6181, %v6274
        %v6344 = vadd.f32 %v6182, %v6278
        %v6345 = vadd.f32 %v6183, %v6280
        %v6346 = vadd.f32 %v6184, %v6282
        %v6347 = vadd.f32 %v6185, %v6284
        %v6348 = vadd.f32 %v6186, %v6288
        %v6349 = vadd.f32 %v6187, %v6290
        %v6350 = vadd.f32 %v6188, %v6292
        %v6351 = vadd.f32 %v6189, %v6294
        %v6352 = vadd.f32 %v6190, %v6298
        %v6353 = vadd.f32 %v6191, %v6300
        %v6354 = vadd.f32 %v6192, %v6302
        %v6355 = vadd.f32 %v6193, %v6304
        %v6356 = vadd.f32 %v6194, %v6308
        %v6357 = vadd.f32 %v6195, %v6310
        %v6358 = vadd.f32 %v6196, %v6312
        %v6359 = vadd.f32 %v6197, %v6314
        %v6360 = vadd.f32 %v6198, %v6318
        %v6361 = vadd.f32 %v6199, %v6320
        %v6362 = vadd.f32 %v6200, %v6322
        %v6363 = vadd.f32 %v6201, %v6324
        %v6364 = vadd.f32 %v6202, %v6328
        %v6365 = vadd.f32 %v6203, %v6330
        %v6366 = vadd.f32 %v6204, %v6332
        %v6367 = vadd.f32 %v6205, %v6334
        %v6368 = vld [vmem:[%s329] sm:$0xc]
        %v6369 = vld [vmem:[%s329 + $0x4] sm:$0xf]
        %v6370 = vld [vmem:[%s329 + $0x8] sm:$0x7]
        %v6371 = vld [vmem:[%s329 + $0xc] sm:$0xc]
        %v6372 = vld [vmem:[%s329 + $0x10] sm:$0xf]
        %v6373 = vld [vmem:[%s329 + $0x14] sm:$0x7]
        %v6374 = vld [vmem:[%s329 + $0x18] sm:$0xc]
        %v6375 = vld [vmem:[%s329 + $0x1c] sm:$0xf]
        %v6376 = vld [vmem:[%s329 + $0x20] sm:$0x7]
        %v6377 = vld [vmem:[%s329 + $0x24] sm:$0xc]
        %v6378 = vld [vmem:[%s329 + $0x28] sm:$0xf]
        %v6379 = vld [vmem:[%s329 + $0x2c] sm:$0x7]
        %v6380 = vld [vmem:[%s329 + $0x30] sm:$0xc]
        %v6381 = vld [vmem:[%s329 + $0x34] sm:$0xf]
        %v6382 = vld [vmem:[%s329 + $0x38] sm:$0x7]
        %v6383 = vld [vmem:[%s329 + $0x3c] sm:$0xc]
        %v6384 = vld [vmem:[%s329 + $0x40] sm:$0xf]
        %v6385 = vld [vmem:[%s329 + $0x44] sm:$0x7]
        %v6386 = vld [vmem:[%s329 + $0x48] sm:$0xc]
        %v6387 = vld [vmem:[%s329 + $0x4c] sm:$0xf]
        %v6388 = vld [vmem:[%s329 + $0x50] sm:$0x7]
        %v6389 = vld [vmem:[%s329 + $0x54] sm:$0xc]
        %v6390 = vld [vmem:[%s329 + $0x58] sm:$0xf]
        %v6391 = vld [vmem:[%s329 + $0x5c] sm:$0x7]
        %v6393 = vshrl.u32 %v6368, 16
        %v6395 = vrot.slane %v6393, 6
        %v6396 = vshll.u32 %v6368, 16
        %v6398 = vrot.slane %v6396, 7
        %v6399 = vor.u32 %v6395, %v6398
        %v6400 = vrot.slane %v6399, 4
        %v6402 = vshrl.u32 %v6369, 16
        %v6404 = vrot.slane %v6402, 6
        %v6405 = vshll.u32 %v6369, 16
        %v6407 = vrot.slane %v6405, 7
        %v6408 = vor.u32 %v6404, %v6407
        %v6409 = vsel %vm5345, %v6400, %v6408
        %v6410 = vrot.slane %v6408, 4
        %v6412 = vshrl.u32 %v6370, 16
        %v6414 = vrot.slane %v6412, 6
        %v6415 = vshll.u32 %v6370, 16
        %v6417 = vrot.slane %v6415, 7
        %v6418 = vor.u32 %v6414, %v6417
        %v6419 = vsel %vm5345, %v6410, %v6418
        %v6421 = vshrl.u32 %v6371, 16
        %v6423 = vrot.slane %v6421, 6
        %v6424 = vshll.u32 %v6371, 16
        %v6426 = vrot.slane %v6424, 7
        %v6427 = vor.u32 %v6423, %v6426
        %v6428 = vrot.slane %v6427, 4
        %v6430 = vshrl.u32 %v6372, 16
        %v6432 = vrot.slane %v6430, 6
        %v6433 = vshll.u32 %v6372, 16
        %v6435 = vrot.slane %v6433, 7
        %v6436 = vor.u32 %v6432, %v6435
        %v6437 = vsel %vm5345, %v6428, %v6436
        %v6438 = vrot.slane %v6436, 4
        %v6440 = vshrl.u32 %v6373, 16
        %v6442 = vrot.slane %v6440, 6
        %v6443 = vshll.u32 %v6373, 16
        %v6445 = vrot.slane %v6443, 7
        %v6446 = vor.u32 %v6442, %v6445
        %v6447 = vsel %vm5345, %v6438, %v6446
        %v6449 = vshrl.u32 %v6374, 16
        %v6451 = vrot.slane %v6449, 6
        %v6452 = vshll.u32 %v6374, 16
        %v6454 = vrot.slane %v6452, 7
        %v6455 = vor.u32 %v6451, %v6454
        %v6456 = vrot.slane %v6455, 4
        %v6458 = vshrl.u32 %v6375, 16
        %v6460 = vrot.slane %v6458, 6
        %v6461 = vshll.u32 %v6375, 16
        %v6463 = vrot.slane %v6461, 7
        %v6464 = vor.u32 %v6460, %v6463
        %v6465 = vsel %vm5345, %v6456, %v6464
        %v6466 = vrot.slane %v6464, 4
        %v6468 = vshrl.u32 %v6376, 16
        %v6470 = vrot.slane %v6468, 6
        %v6471 = vshll.u32 %v6376, 16
        %v6473 = vrot.slane %v6471, 7
        %v6474 = vor.u32 %v6470, %v6473
        %v6475 = vsel %vm5345, %v6466, %v6474
        %v6477 = vshrl.u32 %v6377, 16
        %v6479 = vrot.slane %v6477, 6
        %v6480 = vshll.u32 %v6377, 16
        %v6482 = vrot.slane %v6480, 7
        %v6483 = vor.u32 %v6479, %v6482
        %v6484 = vrot.slane %v6483, 4
        %v6486 = vshrl.u32 %v6378, 16
        %v6488 = vrot.slane %v6486, 6
        %v6489 = vshll.u32 %v6378, 16
        %v6491 = vrot.slane %v6489, 7
        %v6492 = vor.u32 %v6488, %v6491
        %v6493 = vsel %vm5345, %v6484, %v6492
        %v6494 = vrot.slane %v6492, 4
        %v6496 = vshrl.u32 %v6379, 16
        %v6498 = vrot.slane %v6496, 6
        %v6499 = vshll.u32 %v6379, 16
        %v6501 = vrot.slane %v6499, 7
        %v6502 = vor.u32 %v6498, %v6501
        %v6503 = vsel %vm5345, %v6494, %v6502
        %v6505 = vshrl.u32 %v6380, 16
        %v6507 = vrot.slane %v6505, 6
        %v6508 = vshll.u32 %v6380, 16
        %v6510 = vrot.slane %v6508, 7
        %v6511 = vor.u32 %v6507, %v6510
        %v6512 = vrot.slane %v6511, 4
        %v6514 = vshrl.u32 %v6381, 16
        %v6516 = vrot.slane %v6514, 6
        %v6517 = vshll.u32 %v6381, 16
        %v6519 = vrot.slane %v6517, 7
        %v6520 = vor.u32 %v6516, %v6519
        %v6521 = vsel %vm5345, %v6512, %v6520
        %v6522 = vrot.slane %v6520, 4
        %v6524 = vshrl.u32 %v6382, 16
        %v6526 = vrot.slane %v6524, 6
        %v6527 = vshll.u32 %v6382, 16
        %v6529 = vrot.slane %v6527, 7
        %v6530 = vor.u32 %v6526, %v6529
        %v6531 = vsel %vm5345, %v6522, %v6530
        %v6533 = vshrl.u32 %v6383, 16
        %v6535 = vrot.slane %v6533, 6
        %v6536 = vshll.u32 %v6383, 16
        %v6538 = vrot.slane %v6536, 7
        %v6539 = vor.u32 %v6535, %v6538
        %v6540 = vrot.slane %v6539, 4
        %v6542 = vshrl.u32 %v6384, 16
        %v6544 = vrot.slane %v6542, 6
        %v6545 = vshll.u32 %v6384, 16
        %v6547 = vrot.slane %v6545, 7
        %v6548 = vor.u32 %v6544, %v6547
        %v6549 = vsel %vm5345, %v6540, %v6548
        %v6550 = vrot.slane %v6548, 4
        %v6552 = vshrl.u32 %v6385, 16
        %v6554 = vrot.slane %v6552, 6
        %v6555 = vshll.u32 %v6385, 16
        %v6557 = vrot.slane %v6555, 7
        %v6558 = vor.u32 %v6554, %v6557
        %v6559 = vsel %vm5345, %v6550, %v6558
        %v6561 = vshrl.u32 %v6386, 16
        %v6563 = vrot.slane %v6561, 6
        %v6564 = vshll.u32 %v6386, 16
        %v6566 = vrot.slane %v6564, 7
        %v6567 = vor.u32 %v6563, %v6566
        %v6568 = vrot.slane %v6567, 4
        %v6570 = vshrl.u32 %v6387, 16
        %v6572 = vrot.slane %v6570, 6
        %v6573 = vshll.u32 %v6387, 16
        %v6575 = vrot.slane %v6573, 7
        %v6576 = vor.u32 %v6572, %v6575
        %v6577 = vsel %vm5345, %v6568, %v6576
        %v6578 = vrot.slane %v6576, 4
        %v6580 = vshrl.u32 %v6388, 16
        %v6582 = vrot.slane %v6580, 6
        %v6583 = vshll.u32 %v6388, 16
        %v6585 = vrot.slane %v6583, 7
        %v6586 = vor.u32 %v6582, %v6585
        %v6587 = vsel %vm5345, %v6578, %v6586
        %v6589 = vshrl.u32 %v6389, 16
        %v6591 = vrot.slane %v6589, 6
        %v6592 = vshll.u32 %v6389, 16
        %v6594 = vrot.slane %v6592, 7
        %v6595 = vor.u32 %v6591, %v6594
        %v6596 = vrot.slane %v6595, 4
        %v6598 = vshrl.u32 %v6390, 16
        %v6600 = vrot.slane %v6598, 6
        %v6601 = vshll.u32 %v6390, 16
        %v6603 = vrot.slane %v6601, 7
        %v6604 = vor.u32 %v6600, %v6603
        %v6605 = vsel %vm5345, %v6596, %v6604
        %v6606 = vrot.slane %v6604, 4
        %v6608 = vshrl.u32 %v6391, 16
        %v6610 = vrot.slane %v6608, 6
        %v6611 = vshll.u32 %v6391, 16
        %v6613 = vrot.slane %v6611, 7
        %v6614 = vor.u32 %v6610, %v6613
        %v6615 = vsel %vm5345, %v6606, %v6614
        %s6616 = scalar_lea.vmem %s3, 56
        %v6617 = vld [vmem:[%s6616] sm:$0xf]
        %v6618 = vunpack.c.l.b16 %v6409
        %v6619 = vunpack.c.l.b16 %v6419
        %v6620 = vunpack.c.l.b16 %v6437
        %v6621 = vunpack.c.l.b16 %v6447
        %v6622 = vunpack.c.l.b16 %v6465
        %v6623 = vunpack.c.l.b16 %v6475
        %v6624 = vunpack.c.l.b16 %v6493
        %v6625 = vunpack.c.l.b16 %v6503
        %v6626 = vunpack.c.l.b16 %v6521
        %v6627 = vunpack.c.l.b16 %v6531
        %v6628 = vunpack.c.l.b16 %v6549
        %v6629 = vunpack.c.l.b16 %v6559
        %v6630 = vunpack.c.l.b16 %v6577
        %v6631 = vunpack.c.l.b16 %v6587
        %v6632 = vunpack.c.l.b16 %v6605
        %v6633 = vunpack.c.l.b16 %v6615
        %v6634 = vpack.c.b16 %v6619, %v6618
        %v6635 = vpack.c.b16 %v6621, %v6620
        %v6636 = vpack.c.b16 %v6623, %v6622
        %v6637 = vpack.c.b16 %v6625, %v6624
        %v6638 = vpack.c.b16 %v6627, %v6626
        %v6639 = vpack.c.b16 %v6629, %v6628
        %v6640 = vpack.c.b16 %v6631, %v6630
        %v6641 = vpack.c.b16 %v6633, %v6632
        %v6644 = vunpack.c.l.s4 1983009808
        %v6645 = vunpack.c.0.s8 %v6644
        %v6646 = vlaneseq
        %v6647 = vshrl.u32 %v6646, 7
        %v6648 = vsub.s32 %v6645, %v6647
        %v6649 = vrot.slane %v6617, %v6648
        %v6650 = vcombine.high %v6649, %v6649
        %v6652 = vsel %vm615, %v6634, 0
        %v6655 = vsel %vm615, %v6635, 0
        %v6658 = vsel %vm615, %v6636, 0
        %v6661 = vsel %vm615, %v6637, 0
        %v6664 = vsel %vm615, %v6638, 0
        %v6667 = vsel %vm615, %v6639, 0
        %v6670 = vsel %vm615, %v6640, 0
        %v6673 = vsel %vm615, %v6641, 0
        %v6676 = vsel %vm640, %v6649, 0
        %v6679 = vsel %vm640, %v6650, 0
        %6681 = vmatprep.subr.bf16.mxu0 %v6679
        %6682 = vmatpush1.bf16.msra.mxu0 %v6676
        %6683 = vmatprep.subr.bf16.mxu0 0
        %6684 = vmatpush1.bf16.msra.mxu0 0
        %6685 = vmatprep.subr.bf16.mxu0 0
        %6686 = vmatpush1.bf16.msra.mxu0 0
        %6687 = vmatprep.subr.bf16.mxu0 0
        %6688 = vmatpush1.bf16.msra.mxu0 0
        %6689 = vmatprep.subr.bf16.mxu0 0
        %6690 = vmatpush1.bf16.msra.mxu0 0
        %6691 = vmatprep.subr.bf16.mxu0 0
        %6692 = vmatpush1.bf16.msra.mxu0 0
        %6693 = vmatprep.subr.bf16.mxu0 0
        %6694 = vmatpush1.bf16.msra.mxu0 0
        %6695 = vmatprep.subr.bf16.mxu0 0
        %6696 = vmatpush1.bf16.msra.mxu0 0
        %6697 = vmatprep.subr.bf16.mxu0 0
        %6698 = vmatpush1.bf16.msra.mxu0 0
        %6699 = vmatprep.subr.bf16.mxu0 0
        %6700 = vmatpush1.bf16.msra.mxu0 0
        %6701 = vmatprep.subr.bf16.mxu0 0
        %6702 = vmatpush1.bf16.msra.mxu0 0
        %6703 = vmatprep.subr.bf16.mxu0 0
        %6704 = vmatpush1.bf16.msra.mxu0 0
        %6705 = vmatprep.subr.bf16.mxu0 0
        %6706 = vmatpush1.bf16.msra.mxu0 0
        %6707 = vmatprep.subr.bf16.mxu0 0
        %6708 = vmatpush1.bf16.msra.mxu0 0
        %6709 = vmatprep.subr.bf16.mxu0 0
        %6710 = vmatpush1.bf16.msra.mxu0 0
        %6711 = vmatprep.subr.bf16.mxu0 0
        %6712 = vmatpush1.bf16.msra.mxu0 0
        %6713 = vmatprep.mubr.bf16.mxu0 0
        %6714 = vmatmul.mubr.bf16.gmra.mrb[0].mxu0 %v6652
        %v6715 = vpop.f32.mrb[0].mxu0
        %v6716 = vadd.f32 0.0, %v6715
        %v6717 = vpop.f32.mrb[0].mxu0
        %v6718 = vadd.f32 0.0, %v6717
        %v6719 = vpop.f32.mrb[0].mxu0
        %v6720 = vadd.f32 0.0, %v6719
        %v6721 = vpop.f32.mrb[0].mxu0
        %v6722 = vadd.f32 0.0, %v6721
        %6723 = vmatprep.mubr.bf16.mxu0 0
        %6724 = vmatmul.mubr.bf16.gmra.mrb[0].mxu0 %v6655
        %v6725 = vpop.f32.mrb[0].mxu0
        %v6726 = vadd.f32 0.0, %v6725
        %v6727 = vpop.f32.mrb[0].mxu0
        %v6728 = vadd.f32 0.0, %v6727
        %v6729 = vpop.f32.mrb[0].mxu0
        %v6730 = vadd.f32 0.0, %v6729
        %v6731 = vpop.f32.mrb[0].mxu0
        %v6732 = vadd.f32 0.0, %v6731
        %6733 = vmatprep.mubr.bf16.mxu0 0
        %6734 = vmatmul.mubr.bf16.gmra.mrb[0].mxu0 %v6658
        %v6735 = vpop.f32.mrb[0].mxu0
        %v6736 = vadd.f32 0.0, %v6735
        %v6737 = vpop.f32.mrb[0].mxu0
        %v6738 = vadd.f32 0.0, %v6737
        %v6739 = vpop.f32.mrb[0].mxu0
        %v6740 = vadd.f32 0.0, %v6739
        %v6741 = vpop.f32.mrb[0].mxu0
        %v6742 = vadd.f32 0.0, %v6741
        %6743 = vmatprep.mubr.bf16.mxu0 0
        %6744 = vmatmul.mubr.bf16.gmra.mrb[0].mxu0 %v6661
        %v6745 = vpop.f32.mrb[0].mxu0
        %v6746 = vadd.f32 0.0, %v6745
        %v6747 = vpop.f32.mrb[0].mxu0
        %v6748 = vadd.f32 0.0, %v6747
        %v6749 = vpop.f32.mrb[0].mxu0
        %v6750 = vadd.f32 0.0, %v6749
        %v6751 = vpop.f32.mrb[0].mxu0
        %v6752 = vadd.f32 0.0, %v6751
        %6753 = vmatprep.mubr.bf16.mxu0 0
        %6754 = vmatmul.mubr.bf16.gmra.mrb[0].mxu0 %v6664
        %v6755 = vpop.f32.mrb[0].mxu0
        %v6756 = vadd.f32 0.0, %v6755
        %v6757 = vpop.f32.mrb[0].mxu0
        %v6758 = vadd.f32 0.0, %v6757
        %v6759 = vpop.f32.mrb[0].mxu0
        %v6760 = vadd.f32 0.0, %v6759
        %v6761 = vpop.f32.mrb[0].mxu0
        %v6762 = vadd.f32 0.0, %v6761
        %6763 = vmatprep.mubr.bf16.mxu0 0
        %6764 = vmatmul.mubr.bf16.gmra.mrb[0].mxu0 %v6667
        %v6765 = vpop.f32.mrb[0].mxu0
        %v6766 = vadd.f32 0.0, %v6765
        %v6767 = vpop.f32.mrb[0].mxu0
        %v6768 = vadd.f32 0.0, %v6767
        %v6769 = vpop.f32.mrb[0].mxu0
        %v6770 = vadd.f32 0.0, %v6769
        %v6771 = vpop.f32.mrb[0].mxu0
        %v6772 = vadd.f32 0.0, %v6771
        %6773 = vmatprep.mubr.bf16.mxu0 0
        %6774 = vmatmul.mubr.bf16.gmra.mrb[0].mxu0 %v6670
        %v6775 = vpop.f32.mrb[0].mxu0
        %v6776 = vadd.f32 0.0, %v6775
        %v6777 = vpop.f32.mrb[0].mxu0
        %v6778 = vadd.f32 0.0, %v6777
        %v6779 = vpop.f32.mrb[0].mxu0
        %v6780 = vadd.f32 0.0, %v6779
        %v6781 = vpop.f32.mrb[0].mxu0
        %v6782 = vadd.f32 0.0, %v6781
        %6783 = vmatprep.mubr.bf16.mxu0 0
        %6784 = vmatmul.mubr.bf16.gmra.mrb[0].mxu0 %v6673
        %v6785 = vpop.f32.mrb[0].mxu0
        %v6786 = vadd.f32 0.0, %v6785
        %v6787 = vpop.f32.mrb[0].mxu0
        %v6788 = vadd.f32 0.0, %v6787
        %v6789 = vpop.f32.mrb[0].mxu0
        %v6790 = vadd.f32 0.0, %v6789
        %v6791 = vpop.f32.mrb[0].mxu0
        %v6792 = vadd.f32 0.0, %v6791
        %6793 = vdwg.mxu0
        %v6794 = vadd.f32 %v6336, %v6716
        %v6795 = vadd.f32 %v6337, %v6718
        %v6796 = vadd.f32 %v6338, %v6720
        %v6797 = vadd.f32 %v6339, %v6722
        %v6798 = vadd.f32 %v6340, %v6726
        %v6799 = vadd.f32 %v6341, %v6728
        %v6800 = vadd.f32 %v6342, %v6730
        %v6801 = vadd.f32 %v6343, %v6732
        %v6802 = vadd.f32 %v6344, %v6736
        %v6803 = vadd.f32 %v6345, %v6738
        %v6804 = vadd.f32 %v6346, %v6740
        %v6805 = vadd.f32 %v6347, %v6742
        %v6806 = vadd.f32 %v6348, %v6746
        %v6807 = vadd.f32 %v6349, %v6748
        %v6808 = vadd.f32 %v6350, %v6750
        %v6809 = vadd.f32 %v6351, %v6752
        %v6810 = vadd.f32 %v6352, %v6756
        %v6811 = vadd.f32 %v6353, %v6758
        %v6812 = vadd.f32 %v6354, %v6760
        %v6813 = vadd.f32 %v6355, %v6762
        %v6814 = vadd.f32 %v6356, %v6766
        %v6815 = vadd.f32 %v6357, %v6768
        %v6816 = vadd.f32 %v6358, %v6770
        %v6817 = vadd.f32 %v6359, %v6772
        %v6818 = vadd.f32 %v6360, %v6776
        %v6819 = vadd.f32 %v6361, %v6778
        %v6820 = vadd.f32 %v6362, %v6780
        %v6821 = vadd.f32 %v6363, %v6782
        %v6822 = vadd.f32 %v6364, %v6786
        %v6823 = vadd.f32 %v6365, %v6788
        %v6824 = vadd.f32 %v6366, %v6790
        %v6825 = vadd.f32 %v6367, %v6792
        %s6826 = sadd.s32 %s325, 5
        %s6827 = smul.u32 %s6826, 3
        %s6828 = smul.addr %s6827, 4
        %s6829 = scalar_lea.vmem %s318, %s6828
        %v6830 = vld [vmem:[%s6829] sm:$0xf]
        %v6831 = vld [vmem:[%s6829 + $0x4] sm:$0xf]
        %v6832 = vld [vmem:[%s6829 + $0x8] sm:$0x1]
        %v6833 = vld [vmem:[%s6829 + $0xc] sm:$0xf]
        %v6834 = vld [vmem:[%s6829 + $0x10] sm:$0xf]
        %v6835 = vld [vmem:[%s6829 + $0x14] sm:$0x1]
        %v6836 = vld [vmem:[%s6829 + $0x18] sm:$0xf]
        %v6837 = vld [vmem:[%s6829 + $0x1c] sm:$0xf]
        %v6838 = vld [vmem:[%s6829 + $0x20] sm:$0x1]
        %v6839 = vld [vmem:[%s6829 + $0x24] sm:$0xf]
        %v6840 = vld [vmem:[%s6829 + $0x28] sm:$0xf]
        %v6841 = vld [vmem:[%s6829 + $0x2c] sm:$0x1]
        %v6842 = vld [vmem:[%s6829 + $0x30] sm:$0xf]
        %v6843 = vld [vmem:[%s6829 + $0x34] sm:$0xf]
        %v6844 = vld [vmem:[%s6829 + $0x38] sm:$0x1]
        %v6845 = vld [vmem:[%s6829 + $0x3c] sm:$0xf]
        %v6846 = vld [vmem:[%s6829 + $0x40] sm:$0xf]
        %v6847 = vld [vmem:[%s6829 + $0x44] sm:$0x1]
        %v6848 = vld [vmem:[%s6829 + $0x48] sm:$0xf]
        %v6849 = vld [vmem:[%s6829 + $0x4c] sm:$0xf]
        %v6850 = vld [vmem:[%s6829 + $0x50] sm:$0x1]
        %v6851 = vld [vmem:[%s6829 + $0x54] sm:$0xf]
        %v6852 = vld [vmem:[%s6829 + $0x58] sm:$0xf]
        %v6853 = vld [vmem:[%s6829 + $0x5c] sm:$0x1]
        %v6855 = vshrl.u32 %v6830, 16
        %v6857 = vrot.slane %v6855, 4
        %v6858 = vshll.u32 %v6830, 16
        %v6860 = vrot.slane %v6858, 5
        %v6861 = vor.u32 %v6857, %v6860
        %v6862 = vrot.slane %v6861, 4
        %v6864 = vshll.u32 %v6831, 16
        %v6866 = vrot.slane %v6864, 5
        %v6867 = vsel %vm4570, %v6862, %v6866
        %v6868 = vshrl.u32 %v6831, 16
        %v6870 = vrot.slane %v6868, 4
        %v6871 = vor.u32 %v6870, %v6866
        %v6872 = vrot.slane %v6871, 4
        %v6874 = vshll.u32 %v6832, 16
        %v6876 = vrot.slane %v6874, 5
        %v6877 = vsel %vm4570, %v6872, %v6876
        %v6879 = vshrl.u32 %v6833, 16
        %v6881 = vrot.slane %v6879, 4
        %v6882 = vshll.u32 %v6833, 16
        %v6884 = vrot.slane %v6882, 5
        %v6885 = vor.u32 %v6881, %v6884
        %v6886 = vrot.slane %v6885, 4
        %v6888 = vshll.u32 %v6834, 16
        %v6890 = vrot.slane %v6888, 5
        %v6891 = vsel %vm4570, %v6886, %v6890
        %v6892 = vshrl.u32 %v6834, 16
        %v6894 = vrot.slane %v6892, 4
        %v6895 = vor.u32 %v6894, %v6890
        %v6896 = vrot.slane %v6895, 4
        %v6898 = vshll.u32 %v6835, 16
        %v6900 = vrot.slane %v6898, 5
        %v6901 = vsel %vm4570, %v6896, %v6900
        %v6903 = vshrl.u32 %v6836, 16
        %v6905 = vrot.slane %v6903, 4
        %v6906 = vshll.u32 %v6836, 16
        %v6908 = vrot.slane %v6906, 5
        %v6909 = vor.u32 %v6905, %v6908
        %v6910 = vrot.slane %v6909, 4
        %v6912 = vshll.u32 %v6837, 16
        %v6914 = vrot.slane %v6912, 5
        %v6915 = vsel %vm4570, %v6910, %v6914
        %v6916 = vshrl.u32 %v6837, 16
        %v6918 = vrot.slane %v6916, 4
        %v6919 = vor.u32 %v6918, %v6914
        %v6920 = vrot.slane %v6919, 4
        %v6922 = vshll.u32 %v6838, 16
        %v6924 = vrot.slane %v6922, 5
        %v6925 = vsel %vm4570, %v6920, %v6924
        %v6927 = vshrl.u32 %v6839, 16
        %v6929 = vrot.slane %v6927, 4
        %v6930 = vshll.u32 %v6839, 16
        %v6932 = vrot.slane %v6930, 5
        %v6933 = vor.u32 %v6929, %v6932
        %v6934 = vrot.slane %v6933, 4
        %v6936 = vshll.u32 %v6840, 16
        %v6938 = vrot.slane %v6936, 5
        %v6939 = vsel %vm4570, %v6934, %v6938
        %v6940 = vshrl.u32 %v6840, 16
        %v6942 = vrot.slane %v6940, 4
        %v6943 = vor.u32 %v6942, %v6938
        %v6944 = vrot.slane %v6943, 4
        %v6946 = vshll.u32 %v6841, 16
        %v6948 = vrot.slane %v6946, 5
        %v6949 = vsel %vm4570, %v6944, %v6948
        %v6951 = vshrl.u32 %v6842, 16
        %v6953 = vrot.slane %v6951, 4
        %v6954 = vshll.u32 %v6842, 16
        %v6956 = vrot.slane %v6954, 5
        %v6957 = vor.u32 %v6953, %v6956
        %v6958 = vrot.slane %v6957, 4
        %v6960 = vshll.u32 %v6843, 16
        %v6962 = vrot.slane %v6960, 5
        %v6963 = vsel %vm4570, %v6958, %v6962
        %v6964 = vshrl.u32 %v6843, 16
        %v6966 = vrot.slane %v6964, 4
        %v6967 = vor.u32 %v6966, %v6962
        %v6968 = vrot.slane %v6967, 4
        %v6970 = vshll.u32 %v6844, 16
        %v6972 = vrot.slane %v6970, 5
        %v6973 = vsel %vm4570, %v6968, %v6972
        %v6975 = vshrl.u32 %v6845, 16
        %v6977 = vrot.slane %v6975, 4
        %v6978 = vshll.u32 %v6845, 16
        %v6980 = vrot.slane %v6978, 5
        %v6981 = vor.u32 %v6977, %v6980
        %v6982 = vrot.slane %v6981, 4
        %v6984 = vshll.u32 %v6846, 16
        %v6986 = vrot.slane %v6984, 5
        %v6987 = vsel %vm4570, %v6982, %v6986
        %v6988 = vshrl.u32 %v6846, 16
        %v6990 = vrot.slane %v6988, 4
        %v6991 = vor.u32 %v6990, %v6986
        %v6992 = vrot.slane %v6991, 4
        %v6994 = vshll.u32 %v6847, 16
        %v6996 = vrot.slane %v6994, 5
        %v6997 = vsel %vm4570, %v6992, %v6996
        %v6999 = vshrl.u32 %v6848, 16
        %v7001 = vrot.slane %v6999, 4
        %v7002 = vshll.u32 %v6848, 16
        %v7004 = vrot.slane %v7002, 5
        %v7005 = vor.u32 %v7001, %v7004
        %v7006 = vrot.slane %v7005, 4
        %v7008 = vshll.u32 %v6849, 16
        %v7010 = vrot.slane %v7008, 5
        %v7011 = vsel %vm4570, %v7006, %v7010
        %v7012 = vshrl.u32 %v6849, 16
        %v7014 = vrot.slane %v7012, 4
        %v7015 = vor.u32 %v7014, %v7010
        %v7016 = vrot.slane %v7015, 4
        %v7018 = vshll.u32 %v6850, 16
        %v7020 = vrot.slane %v7018, 5
        %v7021 = vsel %vm4570, %v7016, %v7020
        %v7023 = vshrl.u32 %v6851, 16
        %v7025 = vrot.slane %v7023, 4
        %v7026 = vshll.u32 %v6851, 16
        %v7028 = vrot.slane %v7026, 5
        %v7029 = vor.u32 %v7025, %v7028
        %v7030 = vrot.slane %v7029, 4
        %v7032 = vshll.u32 %v6852, 16
        %v7034 = vrot.slane %v7032, 5
        %v7035 = vsel %vm4570, %v7030, %v7034
        %v7036 = vshrl.u32 %v6852, 16
        %v7038 = vrot.slane %v7036, 4
        %v7039 = vor.u32 %v7038, %v7034
        %v7040 = vrot.slane %v7039, 4
        %v7042 = vshll.u32 %v6853, 16
        %v7044 = vrot.slane %v7042, 5
        %v7045 = vsel %vm4570, %v7040, %v7044
        %s7046 = scalar_lea.vmem %s3, 60
        %v7047 = vld [vmem:[%s7046] sm:$0xf]
        %v7048 = vunpack.c.l.b16 %v6867
        %v7049 = vunpack.c.l.b16 %v6877
        %v7050 = vunpack.c.l.b16 %v6891
        %v7051 = vunpack.c.l.b16 %v6901
        %v7052 = vunpack.c.l.b16 %v6915
        %v7053 = vunpack.c.l.b16 %v6925
        %v7054 = vunpack.c.l.b16 %v6939
        %v7055 = vunpack.c.l.b16 %v6949
        %v7056 = vunpack.c.l.b16 %v6963
        %v7057 = vunpack.c.l.b16 %v6973
        %v7058 = vunpack.c.l.b16 %v6987
        %v7059 = vunpack.c.l.b16 %v6997
        %v7060 = vunpack.c.l.b16 %v7011
        %v7061 = vunpack.c.l.b16 %v7021
        %v7062 = vunpack.c.l.b16 %v7035
        %v7063 = vunpack.c.l.b16 %v7045
        %v7064 = vpack.c.b16 %v7049, %v7048
        %v7065 = vpack.c.b16 %v7051, %v7050
        %v7066 = vpack.c.b16 %v7053, %v7052
        %v7067 = vpack.c.b16 %v7055, %v7054
        %v7068 = vpack.c.b16 %v7057, %v7056
        %v7069 = vpack.c.b16 %v7059, %v7058
        %v7070 = vpack.c.b16 %v7061, %v7060
        %v7071 = vpack.c.b16 %v7063, %v7062
        %v7074 = vunpack.c.l.s4 1983009808
        %v7075 = vunpack.c.0.s8 %v7074
        %v7076 = vlaneseq
        %v7077 = vshrl.u32 %v7076, 7
        %v7078 = vsub.s32 %v7075, %v7077
        %v7079 = vrot.slane %v7047, %v7078
        %v7080 = vcombine.high %v7079, %v7079
        %v7082 = vsel %vm615, %v7064, 0
        %v7085 = vsel %vm615, %v7065, 0
        %v7088 = vsel %vm615, %v7066, 0
        %v7091 = vsel %vm615, %v7067, 0
        %v7094 = vsel %vm615, %v7068, 0
        %v7097 = vsel %vm615, %v7069, 0
        %v7100 = vsel %vm615, %v7070, 0
        %v7103 = vsel %vm615, %v7071, 0
        %v7106 = vsel %vm640, %v7079, 0
        %v7109 = vsel %vm640, %v7080, 0
        %7111 = vmatprep.subr.bf16.mxu0 %v7109
        %7112 = vmatpush1.bf16.msra.mxu0 %v7106
        %7113 = vmatprep.subr.bf16.mxu0 0
        %7114 = vmatpush1.bf16.msra.mxu0 0
        %7115 = vmatprep.subr.bf16.mxu0 0
        %7116 = vmatpush1.bf16.msra.mxu0 0
        %7117 = vmatprep.subr.bf16.mxu0 0
        %7118 = vmatpush1.bf16.msra.mxu0 0
        %7119 = vmatprep.subr.bf16.mxu0 0
        %7120 = vmatpush1.bf16.msra.mxu0 0
        %7121 = vmatprep.subr.bf16.mxu0 0
        %7122 = vmatpush1.bf16.msra.mxu0 0
        %7123 = vmatprep.subr.bf16.mxu0 0
        %7124 = vmatpush1.bf16.msra.mxu0 0
        %7125 = vmatprep.subr.bf16.mxu0 0
        %7126 = vmatpush1.bf16.msra.mxu0 0
        %7127 = vmatprep.subr.bf16.mxu0 0
        %7128 = vmatpush1.bf16.msra.mxu0 0
        %7129 = vmatprep.subr.bf16.mxu0 0
        %7130 = vmatpush1.bf16.msra.mxu0 0
        %7131 = vmatprep.subr.bf16.mxu0 0
        %7132 = vmatpush1.bf16.msra.mxu0 0
        %7133 = vmatprep.subr.bf16.mxu0 0
        %7134 = vmatpush1.bf16.msra.mxu0 0
        %7135 = vmatprep.subr.bf16.mxu0 0
        %7136 = vmatpush1.bf16.msra.mxu0 0
        %7137 = vmatprep.subr.bf16.mxu0 0
        %7138 = vmatpush1.bf16.msra.mxu0 0
        %7139 = vmatprep.subr.bf16.mxu0 0
        %7140 = vmatpush1.bf16.msra.mxu0 0
        %7141 = vmatprep.subr.bf16.mxu0 0
        %7142 = vmatpush1.bf16.msra.mxu0 0
        %7143 = vmatprep.mubr.bf16.mxu0 0
        %7144 = vmatmul.mubr.bf16.gmra.mrb[0].mxu0 %v7082
        %v7145 = vpop.f32.mrb[0].mxu0
        %v7146 = vadd.f32 0.0, %v7145
        %v7147 = vpop.f32.mrb[0].mxu0
        %v7148 = vadd.f32 0.0, %v7147
        %v7149 = vpop.f32.mrb[0].mxu0
        %v7150 = vadd.f32 0.0, %v7149
        %v7151 = vpop.f32.mrb[0].mxu0
        %v7152 = vadd.f32 0.0, %v7151
        %7153 = vmatprep.mubr.bf16.mxu0 0
        %7154 = vmatmul.mubr.bf16.gmra.mrb[0].mxu0 %v7085
        %v7155 = vpop.f32.mrb[0].mxu0
        %v7156 = vadd.f32 0.0, %v7155
        %v7157 = vpop.f32.mrb[0].mxu0
        %v7158 = vadd.f32 0.0, %v7157
        %v7159 = vpop.f32.mrb[0].mxu0
        %v7160 = vadd.f32 0.0, %v7159
        %v7161 = vpop.f32.mrb[0].mxu0
        %v7162 = vadd.f32 0.0, %v7161
        %7163 = vmatprep.mubr.bf16.mxu0 0
        %7164 = vmatmul.mubr.bf16.gmra.mrb[0].mxu0 %v7088
        %v7165 = vpop.f32.mrb[0].mxu0
        %v7166 = vadd.f32 0.0, %v7165
        %v7167 = vpop.f32.mrb[0].mxu0
        %v7168 = vadd.f32 0.0, %v7167
        %v7169 = vpop.f32.mrb[0].mxu0
        %v7170 = vadd.f32 0.0, %v7169
        %v7171 = vpop.f32.mrb[0].mxu0
        %v7172 = vadd.f32 0.0, %v7171
        %7173 = vmatprep.mubr.bf16.mxu0 0
        %7174 = vmatmul.mubr.bf16.gmra.mrb[0].mxu0 %v7091
        %v7175 = vpop.f32.mrb[0].mxu0
        %v7176 = vadd.f32 0.0, %v7175
        %v7177 = vpop.f32.mrb[0].mxu0
        %v7178 = vadd.f32 0.0, %v7177
        %v7179 = vpop.f32.mrb[0].mxu0
        %v7180 = vadd.f32 0.0, %v7179
        %v7181 = vpop.f32.mrb[0].mxu0
        %v7182 = vadd.f32 0.0, %v7181
        %7183 = vmatprep.mubr.bf16.mxu0 0
        %7184 = vmatmul.mubr.bf16.gmra.mrb[0].mxu0 %v7094
        %v7185 = vpop.f32.mrb[0].mxu0
        %v7186 = vadd.f32 0.0, %v7185
        %v7187 = vpop.f32.mrb[0].mxu0
        %v7188 = vadd.f32 0.0, %v7187
        %v7189 = vpop.f32.mrb[0].mxu0
        %v7190 = vadd.f32 0.0, %v7189
        %v7191 = vpop.f32.mrb[0].mxu0
        %v7192 = vadd.f32 0.0, %v7191
        %7193 = vmatprep.mubr.bf16.mxu0 0
        %7194 = vmatmul.mubr.bf16.gmra.mrb[0].mxu0 %v7097
        %v7195 = vpop.f32.mrb[0].mxu0
        %v7196 = vadd.f32 0.0, %v7195
        %v7197 = vpop.f32.mrb[0].mxu0
        %v7198 = vadd.f32 0.0, %v7197
        %v7199 = vpop.f32.mrb[0].mxu0
        %v7200 = vadd.f32 0.0, %v7199
        %v7201 = vpop.f32.mrb[0].mxu0
        %v7202 = vadd.f32 0.0, %v7201
        %7203 = vmatprep.mubr.bf16.mxu0 0
        %7204 = vmatmul.mubr.bf16.gmra.mrb[0].mxu0 %v7100
        %v7205 = vpop.f32.mrb[0].mxu0
        %v7206 = vadd.f32 0.0, %v7205
        %v7207 = vpop.f32.mrb[0].mxu0
        %v7208 = vadd.f32 0.0, %v7207
        %v7209 = vpop.f32.mrb[0].mxu0
        %v7210 = vadd.f32 0.0, %v7209
        %v7211 = vpop.f32.mrb[0].mxu0
        %v7212 = vadd.f32 0.0, %v7211
        %7213 = vmatprep.mubr.bf16.mxu0 0
        %7214 = vmatmul.mubr.bf16.gmra.mrb[0].mxu0 %v7103
        %v7215 = vpop.f32.mrb[0].mxu0
        %v7216 = vadd.f32 0.0, %v7215
        %v7217 = vpop.f32.mrb[0].mxu0
        %v7218 = vadd.f32 0.0, %v7217
        %v7219 = vpop.f32.mrb[0].mxu0
        %v7220 = vadd.f32 0.0, %v7219
        %v7221 = vpop.f32.mrb[0].mxu0
        %v7222 = vadd.f32 0.0, %v7221
        %7223 = vdwg.mxu0
        %v7224 = vadd.f32 %v6794, %v7146
        %v7225 = vadd.f32 %v6795, %v7148
        %v7226 = vadd.f32 %v6796, %v7150
        %v7227 = vadd.f32 %v6797, %v7152
        %v7228 = vadd.f32 %v6798, %v7156
        %v7229 = vadd.f32 %v6799, %v7158
        %v7230 = vadd.f32 %v6800, %v7160
        %v7231 = vadd.f32 %v6801, %v7162
        %v7232 = vadd.f32 %v6802, %v7166
        %v7233 = vadd.f32 %v6803, %v7168
        %v7234 = vadd.f32 %v6804, %v7170
        %v7235 = vadd.f32 %v6805, %v7172
        %v7236 = vadd.f32 %v6806, %v7176
        %v7237 = vadd.f32 %v6807, %v7178
        %v7238 = vadd.f32 %v6808, %v7180
        %v7239 = vadd.f32 %v6809, %v7182
        %v7240 = vadd.f32 %v6810, %v7186
        %v7241 = vadd.f32 %v6811, %v7188
        %v7242 = vadd.f32 %v6812, %v7190
        %v7243 = vadd.f32 %v6813, %v7192
        %v7244 = vadd.f32 %v6814, %v7196
        %v7245 = vadd.f32 %v6815, %v7198
        %v7246 = vadd.f32 %v6816, %v7200
        %v7247 = vadd.f32 %v6817, %v7202
        %v7248 = vadd.f32 %v6818, %v7206
        %v7249 = vadd.f32 %v6819, %v7208
        %v7250 = vadd.f32 %v6820, %v7210
        %v7251 = vadd.f32 %v6821, %v7212
        %v7252 = vadd.f32 %v6822, %v7216
        %v7253 = vadd.f32 %v6823, %v7218
        %v7254 = vadd.f32 %v6824, %v7220
        %v7255 = vadd.f32 %v6825, %v7222
        %v7256 = vld [vmem:[%s6829] sm:$0xe]
        %v7257 = vld [vmem:[%s6829 + $0x4] sm:$0xf]
        %v7258 = vld [vmem:[%s6829 + $0x8] sm:$0x3]
        %v7259 = vld [vmem:[%s6829 + $0xc] sm:$0xe]
        %v7260 = vld [vmem:[%s6829 + $0x10] sm:$0xf]
        %v7261 = vld [vmem:[%s6829 + $0x14] sm:$0x3]
        %v7262 = vld [vmem:[%s6829 + $0x18] sm:$0xe]
        %v7263 = vld [vmem:[%s6829 + $0x1c] sm:$0xf]
        %v7264 = vld [vmem:[%s6829 + $0x20] sm:$0x3]
        %v7265 = vld [vmem:[%s6829 + $0x24] sm:$0xe]
        %v7266 = vld [vmem:[%s6829 + $0x28] sm:$0xf]
        %v7267 = vld [vmem:[%s6829 + $0x2c] sm:$0x3]
        %v7268 = vld [vmem:[%s6829 + $0x30] sm:$0xe]
        %v7269 = vld [vmem:[%s6829 + $0x34] sm:$0xf]
        %v7270 = vld [vmem:[%s6829 + $0x38] sm:$0x3]
        %v7271 = vld [vmem:[%s6829 + $0x3c] sm:$0xe]
        %v7272 = vld [vmem:[%s6829 + $0x40] sm:$0xf]
        %v7273 = vld [vmem:[%s6829 + $0x44] sm:$0x3]
        %v7274 = vld [vmem:[%s6829 + $0x48] sm:$0xe]
        %v7275 = vld [vmem:[%s6829 + $0x4c] sm:$0xf]
        %v7276 = vld [vmem:[%s6829 + $0x50] sm:$0x3]
        %v7277 = vld [vmem:[%s6829 + $0x54] sm:$0xe]
        %v7278 = vld [vmem:[%s6829 + $0x58] sm:$0xf]
        %v7279 = vld [vmem:[%s6829 + $0x5c] sm:$0x3]
        %v7281 = vshrl.u32 %v7256, 16
        %v7283 = vrot.slane %v7281, 5
        %v7284 = vshll.u32 %v7256, 16
        %v7286 = vrot.slane %v7284, 6
        %v7287 = vor.u32 %v7283, %v7286
        %v7288 = vrot.slane %v7287, 4
        %v7290 = vshrl.u32 %v7257, 16
        %v7292 = vrot.slane %v7290, 5
        %v7293 = vshll.u32 %v7257, 16
        %v7295 = vrot.slane %v7293, 6
        %v7296 = vor.u32 %v7292, %v7295
        %v7297 = vsel %vm356, %v7288, %v7296
        %v7298 = vrot.slane %v7296, 4
        %v7300 = vshrl.u32 %v7258, 16
        %v7302 = vrot.slane %v7300, 5
        %v7303 = vshll.u32 %v7258, 16
        %v7305 = vrot.slane %v7303, 6
        %v7306 = vor.u32 %v7302, %v7305
        %v7307 = vsel %vm356, %v7298, %v7306
        %v7309 = vshrl.u32 %v7259, 16
        %v7311 = vrot.slane %v7309, 5
        %v7312 = vshll.u32 %v7259, 16
        %v7314 = vrot.slane %v7312, 6
        %v7315 = vor.u32 %v7311, %v7314
        %v7316 = vrot.slane %v7315, 4
        %v7318 = vshrl.u32 %v7260, 16
        %v7320 = vrot.slane %v7318, 5
        %v7321 = vshll.u32 %v7260, 16
        %v7323 = vrot.slane %v7321, 6
        %v7324 = vor.u32 %v7320, %v7323
        %v7325 = vsel %vm356, %v7316, %v7324
        %v7326 = vrot.slane %v7324, 4
        %v7328 = vshrl.u32 %v7261, 16
        %v7330 = vrot.slane %v7328, 5
        %v7331 = vshll.u32 %v7261, 16
        %v7333 = vrot.slane %v7331, 6
        %v7334 = vor.u32 %v7330, %v7333
        %v7335 = vsel %vm356, %v7326, %v7334
        %v7337 = vshrl.u32 %v7262, 16
        %v7339 = vrot.slane %v7337, 5
        %v7340 = vshll.u32 %v7262, 16
        %v7342 = vrot.slane %v7340, 6
        %v7343 = vor.u32 %v7339, %v7342
        %v7344 = vrot.slane %v7343, 4
        %v7346 = vshrl.u32 %v7263, 16
        %v7348 = vrot.slane %v7346, 5
        %v7349 = vshll.u32 %v7263, 16
        %v7351 = vrot.slane %v7349, 6
        %v7352 = vor.u32 %v7348, %v7351
        %v7353 = vsel %vm356, %v7344, %v7352
        %v7354 = vrot.slane %v7352, 4
        %v7356 = vshrl.u32 %v7264, 16
        %v7358 = vrot.slane %v7356, 5
        %v7359 = vshll.u32 %v7264, 16
        %v7361 = vrot.slane %v7359, 6
        %v7362 = vor.u32 %v7358, %v7361
        %v7363 = vsel %vm356, %v7354, %v7362
        %v7365 = vshrl.u32 %v7265, 16
        %v7367 = vrot.slane %v7365, 5
        %v7368 = vshll.u32 %v7265, 16
        %v7370 = vrot.slane %v7368, 6
        %v7371 = vor.u32 %v7367, %v7370
        %v7372 = vrot.slane %v7371, 4
        %v7374 = vshrl.u32 %v7266, 16
        %v7376 = vrot.slane %v7374, 5
        %v7377 = vshll.u32 %v7266, 16
        %v7379 = vrot.slane %v7377, 6
        %v7380 = vor.u32 %v7376, %v7379
        %v7381 = vsel %vm356, %v7372, %v7380
        %v7382 = vrot.slane %v7380, 4
        %v7384 = vshrl.u32 %v7267, 16
        %v7386 = vrot.slane %v7384, 5
        %v7387 = vshll.u32 %v7267, 16
        %v7389 = vrot.slane %v7387, 6
        %v7390 = vor.u32 %v7386, %v7389
        %v7391 = vsel %vm356, %v7382, %v7390
        %v7393 = vshrl.u32 %v7268, 16
        %v7395 = vrot.slane %v7393, 5
        %v7396 = vshll.u32 %v7268, 16
        %v7398 = vrot.slane %v7396, 6
        %v7399 = vor.u32 %v7395, %v7398
        %v7400 = vrot.slane %v7399, 4
        %v7402 = vshrl.u32 %v7269, 16
        %v7404 = vrot.slane %v7402, 5
        %v7405 = vshll.u32 %v7269, 16
        %v7407 = vrot.slane %v7405, 6
        %v7408 = vor.u32 %v7404, %v7407
        %v7409 = vsel %vm356, %v7400, %v7408
        %v7410 = vrot.slane %v7408, 4
        %v7412 = vshrl.u32 %v7270, 16
        %v7414 = vrot.slane %v7412, 5
        %v7415 = vshll.u32 %v7270, 16
        %v7417 = vrot.slane %v7415, 6
        %v7418 = vor.u32 %v7414, %v7417
        %v7419 = vsel %vm356, %v7410, %v7418
        %v7421 = vshrl.u32 %v7271, 16
        %v7423 = vrot.slane %v7421, 5
        %v7424 = vshll.u32 %v7271, 16
        %v7426 = vrot.slane %v7424, 6
        %v7427 = vor.u32 %v7423, %v7426
        %v7428 = vrot.slane %v7427, 4
        %v7430 = vshrl.u32 %v7272, 16
        %v7432 = vrot.slane %v7430, 5
        %v7433 = vshll.u32 %v7272, 16
        %v7435 = vrot.slane %v7433, 6
        %v7436 = vor.u32 %v7432, %v7435
        %v7437 = vsel %vm356, %v7428, %v7436
        %v7438 = vrot.slane %v7436, 4
        %v7440 = vshrl.u32 %v7273, 16
        %v7442 = vrot.slane %v7440, 5
        %v7443 = vshll.u32 %v7273, 16
        %v7445 = vrot.slane %v7443, 6
        %v7446 = vor.u32 %v7442, %v7445
        %v7447 = vsel %vm356, %v7438, %v7446
        %v7449 = vshrl.u32 %v7274, 16
        %v7451 = vrot.slane %v7449, 5
        %v7452 = vshll.u32 %v7274, 16
        %v7454 = vrot.slane %v7452, 6
        %v7455 = vor.u32 %v7451, %v7454
        %v7456 = vrot.slane %v7455, 4
        %v7458 = vshrl.u32 %v7275, 16
        %v7460 = vrot.slane %v7458, 5
        %v7461 = vshll.u32 %v7275, 16
        %v7463 = vrot.slane %v7461, 6
        %v7464 = vor.u32 %v7460, %v7463
        %v7465 = vsel %vm356, %v7456, %v7464
        %v7466 = vrot.slane %v7464, 4
        %v7468 = vshrl.u32 %v7276, 16
        %v7470 = vrot.slane %v7468, 5
        %v7471 = vshll.u32 %v7276, 16
        %v7473 = vrot.slane %v7471, 6
        %v7474 = vor.u32 %v7470, %v7473
        %v7475 = vsel %vm356, %v7466, %v7474
        %v7477 = vshrl.u32 %v7277, 16
        %v7479 = vrot.slane %v7477, 5
        %v7480 = vshll.u32 %v7277, 16
        %v7482 = vrot.slane %v7480, 6
        %v7483 = vor.u32 %v7479, %v7482
        %v7484 = vrot.slane %v7483, 4
        %v7486 = vshrl.u32 %v7278, 16
        %v7488 = vrot.slane %v7486, 5
        %v7489 = vshll.u32 %v7278, 16
        %v7491 = vrot.slane %v7489, 6
        %v7492 = vor.u32 %v7488, %v7491
        %v7493 = vsel %vm356, %v7484, %v7492
        %v7494 = vrot.slane %v7492, 4
        %v7496 = vshrl.u32 %v7279, 16
        %v7498 = vrot.slane %v7496, 5
        %v7499 = vshll.u32 %v7279, 16
        %v7501 = vrot.slane %v7499, 6
        %v7502 = vor.u32 %v7498, %v7501
        %v7503 = vsel %vm356, %v7494, %v7502
        %s7504 = scalar_lea.vmem %s3, 64
        %v7505 = vld [vmem:[%s7504] sm:$0xf]
        %v7506 = vunpack.c.l.b16 %v7297
        %v7507 = vunpack.c.l.b16 %v7307
        %v7508 = vunpack.c.l.b16 %v7325
        %v7509 = vunpack.c.l.b16 %v7335
        %v7510 = vunpack.c.l.b16 %v7353
        %v7511 = vunpack.c.l.b16 %v7363
        %v7512 = vunpack.c.l.b16 %v7381
        %v7513 = vunpack.c.l.b16 %v7391
        %v7514 = vunpack.c.l.b16 %v7409
        %v7515 = vunpack.c.l.b16 %v7419
        %v7516 = vunpack.c.l.b16 %v7437
        %v7517 = vunpack.c.l.b16 %v7447
        %v7518 = vunpack.c.l.b16 %v7465
        %v7519 = vunpack.c.l.b16 %v7475
        %v7520 = vunpack.c.l.b16 %v7493
        %v7521 = vunpack.c.l.b16 %v7503
        %v7522 = vpack.c.b16 %v7507, %v7506
        %v7523 = vpack.c.b16 %v7509, %v7508
        %v7524 = vpack.c.b16 %v7511, %v7510
        %v7525 = vpack.c.b16 %v7513, %v7512
        %v7526 = vpack.c.b16 %v7515, %v7514
        %v7527 = vpack.c.b16 %v7517, %v7516
        %v7528 = vpack.c.b16 %v7519, %v7518
        %v7529 = vpack.c.b16 %v7521, %v7520
        %v7532 = vunpack.c.l.s4 1983009808
        %v7533 = vunpack.c.0.s8 %v7532
        %v7534 = vlaneseq
        %v7535 = vshrl.u32 %v7534, 7
        %v7536 = vsub.s32 %v7533, %v7535
        %v7537 = vrot.slane %v7505, %v7536
        %v7538 = vcombine.high %v7537, %v7537
        %v7540 = vsel %vm615, %v7522, 0
        %v7543 = vsel %vm615, %v7523, 0
        %v7546 = vsel %vm615, %v7524, 0
        %v7549 = vsel %vm615, %v7525, 0
        %v7552 = vsel %vm615, %v7526, 0
        %v7555 = vsel %vm615, %v7527, 0
        %v7558 = vsel %vm615, %v7528, 0
        %v7561 = vsel %vm615, %v7529, 0
        %v7564 = vsel %vm640, %v7537, 0
        %v7567 = vsel %vm640, %v7538, 0
        %7569 = vmatprep.subr.bf16.mxu0 %v7567
        %7570 = vmatpush1.bf16.msra.mxu0 %v7564
        %7571 = vmatprep.subr.bf16.mxu0 0
        %7572 = vmatpush1.bf16.msra.mxu0 0
        %7573 = vmatprep.subr.bf16.mxu0 0
        %7574 = vmatpush1.bf16.msra.mxu0 0
        %7575 = vmatprep.subr.bf16.mxu0 0
        %7576 = vmatpush1.bf16.msra.mxu0 0
        %7577 = vmatprep.subr.bf16.mxu0 0
        %7578 = vmatpush1.bf16.msra.mxu0 0
        %7579 = vmatprep.subr.bf16.mxu0 0
        %7580 = vmatpush1.bf16.msra.mxu0 0
        %7581 = vmatprep.subr.bf16.mxu0 0
        %7582 = vmatpush1.bf16.msra.mxu0 0
        %7583 = vmatprep.subr.bf16.mxu0 0
        %7584 = vmatpush1.bf16.msra.mxu0 0
        %7585 = vmatprep.subr.bf16.mxu0 0
        %7586 = vmatpush1.bf16.msra.mxu0 0
        %7587 = vmatprep.subr.bf16.mxu0 0
        %7588 = vmatpush1.bf16.msra.mxu0 0
        %7589 = vmatprep.subr.bf16.mxu0 0
        %7590 = vmatpush1.bf16.msra.mxu0 0
        %7591 = vmatprep.subr.bf16.mxu0 0
        %7592 = vmatpush1.bf16.msra.mxu0 0
        %7593 = vmatprep.subr.bf16.mxu0 0
        %7594 = vmatpush1.bf16.msra.mxu0 0
        %7595 = vmatprep.subr.bf16.mxu0 0
        %7596 = vmatpush1.bf16.msra.mxu0 0
        %7597 = vmatprep.subr.bf16.mxu0 0
        %7598 = vmatpush1.bf16.msra.mxu0 0
        %7599 = vmatprep.subr.bf16.mxu0 0
        %7600 = vmatpush1.bf16.msra.mxu0 0
        %7601 = vmatprep.mubr.bf16.mxu0 0
        %7602 = vmatmul.mubr.bf16.gmra.mrb[0].mxu0 %v7540
        %v7603 = vpop.f32.mrb[0].mxu0
        %v7604 = vadd.f32 0.0, %v7603
        %v7605 = vpop.f32.mrb[0].mxu0
        %v7606 = vadd.f32 0.0, %v7605
        %v7607 = vpop.f32.mrb[0].mxu0
        %v7608 = vadd.f32 0.0, %v7607
        %v7609 = vpop.f32.mrb[0].mxu0
        %v7610 = vadd.f32 0.0, %v7609
        %7611 = vmatprep.mubr.bf16.mxu0 0
        %7612 = vmatmul.mubr.bf16.gmra.mrb[0].mxu0 %v7543
        %v7613 = vpop.f32.mrb[0].mxu0
        %v7614 = vadd.f32 0.0, %v7613
        %v7615 = vpop.f32.mrb[0].mxu0
        %v7616 = vadd.f32 0.0, %v7615
        %v7617 = vpop.f32.mrb[0].mxu0
        %v7618 = vadd.f32 0.0, %v7617
        %v7619 = vpop.f32.mrb[0].mxu0
        %v7620 = vadd.f32 0.0, %v7619
        %7621 = vmatprep.mubr.bf16.mxu0 0
        %7622 = vmatmul.mubr.bf16.gmra.mrb[0].mxu0 %v7546
        %v7623 = vpop.f32.mrb[0].mxu0
        %v7624 = vadd.f32 0.0, %v7623
        %v7625 = vpop.f32.mrb[0].mxu0
        %v7626 = vadd.f32 0.0, %v7625
        %v7627 = vpop.f32.mrb[0].mxu0
        %v7628 = vadd.f32 0.0, %v7627
        %v7629 = vpop.f32.mrb[0].mxu0
        %v7630 = vadd.f32 0.0, %v7629
        %7631 = vmatprep.mubr.bf16.mxu0 0
        %7632 = vmatmul.mubr.bf16.gmra.mrb[0].mxu0 %v7549
        %v7633 = vpop.f32.mrb[0].mxu0
        %v7634 = vadd.f32 0.0, %v7633
        %v7635 = vpop.f32.mrb[0].mxu0
        %v7636 = vadd.f32 0.0, %v7635
        %v7637 = vpop.f32.mrb[0].mxu0
        %v7638 = vadd.f32 0.0, %v7637
        %v7639 = vpop.f32.mrb[0].mxu0
        %v7640 = vadd.f32 0.0, %v7639
        %7641 = vmatprep.mubr.bf16.mxu0 0
        %7642 = vmatmul.mubr.bf16.gmra.mrb[0].mxu0 %v7552
        %v7643 = vpop.f32.mrb[0].mxu0
        %v7644 = vadd.f32 0.0, %v7643
        %v7645 = vpop.f32.mrb[0].mxu0
        %v7646 = vadd.f32 0.0, %v7645
        %v7647 = vpop.f32.mrb[0].mxu0
        %v7648 = vadd.f32 0.0, %v7647
        %v7649 = vpop.f32.mrb[0].mxu0
        %v7650 = vadd.f32 0.0, %v7649
        %7651 = vmatprep.mubr.bf16.mxu0 0
        %7652 = vmatmul.mubr.bf16.gmra.mrb[0].mxu0 %v7555
        %v7653 = vpop.f32.mrb[0].mxu0
        %v7654 = vadd.f32 0.0, %v7653
        %v7655 = vpop.f32.mrb[0].mxu0
        %v7656 = vadd.f32 0.0, %v7655
        %v7657 = vpop.f32.mrb[0].mxu0
        %v7658 = vadd.f32 0.0, %v7657
        %v7659 = vpop.f32.mrb[0].mxu0
        %v7660 = vadd.f32 0.0, %v7659
        %7661 = vmatprep.mubr.bf16.mxu0 0
        %7662 = vmatmul.mubr.bf16.gmra.mrb[0].mxu0 %v7558
        %v7663 = vpop.f32.mrb[0].mxu0
        %v7664 = vadd.f32 0.0, %v7663
        %v7665 = vpop.f32.mrb[0].mxu0
        %v7666 = vadd.f32 0.0, %v7665
        %v7667 = vpop.f32.mrb[0].mxu0
        %v7668 = vadd.f32 0.0, %v7667
        %v7669 = vpop.f32.mrb[0].mxu0
        %v7670 = vadd.f32 0.0, %v7669
        %7671 = vmatprep.mubr.bf16.mxu0 0
        %7672 = vmatmul.mubr.bf16.gmra.mrb[0].mxu0 %v7561
        %v7673 = vpop.f32.mrb[0].mxu0
        %v7674 = vadd.f32 0.0, %v7673
        %v7675 = vpop.f32.mrb[0].mxu0
        %v7676 = vadd.f32 0.0, %v7675
        %v7677 = vpop.f32.mrb[0].mxu0
        %v7678 = vadd.f32 0.0, %v7677
        %v7679 = vpop.f32.mrb[0].mxu0
        %v7680 = vadd.f32 0.0, %v7679
        %7681 = vdwg.mxu0
        %v7682 = vadd.f32 %v7224, %v7604
        %v7683 = vadd.f32 %v7225, %v7606
        %v7684 = vadd.f32 %v7226, %v7608
        %v7685 = vadd.f32 %v7227, %v7610
        %v7686 = vadd.f32 %v7228, %v7614
        %v7687 = vadd.f32 %v7229, %v7616
        %v7688 = vadd.f32 %v7230, %v7618
        %v7689 = vadd.f32 %v7231, %v7620
        %v7690 = vadd.f32 %v7232, %v7624
        %v7691 = vadd.f32 %v7233, %v7626
        %v7692 = vadd.f32 %v7234, %v7628
        %v7693 = vadd.f32 %v7235, %v7630
        %v7694 = vadd.f32 %v7236, %v7634
        %v7695 = vadd.f32 %v7237, %v7636
        %v7696 = vadd.f32 %v7238, %v7638
        %v7697 = vadd.f32 %v7239, %v7640
        %v7698 = vadd.f32 %v7240, %v7644
        %v7699 = vadd.f32 %v7241, %v7646
        %v7700 = vadd.f32 %v7242, %v7648
        %v7701 = vadd.f32 %v7243, %v7650
        %v7702 = vadd.f32 %v7244, %v7654
        %v7703 = vadd.f32 %v7245, %v7656
        %v7704 = vadd.f32 %v7246, %v7658
        %v7705 = vadd.f32 %v7247, %v7660
        %v7706 = vadd.f32 %v7248, %v7664
        %v7707 = vadd.f32 %v7249, %v7666
        %v7708 = vadd.f32 %v7250, %v7668
        %v7709 = vadd.f32 %v7251, %v7670
        %v7710 = vadd.f32 %v7252, %v7674
        %v7711 = vadd.f32 %v7253, %v7676
        %v7712 = vadd.f32 %v7254, %v7678
        %v7713 = vadd.f32 %v7255, %v7680
        %v7714 = vld [vmem:[%s6829] sm:$0xc]
        %v7715 = vld [vmem:[%s6829 + $0x4] sm:$0xf]
        %v7716 = vld [vmem:[%s6829 + $0x8] sm:$0x7]
        %v7717 = vld [vmem:[%s6829 + $0xc] sm:$0xc]
        %v7718 = vld [vmem:[%s6829 + $0x10] sm:$0xf]
        %v7719 = vld [vmem:[%s6829 + $0x14] sm:$0x7]
        %v7720 = vld [vmem:[%s6829 + $0x18] sm:$0xc]
        %v7721 = vld [vmem:[%s6829 + $0x1c] sm:$0xf]
        %v7722 = vld [vmem:[%s6829 + $0x20] sm:$0x7]
        %v7723 = vld [vmem:[%s6829 + $0x24] sm:$0xc]
        %v7724 = vld [vmem:[%s6829 + $0x28] sm:$0xf]
        %v7725 = vld [vmem:[%s6829 + $0x2c] sm:$0x7]
        %v7726 = vld [vmem:[%s6829 + $0x30] sm:$0xc]
        %v7727 = vld [vmem:[%s6829 + $0x34] sm:$0xf]
        %v7728 = vld [vmem:[%s6829 + $0x38] sm:$0x7]
        %v7729 = vld [vmem:[%s6829 + $0x3c] sm:$0xc]
        %v7730 = vld [vmem:[%s6829 + $0x40] sm:$0xf]
        %v7731 = vld [vmem:[%s6829 + $0x44] sm:$0x7]
        %v7732 = vld [vmem:[%s6829 + $0x48] sm:$0xc]
        %v7733 = vld [vmem:[%s6829 + $0x4c] sm:$0xf]
        %v7734 = vld [vmem:[%s6829 + $0x50] sm:$0x7]
        %v7735 = vld [vmem:[%s6829 + $0x54] sm:$0xc]
        %v7736 = vld [vmem:[%s6829 + $0x58] sm:$0xf]
        %v7737 = vld [vmem:[%s6829 + $0x5c] sm:$0x7]
        %v7739 = vshrl.u32 %v7714, 16
        %v7741 = vrot.slane %v7739, 6
        %v7742 = vshll.u32 %v7714, 16
        %v7744 = vrot.slane %v7742, 7
        %v7745 = vor.u32 %v7741, %v7744
        %v7746 = vrot.slane %v7745, 4
        %v7748 = vshrl.u32 %v7715, 16
        %v7750 = vrot.slane %v7748, 6
        %v7751 = vshll.u32 %v7715, 16
        %v7753 = vrot.slane %v7751, 7
        %v7754 = vor.u32 %v7750, %v7753
        %v7755 = vsel %vm5345, %v7746, %v7754
        %v7756 = vrot.slane %v7754, 4
        %v7758 = vshrl.u32 %v7716, 16
        %v7760 = vrot.slane %v7758, 6
        %v7761 = vshll.u32 %v7716, 16
        %v7763 = vrot.slane %v7761, 7
        %v7764 = vor.u32 %v7760, %v7763
        %v7765 = vsel %vm5345, %v7756, %v7764
        %v7767 = vshrl.u32 %v7717, 16
        %v7769 = vrot.slane %v7767, 6
        %v7770 = vshll.u32 %v7717, 16
        %v7772 = vrot.slane %v7770, 7
        %v7773 = vor.u32 %v7769, %v7772
        %v7774 = vrot.slane %v7773, 4
        %v7776 = vshrl.u32 %v7718, 16
        %v7778 = vrot.slane %v7776, 6
        %v7779 = vshll.u32 %v7718, 16
        %v7781 = vrot.slane %v7779, 7
        %v7782 = vor.u32 %v7778, %v7781
        %v7783 = vsel %vm5345, %v7774, %v7782
        %v7784 = vrot.slane %v7782, 4
        %v7786 = vshrl.u32 %v7719, 16
        %v7788 = vrot.slane %v7786, 6
        %v7789 = vshll.u32 %v7719, 16
        %v7791 = vrot.slane %v7789, 7
        %v7792 = vor.u32 %v7788, %v7791
        %v7793 = vsel %vm5345, %v7784, %v7792
        %v7795 = vshrl.u32 %v7720, 16
        %v7797 = vrot.slane %v7795, 6
        %v7798 = vshll.u32 %v7720, 16
        %v7800 = vrot.slane %v7798, 7
        %v7801 = vor.u32 %v7797, %v7800
        %v7802 = vrot.slane %v7801, 4
        %v7804 = vshrl.u32 %v7721, 16
        %v7806 = vrot.slane %v7804, 6
        %v7807 = vshll.u32 %v7721, 16
        %v7809 = vrot.slane %v7807, 7
        %v7810 = vor.u32 %v7806, %v7809
        %v7811 = vsel %vm5345, %v7802, %v7810
        %v7812 = vrot.slane %v7810, 4
        %v7814 = vshrl.u32 %v7722, 16
        %v7816 = vrot.slane %v7814, 6
        %v7817 = vshll.u32 %v7722, 16
        %v7819 = vrot.slane %v7817, 7
        %v7820 = vor.u32 %v7816, %v7819
        %v7821 = vsel %vm5345, %v7812, %v7820
        %v7823 = vshrl.u32 %v7723, 16
        %v7825 = vrot.slane %v7823, 6
        %v7826 = vshll.u32 %v7723, 16
        %v7828 = vrot.slane %v7826, 7
        %v7829 = vor.u32 %v7825, %v7828
        %v7830 = vrot.slane %v7829, 4
        %v7832 = vshrl.u32 %v7724, 16
        %v7834 = vrot.slane %v7832, 6
        %v7835 = vshll.u32 %v7724, 16
        %v7837 = vrot.slane %v7835, 7
        %v7838 = vor.u32 %v7834, %v7837
        %v7839 = vsel %vm5345, %v7830, %v7838
        %v7840 = vrot.slane %v7838, 4
        %v7842 = vshrl.u32 %v7725, 16
        %v7844 = vrot.slane %v7842, 6
        %v7845 = vshll.u32 %v7725, 16
        %v7847 = vrot.slane %v7845, 7
        %v7848 = vor.u32 %v7844, %v7847
        %v7849 = vsel %vm5345, %v7840, %v7848
        %v7851 = vshrl.u32 %v7726, 16
        %v7853 = vrot.slane %v7851, 6
        %v7854 = vshll.u32 %v7726, 16
        %v7856 = vrot.slane %v7854, 7
        %v7857 = vor.u32 %v7853, %v7856
        %v7858 = vrot.slane %v7857, 4
        %v7860 = vshrl.u32 %v7727, 16
        %v7862 = vrot.slane %v7860, 6
        %v7863 = vshll.u32 %v7727, 16
        %v7865 = vrot.slane %v7863, 7
        %v7866 = vor.u32 %v7862, %v7865
        %v7867 = vsel %vm5345, %v7858, %v7866
        %v7868 = vrot.slane %v7866, 4
        %v7870 = vshrl.u32 %v7728, 16
        %v7872 = vrot.slane %v7870, 6
        %v7873 = vshll.u32 %v7728, 16
        %v7875 = vrot.slane %v7873, 7
        %v7876 = vor.u32 %v7872, %v7875
        %v7877 = vsel %vm5345, %v7868, %v7876
        %v7879 = vshrl.u32 %v7729, 16
        %v7881 = vrot.slane %v7879, 6
        %v7882 = vshll.u32 %v7729, 16
        %v7884 = vrot.slane %v7882, 7
        %v7885 = vor.u32 %v7881, %v7884
        %v7886 = vrot.slane %v7885, 4
        %v7888 = vshrl.u32 %v7730, 16
        %v7890 = vrot.slane %v7888, 6
        %v7891 = vshll.u32 %v7730, 16
        %v7893 = vrot.slane %v7891, 7
        %v7894 = vor.u32 %v7890, %v7893
        %v7895 = vsel %vm5345, %v7886, %v7894
        %v7896 = vrot.slane %v7894, 4
        %v7898 = vshrl.u32 %v7731, 16
        %v7900 = vrot.slane %v7898, 6
        %v7901 = vshll.u32 %v7731, 16
        %v7903 = vrot.slane %v7901, 7
        %v7904 = vor.u32 %v7900, %v7903
        %v7905 = vsel %vm5345, %v7896, %v7904
        %v7907 = vshrl.u32 %v7732, 16
        %v7909 = vrot.slane %v7907, 6
        %v7910 = vshll.u32 %v7732, 16
        %v7912 = vrot.slane %v7910, 7
        %v7913 = vor.u32 %v7909, %v7912
        %v7914 = vrot.slane %v7913, 4
        %v7916 = vshrl.u32 %v7733, 16
        %v7918 = vrot.slane %v7916, 6
        %v7919 = vshll.u32 %v7733, 16
        %v7921 = vrot.slane %v7919, 7
        %v7922 = vor.u32 %v7918, %v7921
        %v7923 = vsel %vm5345, %v7914, %v7922
        %v7924 = vrot.slane %v7922, 4
        %v7926 = vshrl.u32 %v7734, 16
        %v7928 = vrot.slane %v7926, 6
        %v7929 = vshll.u32 %v7734, 16
        %v7931 = vrot.slane %v7929, 7
        %v7932 = vor.u32 %v7928, %v7931
        %v7933 = vsel %vm5345, %v7924, %v7932
        %v7935 = vshrl.u32 %v7735, 16
        %v7937 = vrot.slane %v7935, 6
        %v7938 = vshll.u32 %v7735, 16
        %v7940 = vrot.slane %v7938, 7
        %v7941 = vor.u32 %v7937, %v7940
        %v7942 = vrot.slane %v7941, 4
        %v7944 = vshrl.u32 %v7736, 16
        %v7946 = vrot.slane %v7944, 6
        %v7947 = vshll.u32 %v7736, 16
        %v7949 = vrot.slane %v7947, 7
        %v7950 = vor.u32 %v7946, %v7949
        %v7951 = vsel %vm5345, %v7942, %v7950
        %v7952 = vrot.slane %v7950, 4
        %v7954 = vshrl.u32 %v7737, 16
        %v7956 = vrot.slane %v7954, 6
        %v7957 = vshll.u32 %v7737, 16
        %v7959 = vrot.slane %v7957, 7
        %v7960 = vor.u32 %v7956, %v7959
        %v7961 = vsel %vm5345, %v7952, %v7960
        %s7962 = scalar_lea.vmem %s3, 68
        %v7963 = vld [vmem:[%s7962] sm:$0xf]
        %v7964 = vunpack.c.l.b16 %v7755
        %v7965 = vunpack.c.l.b16 %v7765
        %v7966 = vunpack.c.l.b16 %v7783
        %v7967 = vunpack.c.l.b16 %v7793
        %v7968 = vunpack.c.l.b16 %v7811
        %v7969 = vunpack.c.l.b16 %v7821
        %v7970 = vunpack.c.l.b16 %v7839
        %v7971 = vunpack.c.l.b16 %v7849
        %v7972 = vunpack.c.l.b16 %v7867
        %v7973 = vunpack.c.l.b16 %v7877
        %v7974 = vunpack.c.l.b16 %v7895
        %v7975 = vunpack.c.l.b16 %v7905
        %v7976 = vunpack.c.l.b16 %v7923
        %v7977 = vunpack.c.l.b16 %v7933
        %v7978 = vunpack.c.l.b16 %v7951
        %v7979 = vunpack.c.l.b16 %v7961
        %v7980 = vpack.c.b16 %v7965, %v7964
        %v7981 = vpack.c.b16 %v7967, %v7966
        %v7982 = vpack.c.b16 %v7969, %v7968
        %v7983 = vpack.c.b16 %v7971, %v7970
        %v7984 = vpack.c.b16 %v7973, %v7972
        %v7985 = vpack.c.b16 %v7975, %v7974
        %v7986 = vpack.c.b16 %v7977, %v7976
        %v7987 = vpack.c.b16 %v7979, %v7978
        %v7990 = vunpack.c.l.s4 1983009808
        %v7991 = vunpack.c.0.s8 %v7990
        %v7992 = vlaneseq
        %v7993 = vshrl.u32 %v7992, 7
        %v7994 = vsub.s32 %v7991, %v7993
        %v7995 = vrot.slane %v7963, %v7994
        %v7996 = vcombine.high %v7995, %v7995
        %v7998 = vsel %vm615, %v7980, 0
        %v8001 = vsel %vm615, %v7981, 0
        %v8004 = vsel %vm615, %v7982, 0
        %v8007 = vsel %vm615, %v7983, 0
        %v8010 = vsel %vm615, %v7984, 0
        %v8013 = vsel %vm615, %v7985, 0
        %v8016 = vsel %vm615, %v7986, 0
        %v8019 = vsel %vm615, %v7987, 0
        %v8022 = vsel %vm640, %v7995, 0
        %v8025 = vsel %vm640, %v7996, 0
        %8027 = vmatprep.subr.bf16.mxu0 %v8025
        %8028 = vmatpush1.bf16.msra.mxu0 %v8022
        %8029 = vmatprep.subr.bf16.mxu0 0
        %8030 = vmatpush1.bf16.msra.mxu0 0
        %8031 = vmatprep.subr.bf16.mxu0 0
        %8032 = vmatpush1.bf16.msra.mxu0 0
        %8033 = vmatprep.subr.bf16.mxu0 0
        %8034 = vmatpush1.bf16.msra.mxu0 0
        %8035 = vmatprep.subr.bf16.mxu0 0
        %8036 = vmatpush1.bf16.msra.mxu0 0
        %8037 = vmatprep.subr.bf16.mxu0 0
        %8038 = vmatpush1.bf16.msra.mxu0 0
        %8039 = vmatprep.subr.bf16.mxu0 0
        %8040 = vmatpush1.bf16.msra.mxu0 0
        %8041 = vmatprep.subr.bf16.mxu0 0
        %8042 = vmatpush1.bf16.msra.mxu0 0
        %8043 = vmatprep.subr.bf16.mxu0 0
        %8044 = vmatpush1.bf16.msra.mxu0 0
        %8045 = vmatprep.subr.bf16.mxu0 0
        %8046 = vmatpush1.bf16.msra.mxu0 0
        %8047 = vmatprep.subr.bf16.mxu0 0
        %8048 = vmatpush1.bf16.msra.mxu0 0
        %8049 = vmatprep.subr.bf16.mxu0 0
        %8050 = vmatpush1.bf16.msra.mxu0 0
        %8051 = vmatprep.subr.bf16.mxu0 0
        %8052 = vmatpush1.bf16.msra.mxu0 0
        %8053 = vmatprep.subr.bf16.mxu0 0
        %8054 = vmatpush1.bf16.msra.mxu0 0
        %8055 = vmatprep.subr.bf16.mxu0 0
        %8056 = vmatpush1.bf16.msra.mxu0 0
        %8057 = vmatprep.subr.bf16.mxu0 0
        %8058 = vmatpush1.bf16.msra.mxu0 0
        %8059 = vmatprep.mubr.bf16.mxu0 0
        %8060 = vmatmul.mubr.bf16.gmra.mrb[0].mxu0 %v7998
        %v8061 = vpop.f32.mrb[0].mxu0
        %v8062 = vadd.f32 0.0, %v8061
        %v8063 = vpop.f32.mrb[0].mxu0
        %v8064 = vadd.f32 0.0, %v8063
        %v8065 = vpop.f32.mrb[0].mxu0
        %v8066 = vadd.f32 0.0, %v8065
        %v8067 = vpop.f32.mrb[0].mxu0
        %v8068 = vadd.f32 0.0, %v8067
        %8069 = vmatprep.mubr.bf16.mxu0 0
        %8070 = vmatmul.mubr.bf16.gmra.mrb[0].mxu0 %v8001
        %v8071 = vpop.f32.mrb[0].mxu0
        %v8072 = vadd.f32 0.0, %v8071
        %v8073 = vpop.f32.mrb[0].mxu0
        %v8074 = vadd.f32 0.0, %v8073
        %v8075 = vpop.f32.mrb[0].mxu0
        %v8076 = vadd.f32 0.0, %v8075
        %v8077 = vpop.f32.mrb[0].mxu0
        %v8078 = vadd.f32 0.0, %v8077
        %8079 = vmatprep.mubr.bf16.mxu0 0
        %8080 = vmatmul.mubr.bf16.gmra.mrb[0].mxu0 %v8004
        %v8081 = vpop.f32.mrb[0].mxu0
        %v8082 = vadd.f32 0.0, %v8081
        %v8083 = vpop.f32.mrb[0].mxu0
        %v8084 = vadd.f32 0.0, %v8083
        %v8085 = vpop.f32.mrb[0].mxu0
        %v8086 = vadd.f32 0.0, %v8085
        %v8087 = vpop.f32.mrb[0].mxu0
        %v8088 = vadd.f32 0.0, %v8087
        %8089 = vmatprep.mubr.bf16.mxu0 0
        %8090 = vmatmul.mubr.bf16.gmra.mrb[0].mxu0 %v8007
        %v8091 = vpop.f32.mrb[0].mxu0
        %v8092 = vadd.f32 0.0, %v8091
        %v8093 = vpop.f32.mrb[0].mxu0
        %v8094 = vadd.f32 0.0, %v8093
        %v8095 = vpop.f32.mrb[0].mxu0
        %v8096 = vadd.f32 0.0, %v8095
        %v8097 = vpop.f32.mrb[0].mxu0
        %v8098 = vadd.f32 0.0, %v8097
        %8099 = vmatprep.mubr.bf16.mxu0 0
        %8100 = vmatmul.mubr.bf16.gmra.mrb[0].mxu0 %v8010
        %v8101 = vpop.f32.mrb[0].mxu0
        %v8102 = vadd.f32 0.0, %v8101
        %v8103 = vpop.f32.mrb[0].mxu0
        %v8104 = vadd.f32 0.0, %v8103
        %v8105 = vpop.f32.mrb[0].mxu0
        %v8106 = vadd.f32 0.0, %v8105
        %v8107 = vpop.f32.mrb[0].mxu0
        %v8108 = vadd.f32 0.0, %v8107
        %8109 = vmatprep.mubr.bf16.mxu0 0
        %8110 = vmatmul.mubr.bf16.gmra.mrb[0].mxu0 %v8013
        %v8111 = vpop.f32.mrb[0].mxu0
        %v8112 = vadd.f32 0.0, %v8111
        %v8113 = vpop.f32.mrb[0].mxu0
        %v8114 = vadd.f32 0.0, %v8113
        %v8115 = vpop.f32.mrb[0].mxu0
        %v8116 = vadd.f32 0.0, %v8115
        %v8117 = vpop.f32.mrb[0].mxu0
        %v8118 = vadd.f32 0.0, %v8117
        %8119 = vmatprep.mubr.bf16.mxu0 0
        %8120 = vmatmul.mubr.bf16.gmra.mrb[0].mxu0 %v8016
        %v8121 = vpop.f32.mrb[0].mxu0
        %v8122 = vadd.f32 0.0, %v8121
        %v8123 = vpop.f32.mrb[0].mxu0
        %v8124 = vadd.f32 0.0, %v8123
        %v8125 = vpop.f32.mrb[0].mxu0
        %v8126 = vadd.f32 0.0, %v8125
        %v8127 = vpop.f32.mrb[0].mxu0
        %v8128 = vadd.f32 0.0, %v8127
        %8129 = vmatprep.mubr.bf16.mxu0 0
        %8130 = vmatmul.mubr.bf16.gmra.mrb[0].mxu0 %v8019
        %v8131 = vpop.f32.mrb[0].mxu0
        %v8132 = vadd.f32 0.0, %v8131
        %v8133 = vpop.f32.mrb[0].mxu0
        %v8134 = vadd.f32 0.0, %v8133
        %v8135 = vpop.f32.mrb[0].mxu0
        %v8136 = vadd.f32 0.0, %v8135
        %v8137 = vpop.f32.mrb[0].mxu0
        %v8138 = vadd.f32 0.0, %v8137
        %8139 = vdwg.mxu0
        %v8140 = vadd.f32 %v7682, %v8062
        %v8141 = vadd.f32 %v7683, %v8064
        %v8142 = vadd.f32 %v7684, %v8066
        %v8143 = vadd.f32 %v7685, %v8068
        %v8144 = vadd.f32 %v7686, %v8072
        %v8145 = vadd.f32 %v7687, %v8074
        %v8146 = vadd.f32 %v7688, %v8076
        %v8147 = vadd.f32 %v7689, %v8078
        %v8148 = vadd.f32 %v7690, %v8082
        %v8149 = vadd.f32 %v7691, %v8084
        %v8150 = vadd.f32 %v7692, %v8086
        %v8151 = vadd.f32 %v7693, %v8088
        %v8152 = vadd.f32 %v7694, %v8092
        %v8153 = vadd.f32 %v7695, %v8094
        %v8154 = vadd.f32 %v7696, %v8096
        %v8155 = vadd.f32 %v7697, %v8098
        %v8156 = vadd.f32 %v7698, %v8102
        %v8157 = vadd.f32 %v7699, %v8104
        %v8158 = vadd.f32 %v7700, %v8106
        %v8159 = vadd.f32 %v7701, %v8108
        %v8160 = vadd.f32 %v7702, %v8112
        %v8161 = vadd.f32 %v7703, %v8114
        %v8162 = vadd.f32 %v7704, %v8116
        %v8163 = vadd.f32 %v7705, %v8118
        %v8164 = vadd.f32 %v7706, %v8122
        %v8165 = vadd.f32 %v7707, %v8124
        %v8166 = vadd.f32 %v7708, %v8126
        %v8167 = vadd.f32 %v7709, %v8128
        %v8168 = vadd.f32 %v7710, %v8132
        %v8169 = vadd.f32 %v7711, %v8134
        %v8170 = vadd.f32 %v7712, %v8136
        %v8171 = vadd.f32 %v7713, %v8138
        %s8172 = scalar_lea.vmem %s5, 2
        %v8173 = vld [vmem:[%s8172] ss:$8 sm:$0x3]
        %v8175 = vlaneseq
        %v8176 = vshrl.u32 %v8175, 7
        %v8177 = vsub.s32 0, %v8176
        %v8178 = vrot.slane %v8173, %v8177
        %v8179 = vlaneseq
        %v8180 = vshrl.u32 %v8179, 7
        %v8181 = vsub.s32 1, %v8180
        %v8182 = vrot.slane %v8173, %v8181
        %v8185 = vmul.f32 %v8140, %v8178
        %v8186 = vmul.f32 %v8141, %v8182
        %v8187 = vmul.f32 %v8142, %v8178
        %v8188 = vmul.f32 %v8143, %v8182
        %v8189 = vmul.f32 %v8144, %v8178
        %v8190 = vmul.f32 %v8145, %v8182
        %v8191 = vmul.f32 %v8146, %v8178
        %v8192 = vmul.f32 %v8147, %v8182
        %v8193 = vmul.f32 %v8148, %v8178
        %v8194 = vmul.f32 %v8149, %v8182
        %v8195 = vmul.f32 %v8150, %v8178
        %v8196 = vmul.f32 %v8151, %v8182
        %v8197 = vmul.f32 %v8152, %v8178
        %v8198 = vmul.f32 %v8153, %v8182
        %v8199 = vmul.f32 %v8154, %v8178
        %v8200 = vmul.f32 %v8155, %v8182
        %v8201 = vmul.f32 %v8156, %v8178
        %v8202 = vmul.f32 %v8157, %v8182
        %v8203 = vmul.f32 %v8158, %v8178
        %v8204 = vmul.f32 %v8159, %v8182
        %v8205 = vmul.f32 %v8160, %v8178
        %v8206 = vmul.f32 %v8161, %v8182
        %v8207 = vmul.f32 %v8162, %v8178
        %v8208 = vmul.f32 %v8163, %v8182
        %v8209 = vmul.f32 %v8164, %v8178
        %v8210 = vmul.f32 %v8165, %v8182
        %v8211 = vmul.f32 %v8166, %v8178
        %v8212 = vmul.f32 %v8167, %v8182
        %v8213 = vmul.f32 %v8168, %v8178
        %v8214 = vmul.f32 %v8169, %v8182
        %v8215 = vmul.f32 %v8170, %v8178
        %v8216 = vmul.f32 %v8171, %v8182
        %s8217 = scalar_lea.vmem %s6, 2
        %v8218 = vld [vmem:[%s8217] ss:$8 sm:$0x3]
        %v8220 = vlaneseq
        %v8221 = vshrl.u32 %v8220, 7
        %v8222 = vsub.s32 0, %v8221
        %v8223 = vrot.slane %v8218, %v8222
        %v8224 = vlaneseq
        %v8225 = vshrl.u32 %v8224, 7
        %v8226 = vsub.s32 1, %v8225
        %v8227 = vrot.slane %v8218, %v8226
        %v8230 = vadd.f32 %v8185, %v8223
        %v8231 = vadd.f32 %v8186, %v8227
        %v8232 = vadd.f32 %v8187, %v8223
        %v8233 = vadd.f32 %v8188, %v8227
        %v8234 = vadd.f32 %v8189, %v8223
        %v8235 = vadd.f32 %v8190, %v8227
        %v8236 = vadd.f32 %v8191, %v8223
        %v8237 = vadd.f32 %v8192, %v8227
        %v8238 = vadd.f32 %v8193, %v8223
        %v8239 = vadd.f32 %v8194, %v8227
        %v8240 = vadd.f32 %v8195, %v8223
        %v8241 = vadd.f32 %v8196, %v8227
        %v8242 = vadd.f32 %v8197, %v8223
        %v8243 = vadd.f32 %v8198, %v8227
        %v8244 = vadd.f32 %v8199, %v8223
        %v8245 = vadd.f32 %v8200, %v8227
        %v8246 = vadd.f32 %v8201, %v8223
        %v8247 = vadd.f32 %v8202, %v8227
        %v8248 = vadd.f32 %v8203, %v8223
        %v8249 = vadd.f32 %v8204, %v8227
        %v8250 = vadd.f32 %v8205, %v8223
        %v8251 = vadd.f32 %v8206, %v8227
        %v8252 = vadd.f32 %v8207, %v8223
        %v8253 = vadd.f32 %v8208, %v8227
        %v8254 = vadd.f32 %v8209, %v8223
        %v8255 = vadd.f32 %v8210, %v8227
        %v8256 = vadd.f32 %v8211, %v8223
        %v8257 = vadd.f32 %v8212, %v8227
        %v8258 = vadd.f32 %v8213, %v8223
        %v8259 = vadd.f32 %v8214, %v8227
        %v8260 = vadd.f32 %v8215, %v8223
        %v8261 = vadd.f32 %v8216, %v8227
        %v8262 = vmax.f32 %v8230, 0.0
        %v8263 = vmax.f32 %v8231, 0.0
        %v8264 = vmax.f32 %v8232, 0.0
        %v8265 = vmax.f32 %v8233, 0.0
        %v8266 = vmax.f32 %v8234, 0.0
        %v8267 = vmax.f32 %v8235, 0.0
        %v8268 = vmax.f32 %v8236, 0.0
        %v8269 = vmax.f32 %v8237, 0.0
        %v8270 = vmax.f32 %v8238, 0.0
        %v8271 = vmax.f32 %v8239, 0.0
        %v8272 = vmax.f32 %v8240, 0.0
        %v8273 = vmax.f32 %v8241, 0.0
        %v8274 = vmax.f32 %v8242, 0.0
        %v8275 = vmax.f32 %v8243, 0.0
        %v8276 = vmax.f32 %v8244, 0.0
        %v8277 = vmax.f32 %v8245, 0.0
        %v8278 = vmax.f32 %v8246, 0.0
        %v8279 = vmax.f32 %v8247, 0.0
        %v8280 = vmax.f32 %v8248, 0.0
        %v8281 = vmax.f32 %v8249, 0.0
        %v8282 = vmax.f32 %v8250, 0.0
        %v8283 = vmax.f32 %v8251, 0.0
        %v8284 = vmax.f32 %v8252, 0.0
        %v8285 = vmax.f32 %v8253, 0.0
        %v8286 = vmax.f32 %v8254, 0.0
        %v8287 = vmax.f32 %v8255, 0.0
        %v8288 = vmax.f32 %v8256, 0.0
        %v8289 = vmax.f32 %v8257, 0.0
        %v8290 = vmax.f32 %v8258, 0.0
        %v8291 = vmax.f32 %v8259, 0.0
        %v8292 = vmax.f32 %v8260, 0.0
        %v8293 = vmax.f32 %v8261, 0.0
        %v8294 = vpack.c.bf16 %v8264, %v8262
        %v8295 = vpack.c.bf16 %v8265, %v8263
        %v8296 = vpack.c.bf16 %v8268, %v8266
        %v8297 = vpack.c.bf16 %v8269, %v8267
        %v8298 = vpack.c.bf16 %v8272, %v8270
        %v8299 = vpack.c.bf16 %v8273, %v8271
        %v8300 = vpack.c.bf16 %v8276, %v8274
        %v8301 = vpack.c.bf16 %v8277, %v8275
        %v8302 = vpack.c.bf16 %v8280, %v8278
        %v8303 = vpack.c.bf16 %v8281, %v8279
        %v8304 = vpack.c.bf16 %v8284, %v8282
        %v8305 = vpack.c.bf16 %v8285, %v8283
        %v8306 = vpack.c.bf16 %v8288, %v8286
        %v8307 = vpack.c.bf16 %v8289, %v8287
        %v8308 = vpack.c.bf16 %v8292, %v8290
        %v8309 = vpack.c.bf16 %v8293, %v8291
        %s8310 = scalar_lea.vmem [#allocation2], 512
        %v8311 = vld [vmem:[%s8310] sm:$0xff]
        %v8312 = vld [vmem:[%s8310 + $0x8] sm:$0xff]
        %v8313 = vld [vmem:[%s8310 + $0x10] sm:$0xff]
        %v8314 = vld [vmem:[%s8310 + $0x18] sm:$0xff]
        %v8315 = vld [vmem:[%s8310 + $0x20] sm:$0xff]
        %v8316 = vld [vmem:[%s8310 + $0x28] sm:$0xff]
        %v8317 = vld [vmem:[%s8310 + $0x30] sm:$0xff]
        %v8318 = vld [vmem:[%s8310 + $0x38] sm:$0xff]
        %v8319 = vld [vmem:[%s8310 + $0x40] sm:$0xff]
        %v8320 = vld [vmem:[%s8310 + $0x48] sm:$0xff]
        %v8321 = vld [vmem:[%s8310 + $0x50] sm:$0xff]
        %v8322 = vld [vmem:[%s8310 + $0x58] sm:$0xff]
        %v8323 = vld [vmem:[%s8310 + $0x60] sm:$0xff]
        %v8324 = vld [vmem:[%s8310 + $0x68] sm:$0xff]
        %v8325 = vld [vmem:[%s8310 + $0x70] sm:$0xff]
        %v8326 = vld [vmem:[%s8310 + $0x78] sm:$0xff]
        %v8327 = vld [vmem:[%s8310 + $0x80] sm:$0xff]
        %v8328 = vld [vmem:[%s8310 + $0x88] sm:$0xff]
        %v8329 = vld [vmem:[%s8310 + $0x90] sm:$0xff]
        %v8330 = vld [vmem:[%s8310 + $0x98] sm:$0xff]
        %v8331 = vld [vmem:[%s8310 + $0xa0] sm:$0xff]
        %v8332 = vld [vmem:[%s8310 + $0xa8] sm:$0xff]
        %v8333 = vld [vmem:[%s8310 + $0xb0] sm:$0xff]
        %v8334 = vld [vmem:[%s8310 + $0xb8] sm:$0xff]
        %v8335 = vld [vmem:[%s8310 + $0xc0] sm:$0xff]
        %v8336 = vld [vmem:[%s8310 + $0xc8] sm:$0xff]
        %v8337 = vld [vmem:[%s8310 + $0xd0] sm:$0xff]
        %v8338 = vld [vmem:[%s8310 + $0xd8] sm:$0xff]
        %v8339 = vld [vmem:[%s8310 + $0xe0] sm:$0xff]
        %v8340 = vld [vmem:[%s8310 + $0xe8] sm:$0xff]
        %v8341 = vld [vmem:[%s8310 + $0xf0] sm:$0xff]
        %v8342 = vld [vmem:[%s8310 + $0xf8] sm:$0xff]
        %v8375 = vunpack.c.l.b16 %v8311
        %v8376 = vunpack.c.h.b16 %v8311
        %v8377 = vunpack.c.l.b16 %v8312
        %v8378 = vunpack.c.h.b16 %v8312
        %v8379 = vunpack.c.l.b16 %v8313
        %v8380 = vunpack.c.h.b16 %v8313
        %v8381 = vunpack.c.l.b16 %v8314
        %v8382 = vunpack.c.h.b16 %v8314
        %v8383 = vunpack.c.l.b16 %v8315
        %v8384 = vunpack.c.h.b16 %v8315
        %v8385 = vunpack.c.l.b16 %v8316
        %v8386 = vunpack.c.h.b16 %v8316
        %v8387 = vunpack.c.l.b16 %v8317
        %v8388 = vunpack.c.h.b16 %v8317
        %v8389 = vunpack.c.l.b16 %v8318
        %v8390 = vunpack.c.h.b16 %v8318
        %v8391 = vunpack.c.l.b16 %v8319
        %v8392 = vunpack.c.h.b16 %v8319
        %v8393 = vunpack.c.l.b16 %v8320
        %v8394 = vunpack.c.h.b16 %v8320
        %v8395 = vunpack.c.l.b16 %v8321
        %v8396 = vunpack.c.h.b16 %v8321
        %v8397 = vunpack.c.l.b16 %v8322
        %v8398 = vunpack.c.h.b16 %v8322
        %v8399 = vunpack.c.l.b16 %v8323
        %v8400 = vunpack.c.h.b16 %v8323
        %v8401 = vunpack.c.l.b16 %v8324
        %v8402 = vunpack.c.h.b16 %v8324
        %v8403 = vunpack.c.l.b16 %v8325
        %v8404 = vunpack.c.h.b16 %v8325
        %v8405 = vunpack.c.l.b16 %v8326
        %v8406 = vunpack.c.h.b16 %v8326
        %v8407 = vunpack.c.l.b16 %v8327
        %v8408 = vunpack.c.h.b16 %v8327
        %v8409 = vunpack.c.l.b16 %v8328
        %v8410 = vunpack.c.h.b16 %v8328
        %v8411 = vunpack.c.l.b16 %v8329
        %v8412 = vunpack.c.h.b16 %v8329
        %v8413 = vunpack.c.l.b16 %v8330
        %v8414 = vunpack.c.h.b16 %v8330
        %v8415 = vunpack.c.l.b16 %v8331
        %v8416 = vunpack.c.h.b16 %v8331
        %v8417 = vunpack.c.l.b16 %v8332
        %v8418 = vunpack.c.h.b16 %v8332
        %v8419 = vunpack.c.l.b16 %v8333
        %v8420 = vunpack.c.h.b16 %v8333
        %v8421 = vunpack.c.l.b16 %v8334
        %v8422 = vunpack.c.h.b16 %v8334
        %v8423 = vunpack.c.l.b16 %v8335
        %v8424 = vunpack.c.h.b16 %v8335
        %v8425 = vunpack.c.l.b16 %v8336
        %v8426 = vunpack.c.h.b16 %v8336
        %v8427 = vunpack.c.l.b16 %v8337
        %v8428 = vunpack.c.h.b16 %v8337
        %v8429 = vunpack.c.l.b16 %v8338
        %v8430 = vunpack.c.h.b16 %v8338
        %v8431 = vunpack.c.l.b16 %v8339
        %v8432 = vunpack.c.h.b16 %v8339
        %v8433 = vunpack.c.l.b16 %v8340
        %v8434 = vunpack.c.h.b16 %v8340
        %v8435 = vunpack.c.l.b16 %v8341
        %v8436 = vunpack.c.h.b16 %v8341
        %v8437 = vunpack.c.l.b16 %v8342
        %v8438 = vunpack.c.h.b16 %v8342
        %v8439 = vpack.c.b16 %v8377, %v8375
        %v8440 = vpack.c.b16 %v8378, %v8376
        %v8441 = vpack.c.b16 %v8381, %v8379
        %v8442 = vpack.c.b16 %v8382, %v8380
        %v8443 = vpack.c.b16 %v8385, %v8383
        %v8444 = vpack.c.b16 %v8386, %v8384
        %v8445 = vpack.c.b16 %v8389, %v8387
        %v8446 = vpack.c.b16 %v8390, %v8388
        %v8447 = vpack.c.b16 %v8393, %v8391
        %v8448 = vpack.c.b16 %v8394, %v8392
        %v8449 = vpack.c.b16 %v8397, %v8395
        %v8450 = vpack.c.b16 %v8398, %v8396
        %v8451 = vpack.c.b16 %v8401, %v8399
        %v8452 = vpack.c.b16 %v8402, %v8400
        %v8453 = vpack.c.b16 %v8405, %v8403
        %v8454 = vpack.c.b16 %v8406, %v8404
        %v8455 = vpack.c.b16 %v8409, %v8407
        %v8456 = vpack.c.b16 %v8410, %v8408
        %v8457 = vpack.c.b16 %v8413, %v8411
        %v8458 = vpack.c.b16 %v8414, %v8412
        %v8459 = vpack.c.b16 %v8417, %v8415
        %v8460 = vpack.c.b16 %v8418, %v8416
        %v8461 = vpack.c.b16 %v8421, %v8419
        %v8462 = vpack.c.b16 %v8422, %v8420
        %v8463 = vpack.c.b16 %v8425, %v8423
        %v8464 = vpack.c.b16 %v8426, %v8424
        %v8465 = vpack.c.b16 %v8429, %v8427
        %v8466 = vpack.c.b16 %v8430, %v8428
        %v8467 = vpack.c.b16 %v8433, %v8431
        %v8468 = vpack.c.b16 %v8434, %v8432
        %v8469 = vpack.c.b16 %v8437, %v8435
        %v8470 = vpack.c.b16 %v8438, %v8436
        %8503 = vmatprep.subr.bf16.mxu0 %v8440
        %8504 = vmatpush1.bf16.msra.mxu0 %v8439
        %8505 = vmatprep.subr.bf16.mxu0 %v8442
        %8506 = vmatpush1.bf16.msra.mxu0 %v8441
        %8507 = vmatprep.subr.bf16.mxu0 %v8444
        %8508 = vmatpush1.bf16.msra.mxu0 %v8443
        %8509 = vmatprep.subr.bf16.mxu0 %v8446
        %8510 = vmatpush1.bf16.msra.mxu0 %v8445
        %8511 = vmatprep.subr.bf16.mxu0 %v8448
        %8512 = vmatpush1.bf16.msra.mxu0 %v8447
        %8513 = vmatprep.subr.bf16.mxu0 %v8450
        %8514 = vmatpush1.bf16.msra.mxu0 %v8449
        %8515 = vmatprep.subr.bf16.mxu0 %v8452
        %8516 = vmatpush1.bf16.msra.mxu0 %v8451
        %8517 = vmatprep.subr.bf16.mxu0 %v8454
        %8518 = vmatpush1.bf16.msra.mxu0 %v8453
        %8519 = vmatprep.subr.bf16.mxu0 %v8456
        %8520 = vmatpush1.bf16.msra.mxu0 %v8455
        %8521 = vmatprep.subr.bf16.mxu0 %v8458
        %8522 = vmatpush1.bf16.msra.mxu0 %v8457
        %8523 = vmatprep.subr.bf16.mxu0 %v8460
        %8524 = vmatpush1.bf16.msra.mxu0 %v8459
        %8525 = vmatprep.subr.bf16.mxu0 %v8462
        %8526 = vmatpush1.bf16.msra.mxu0 %v8461
        %8527 = vmatprep.subr.bf16.mxu0 %v8464
        %8528 = vmatpush1.bf16.msra.mxu0 %v8463
        %8529 = vmatprep.subr.bf16.mxu0 %v8466
        %8530 = vmatpush1.bf16.msra.mxu0 %v8465
        %8531 = vmatprep.subr.bf16.mxu0 %v8468
        %8532 = vmatpush1.bf16.msra.mxu0 %v8467
        %8533 = vmatprep.subr.bf16.mxu0 %v8470
        %8534 = vmatpush1.bf16.msra.mxu0 %v8469
        %8535 = vmatprep.mubr.bf16.mxu0 %v8295
        %8536 = vmatmul.mubr.bf16.gmra.mrb[0].mxu0 %v8294
        %v8537 = vpop.f32.mrb[0].mxu0
        %v8538 = vadd.f32 0.0, %v8537
        %v8539 = vpop.f32.mrb[0].mxu0
        %v8540 = vadd.f32 0.0, %v8539
        %v8541 = vpop.f32.mrb[0].mxu0
        %v8542 = vadd.f32 0.0, %v8541
        %v8543 = vpop.f32.mrb[0].mxu0
        %v8544 = vadd.f32 0.0, %v8543
        %8545 = vmatprep.mubr.bf16.mxu0 %v8297
        %8546 = vmatmul.mubr.bf16.gmra.mrb[0].mxu0 %v8296
        %v8547 = vpop.f32.mrb[0].mxu0
        %v8548 = vadd.f32 0.0, %v8547
        %v8549 = vpop.f32.mrb[0].mxu0
        %v8550 = vadd.f32 0.0, %v8549
        %v8551 = vpop.f32.mrb[0].mxu0
        %v8552 = vadd.f32 0.0, %v8551
        %v8553 = vpop.f32.mrb[0].mxu0
        %v8554 = vadd.f32 0.0, %v8553
        %8555 = vmatprep.mubr.bf16.mxu0 %v8299
        %8556 = vmatmul.mubr.bf16.gmra.mrb[0].mxu0 %v8298
        %v8557 = vpop.f32.mrb[0].mxu0
        %v8558 = vadd.f32 0.0, %v8557
        %v8559 = vpop.f32.mrb[0].mxu0
        %v8560 = vadd.f32 0.0, %v8559
        %v8561 = vpop.f32.mrb[0].mxu0
        %v8562 = vadd.f32 0.0, %v8561
        %v8563 = vpop.f32.mrb[0].mxu0
        %v8564 = vadd.f32 0.0, %v8563
        %8565 = vmatprep.mubr.bf16.mxu0 %v8301
        %8566 = vmatmul.mubr.bf16.gmra.mrb[0].mxu0 %v8300
        %v8567 = vpop.f32.mrb[0].mxu0
        %v8568 = vadd.f32 0.0, %v8567
        %v8569 = vpop.f32.mrb[0].mxu0
        %v8570 = vadd.f32 0.0, %v8569
        %v8571 = vpop.f32.mrb[0].mxu0
        %v8572 = vadd.f32 0.0, %v8571
        %v8573 = vpop.f32.mrb[0].mxu0
        %v8574 = vadd.f32 0.0, %v8573
        %8575 = vmatprep.mubr.bf16.mxu0 %v8303
        %8576 = vmatmul.mubr.bf16.gmra.mrb[0].mxu0 %v8302
        %v8577 = vpop.f32.mrb[0].mxu0
        %v8578 = vadd.f32 0.0, %v8577
        %v8579 = vpop.f32.mrb[0].mxu0
        %v8580 = vadd.f32 0.0, %v8579
        %v8581 = vpop.f32.mrb[0].mxu0
        %v8582 = vadd.f32 0.0, %v8581
        %v8583 = vpop.f32.mrb[0].mxu0
        %v8584 = vadd.f32 0.0, %v8583
        %8585 = vmatprep.mubr.bf16.mxu0 %v8305
        %8586 = vmatmul.mubr.bf16.gmra.mrb[0].mxu0 %v8304
        %v8587 = vpop.f32.mrb[0].mxu0
        %v8588 = vadd.f32 0.0, %v8587
        %v8589 = vpop.f32.mrb[0].mxu0
        %v8590 = vadd.f32 0.0, %v8589
        %v8591 = vpop.f32.mrb[0].mxu0
        %v8592 = vadd.f32 0.0, %v8591
        %v8593 = vpop.f32.mrb[0].mxu0
        %v8594 = vadd.f32 0.0, %v8593
        %8595 = vmatprep.mubr.bf16.mxu0 %v8307
        %8596 = vmatmul.mubr.bf16.gmra.mrb[0].mxu0 %v8306
        %v8597 = vpop.f32.mrb[0].mxu0
        %v8598 = vadd.f32 0.0, %v8597
        %v8599 = vpop.f32.mrb[0].mxu0
        %v8600 = vadd.f32 0.0, %v8599
        %v8601 = vpop.f32.mrb[0].mxu0
        %v8602 = vadd.f32 0.0, %v8601
        %v8603 = vpop.f32.mrb[0].mxu0
        %v8604 = vadd.f32 0.0, %v8603
        %8605 = vmatprep.mubr.bf16.mxu0 %v8309
        %8606 = vmatmul.mubr.bf16.gmra.mrb[0].mxu0 %v8308
        %v8607 = vpop.f32.mrb[0].mxu0
        %v8608 = vadd.f32 0.0, %v8607
        %v8609 = vpop.f32.mrb[0].mxu0
        %v8610 = vadd.f32 0.0, %v8609
        %v8611 = vpop.f32.mrb[0].mxu0
        %v8612 = vadd.f32 0.0, %v8611
        %v8613 = vpop.f32.mrb[0].mxu0
        %v8614 = vadd.f32 0.0, %v8613
        %8615 = vdwg.mxu0
        %v8616 = vadd.f32 %v4462, %v8538
        %v8617 = vadd.f32 %v4464, %v8540
        %v8618 = vadd.f32 %v4466, %v8542
        %v8619 = vadd.f32 %v4468, %v8544
        %v8620 = vadd.f32 %v4472, %v8548
        %v8621 = vadd.f32 %v4474, %v8550
        %v8622 = vadd.f32 %v4476, %v8552
        %v8623 = vadd.f32 %v4478, %v8554
        %v8624 = vadd.f32 %v4482, %v8558
        %v8625 = vadd.f32 %v4484, %v8560
        %v8626 = vadd.f32 %v4486, %v8562
        %v8627 = vadd.f32 %v4488, %v8564
        %v8628 = vadd.f32 %v4492, %v8568
        %v8629 = vadd.f32 %v4494, %v8570
        %v8630 = vadd.f32 %v4496, %v8572
        %v8631 = vadd.f32 %v4498, %v8574
        %v8632 = vadd.f32 %v4502, %v8578
        %v8633 = vadd.f32 %v4504, %v8580
        %v8634 = vadd.f32 %v4506, %v8582
        %v8635 = vadd.f32 %v4508, %v8584
        %v8636 = vadd.f32 %v4512, %v8588
        %v8637 = vadd.f32 %v4514, %v8590
        %v8638 = vadd.f32 %v4516, %v8592
        %v8639 = vadd.f32 %v4518, %v8594
        %v8640 = vadd.f32 %v4522, %v8598
        %v8641 = vadd.f32 %v4524, %v8600
        %v8642 = vadd.f32 %v4526, %v8602
        %v8643 = vadd.f32 %v4528, %v8604
        %v8644 = vadd.f32 %v4532, %v8608
        %v8645 = vadd.f32 %v4534, %v8610
        %v8646 = vadd.f32 %v4536, %v8612
        %v8647 = vadd.f32 %v4538, %v8614
        %s8648 = smul.u32 %s325, 3
        %s8649 = smul.addr %s8648, 4
        %s8650 = scalar_lea.vmem %s318, %s8649
        %v8651 = vld [vmem:[%s8650] sm:$0xf]
        %v8652 = vld [vmem:[%s8650 + $0x4] sm:$0xf]
        %v8653 = vld [vmem:[%s8650 + $0xc] sm:$0xf]
        %v8654 = vld [vmem:[%s8650 + $0x10] sm:$0xf]
        %v8655 = vld [vmem:[%s8650 + $0x18] sm:$0xf]
        %v8656 = vld [vmem:[%s8650 + $0x1c] sm:$0xf]
        %v8657 = vld [vmem:[%s8650 + $0x24] sm:$0xf]
        %v8658 = vld [vmem:[%s8650 + $0x28] sm:$0xf]
        %v8659 = vld [vmem:[%s8650 + $0x30] sm:$0xf]
        %v8660 = vld [vmem:[%s8650 + $0x34] sm:$0xf]
        %v8661 = vld [vmem:[%s8650 + $0x3c] sm:$0xf]
        %v8662 = vld [vmem:[%s8650 + $0x40] sm:$0xf]
        %v8663 = vld [vmem:[%s8650 + $0x48] sm:$0xf]
        %v8664 = vld [vmem:[%s8650 + $0x4c] sm:$0xf]
        %v8665 = vld [vmem:[%s8650 + $0x54] sm:$0xf]
        %v8666 = vld [vmem:[%s8650 + $0x58] sm:$0xf]
        %s8667 = scalar_lea.vmem %s3, 72
        %v8668 = vld [vmem:[%s8667] sm:$0xf]
        %v8669 = vld [vmem:[%s8650] sm:$0xe]
        %v8670 = vld [vmem:[%s8650 + $0x8] sm:$0x3]
        %v8671 = vld [vmem:[%s8650 + $0xc] sm:$0xe]
        %v8672 = vld [vmem:[%s8650 + $0x14] sm:$0x3]
        %v8673 = vld [vmem:[%s8650 + $0x18] sm:$0xe]
        %v8674 = vld [vmem:[%s8650 + $0x20] sm:$0x3]
        %v8675 = vld [vmem:[%s8650 + $0x24] sm:$0xe]
        %v8676 = vld [vmem:[%s8650 + $0x2c] sm:$0x3]
        %v8677 = vld [vmem:[%s8650 + $0x30] sm:$0xe]
        %v8678 = vld [vmem:[%s8650 + $0x38] sm:$0x3]
        %v8679 = vld [vmem:[%s8650 + $0x3c] sm:$0xe]
        %v8680 = vld [vmem:[%s8650 + $0x44] sm:$0x3]
        %v8681 = vld [vmem:[%s8650 + $0x48] sm:$0xe]
        %v8682 = vld [vmem:[%s8650 + $0x50] sm:$0x3]
        %v8683 = vld [vmem:[%s8650 + $0x54] sm:$0xe]
        %v8684 = vld [vmem:[%s8650 + $0x5c] sm:$0x3]
        %v8686 = vshrl.u32 %v8669, 16
        %v8688 = vrot.slane %v8686, 5
        %v8689 = vshll.u32 %v8669, 16
        %v8691 = vrot.slane %v8689, 6
        %v8692 = vor.u32 %v8688, %v8691
        %v8693 = vrot.slane %v8692, 4
        %v8695 = vshrl.u32 %v8652, 16
        %v8697 = vrot.slane %v8695, 5
        %v8698 = vshll.u32 %v8652, 16
        %v8700 = vrot.slane %v8698, 6
        %v8701 = vor.u32 %v8697, %v8700
        %v8702 = vsel %vm356, %v8693, %v8701
        %v8703 = vrot.slane %v8701, 4
        %v8705 = vshrl.u32 %v8670, 16
        %v8707 = vrot.slane %v8705, 5
        %v8708 = vshll.u32 %v8670, 16
        %v8710 = vrot.slane %v8708, 6
        %v8711 = vor.u32 %v8707, %v8710
        %v8712 = vsel %vm356, %v8703, %v8711
        %v8714 = vshrl.u32 %v8671, 16
        %v8716 = vrot.slane %v8714, 5
        %v8717 = vshll.u32 %v8671, 16
        %v8719 = vrot.slane %v8717, 6
        %v8720 = vor.u32 %v8716, %v8719
        %v8721 = vrot.slane %v8720, 4
        %v8723 = vshrl.u32 %v8654, 16
        %v8725 = vrot.slane %v8723, 5
        %v8726 = vshll.u32 %v8654, 16
        %v8728 = vrot.slane %v8726, 6
        %v8729 = vor.u32 %v8725, %v8728
        %v8730 = vsel %vm356, %v8721, %v8729
        %v8731 = vrot.slane %v8729, 4
        %v8733 = vshrl.u32 %v8672, 16
        %v8735 = vrot.slane %v8733, 5
        %v8736 = vshll.u32 %v8672, 16
        %v8738 = vrot.slane %v8736, 6
        %v8739 = vor.u32 %v8735, %v8738
        %v8740 = vsel %vm356, %v8731, %v8739
        %v8742 = vshrl.u32 %v8673, 16
        %v8744 = vrot.slane %v8742, 5
        %v8745 = vshll.u32 %v8673, 16
        %v8747 = vrot.slane %v8745, 6
        %v8748 = vor.u32 %v8744, %v8747
        %v8749 = vrot.slane %v8748, 4
        %v8751 = vshrl.u32 %v8656, 16
        %v8753 = vrot.slane %v8751, 5
        %v8754 = vshll.u32 %v8656, 16
        %v8756 = vrot.slane %v8754, 6
        %v8757 = vor.u32 %v8753, %v8756
        %v8758 = vsel %vm356, %v8749, %v8757
        %v8759 = vrot.slane %v8757, 4
        %v8761 = vshrl.u32 %v8674, 16
        %v8763 = vrot.slane %v8761, 5
        %v8764 = vshll.u32 %v8674, 16
        %v8766 = vrot.slane %v8764, 6
        %v8767 = vor.u32 %v8763, %v8766
        %v8768 = vsel %vm356, %v8759, %v8767
        %v8770 = vshrl.u32 %v8675, 16
        %v8772 = vrot.slane %v8770, 5
        %v8773 = vshll.u32 %v8675, 16
        %v8775 = vrot.slane %v8773, 6
        %v8776 = vor.u32 %v8772, %v8775
        %v8777 = vrot.slane %v8776, 4
        %v8779 = vshrl.u32 %v8658, 16
        %v8781 = vrot.slane %v8779, 5
        %v8782 = vshll.u32 %v8658, 16
        %v8784 = vrot.slane %v8782, 6
        %v8785 = vor.u32 %v8781, %v8784
        %v8786 = vsel %vm356, %v8777, %v8785
        %v8787 = vrot.slane %v8785, 4
        %v8789 = vshrl.u32 %v8676, 16
        %v8791 = vrot.slane %v8789, 5
        %v8792 = vshll.u32 %v8676, 16
        %v8794 = vrot.slane %v8792, 6
        %v8795 = vor.u32 %v8791, %v8794
        %v8796 = vsel %vm356, %v8787, %v8795
        %v8798 = vshrl.u32 %v8677, 16
        %v8800 = vrot.slane %v8798, 5
        %v8801 = vshll.u32 %v8677, 16
        %v8803 = vrot.slane %v8801, 6
        %v8804 = vor.u32 %v8800, %v8803
        %v8805 = vrot.slane %v8804, 4
        %v8807 = vshrl.u32 %v8660, 16
        %v8809 = vrot.slane %v8807, 5
        %v8810 = vshll.u32 %v8660, 16
        %v8812 = vrot.slane %v8810, 6
        %v8813 = vor.u32 %v8809, %v8812
        %v8814 = vsel %vm356, %v8805, %v8813
        %v8815 = vrot.slane %v8813, 4
        %v8817 = vshrl.u32 %v8678, 16
        %v8819 = vrot.slane %v8817, 5
        %v8820 = vshll.u32 %v8678, 16
        %v8822 = vrot.slane %v8820, 6
        %v8823 = vor.u32 %v8819, %v8822
        %v8824 = vsel %vm356, %v8815, %v8823
        %v8826 = vshrl.u32 %v8679, 16
        %v8828 = vrot.slane %v8826, 5
        %v8829 = vshll.u32 %v8679, 16
        %v8831 = vrot.slane %v8829, 6
        %v8832 = vor.u32 %v8828, %v8831
        %v8833 = vrot.slane %v8832, 4
        %v8835 = vshrl.u32 %v8662, 16
        %v8837 = vrot.slane %v8835, 5
        %v8838 = vshll.u32 %v8662, 16
        %v8840 = vrot.slane %v8838, 6
        %v8841 = vor.u32 %v8837, %v8840
        %v8842 = vsel %vm356, %v8833, %v8841
        %v8843 = vrot.slane %v8841, 4
        %v8845 = vshrl.u32 %v8680, 16
        %v8847 = vrot.slane %v8845, 5
        %v8848 = vshll.u32 %v8680, 16
        %v8850 = vrot.slane %v8848, 6
        %v8851 = vor.u32 %v8847, %v8850
        %v8852 = vsel %vm356, %v8843, %v8851
        %v8854 = vshrl.u32 %v8681, 16
        %v8856 = vrot.slane %v8854, 5
        %v8857 = vshll.u32 %v8681, 16
        %v8859 = vrot.slane %v8857, 6
        %v8860 = vor.u32 %v8856, %v8859
        %v8861 = vrot.slane %v8860, 4
        %v8863 = vshrl.u32 %v8664, 16
        %v8865 = vrot.slane %v8863, 5
        %v8866 = vshll.u32 %v8664, 16
        %v8868 = vrot.slane %v8866, 6
        %v8869 = vor.u32 %v8865, %v8868
        %v8870 = vsel %vm356, %v8861, %v8869
        %v8871 = vrot.slane %v8869, 4
        %v8873 = vshrl.u32 %v8682, 16
        %v8875 = vrot.slane %v8873, 5
        %v8876 = vshll.u32 %v8682, 16
        %v8878 = vrot.slane %v8876, 6
        %v8879 = vor.u32 %v8875, %v8878
        %v8880 = vsel %vm356, %v8871, %v8879
        %v8882 = vshrl.u32 %v8683, 16
        %v8884 = vrot.slane %v8882, 5
        %v8885 = vshll.u32 %v8683, 16
        %v8887 = vrot.slane %v8885, 6
        %v8888 = vor.u32 %v8884, %v8887
        %v8889 = vrot.slane %v8888, 4
        %v8891 = vshrl.u32 %v8666, 16
        %v8893 = vrot.slane %v8891, 5
        %v8894 = vshll.u32 %v8666, 16
        %v8896 = vrot.slane %v8894, 6
        %v8897 = vor.u32 %v8893, %v8896
        %v8898 = vsel %vm356, %v8889, %v8897
        %v8899 = vrot.slane %v8897, 4
        %v8901 = vshrl.u32 %v8684, 16
        %v8903 = vrot.slane %v8901, 5
        %v8904 = vshll.u32 %v8684, 16
        %v8906 = vrot.slane %v8904, 6
        %v8907 = vor.u32 %v8903, %v8906
        %v8908 = vsel %vm356, %v8899, %v8907
        %s8909 = scalar_lea.vmem %s3, 76
        %v8910 = vld [vmem:[%s8909] sm:$0xf]
        %v8911 = vunpack.c.l.b16 %v8702
        %v8912 = vunpack.c.l.b16 %v8712
        %v8913 = vunpack.c.l.b16 %v8730
        %v8914 = vunpack.c.l.b16 %v8740
        %v8915 = vunpack.c.l.b16 %v8758
        %v8916 = vunpack.c.l.b16 %v8768
        %v8917 = vunpack.c.l.b16 %v8786
        %v8918 = vunpack.c.l.b16 %v8796
        %v8919 = vunpack.c.l.b16 %v8814
        %v8920 = vunpack.c.l.b16 %v8824
        %v8921 = vunpack.c.l.b16 %v8842
        %v8922 = vunpack.c.l.b16 %v8852
        %v8923 = vunpack.c.l.b16 %v8870
        %v8924 = vunpack.c.l.b16 %v8880
        %v8925 = vunpack.c.l.b16 %v8898
        %v8926 = vunpack.c.l.b16 %v8908
        %v8927 = vpack.c.b16 %v8912, %v8911
        %v8928 = vpack.c.b16 %v8914, %v8913
        %v8929 = vpack.c.b16 %v8916, %v8915
        %v8930 = vpack.c.b16 %v8918, %v8917
        %v8931 = vpack.c.b16 %v8920, %v8919
        %v8932 = vpack.c.b16 %v8922, %v8921
        %v8933 = vpack.c.b16 %v8924, %v8923
        %v8934 = vpack.c.b16 %v8926, %v8925
        %v8937 = vunpack.c.l.s4 1983009808
        %v8938 = vunpack.c.0.s8 %v8937
        %v8939 = vlaneseq
        %v8940 = vshrl.u32 %v8939, 7
        %v8941 = vsub.s32 %v8938, %v8940
        %v8942 = vrot.slane %v8910, %v8941
        %v8943 = vcombine.high %v8942, %v8942
        %v8945 = vsel %vm615, %v8927, 0
        %v8948 = vsel %vm615, %v8928, 0
        %v8951 = vsel %vm615, %v8929, 0
        %v8954 = vsel %vm615, %v8930, 0
        %v8957 = vsel %vm615, %v8931, 0
        %v8960 = vsel %vm615, %v8932, 0
        %v8963 = vsel %vm615, %v8933, 0
        %v8966 = vsel %vm615, %v8934, 0
        %v8969 = vsel %vm640, %v8942, 0
        %v8972 = vsel %vm640, %v8943, 0
        %8974 = vmatprep.subr.bf16.mxu0 %v8972
        %8975 = vmatpush1.bf16.msra.mxu0 %v8969
        %8976 = vmatprep.subr.bf16.mxu0 0
        %8977 = vmatpush1.bf16.msra.mxu0 0
        %8978 = vmatprep.subr.bf16.mxu0 0
        %8979 = vmatpush1.bf16.msra.mxu0 0
        %8980 = vmatprep.subr.bf16.mxu0 0
        %8981 = vmatpush1.bf16.msra.mxu0 0
        %8982 = vmatprep.subr.bf16.mxu0 0
        %8983 = vmatpush1.bf16.msra.mxu0 0
        %8984 = vmatprep.subr.bf16.mxu0 0
        %8985 = vmatpush1.bf16.msra.mxu0 0
        %8986 = vmatprep.subr.bf16.mxu0 0
        %8987 = vmatpush1.bf16.msra.mxu0 0
        %8988 = vmatprep.subr.bf16.mxu0 0
        %8989 = vmatpush1.bf16.msra.mxu0 0
        %8990 = vmatprep.subr.bf16.mxu0 0
        %8991 = vmatpush1.bf16.msra.mxu0 0
        %8992 = vmatprep.subr.bf16.mxu0 0
        %8993 = vmatpush1.bf16.msra.mxu0 0
        %8994 = vmatprep.subr.bf16.mxu0 0
        %8995 = vmatpush1.bf16.msra.mxu0 0
        %8996 = vmatprep.subr.bf16.mxu0 0
        %8997 = vmatpush1.bf16.msra.mxu0 0
        %8998 = vmatprep.subr.bf16.mxu0 0
        %8999 = vmatpush1.bf16.msra.mxu0 0
        %9000 = vmatprep.subr.bf16.mxu0 0
        %9001 = vmatpush1.bf16.msra.mxu0 0
        %9002 = vmatprep.subr.bf16.mxu0 0
        %9003 = vmatpush1.bf16.msra.mxu0 0
        %9004 = vmatprep.subr.bf16.mxu0 0
        %9005 = vmatpush1.bf16.msra.mxu0 0
        %9006 = vmatprep.mubr.bf16.mxu0 0
        %9007 = vmatmul.mubr.bf16.gmra.mrb[0].mxu0 %v8945
        %v9008 = vpop.f32.mrb[0].mxu0
        %v9009 = vadd.f32 0.0, %v9008
        %v9010 = vpop.f32.mrb[0].mxu0
        %v9011 = vadd.f32 0.0, %v9010
        %v9012 = vpop.f32.mrb[0].mxu0
        %v9013 = vadd.f32 0.0, %v9012
        %v9014 = vpop.f32.mrb[0].mxu0
        %v9015 = vadd.f32 0.0, %v9014
        %9016 = vmatprep.mubr.bf16.mxu0 0
        %9017 = vmatmul.mubr.bf16.gmra.mrb[0].mxu0 %v8948
        %v9018 = vpop.f32.mrb[0].mxu0
        %v9019 = vadd.f32 0.0, %v9018
        %v9020 = vpop.f32.mrb[0].mxu0
        %v9021 = vadd.f32 0.0, %v9020
        %v9022 = vpop.f32.mrb[0].mxu0
        %v9023 = vadd.f32 0.0, %v9022
        %v9024 = vpop.f32.mrb[0].mxu0
        %v9025 = vadd.f32 0.0, %v9024
        %9026 = vmatprep.mubr.bf16.mxu0 0
        %9027 = vmatmul.mubr.bf16.gmra.mrb[0].mxu0 %v8951
        %v9028 = vpop.f32.mrb[0].mxu0
        %v9029 = vadd.f32 0.0, %v9028
        %v9030 = vpop.f32.mrb[0].mxu0
        %v9031 = vadd.f32 0.0, %v9030
        %v9032 = vpop.f32.mrb[0].mxu0
        %v9033 = vadd.f32 0.0, %v9032
        %v9034 = vpop.f32.mrb[0].mxu0
        %v9035 = vadd.f32 0.0, %v9034
        %9036 = vmatprep.mubr.bf16.mxu0 0
        %9037 = vmatmul.mubr.bf16.gmra.mrb[0].mxu0 %v8954
        %v9038 = vpop.f32.mrb[0].mxu0
        %v9039 = vadd.f32 0.0, %v9038
        %v9040 = vpop.f32.mrb[0].mxu0
        %v9041 = vadd.f32 0.0, %v9040
        %v9042 = vpop.f32.mrb[0].mxu0
        %v9043 = vadd.f32 0.0, %v9042
        %v9044 = vpop.f32.mrb[0].mxu0
        %v9045 = vadd.f32 0.0, %v9044
        %9046 = vmatprep.mubr.bf16.mxu0 0
        %9047 = vmatmul.mubr.bf16.gmra.mrb[0].mxu0 %v8957
        %v9048 = vpop.f32.mrb[0].mxu0
        %v9049 = vadd.f32 0.0, %v9048
        %v9050 = vpop.f32.mrb[0].mxu0
        %v9051 = vadd.f32 0.0, %v9050
        %v9052 = vpop.f32.mrb[0].mxu0
        %v9053 = vadd.f32 0.0, %v9052
        %v9054 = vpop.f32.mrb[0].mxu0
        %v9055 = vadd.f32 0.0, %v9054
        %9056 = vmatprep.mubr.bf16.mxu0 0
        %9057 = vmatmul.mubr.bf16.gmra.mrb[0].mxu0 %v8960
        %v9058 = vpop.f32.mrb[0].mxu0
        %v9059 = vadd.f32 0.0, %v9058
        %v9060 = vpop.f32.mrb[0].mxu0
        %v9061 = vadd.f32 0.0, %v9060
        %v9062 = vpop.f32.mrb[0].mxu0
        %v9063 = vadd.f32 0.0, %v9062
        %v9064 = vpop.f32.mrb[0].mxu0
        %v9065 = vadd.f32 0.0, %v9064
        %9066 = vmatprep.mubr.bf16.mxu0 0
        %9067 = vmatmul.mubr.bf16.gmra.mrb[0].mxu0 %v8963
        %v9068 = vpop.f32.mrb[0].mxu0
        %v9069 = vadd.f32 0.0, %v9068
        %v9070 = vpop.f32.mrb[0].mxu0
        %v9071 = vadd.f32 0.0, %v9070
        %v9072 = vpop.f32.mrb[0].mxu0
        %v9073 = vadd.f32 0.0, %v9072
        %v9074 = vpop.f32.mrb[0].mxu0
        %v9075 = vadd.f32 0.0, %v9074
        %9076 = vmatprep.mubr.bf16.mxu0 0
        %9077 = vmatmul.mubr.bf16.gmra.mrb[0].mxu0 %v8966
        %v9078 = vpop.f32.mrb[0].mxu0
        %v9079 = vadd.f32 0.0, %v9078
        %v9080 = vpop.f32.mrb[0].mxu0
        %v9081 = vadd.f32 0.0, %v9080
        %v9082 = vpop.f32.mrb[0].mxu0
        %v9083 = vadd.f32 0.0, %v9082
        %v9084 = vpop.f32.mrb[0].mxu0
        %v9085 = vadd.f32 0.0, %v9084
        %9086 = vdwg.mxu0
        %v9103 = vunpack.c.l.b16 %v8651
        %v9104 = vunpack.c.l.b16 %v8652
        %v9105 = vunpack.c.l.b16 %v8653
        %v9106 = vunpack.c.l.b16 %v8654
        %v9107 = vunpack.c.l.b16 %v8655
        %v9108 = vunpack.c.l.b16 %v8656
        %v9109 = vunpack.c.l.b16 %v8657
        %v9110 = vunpack.c.l.b16 %v8658
        %v9111 = vunpack.c.l.b16 %v8659
        %v9112 = vunpack.c.l.b16 %v8660
        %v9113 = vunpack.c.l.b16 %v8661
        %v9114 = vunpack.c.l.b16 %v8662
        %v9115 = vunpack.c.l.b16 %v8663
        %v9116 = vunpack.c.l.b16 %v8664
        %v9117 = vunpack.c.l.b16 %v8665
        %v9118 = vunpack.c.l.b16 %v8666
        %v9119 = vpack.c.b16 %v9104, %v9103
        %v9120 = vpack.c.b16 %v9106, %v9105
        %v9121 = vpack.c.b16 %v9108, %v9107
        %v9122 = vpack.c.b16 %v9110, %v9109
        %v9123 = vpack.c.b16 %v9112, %v9111
        %v9124 = vpack.c.b16 %v9114, %v9113
        %v9125 = vpack.c.b16 %v9116, %v9115
        %v9126 = vpack.c.b16 %v9118, %v9117
        %v9129 = vunpack.c.l.s4 1983009808
        %v9130 = vunpack.c.0.s8 %v9129
        %v9131 = vlaneseq
        %v9132 = vshrl.u32 %v9131, 7
        %v9133 = vsub.s32 %v9130, %v9132
        %v9134 = vrot.slane %v8668, %v9133
        %v9135 = vcombine.high %v9134, %v9134
        %v9137 = vsel %vm615, %v9119, 0
        %v9140 = vsel %vm615, %v9120, 0
        %v9143 = vsel %vm615, %v9121, 0
        %v9146 = vsel %vm615, %v9122, 0
        %v9149 = vsel %vm615, %v9123, 0
        %v9152 = vsel %vm615, %v9124, 0
        %v9155 = vsel %vm615, %v9125, 0
        %v9158 = vsel %vm615, %v9126, 0
        %v9161 = vsel %vm640, %v9134, 0
        %v9164 = vsel %vm640, %v9135, 0
        %9166 = vmatprep.subr.bf16.mxu0 %v9164
        %9167 = vmatpush1.bf16.msra.mxu0 %v9161
        %9168 = vmatprep.subr.bf16.mxu0 0
        %9169 = vmatpush1.bf16.msra.mxu0 0
        %9170 = vmatprep.subr.bf16.mxu0 0
        %9171 = vmatpush1.bf16.msra.mxu0 0
        %9172 = vmatprep.subr.bf16.mxu0 0
        %9173 = vmatpush1.bf16.msra.mxu0 0
        %9174 = vmatprep.subr.bf16.mxu0 0
        %9175 = vmatpush1.bf16.msra.mxu0 0
        %9176 = vmatprep.subr.bf16.mxu0 0
        %9177 = vmatpush1.bf16.msra.mxu0 0
        %9178 = vmatprep.subr.bf16.mxu0 0
        %9179 = vmatpush1.bf16.msra.mxu0 0
        %9180 = vmatprep.subr.bf16.mxu0 0
        %9181 = vmatpush1.bf16.msra.mxu0 0
        %9182 = vmatprep.subr.bf16.mxu0 0
        %9183 = vmatpush1.bf16.msra.mxu0 0
        %9184 = vmatprep.subr.bf16.mxu0 0
        %9185 = vmatpush1.bf16.msra.mxu0 0
        %9186 = vmatprep.subr.bf16.mxu0 0
        %9187 = vmatpush1.bf16.msra.mxu0 0
        %9188 = vmatprep.subr.bf16.mxu0 0
        %9189 = vmatpush1.bf16.msra.mxu0 0
        %9190 = vmatprep.subr.bf16.mxu0 0
        %9191 = vmatpush1.bf16.msra.mxu0 0
        %9192 = vmatprep.subr.bf16.mxu0 0
        %9193 = vmatpush1.bf16.msra.mxu0 0
        %9194 = vmatprep.subr.bf16.mxu0 0
        %9195 = vmatpush1.bf16.msra.mxu0 0
        %9196 = vmatprep.subr.bf16.mxu0 0
        %9197 = vmatpush1.bf16.msra.mxu0 0
        %9198 = vmatprep.mubr.bf16.mxu0 0
        %9199 = vmatmul.mubr.bf16.gmra.mrb[0].mxu0 %v9137
        %v9200 = vpop.f32.mrb[0].mxu0
        %v9201 = vadd.f32 %v9009, %v9200
        %v9202 = vpop.f32.mrb[0].mxu0
        %v9203 = vadd.f32 %v9011, %v9202
        %v9204 = vpop.f32.mrb[0].mxu0
        %v9205 = vadd.f32 %v9013, %v9204
        %v9206 = vpop.f32.mrb[0].mxu0
        %v9207 = vadd.f32 %v9015, %v9206
        %9208 = vmatprep.mubr.bf16.mxu0 0
        %9209 = vmatmul.mubr.bf16.gmra.mrb[0].mxu0 %v9140
        %v9210 = vpop.f32.mrb[0].mxu0
        %v9211 = vadd.f32 %v9019, %v9210
        %v9212 = vpop.f32.mrb[0].mxu0
        %v9213 = vadd.f32 %v9021, %v9212
        %v9214 = vpop.f32.mrb[0].mxu0
        %v9215 = vadd.f32 %v9023, %v9214
        %v9216 = vpop.f32.mrb[0].mxu0
        %v9217 = vadd.f32 %v9025, %v9216
        %9218 = vmatprep.mubr.bf16.mxu0 0
        %9219 = vmatmul.mubr.bf16.gmra.mrb[0].mxu0 %v9143
        %v9220 = vpop.f32.mrb[0].mxu0
        %v9221 = vadd.f32 %v9029, %v9220
        %v9222 = vpop.f32.mrb[0].mxu0
        %v9223 = vadd.f32 %v9031, %v9222
        %v9224 = vpop.f32.mrb[0].mxu0
        %v9225 = vadd.f32 %v9033, %v9224
        %v9226 = vpop.f32.mrb[0].mxu0
        %v9227 = vadd.f32 %v9035, %v9226
        %9228 = vmatprep.mubr.bf16.mxu0 0
        %9229 = vmatmul.mubr.bf16.gmra.mrb[0].mxu0 %v9146
        %v9230 = vpop.f32.mrb[0].mxu0
        %v9231 = vadd.f32 %v9039, %v9230
        %v9232 = vpop.f32.mrb[0].mxu0
        %v9233 = vadd.f32 %v9041, %v9232
        %v9234 = vpop.f32.mrb[0].mxu0
        %v9235 = vadd.f32 %v9043, %v9234
        %v9236 = vpop.f32.mrb[0].mxu0
        %v9237 = vadd.f32 %v9045, %v9236
        %9238 = vmatprep.mubr.bf16.mxu0 0
        %9239 = vmatmul.mubr.bf16.gmra.mrb[0].mxu0 %v9149
        %v9240 = vpop.f32.mrb[0].mxu0
        %v9241 = vadd.f32 %v9049, %v9240
        %v9242 = vpop.f32.mrb[0].mxu0
        %v9243 = vadd.f32 %v9051, %v9242
        %v9244 = vpop.f32.mrb[0].mxu0
        %v9245 = vadd.f32 %v9053, %v9244
        %v9246 = vpop.f32.mrb[0].mxu0
        %v9247 = vadd.f32 %v9055, %v9246
        %9248 = vmatprep.mubr.bf16.mxu0 0
        %9249 = vmatmul.mubr.bf16.gmra.mrb[0].mxu0 %v9152
        %v9250 = vpop.f32.mrb[0].mxu0
        %v9251 = vadd.f32 %v9059, %v9250
        %v9252 = vpop.f32.mrb[0].mxu0
        %v9253 = vadd.f32 %v9061, %v9252
        %v9254 = vpop.f32.mrb[0].mxu0
        %v9255 = vadd.f32 %v9063, %v9254
        %v9256 = vpop.f32.mrb[0].mxu0
        %v9257 = vadd.f32 %v9065, %v9256
        %9258 = vmatprep.mubr.bf16.mxu0 0
        %9259 = vmatmul.mubr.bf16.gmra.mrb[0].mxu0 %v9155
        %v9260 = vpop.f32.mrb[0].mxu0
        %v9261 = vadd.f32 %v9069, %v9260
        %v9262 = vpop.f32.mrb[0].mxu0
        %v9263 = vadd.f32 %v9071, %v9262
        %v9264 = vpop.f32.mrb[0].mxu0
        %v9265 = vadd.f32 %v9073, %v9264
        %v9266 = vpop.f32.mrb[0].mxu0
        %v9267 = vadd.f32 %v9075, %v9266
        %9268 = vmatprep.mubr.bf16.mxu0 0
        %9269 = vmatmul.mubr.bf16.gmra.mrb[0].mxu0 %v9158
        %v9270 = vpop.f32.mrb[0].mxu0
        %v9271 = vadd.f32 %v9079, %v9270
        %v9272 = vpop.f32.mrb[0].mxu0
        %v9273 = vadd.f32 %v9081, %v9272
        %v9274 = vpop.f32.mrb[0].mxu0
        %v9275 = vadd.f32 %v9083, %v9274
        %v9276 = vpop.f32.mrb[0].mxu0
        %v9277 = vadd.f32 %v9085, %v9276
        %9278 = vdwg.mxu0
        %v9279 = vld [vmem:[%s8650] sm:$0x8]
        %v9280 = vld [vmem:[%s8650 + $0x4] sm:$0xf]
        %v9281 = vld [vmem:[%s8650 + $0x8] sm:$0x7]
        %v9282 = vld [vmem:[%s8650 + $0xc] sm:$0x8]
        %v9283 = vld [vmem:[%s8650 + $0x10] sm:$0xf]
        %v9284 = vld [vmem:[%s8650 + $0x14] sm:$0x7]
        %v9285 = vld [vmem:[%s8650 + $0x18] sm:$0x8]
        %v9286 = vld [vmem:[%s8650 + $0x1c] sm:$0xf]
        %v9287 = vld [vmem:[%s8650 + $0x20] sm:$0x7]
        %v9288 = vld [vmem:[%s8650 + $0x24] sm:$0x8]
        %v9289 = vld [vmem:[%s8650 + $0x28] sm:$0xf]
        %v9290 = vld [vmem:[%s8650 + $0x2c] sm:$0x7]
        %v9291 = vld [vmem:[%s8650 + $0x30] sm:$0x8]
        %v9292 = vld [vmem:[%s8650 + $0x34] sm:$0xf]
        %v9293 = vld [vmem:[%s8650 + $0x38] sm:$0x7]
        %v9294 = vld [vmem:[%s8650 + $0x3c] sm:$0x8]
        %v9295 = vld [vmem:[%s8650 + $0x40] sm:$0xf]
        %v9296 = vld [vmem:[%s8650 + $0x44] sm:$0x7]
        %v9297 = vld [vmem:[%s8650 + $0x48] sm:$0x8]
        %v9298 = vld [vmem:[%s8650 + $0x4c] sm:$0xf]
        %v9299 = vld [vmem:[%s8650 + $0x50] sm:$0x7]
        %v9300 = vld [vmem:[%s8650 + $0x54] sm:$0x8]
        %v9301 = vld [vmem:[%s8650 + $0x58] sm:$0xf]
        %v9302 = vld [vmem:[%s8650 + $0x5c] sm:$0x7]
        %vm9327 = vcmask 1040384
        %vm9328 = vcmask 1044484
        %vm9329 = vmor %vm9327, %vm9328
        %v9330 = vrot.slane %v9279, 7
        %v9331 = vrot.slane %v9330, 4
        %v9332 = vrot.slane %v9280, 7
        %v9333 = vsel %vm9329, %v9331, %v9332
        %v9334 = vrot.slane %v9332, 4
        %v9335 = vrot.slane %v9281, 7
        %v9336 = vsel %vm9329, %v9334, %v9335
        %v9337 = vrot.slane %v9282, 7
        %v9338 = vrot.slane %v9337, 4
        %v9339 = vrot.slane %v9283, 7
        %v9340 = vsel %vm9329, %v9338, %v9339
        %v9341 = vrot.slane %v9339, 4
        %v9342 = vrot.slane %v9284, 7
        %v9343 = vsel %vm9329, %v9341, %v9342
        %v9344 = vrot.slane %v9285, 7
        %v9345 = vrot.slane %v9344, 4
        %v9346 = vrot.slane %v9286, 7
        %v9347 = vsel %vm9329, %v9345, %v9346
        %v9348 = vrot.slane %v9346, 4
        %v9349 = vrot.slane %v9287, 7
        %v9350 = vsel %vm9329, %v9348, %v9349
        %v9351 = vrot.slane %v9288, 7
        %v9352 = vrot.slane %v9351, 4
        %v9353 = vrot.slane %v9289, 7
        %v9354 = vsel %vm9329, %v9352, %v9353
        %v9355 = vrot.slane %v9353, 4
        %v9356 = vrot.slane %v9290, 7
        %v9357 = vsel %vm9329, %v9355, %v9356
        %v9358 = vrot.slane %v9291, 7
        %v9359 = vrot.slane %v9358, 4
        %v9360 = vrot.slane %v9292, 7
        %v9361 = vsel %vm9329, %v9359, %v9360
        %v9362 = vrot.slane %v9360, 4
        %v9363 = vrot.slane %v9293, 7
        %v9364 = vsel %vm9329, %v9362, %v9363
        %v9365 = vrot.slane %v9294, 7
        %v9366 = vrot.slane %v9365, 4
        %v9367 = vrot.slane %v9295, 7
        %v9368 = vsel %vm9329, %v9366, %v9367
        %v9369 = vrot.slane %v9367, 4
        %v9370 = vrot.slane %v9296, 7
        %v9371 = vsel %vm9329, %v9369, %v9370
        %v9372 = vrot.slane %v9297, 7
        %v9373 = vrot.slane %v9372, 4
        %v9374 = vrot.slane %v9298, 7
        %v9375 = vsel %vm9329, %v9373, %v9374
        %v9376 = vrot.slane %v9374, 4
        %v9377 = vrot.slane %v9299, 7
        %v9378 = vsel %vm9329, %v9376, %v9377
        %v9379 = vrot.slane %v9300, 7
        %v9380 = vrot.slane %v9379, 4
        %v9381 = vrot.slane %v9301, 7
        %v9382 = vsel %vm9329, %v9380, %v9381
        %v9383 = vrot.slane %v9381, 4
        %v9384 = vrot.slane %v9302, 7
        %v9385 = vsel %vm9329, %v9383, %v9384
        %s9386 = scalar_lea.vmem %s3, 80
        %v9387 = vld [vmem:[%s9386] sm:$0xf]
        %v9388 = vunpack.c.l.b16 %v9333
        %v9389 = vunpack.c.l.b16 %v9336
        %v9390 = vunpack.c.l.b16 %v9340
        %v9391 = vunpack.c.l.b16 %v9343
        %v9392 = vunpack.c.l.b16 %v9347
        %v9393 = vunpack.c.l.b16 %v9350
        %v9394 = vunpack.c.l.b16 %v9354
        %v9395 = vunpack.c.l.b16 %v9357
        %v9396 = vunpack.c.l.b16 %v9361
        %v9397 = vunpack.c.l.b16 %v9364
        %v9398 = vunpack.c.l.b16 %v9368
        %v9399 = vunpack.c.l.b16 %v9371
        %v9400 = vunpack.c.l.b16 %v9375
        %v9401 = vunpack.c.l.b16 %v9378
        %v9402 = vunpack.c.l.b16 %v9382
        %v9403 = vunpack.c.l.b16 %v9385
        %v9404 = vpack.c.b16 %v9389, %v9388
        %v9405 = vpack.c.b16 %v9391, %v9390
        %v9406 = vpack.c.b16 %v9393, %v9392
        %v9407 = vpack.c.b16 %v9395, %v9394
        %v9408 = vpack.c.b16 %v9397, %v9396
        %v9409 = vpack.c.b16 %v9399, %v9398
        %v9410 = vpack.c.b16 %v9401, %v9400
        %v9411 = vpack.c.b16 %v9403, %v9402
        %v9414 = vunpack.c.l.s4 1983009808
        %v9415 = vunpack.c.0.s8 %v9414
        %v9416 = vlaneseq
        %v9417 = vshrl.u32 %v9416, 7
        %v9418 = vsub.s32 %v9415, %v9417
        %v9419 = vrot.slane %v9387, %v9418
        %v9420 = vcombine.high %v9419, %v9419
        %v9422 = vsel %vm615, %v9404, 0
        %v9425 = vsel %vm615, %v9405, 0
        %v9428 = vsel %vm615, %v9406, 0
        %v9431 = vsel %vm615, %v9407, 0
        %v9434 = vsel %vm615, %v9408, 0
        %v9437 = vsel %vm615, %v9409, 0
        %v9440 = vsel %vm615, %v9410, 0
        %v9443 = vsel %vm615, %v9411, 0
        %v9446 = vsel %vm640, %v9419, 0
        %v9449 = vsel %vm640, %v9420, 0
        %9451 = vmatprep.subr.bf16.mxu0 %v9449
        %9452 = vmatpush1.bf16.msra.mxu0 %v9446
        %9453 = vmatprep.subr.bf16.mxu0 0
        %9454 = vmatpush1.bf16.msra.mxu0 0
        %9455 = vmatprep.subr.bf16.mxu0 0
        %9456 = vmatpush1.bf16.msra.mxu0 0
        %9457 = vmatprep.subr.bf16.mxu0 0
        %9458 = vmatpush1.bf16.msra.mxu0 0
        %9459 = vmatprep.subr.bf16.mxu0 0
        %9460 = vmatpush1.bf16.msra.mxu0 0
        %9461 = vmatprep.subr.bf16.mxu0 0
        %9462 = vmatpush1.bf16.msra.mxu0 0
        %9463 = vmatprep.subr.bf16.mxu0 0
        %9464 = vmatpush1.bf16.msra.mxu0 0
        %9465 = vmatprep.subr.bf16.mxu0 0
        %9466 = vmatpush1.bf16.msra.mxu0 0
        %9467 = vmatprep.subr.bf16.mxu0 0
        %9468 = vmatpush1.bf16.msra.mxu0 0
        %9469 = vmatprep.subr.bf16.mxu0 0
        %9470 = vmatpush1.bf16.msra.mxu0 0
        %9471 = vmatprep.subr.bf16.mxu0 0
        %9472 = vmatpush1.bf16.msra.mxu0 0
        %9473 = vmatprep.subr.bf16.mxu0 0
        %9474 = vmatpush1.bf16.msra.mxu0 0
        %9475 = vmatprep.subr.bf16.mxu0 0
        %9476 = vmatpush1.bf16.msra.mxu0 0
        %9477 = vmatprep.subr.bf16.mxu0 0
        %9478 = vmatpush1.bf16.msra.mxu0 0
        %9479 = vmatprep.subr.bf16.mxu0 0
        %9480 = vmatpush1.bf16.msra.mxu0 0
        %9481 = vmatprep.subr.bf16.mxu0 0
        %9482 = vmatpush1.bf16.msra.mxu0 0
        %9483 = vmatprep.mubr.bf16.mxu0 0
        %9484 = vmatmul.mubr.bf16.gmra.mrb[0].mxu0 %v9422
        %v9485 = vpop.f32.mrb[0].mxu0
        %v9486 = vadd.f32 0.0, %v9485
        %v9487 = vpop.f32.mrb[0].mxu0
        %v9488 = vadd.f32 0.0, %v9487
        %v9489 = vpop.f32.mrb[0].mxu0
        %v9490 = vadd.f32 0.0, %v9489
        %v9491 = vpop.f32.mrb[0].mxu0
        %v9492 = vadd.f32 0.0, %v9491
        %9493 = vmatprep.mubr.bf16.mxu0 0
        %9494 = vmatmul.mubr.bf16.gmra.mrb[0].mxu0 %v9425
        %v9495 = vpop.f32.mrb[0].mxu0
        %v9496 = vadd.f32 0.0, %v9495
        %v9497 = vpop.f32.mrb[0].mxu0
        %v9498 = vadd.f32 0.0, %v9497
        %v9499 = vpop.f32.mrb[0].mxu0
        %v9500 = vadd.f32 0.0, %v9499
        %v9501 = vpop.f32.mrb[0].mxu0
        %v9502 = vadd.f32 0.0, %v9501
        %9503 = vmatprep.mubr.bf16.mxu0 0
        %9504 = vmatmul.mubr.bf16.gmra.mrb[0].mxu0 %v9428
        %v9505 = vpop.f32.mrb[0].mxu0
        %v9506 = vadd.f32 0.0, %v9505
        %v9507 = vpop.f32.mrb[0].mxu0
        %v9508 = vadd.f32 0.0, %v9507
        %v9509 = vpop.f32.mrb[0].mxu0
        %v9510 = vadd.f32 0.0, %v9509
        %v9511 = vpop.f32.mrb[0].mxu0
        %v9512 = vadd.f32 0.0, %v9511
        %9513 = vmatprep.mubr.bf16.mxu0 0
        %9514 = vmatmul.mubr.bf16.gmra.mrb[0].mxu0 %v9431
        %v9515 = vpop.f32.mrb[0].mxu0
        %v9516 = vadd.f32 0.0, %v9515
        %v9517 = vpop.f32.mrb[0].mxu0
        %v9518 = vadd.f32 0.0, %v9517
        %v9519 = vpop.f32.mrb[0].mxu0
        %v9520 = vadd.f32 0.0, %v9519
        %v9521 = vpop.f32.mrb[0].mxu0
        %v9522 = vadd.f32 0.0, %v9521
        %9523 = vmatprep.mubr.bf16.mxu0 0
        %9524 = vmatmul.mubr.bf16.gmra.mrb[0].mxu0 %v9434
        %v9525 = vpop.f32.mrb[0].mxu0
        %v9526 = vadd.f32 0.0, %v9525
        %v9527 = vpop.f32.mrb[0].mxu0
        %v9528 = vadd.f32 0.0, %v9527
        %v9529 = vpop.f32.mrb[0].mxu0
        %v9530 = vadd.f32 0.0, %v9529
        %v9531 = vpop.f32.mrb[0].mxu0
        %v9532 = vadd.f32 0.0, %v9531
        %9533 = vmatprep.mubr.bf16.mxu0 0
        %9534 = vmatmul.mubr.bf16.gmra.mrb[0].mxu0 %v9437
        %v9535 = vpop.f32.mrb[0].mxu0
        %v9536 = vadd.f32 0.0, %v9535
        %v9537 = vpop.f32.mrb[0].mxu0
        %v9538 = vadd.f32 0.0, %v9537
        %v9539 = vpop.f32.mrb[0].mxu0
        %v9540 = vadd.f32 0.0, %v9539
        %v9541 = vpop.f32.mrb[0].mxu0
        %v9542 = vadd.f32 0.0, %v9541
        %9543 = vmatprep.mubr.bf16.mxu0 0
        %9544 = vmatmul.mubr.bf16.gmra.mrb[0].mxu0 %v9440
        %v9545 = vpop.f32.mrb[0].mxu0
        %v9546 = vadd.f32 0.0, %v9545
        %v9547 = vpop.f32.mrb[0].mxu0
        %v9548 = vadd.f32 0.0, %v9547
        %v9549 = vpop.f32.mrb[0].mxu0
        %v9550 = vadd.f32 0.0, %v9549
        %v9551 = vpop.f32.mrb[0].mxu0
        %v9552 = vadd.f32 0.0, %v9551
        %9553 = vmatprep.mubr.bf16.mxu0 0
        %9554 = vmatmul.mubr.bf16.gmra.mrb[0].mxu0 %v9443
        %v9555 = vpop.f32.mrb[0].mxu0
        %v9556 = vadd.f32 0.0, %v9555
        %v9557 = vpop.f32.mrb[0].mxu0
        %v9558 = vadd.f32 0.0, %v9557
        %v9559 = vpop.f32.mrb[0].mxu0
        %v9560 = vadd.f32 0.0, %v9559
        %v9561 = vpop.f32.mrb[0].mxu0
        %v9562 = vadd.f32 0.0, %v9561
        %9563 = vdwg.mxu0
        %v9564 = vadd.f32 %v9201, %v9486
        %v9565 = vadd.f32 %v9203, %v9488
        %v9566 = vadd.f32 %v9205, %v9490
        %v9567 = vadd.f32 %v9207, %v9492
        %v9568 = vadd.f32 %v9211, %v9496
        %v9569 = vadd.f32 %v9213, %v9498
        %v9570 = vadd.f32 %v9215, %v9500
        %v9571 = vadd.f32 %v9217, %v9502
        %v9572 = vadd.f32 %v9221, %v9506
        %v9573 = vadd.f32 %v9223, %v9508
        %v9574 = vadd.f32 %v9225, %v9510
        %v9575 = vadd.f32 %v9227, %v9512
        %v9576 = vadd.f32 %v9231, %v9516
        %v9577 = vadd.f32 %v9233, %v9518
        %v9578 = vadd.f32 %v9235, %v9520
        %v9579 = vadd.f32 %v9237, %v9522
        %v9580 = vadd.f32 %v9241, %v9526
        %v9581 = vadd.f32 %v9243, %v9528
        %v9582 = vadd.f32 %v9245, %v9530
        %v9583 = vadd.f32 %v9247, %v9532
        %v9584 = vadd.f32 %v9251, %v9536
        %v9585 = vadd.f32 %v9253, %v9538
        %v9586 = vadd.f32 %v9255, %v9540
        %v9587 = vadd.f32 %v9257, %v9542
        %v9588 = vadd.f32 %v9261, %v9546
        %v9589 = vadd.f32 %v9263, %v9548
        %v9590 = vadd.f32 %v9265, %v9550
        %v9591 = vadd.f32 %v9267, %v9552
        %v9592 = vadd.f32 %v9271, %v9556
        %v9593 = vadd.f32 %v9273, %v9558
        %v9594 = vadd.f32 %v9275, %v9560
        %v9595 = vadd.f32 %v9277, %v9562
        %v9596 = vld [vmem:[%s329] sm:$0xf]
        %v9597 = vld [vmem:[%s329 + $0x4] sm:$0xf]
        %v9598 = vld [vmem:[%s329 + $0xc] sm:$0xf]
        %v9599 = vld [vmem:[%s329 + $0x10] sm:$0xf]
        %v9600 = vld [vmem:[%s329 + $0x18] sm:$0xf]
        %v9601 = vld [vmem:[%s329 + $0x1c] sm:$0xf]
        %v9602 = vld [vmem:[%s329 + $0x24] sm:$0xf]
        %v9603 = vld [vmem:[%s329 + $0x28] sm:$0xf]
        %v9604 = vld [vmem:[%s329 + $0x30] sm:$0xf]
        %v9605 = vld [vmem:[%s329 + $0x34] sm:$0xf]
        %v9606 = vld [vmem:[%s329 + $0x3c] sm:$0xf]
        %v9607 = vld [vmem:[%s329 + $0x40] sm:$0xf]
        %v9608 = vld [vmem:[%s329 + $0x48] sm:$0xf]
        %v9609 = vld [vmem:[%s329 + $0x4c] sm:$0xf]
        %v9610 = vld [vmem:[%s329 + $0x54] sm:$0xf]
        %v9611 = vld [vmem:[%s329 + $0x58] sm:$0xf]
        %s9612 = scalar_lea.vmem %s3, 84
        %v9613 = vld [vmem:[%s9612] sm:$0xf]
        %v9630 = vunpack.c.l.b16 %v9596
        %v9631 = vunpack.c.l.b16 %v9597
        %v9632 = vunpack.c.l.b16 %v9598
        %v9633 = vunpack.c.l.b16 %v9599
        %v9634 = vunpack.c.l.b16 %v9600
        %v9635 = vunpack.c.l.b16 %v9601
        %v9636 = vunpack.c.l.b16 %v9602
        %v9637 = vunpack.c.l.b16 %v9603
        %v9638 = vunpack.c.l.b16 %v9604
        %v9639 = vunpack.c.l.b16 %v9605
        %v9640 = vunpack.c.l.b16 %v9606
        %v9641 = vunpack.c.l.b16 %v9607
        %v9642 = vunpack.c.l.b16 %v9608
        %v9643 = vunpack.c.l.b16 %v9609
        %v9644 = vunpack.c.l.b16 %v9610
        %v9645 = vunpack.c.l.b16 %v9611
        %v9646 = vpack.c.b16 %v9631, %v9630
        %v9647 = vpack.c.b16 %v9633, %v9632
        %v9648 = vpack.c.b16 %v9635, %v9634
        %v9649 = vpack.c.b16 %v9637, %v9636
        %v9650 = vpack.c.b16 %v9639, %v9638
        %v9651 = vpack.c.b16 %v9641, %v9640
        %v9652 = vpack.c.b16 %v9643, %v9642
        %v9653 = vpack.c.b16 %v9645, %v9644
        %v9656 = vunpack.c.l.s4 1983009808
        %v9657 = vunpack.c.0.s8 %v9656
        %v9658 = vlaneseq
        %v9659 = vshrl.u32 %v9658, 7
        %v9660 = vsub.s32 %v9657, %v9659
        %v9661 = vrot.slane %v9613, %v9660
        %v9662 = vcombine.high %v9661, %v9661
        %v9664 = vsel %vm615, %v9646, 0
        %v9667 = vsel %vm615, %v9647, 0
        %v9670 = vsel %vm615, %v9648, 0
        %v9673 = vsel %vm615, %v9649, 0
        %v9676 = vsel %vm615, %v9650, 0
        %v9679 = vsel %vm615, %v9651, 0
        %v9682 = vsel %vm615, %v9652, 0
        %v9685 = vsel %vm615, %v9653, 0
        %v9688 = vsel %vm640, %v9661, 0
        %v9691 = vsel %vm640, %v9662, 0
        %9693 = vmatprep.subr.bf16.mxu0 %v9691
        %9694 = vmatpush1.bf16.msra.mxu0 %v9688
        %9695 = vmatprep.subr.bf16.mxu0 0
        %9696 = vmatpush1.bf16.msra.mxu0 0
        %9697 = vmatprep.subr.bf16.mxu0 0
        %9698 = vmatpush1.bf16.msra.mxu0 0
        %9699 = vmatprep.subr.bf16.mxu0 0
        %9700 = vmatpush1.bf16.msra.mxu0 0
        %9701 = vmatprep.subr.bf16.mxu0 0
        %9702 = vmatpush1.bf16.msra.mxu0 0
        %9703 = vmatprep.subr.bf16.mxu0 0
        %9704 = vmatpush1.bf16.msra.mxu0 0
        %9705 = vmatprep.subr.bf16.mxu0 0
        %9706 = vmatpush1.bf16.msra.mxu0 0
        %9707 = vmatprep.subr.bf16.mxu0 0
        %9708 = vmatpush1.bf16.msra.mxu0 0
        %9709 = vmatprep.subr.bf16.mxu0 0
        %9710 = vmatpush1.bf16.msra.mxu0 0
        %9711 = vmatprep.subr.bf16.mxu0 0
        %9712 = vmatpush1.bf16.msra.mxu0 0
        %9713 = vmatprep.subr.bf16.mxu0 0
        %9714 = vmatpush1.bf16.msra.mxu0 0
        %9715 = vmatprep.subr.bf16.mxu0 0
        %9716 = vmatpush1.bf16.msra.mxu0 0
        %9717 = vmatprep.subr.bf16.mxu0 0
        %9718 = vmatpush1.bf16.msra.mxu0 0
        %9719 = vmatprep.subr.bf16.mxu0 0
        %9720 = vmatpush1.bf16.msra.mxu0 0
        %9721 = vmatprep.subr.bf16.mxu0 0
        %9722 = vmatpush1.bf16.msra.mxu0 0
        %9723 = vmatprep.subr.bf16.mxu0 0
        %9724 = vmatpush1.bf16.msra.mxu0 0
        %9725 = vmatprep.mubr.bf16.mxu0 0
        %9726 = vmatmul.mubr.bf16.gmra.mrb[0].mxu0 %v9664
        %v9727 = vpop.f32.mrb[0].mxu0
        %v9728 = vadd.f32 0.0, %v9727
        %v9729 = vpop.f32.mrb[0].mxu0
        %v9730 = vadd.f32 0.0, %v9729
        %v9731 = vpop.f32.mrb[0].mxu0
        %v9732 = vadd.f32 0.0, %v9731
        %v9733 = vpop.f32.mrb[0].mxu0
        %v9734 = vadd.f32 0.0, %v9733
        %9735 = vmatprep.mubr.bf16.mxu0 0
        %9736 = vmatmul.mubr.bf16.gmra.mrb[0].mxu0 %v9667
        %v9737 = vpop.f32.mrb[0].mxu0
        %v9738 = vadd.f32 0.0, %v9737
        %v9739 = vpop.f32.mrb[0].mxu0
        %v9740 = vadd.f32 0.0, %v9739
        %v9741 = vpop.f32.mrb[0].mxu0
        %v9742 = vadd.f32 0.0, %v9741
        %v9743 = vpop.f32.mrb[0].mxu0
        %v9744 = vadd.f32 0.0, %v9743
        %9745 = vmatprep.mubr.bf16.mxu0 0
        %9746 = vmatmul.mubr.bf16.gmra.mrb[0].mxu0 %v9670
        %v9747 = vpop.f32.mrb[0].mxu0
        %v9748 = vadd.f32 0.0, %v9747
        %v9749 = vpop.f32.mrb[0].mxu0
        %v9750 = vadd.f32 0.0, %v9749
        %v9751 = vpop.f32.mrb[0].mxu0
        %v9752 = vadd.f32 0.0, %v9751
        %v9753 = vpop.f32.mrb[0].mxu0
        %v9754 = vadd.f32 0.0, %v9753
        %9755 = vmatprep.mubr.bf16.mxu0 0
        %9756 = vmatmul.mubr.bf16.gmra.mrb[0].mxu0 %v9673
        %v9757 = vpop.f32.mrb[0].mxu0
        %v9758 = vadd.f32 0.0, %v9757
        %v9759 = vpop.f32.mrb[0].mxu0
        %v9760 = vadd.f32 0.0, %v9759
        %v9761 = vpop.f32.mrb[0].mxu0
        %v9762 = vadd.f32 0.0, %v9761
        %v9763 = vpop.f32.mrb[0].mxu0
        %v9764 = vadd.f32 0.0, %v9763
        %9765 = vmatprep.mubr.bf16.mxu0 0
        %9766 = vmatmul.mubr.bf16.gmra.mrb[0].mxu0 %v9676
        %v9767 = vpop.f32.mrb[0].mxu0
        %v9768 = vadd.f32 0.0, %v9767
        %v9769 = vpop.f32.mrb[0].mxu0
        %v9770 = vadd.f32 0.0, %v9769
        %v9771 = vpop.f32.mrb[0].mxu0
        %v9772 = vadd.f32 0.0, %v9771
        %v9773 = vpop.f32.mrb[0].mxu0
        %v9774 = vadd.f32 0.0, %v9773
        %9775 = vmatprep.mubr.bf16.mxu0 0
        %9776 = vmatmul.mubr.bf16.gmra.mrb[0].mxu0 %v9679
        %v9777 = vpop.f32.mrb[0].mxu0
        %v9778 = vadd.f32 0.0, %v9777
        %v9779 = vpop.f32.mrb[0].mxu0
        %v9780 = vadd.f32 0.0, %v9779
        %v9781 = vpop.f32.mrb[0].mxu0
        %v9782 = vadd.f32 0.0, %v9781
        %v9783 = vpop.f32.mrb[0].mxu0
        %v9784 = vadd.f32 0.0, %v9783
        %9785 = vmatprep.mubr.bf16.mxu0 0
        %9786 = vmatmul.mubr.bf16.gmra.mrb[0].mxu0 %v9682
        %v9787 = vpop.f32.mrb[0].mxu0
        %v9788 = vadd.f32 0.0, %v9787
        %v9789 = vpop.f32.mrb[0].mxu0
        %v9790 = vadd.f32 0.0, %v9789
        %v9791 = vpop.f32.mrb[0].mxu0
        %v9792 = vadd.f32 0.0, %v9791
        %v9793 = vpop.f32.mrb[0].mxu0
        %v9794 = vadd.f32 0.0, %v9793
        %9795 = vmatprep.mubr.bf16.mxu0 0
        %9796 = vmatmul.mubr.bf16.gmra.mrb[0].mxu0 %v9685
        %v9797 = vpop.f32.mrb[0].mxu0
        %v9798 = vadd.f32 0.0, %v9797
        %v9799 = vpop.f32.mrb[0].mxu0
        %v9800 = vadd.f32 0.0, %v9799
        %v9801 = vpop.f32.mrb[0].mxu0
        %v9802 = vadd.f32 0.0, %v9801
        %v9803 = vpop.f32.mrb[0].mxu0
        %v9804 = vadd.f32 0.0, %v9803
        %9805 = vdwg.mxu0
        %v9806 = vadd.f32 %v9564, %v9728
        %v9807 = vadd.f32 %v9565, %v9730
        %v9808 = vadd.f32 %v9566, %v9732
        %v9809 = vadd.f32 %v9567, %v9734
        %v9810 = vadd.f32 %v9568, %v9738
        %v9811 = vadd.f32 %v9569, %v9740
        %v9812 = vadd.f32 %v9570, %v9742
        %v9813 = vadd.f32 %v9571, %v9744
        %v9814 = vadd.f32 %v9572, %v9748
        %v9815 = vadd.f32 %v9573, %v9750
        %v9816 = vadd.f32 %v9574, %v9752
        %v9817 = vadd.f32 %v9575, %v9754
        %v9818 = vadd.f32 %v9576, %v9758
        %v9819 = vadd.f32 %v9577, %v9760
        %v9820 = vadd.f32 %v9578, %v9762
        %v9821 = vadd.f32 %v9579, %v9764
        %v9822 = vadd.f32 %v9580, %v9768
        %v9823 = vadd.f32 %v9581, %v9770
        %v9824 = vadd.f32 %v9582, %v9772
        %v9825 = vadd.f32 %v9583, %v9774
        %v9826 = vadd.f32 %v9584, %v9778
        %v9827 = vadd.f32 %v9585, %v9780
        %v9828 = vadd.f32 %v9586, %v9782
        %v9829 = vadd.f32 %v9587, %v9784
        %v9830 = vadd.f32 %v9588, %v9788
        %v9831 = vadd.f32 %v9589, %v9790
        %v9832 = vadd.f32 %v9590, %v9792
        %v9833 = vadd.f32 %v9591, %v9794
        %v9834 = vadd.f32 %v9592, %v9798
        %v9835 = vadd.f32 %v9593, %v9800
        %v9836 = vadd.f32 %v9594, %v9802
        %v9837 = vadd.f32 %v9595, %v9804
        %s9838 = scalar_lea.vmem %s3, 88
        %v9839 = vld [vmem:[%s9838] sm:$0xf]
        %v9842 = vunpack.c.l.s4 1983009808
        %v9843 = vunpack.c.0.s8 %v9842
        %v9844 = vlaneseq
        %v9845 = vshrl.u32 %v9844, 7
        %v9846 = vsub.s32 %v9843, %v9845
        %v9847 = vrot.slane %v9839, %v9846
        %v9848 = vcombine.high %v9847, %v9847
        %v9850 = vsel %vm640, %v9847, 0
        %v9853 = vsel %vm640, %v9848, 0
        %9855 = vmatprep.subr.bf16.mxu0 %v9853
        %9856 = vmatpush1.bf16.msra.mxu0 %v9850
        %9857 = vmatprep.subr.bf16.mxu0 0
        %9858 = vmatpush1.bf16.msra.mxu0 0
        %9859 = vmatprep.subr.bf16.mxu0 0
        %9860 = vmatpush1.bf16.msra.mxu0 0
        %9861 = vmatprep.subr.bf16.mxu0 0
        %9862 = vmatpush1.bf16.msra.mxu0 0
        %9863 = vmatprep.subr.bf16.mxu0 0
        %9864 = vmatpush1.bf16.msra.mxu0 0
        %9865 = vmatprep.subr.bf16.mxu0 0
        %9866 = vmatpush1.bf16.msra.mxu0 0
        %9867 = vmatprep.subr.bf16.mxu0 0
        %9868 = vmatpush1.bf16.msra.mxu0 0
        %9869 = vmatprep.subr.bf16.mxu0 0
        %9870 = vmatpush1.bf16.msra.mxu0 0
        %9871 = vmatprep.subr.bf16.mxu0 0
        %9872 = vmatpush1.bf16.msra.mxu0 0
        %9873 = vmatprep.subr.bf16.mxu0 0
        %9874 = vmatpush1.bf16.msra.mxu0 0
        %9875 = vmatprep.subr.bf16.mxu0 0
        %9876 = vmatpush1.bf16.msra.mxu0 0
        %9877 = vmatprep.subr.bf16.mxu0 0
        %9878 = vmatpush1.bf16.msra.mxu0 0
        %9879 = vmatprep.subr.bf16.mxu0 0
        %9880 = vmatpush1.bf16.msra.mxu0 0
        %9881 = vmatprep.subr.bf16.mxu0 0
        %9882 = vmatpush1.bf16.msra.mxu0 0
        %9883 = vmatprep.subr.bf16.mxu0 0
        %9884 = vmatpush1.bf16.msra.mxu0 0
        %9885 = vmatprep.subr.bf16.mxu0 0
        %9886 = vmatpush1.bf16.msra.mxu0 0
        %9887 = vmatprep.mubr.bf16.mxu0 0
        %9888 = vmatmul.mubr.bf16.gmra.mrb[0].mxu0 %v617
        %v9889 = vpop.f32.mrb[0].mxu0
        %v9890 = vadd.f32 0.0, %v9889
        %v9891 = vpop.f32.mrb[0].mxu0
        %v9892 = vadd.f32 0.0, %v9891
        %v9893 = vpop.f32.mrb[0].mxu0
        %v9894 = vadd.f32 0.0, %v9893
        %v9895 = vpop.f32.mrb[0].mxu0
        %v9896 = vadd.f32 0.0, %v9895
        %9897 = vmatprep.mubr.bf16.mxu0 0
        %9898 = vmatmul.mubr.bf16.gmra.mrb[0].mxu0 %v620
        %v9899 = vpop.f32.mrb[0].mxu0
        %v9900 = vadd.f32 0.0, %v9899
        %v9901 = vpop.f32.mrb[0].mxu0
        %v9902 = vadd.f32 0.0, %v9901
        %v9903 = vpop.f32.mrb[0].mxu0
        %v9904 = vadd.f32 0.0, %v9903
        %v9905 = vpop.f32.mrb[0].mxu0
        %v9906 = vadd.f32 0.0, %v9905
        %9907 = vmatprep.mubr.bf16.mxu0 0
        %9908 = vmatmul.mubr.bf16.gmra.mrb[0].mxu0 %v623
        %v9909 = vpop.f32.mrb[0].mxu0
        %v9910 = vadd.f32 0.0, %v9909
        %v9911 = vpop.f32.mrb[0].mxu0
        %v9912 = vadd.f32 0.0, %v9911
        %v9913 = vpop.f32.mrb[0].mxu0
        %v9914 = vadd.f32 0.0, %v9913
        %v9915 = vpop.f32.mrb[0].mxu0
        %v9916 = vadd.f32 0.0, %v9915
        %9917 = vmatprep.mubr.bf16.mxu0 0
        %9918 = vmatmul.mubr.bf16.gmra.mrb[0].mxu0 %v626
        %v9919 = vpop.f32.mrb[0].mxu0
        %v9920 = vadd.f32 0.0, %v9919
        %v9921 = vpop.f32.mrb[0].mxu0
        %v9922 = vadd.f32 0.0, %v9921
        %v9923 = vpop.f32.mrb[0].mxu0
        %v9924 = vadd.f32 0.0, %v9923
        %v9925 = vpop.f32.mrb[0].mxu0
        %v9926 = vadd.f32 0.0, %v9925
        %9927 = vmatprep.mubr.bf16.mxu0 0
        %9928 = vmatmul.mubr.bf16.gmra.mrb[0].mxu0 %v629
        %v9929 = vpop.f32.mrb[0].mxu0
        %v9930 = vadd.f32 0.0, %v9929
        %v9931 = vpop.f32.mrb[0].mxu0
        %v9932 = vadd.f32 0.0, %v9931
        %v9933 = vpop.f32.mrb[0].mxu0
        %v9934 = vadd.f32 0.0, %v9933
        %v9935 = vpop.f32.mrb[0].mxu0
        %v9936 = vadd.f32 0.0, %v9935
        %9937 = vmatprep.mubr.bf16.mxu0 0
        %9938 = vmatmul.mubr.bf16.gmra.mrb[0].mxu0 %v632
        %v9939 = vpop.f32.mrb[0].mxu0
        %v9940 = vadd.f32 0.0, %v9939
        %v9941 = vpop.f32.mrb[0].mxu0
        %v9942 = vadd.f32 0.0, %v9941
        %v9943 = vpop.f32.mrb[0].mxu0
        %v9944 = vadd.f32 0.0, %v9943
        %v9945 = vpop.f32.mrb[0].mxu0
        %v9946 = vadd.f32 0.0, %v9945
        %9947 = vmatprep.mubr.bf16.mxu0 0
        %9948 = vmatmul.mubr.bf16.gmra.mrb[0].mxu0 %v635
        %v9949 = vpop.f32.mrb[0].mxu0
        %v9950 = vadd.f32 0.0, %v9949
        %v9951 = vpop.f32.mrb[0].mxu0
        %v9952 = vadd.f32 0.0, %v9951
        %v9953 = vpop.f32.mrb[0].mxu0
        %v9954 = vadd.f32 0.0, %v9953
        %v9955 = vpop.f32.mrb[0].mxu0
        %v9956 = vadd.f32 0.0, %v9955
        %9957 = vmatprep.mubr.bf16.mxu0 0
        %9958 = vmatmul.mubr.bf16.gmra.mrb[0].mxu0 %v638
        %v9959 = vpop.f32.mrb[0].mxu0
        %v9960 = vadd.f32 0.0, %v9959
        %v9961 = vpop.f32.mrb[0].mxu0
        %v9962 = vadd.f32 0.0, %v9961
        %v9963 = vpop.f32.mrb[0].mxu0
        %v9964 = vadd.f32 0.0, %v9963
        %v9965 = vpop.f32.mrb[0].mxu0
        %v9966 = vadd.f32 0.0, %v9965
        %9967 = vdwg.mxu0
        %v9968 = vadd.f32 %v9806, %v9890
        %v9969 = vadd.f32 %v9807, %v9892
        %v9970 = vadd.f32 %v9808, %v9894
        %v9971 = vadd.f32 %v9809, %v9896
        %v9972 = vadd.f32 %v9810, %v9900
        %v9973 = vadd.f32 %v9811, %v9902
        %v9974 = vadd.f32 %v9812, %v9904
        %v9975 = vadd.f32 %v9813, %v9906
        %v9976 = vadd.f32 %v9814, %v9910
        %v9977 = vadd.f32 %v9815, %v9912
        %v9978 = vadd.f32 %v9816, %v9914
        %v9979 = vadd.f32 %v9817, %v9916
        %v9980 = vadd.f32 %v9818, %v9920
        %v9981 = vadd.f32 %v9819, %v9922
        %v9982 = vadd.f32 %v9820, %v9924
        %v9983 = vadd.f32 %v9821, %v9926
        %v9984 = vadd.f32 %v9822, %v9930
        %v9985 = vadd.f32 %v9823, %v9932
        %v9986 = vadd.f32 %v9824, %v9934
        %v9987 = vadd.f32 %v9825, %v9936
        %v9988 = vadd.f32 %v9826, %v9940
        %v9989 = vadd.f32 %v9827, %v9942
        %v9990 = vadd.f32 %v9828, %v9944
        %v9991 = vadd.f32 %v9829, %v9946
        %v9992 = vadd.f32 %v9830, %v9950
        %v9993 = vadd.f32 %v9831, %v9952
        %v9994 = vadd.f32 %v9832, %v9954
        %v9995 = vadd.f32 %v9833, %v9956
        %v9996 = vadd.f32 %v9834, %v9960
        %v9997 = vadd.f32 %v9835, %v9962
        %v9998 = vadd.f32 %v9836, %v9964
        %v9999 = vadd.f32 %v9837, %v9966
        %v10000 = vld [vmem:[%s329] sm:$0x8]
        %v10001 = vld [vmem:[%s329 + $0x4] sm:$0xf]
        %v10002 = vld [vmem:[%s329 + $0x8] sm:$0x7]
        %v10003 = vld [vmem:[%s329 + $0xc] sm:$0x8]
        %v10004 = vld [vmem:[%s329 + $0x10] sm:$0xf]
        %v10005 = vld [vmem:[%s329 + $0x14] sm:$0x7]
        %v10006 = vld [vmem:[%s329 + $0x18] sm:$0x8]
        %v10007 = vld [vmem:[%s329 + $0x1c] sm:$0xf]
        %v10008 = vld [vmem:[%s329 + $0x20] sm:$0x7]
        %v10009 = vld [vmem:[%s329 + $0x24] sm:$0x8]
        %v10010 = vld [vmem:[%s329 + $0x28] sm:$0xf]
        %v10011 = vld [vmem:[%s329 + $0x2c] sm:$0x7]
        %v10012 = vld [vmem:[%s329 + $0x30] sm:$0x8]
        %v10013 = vld [vmem:[%s329 + $0x34] sm:$0xf]
        %v10014 = vld [vmem:[%s329 + $0x38] sm:$0x7]
        %v10015 = vld [vmem:[%s329 + $0x3c] sm:$0x8]
        %v10016 = vld [vmem:[%s329 + $0x40] sm:$0xf]
        %v10017 = vld [vmem:[%s329 + $0x44] sm:$0x7]
        %v10018 = vld [vmem:[%s329 + $0x48] sm:$0x8]
        %v10019 = vld [vmem:[%s329 + $0x4c] sm:$0xf]
        %v10020 = vld [vmem:[%s329 + $0x50] sm:$0x7]
        %v10021 = vld [vmem:[%s329 + $0x54] sm:$0x8]
        %v10022 = vld [vmem:[%s329 + $0x58] sm:$0xf]
        %v10023 = vld [vmem:[%s329 + $0x5c] sm:$0x7]
        %v10048 = vrot.slane %v10000, 7
        %v10049 = vrot.slane %v10048, 4
        %v10050 = vrot.slane %v10001, 7
        %v10051 = vsel %vm9329, %v10049, %v10050
        %v10052 = vrot.slane %v10050, 4
        %v10053 = vrot.slane %v10002, 7
        %v10054 = vsel %vm9329, %v10052, %v10053
        %v10055 = vrot.slane %v10003, 7
        %v10056 = vrot.slane %v10055, 4
        %v10057 = vrot.slane %v10004, 7
        %v10058 = vsel %vm9329, %v10056, %v10057
        %v10059 = vrot.slane %v10057, 4
        %v10060 = vrot.slane %v10005, 7
        %v10061 = vsel %vm9329, %v10059, %v10060
        %v10062 = vrot.slane %v10006, 7
        %v10063 = vrot.slane %v10062, 4
        %v10064 = vrot.slane %v10007, 7
        %v10065 = vsel %vm9329, %v10063, %v10064
        %v10066 = vrot.slane %v10064, 4
        %v10067 = vrot.slane %v10008, 7
        %v10068 = vsel %vm9329, %v10066, %v10067
        %v10069 = vrot.slane %v10009, 7
        %v10070 = vrot.slane %v10069, 4
        %v10071 = vrot.slane %v10010, 7
        %v10072 = vsel %vm9329, %v10070, %v10071
        %v10073 = vrot.slane %v10071, 4
        %v10074 = vrot.slane %v10011, 7
        %v10075 = vsel %vm9329, %v10073, %v10074
        %v10076 = vrot.slane %v10012, 7
        %v10077 = vrot.slane %v10076, 4
        %v10078 = vrot.slane %v10013, 7
        %v10079 = vsel %vm9329, %v10077, %v10078
        %v10080 = vrot.slane %v10078, 4
        %v10081 = vrot.slane %v10014, 7
        %v10082 = vsel %vm9329, %v10080, %v10081
        %v10083 = vrot.slane %v10015, 7
        %v10084 = vrot.slane %v10083, 4
        %v10085 = vrot.slane %v10016, 7
        %v10086 = vsel %vm9329, %v10084, %v10085
        %v10087 = vrot.slane %v10085, 4
        %v10088 = vrot.slane %v10017, 7
        %v10089 = vsel %vm9329, %v10087, %v10088
        %v10090 = vrot.slane %v10018, 7
        %v10091 = vrot.slane %v10090, 4
        %v10092 = vrot.slane %v10019, 7
        %v10093 = vsel %vm9329, %v10091, %v10092
        %v10094 = vrot.slane %v10092, 4
        %v10095 = vrot.slane %v10020, 7
        %v10096 = vsel %vm9329, %v10094, %v10095
        %v10097 = vrot.slane %v10021, 7
        %v10098 = vrot.slane %v10097, 4
        %v10099 = vrot.slane %v10022, 7
        %v10100 = vsel %vm9329, %v10098, %v10099
        %v10101 = vrot.slane %v10099, 4
        %v10102 = vrot.slane %v10023, 7
        %v10103 = vsel %vm9329, %v10101, %v10102
        %s10104 = scalar_lea.vmem %s3, 92
        %v10105 = vld [vmem:[%s10104] sm:$0xf]
        %v10106 = vunpack.c.l.b16 %v10051
        %v10107 = vunpack.c.l.b16 %v10054
        %v10108 = vunpack.c.l.b16 %v10058
        %v10109 = vunpack.c.l.b16 %v10061
        %v10110 = vunpack.c.l.b16 %v10065
        %v10111 = vunpack.c.l.b16 %v10068
        %v10112 = vunpack.c.l.b16 %v10072
        %v10113 = vunpack.c.l.b16 %v10075
        %v10114 = vunpack.c.l.b16 %v10079
        %v10115 = vunpack.c.l.b16 %v10082
        %v10116 = vunpack.c.l.b16 %v10086
        %v10117 = vunpack.c.l.b16 %v10089
        %v10118 = vunpack.c.l.b16 %v10093
        %v10119 = vunpack.c.l.b16 %v10096
        %v10120 = vunpack.c.l.b16 %v10100
        %v10121 = vunpack.c.l.b16 %v10103
        %v10122 = vpack.c.b16 %v10107, %v10106
        %v10123 = vpack.c.b16 %v10109, %v10108
        %v10124 = vpack.c.b16 %v10111, %v10110
        %v10125 = vpack.c.b16 %v10113, %v10112
        %v10126 = vpack.c.b16 %v10115, %v10114
        %v10127 = vpack.c.b16 %v10117, %v10116
        %v10128 = vpack.c.b16 %v10119, %v10118
        %v10129 = vpack.c.b16 %v10121, %v10120
        %v10132 = vunpack.c.l.s4 1983009808
        %v10133 = vunpack.c.0.s8 %v10132
        %v10134 = vlaneseq
        %v10135 = vshrl.u32 %v10134, 7
        %v10136 = vsub.s32 %v10133, %v10135
        %v10137 = vrot.slane %v10105, %v10136
        %v10138 = vcombine.high %v10137, %v10137
        %v10140 = vsel %vm615, %v10122, 0
        %v10143 = vsel %vm615, %v10123, 0
        %v10146 = vsel %vm615, %v10124, 0
        %v10149 = vsel %vm615, %v10125, 0
        %v10152 = vsel %vm615, %v10126, 0
        %v10155 = vsel %vm615, %v10127, 0
        %v10158 = vsel %vm615, %v10128, 0
        %v10161 = vsel %vm615, %v10129, 0
        %v10164 = vsel %vm640, %v10137, 0
        %v10167 = vsel %vm640, %v10138, 0
        %10169 = vmatprep.subr.bf16.mxu0 %v10167
        %10170 = vmatpush1.bf16.msra.mxu0 %v10164
        %10171 = vmatprep.subr.bf16.mxu0 0
        %10172 = vmatpush1.bf16.msra.mxu0 0
        %10173 = vmatprep.subr.bf16.mxu0 0
        %10174 = vmatpush1.bf16.msra.mxu0 0
        %10175 = vmatprep.subr.bf16.mxu0 0
        %10176 = vmatpush1.bf16.msra.mxu0 0
        %10177 = vmatprep.subr.bf16.mxu0 0
        %10178 = vmatpush1.bf16.msra.mxu0 0
        %10179 = vmatprep.subr.bf16.mxu0 0
        %10180 = vmatpush1.bf16.msra.mxu0 0
        %10181 = vmatprep.subr.bf16.mxu0 0
        %10182 = vmatpush1.bf16.msra.mxu0 0
        %10183 = vmatprep.subr.bf16.mxu0 0
        %10184 = vmatpush1.bf16.msra.mxu0 0
        %10185 = vmatprep.subr.bf16.mxu0 0
        %10186 = vmatpush1.bf16.msra.mxu0 0
        %10187 = vmatprep.subr.bf16.mxu0 0
        %10188 = vmatpush1.bf16.msra.mxu0 0
        %10189 = vmatprep.subr.bf16.mxu0 0
        %10190 = vmatpush1.bf16.msra.mxu0 0
        %10191 = vmatprep.subr.bf16.mxu0 0
        %10192 = vmatpush1.bf16.msra.mxu0 0
        %10193 = vmatprep.subr.bf16.mxu0 0
        %10194 = vmatpush1.bf16.msra.mxu0 0
        %10195 = vmatprep.subr.bf16.mxu0 0
        %10196 = vmatpush1.bf16.msra.mxu0 0
        %10197 = vmatprep.subr.bf16.mxu0 0
        %10198 = vmatpush1.bf16.msra.mxu0 0
        %10199 = vmatprep.subr.bf16.mxu0 0
        %10200 = vmatpush1.bf16.msra.mxu0 0
        %10201 = vmatprep.mubr.bf16.mxu0 0
        %10202 = vmatmul.mubr.bf16.gmra.mrb[0].mxu0 %v10140
        %v10203 = vpop.f32.mrb[0].mxu0
        %v10204 = vadd.f32 0.0, %v10203
        %v10205 = vpop.f32.mrb[0].mxu0
        %v10206 = vadd.f32 0.0, %v10205
        %v10207 = vpop.f32.mrb[0].mxu0
        %v10208 = vadd.f32 0.0, %v10207
        %v10209 = vpop.f32.mrb[0].mxu0
        %v10210 = vadd.f32 0.0, %v10209
        %10211 = vmatprep.mubr.bf16.mxu0 0
        %10212 = vmatmul.mubr.bf16.gmra.mrb[0].mxu0 %v10143
        %v10213 = vpop.f32.mrb[0].mxu0
        %v10214 = vadd.f32 0.0, %v10213
        %v10215 = vpop.f32.mrb[0].mxu0
        %v10216 = vadd.f32 0.0, %v10215
        %v10217 = vpop.f32.mrb[0].mxu0
        %v10218 = vadd.f32 0.0, %v10217
        %v10219 = vpop.f32.mrb[0].mxu0
        %v10220 = vadd.f32 0.0, %v10219
        %10221 = vmatprep.mubr.bf16.mxu0 0
        %10222 = vmatmul.mubr.bf16.gmra.mrb[0].mxu0 %v10146
        %v10223 = vpop.f32.mrb[0].mxu0
        %v10224 = vadd.f32 0.0, %v10223
        %v10225 = vpop.f32.mrb[0].mxu0
        %v10226 = vadd.f32 0.0, %v10225
        %v10227 = vpop.f32.mrb[0].mxu0
        %v10228 = vadd.f32 0.0, %v10227
        %v10229 = vpop.f32.mrb[0].mxu0
        %v10230 = vadd.f32 0.0, %v10229
        %10231 = vmatprep.mubr.bf16.mxu0 0
        %10232 = vmatmul.mubr.bf16.gmra.mrb[0].mxu0 %v10149
        %v10233 = vpop.f32.mrb[0].mxu0
        %v10234 = vadd.f32 0.0, %v10233
        %v10235 = vpop.f32.mrb[0].mxu0
        %v10236 = vadd.f32 0.0, %v10235
        %v10237 = vpop.f32.mrb[0].mxu0
        %v10238 = vadd.f32 0.0, %v10237
        %v10239 = vpop.f32.mrb[0].mxu0
        %v10240 = vadd.f32 0.0, %v10239
        %10241 = vmatprep.mubr.bf16.mxu0 0
        %10242 = vmatmul.mubr.bf16.gmra.mrb[0].mxu0 %v10152
        %v10243 = vpop.f32.mrb[0].mxu0
        %v10244 = vadd.f32 0.0, %v10243
        %v10245 = vpop.f32.mrb[0].mxu0
        %v10246 = vadd.f32 0.0, %v10245
        %v10247 = vpop.f32.mrb[0].mxu0
        %v10248 = vadd.f32 0.0, %v10247
        %v10249 = vpop.f32.mrb[0].mxu0
        %v10250 = vadd.f32 0.0, %v10249
        %10251 = vmatprep.mubr.bf16.mxu0 0
        %10252 = vmatmul.mubr.bf16.gmra.mrb[0].mxu0 %v10155
        %v10253 = vpop.f32.mrb[0].mxu0
        %v10254 = vadd.f32 0.0, %v10253
        %v10255 = vpop.f32.mrb[0].mxu0
        %v10256 = vadd.f32 0.0, %v10255
        %v10257 = vpop.f32.mrb[0].mxu0
        %v10258 = vadd.f32 0.0, %v10257
        %v10259 = vpop.f32.mrb[0].mxu0
        %v10260 = vadd.f32 0.0, %v10259
        %10261 = vmatprep.mubr.bf16.mxu0 0
        %10262 = vmatmul.mubr.bf16.gmra.mrb[0].mxu0 %v10158
        %v10263 = vpop.f32.mrb[0].mxu0
        %v10264 = vadd.f32 0.0, %v10263
        %v10265 = vpop.f32.mrb[0].mxu0
        %v10266 = vadd.f32 0.0, %v10265
        %v10267 = vpop.f32.mrb[0].mxu0
        %v10268 = vadd.f32 0.0, %v10267
        %v10269 = vpop.f32.mrb[0].mxu0
        %v10270 = vadd.f32 0.0, %v10269
        %10271 = vmatprep.mubr.bf16.mxu0 0
        %10272 = vmatmul.mubr.bf16.gmra.mrb[0].mxu0 %v10161
        %v10273 = vpop.f32.mrb[0].mxu0
        %v10274 = vadd.f32 0.0, %v10273
        %v10275 = vpop.f32.mrb[0].mxu0
        %v10276 = vadd.f32 0.0, %v10275
        %v10277 = vpop.f32.mrb[0].mxu0
        %v10278 = vadd.f32 0.0, %v10277
        %v10279 = vpop.f32.mrb[0].mxu0
        %v10280 = vadd.f32 0.0, %v10279
        %10281 = vdwg.mxu0
        %v10282 = vadd.f32 %v9968, %v10204
        %v10283 = vadd.f32 %v9969, %v10206
        %v10284 = vadd.f32 %v9970, %v10208
        %v10285 = vadd.f32 %v9971, %v10210
        %v10286 = vadd.f32 %v9972, %v10214
        %v10287 = vadd.f32 %v9973, %v10216
        %v10288 = vadd.f32 %v9974, %v10218
        %v10289 = vadd.f32 %v9975, %v10220
        %v10290 = vadd.f32 %v9976, %v10224
        %v10291 = vadd.f32 %v9977, %v10226
        %v10292 = vadd.f32 %v9978, %v10228
        %v10293 = vadd.f32 %v9979, %v10230
        %v10294 = vadd.f32 %v9980, %v10234
        %v10295 = vadd.f32 %v9981, %v10236
        %v10296 = vadd.f32 %v9982, %v10238
        %v10297 = vadd.f32 %v9983, %v10240
        %v10298 = vadd.f32 %v9984, %v10244
        %v10299 = vadd.f32 %v9985, %v10246
        %v10300 = vadd.f32 %v9986, %v10248
        %v10301 = vadd.f32 %v9987, %v10250
        %v10302 = vadd.f32 %v9988, %v10254
        %v10303 = vadd.f32 %v9989, %v10256
        %v10304 = vadd.f32 %v9990, %v10258
        %v10305 = vadd.f32 %v9991, %v10260
        %v10306 = vadd.f32 %v9992, %v10264
        %v10307 = vadd.f32 %v9993, %v10266
        %v10308 = vadd.f32 %v9994, %v10268
        %v10309 = vadd.f32 %v9995, %v10270
        %v10310 = vadd.f32 %v9996, %v10274
        %v10311 = vadd.f32 %v9997, %v10276
        %v10312 = vadd.f32 %v9998, %v10278
        %v10313 = vadd.f32 %v9999, %v10280
        %s10314 = sadd.s32 %s325, 6
        %s10315 = smul.u32 %s10314, 3
        %s10316 = smul.addr %s10315, 4
        %s10317 = scalar_lea.vmem %s318, %s10316
        %v10318 = vld [vmem:[%s10317] sm:$0xf]
        %v10319 = vld [vmem:[%s10317 + $0x4] sm:$0xf]
        %v10320 = vld [vmem:[%s10317 + $0xc] sm:$0xf]
        %v10321 = vld [vmem:[%s10317 + $0x10] sm:$0xf]
        %v10322 = vld [vmem:[%s10317 + $0x18] sm:$0xf]
        %v10323 = vld [vmem:[%s10317 + $0x1c] sm:$0xf]
        %v10324 = vld [vmem:[%s10317 + $0x24] sm:$0xf]
        %v10325 = vld [vmem:[%s10317 + $0x28] sm:$0xf]
        %v10326 = vld [vmem:[%s10317 + $0x30] sm:$0xf]
        %v10327 = vld [vmem:[%s10317 + $0x34] sm:$0xf]
        %v10328 = vld [vmem:[%s10317 + $0x3c] sm:$0xf]
        %v10329 = vld [vmem:[%s10317 + $0x40] sm:$0xf]
        %v10330 = vld [vmem:[%s10317 + $0x48] sm:$0xf]
        %v10331 = vld [vmem:[%s10317 + $0x4c] sm:$0xf]
        %v10332 = vld [vmem:[%s10317 + $0x54] sm:$0xf]
        %v10333 = vld [vmem:[%s10317 + $0x58] sm:$0xf]
        %s10334 = scalar_lea.vmem %s3, 96
        %v10335 = vld [vmem:[%s10334] sm:$0xf]
        %v10352 = vunpack.c.l.b16 %v10318
        %v10353 = vunpack.c.l.b16 %v10319
        %v10354 = vunpack.c.l.b16 %v10320
        %v10355 = vunpack.c.l.b16 %v10321
        %v10356 = vunpack.c.l.b16 %v10322
        %v10357 = vunpack.c.l.b16 %v10323
        %v10358 = vunpack.c.l.b16 %v10324
        %v10359 = vunpack.c.l.b16 %v10325
        %v10360 = vunpack.c.l.b16 %v10326
        %v10361 = vunpack.c.l.b16 %v10327
        %v10362 = vunpack.c.l.b16 %v10328
        %v10363 = vunpack.c.l.b16 %v10329
        %v10364 = vunpack.c.l.b16 %v10330
        %v10365 = vunpack.c.l.b16 %v10331
        %v10366 = vunpack.c.l.b16 %v10332
        %v10367 = vunpack.c.l.b16 %v10333
        %v10368 = vpack.c.b16 %v10353, %v10352
        %v10369 = vpack.c.b16 %v10355, %v10354
        %v10370 = vpack.c.b16 %v10357, %v10356
        %v10371 = vpack.c.b16 %v10359, %v10358
        %v10372 = vpack.c.b16 %v10361, %v10360
        %v10373 = vpack.c.b16 %v10363, %v10362
        %v10374 = vpack.c.b16 %v10365, %v10364
        %v10375 = vpack.c.b16 %v10367, %v10366
        %v10378 = vunpack.c.l.s4 1983009808
        %v10379 = vunpack.c.0.s8 %v10378
        %v10380 = vlaneseq
        %v10381 = vshrl.u32 %v10380, 7
        %v10382 = vsub.s32 %v10379, %v10381
        %v10383 = vrot.slane %v10335, %v10382
        %v10384 = vcombine.high %v10383, %v10383
        %v10386 = vsel %vm615, %v10368, 0
        %v10389 = vsel %vm615, %v10369, 0
        %v10392 = vsel %vm615, %v10370, 0
        %v10395 = vsel %vm615, %v10371, 0
        %v10398 = vsel %vm615, %v10372, 0
        %v10401 = vsel %vm615, %v10373, 0
        %v10404 = vsel %vm615, %v10374, 0
        %v10407 = vsel %vm615, %v10375, 0
        %v10410 = vsel %vm640, %v10383, 0
        %v10413 = vsel %vm640, %v10384, 0
        %10415 = vmatprep.subr.bf16.mxu0 %v10413
        %10416 = vmatpush1.bf16.msra.mxu0 %v10410
        %10417 = vmatprep.subr.bf16.mxu0 0
        %10418 = vmatpush1.bf16.msra.mxu0 0
        %10419 = vmatprep.subr.bf16.mxu0 0
        %10420 = vmatpush1.bf16.msra.mxu0 0
        %10421 = vmatprep.subr.bf16.mxu0 0
        %10422 = vmatpush1.bf16.msra.mxu0 0
        %10423 = vmatprep.subr.bf16.mxu0 0
        %10424 = vmatpush1.bf16.msra.mxu0 0
        %10425 = vmatprep.subr.bf16.mxu0 0
        %10426 = vmatpush1.bf16.msra.mxu0 0
        %10427 = vmatprep.subr.bf16.mxu0 0
        %10428 = vmatpush1.bf16.msra.mxu0 0
        %10429 = vmatprep.subr.bf16.mxu0 0
        %10430 = vmatpush1.bf16.msra.mxu0 0
        %10431 = vmatprep.subr.bf16.mxu0 0
        %10432 = vmatpush1.bf16.msra.mxu0 0
        %10433 = vmatprep.subr.bf16.mxu0 0
        %10434 = vmatpush1.bf16.msra.mxu0 0
        %10435 = vmatprep.subr.bf16.mxu0 0
        %10436 = vmatpush1.bf16.msra.mxu0 0
        %10437 = vmatprep.subr.bf16.mxu0 0
        %10438 = vmatpush1.bf16.msra.mxu0 0
        %10439 = vmatprep.subr.bf16.mxu0 0
        %10440 = vmatpush1.bf16.msra.mxu0 0
        %10441 = vmatprep.subr.bf16.mxu0 0
        %10442 = vmatpush1.bf16.msra.mxu0 0
        %10443 = vmatprep.subr.bf16.mxu0 0
        %10444 = vmatpush1.bf16.msra.mxu0 0
        %10445 = vmatprep.subr.bf16.mxu0 0
        %10446 = vmatpush1.bf16.msra.mxu0 0
        %10447 = vmatprep.mubr.bf16.mxu0 0
        %10448 = vmatmul.mubr.bf16.gmra.mrb[0].mxu0 %v10386
        %v10449 = vpop.f32.mrb[0].mxu0
        %v10450 = vadd.f32 0.0, %v10449
        %v10451 = vpop.f32.mrb[0].mxu0
        %v10452 = vadd.f32 0.0, %v10451
        %v10453 = vpop.f32.mrb[0].mxu0
        %v10454 = vadd.f32 0.0, %v10453
        %v10455 = vpop.f32.mrb[0].mxu0
        %v10456 = vadd.f32 0.0, %v10455
        %10457 = vmatprep.mubr.bf16.mxu0 0
        %10458 = vmatmul.mubr.bf16.gmra.mrb[0].mxu0 %v10389
        %v10459 = vpop.f32.mrb[0].mxu0
        %v10460 = vadd.f32 0.0, %v10459
        %v10461 = vpop.f32.mrb[0].mxu0
        %v10462 = vadd.f32 0.0, %v10461
        %v10463 = vpop.f32.mrb[0].mxu0
        %v10464 = vadd.f32 0.0, %v10463
        %v10465 = vpop.f32.mrb[0].mxu0
        %v10466 = vadd.f32 0.0, %v10465
        %10467 = vmatprep.mubr.bf16.mxu0 0
        %10468 = vmatmul.mubr.bf16.gmra.mrb[0].mxu0 %v10392
        %v10469 = vpop.f32.mrb[0].mxu0
        %v10470 = vadd.f32 0.0, %v10469
        %v10471 = vpop.f32.mrb[0].mxu0
        %v10472 = vadd.f32 0.0, %v10471
        %v10473 = vpop.f32.mrb[0].mxu0
        %v10474 = vadd.f32 0.0, %v10473
        %v10475 = vpop.f32.mrb[0].mxu0
        %v10476 = vadd.f32 0.0, %v10475
        %10477 = vmatprep.mubr.bf16.mxu0 0
        %10478 = vmatmul.mubr.bf16.gmra.mrb[0].mxu0 %v10395
        %v10479 = vpop.f32.mrb[0].mxu0
        %v10480 = vadd.f32 0.0, %v10479
        %v10481 = vpop.f32.mrb[0].mxu0
        %v10482 = vadd.f32 0.0, %v10481
        %v10483 = vpop.f32.mrb[0].mxu0
        %v10484 = vadd.f32 0.0, %v10483
        %v10485 = vpop.f32.mrb[0].mxu0
        %v10486 = vadd.f32 0.0, %v10485
        %10487 = vmatprep.mubr.bf16.mxu0 0
        %10488 = vmatmul.mubr.bf16.gmra.mrb[0].mxu0 %v10398
        %v10489 = vpop.f32.mrb[0].mxu0
        %v10490 = vadd.f32 0.0, %v10489
        %v10491 = vpop.f32.mrb[0].mxu0
        %v10492 = vadd.f32 0.0, %v10491
        %v10493 = vpop.f32.mrb[0].mxu0
        %v10494 = vadd.f32 0.0, %v10493
        %v10495 = vpop.f32.mrb[0].mxu0
        %v10496 = vadd.f32 0.0, %v10495
        %10497 = vmatprep.mubr.bf16.mxu0 0
        %10498 = vmatmul.mubr.bf16.gmra.mrb[0].mxu0 %v10401
        %v10499 = vpop.f32.mrb[0].mxu0
        %v10500 = vadd.f32 0.0, %v10499
        %v10501 = vpop.f32.mrb[0].mxu0
        %v10502 = vadd.f32 0.0, %v10501
        %v10503 = vpop.f32.mrb[0].mxu0
        %v10504 = vadd.f32 0.0, %v10503
        %v10505 = vpop.f32.mrb[0].mxu0
        %v10506 = vadd.f32 0.0, %v10505
        %10507 = vmatprep.mubr.bf16.mxu0 0
        %10508 = vmatmul.mubr.bf16.gmra.mrb[0].mxu0 %v10404
        %v10509 = vpop.f32.mrb[0].mxu0
        %v10510 = vadd.f32 0.0, %v10509
        %v10511 = vpop.f32.mrb[0].mxu0
        %v10512 = vadd.f32 0.0, %v10511
        %v10513 = vpop.f32.mrb[0].mxu0
        %v10514 = vadd.f32 0.0, %v10513
        %v10515 = vpop.f32.mrb[0].mxu0
        %v10516 = vadd.f32 0.0, %v10515
        %10517 = vmatprep.mubr.bf16.mxu0 0
        %10518 = vmatmul.mubr.bf16.gmra.mrb[0].mxu0 %v10407
        %v10519 = vpop.f32.mrb[0].mxu0
        %v10520 = vadd.f32 0.0, %v10519
        %v10521 = vpop.f32.mrb[0].mxu0
        %v10522 = vadd.f32 0.0, %v10521
        %v10523 = vpop.f32.mrb[0].mxu0
        %v10524 = vadd.f32 0.0, %v10523
        %v10525 = vpop.f32.mrb[0].mxu0
        %v10526 = vadd.f32 0.0, %v10525
        %10527 = vdwg.mxu0
        %v10528 = vadd.f32 %v10282, %v10450
        %v10529 = vadd.f32 %v10283, %v10452
        %v10530 = vadd.f32 %v10284, %v10454
        %v10531 = vadd.f32 %v10285, %v10456
        %v10532 = vadd.f32 %v10286, %v10460
        %v10533 = vadd.f32 %v10287, %v10462
        %v10534 = vadd.f32 %v10288, %v10464
        %v10535 = vadd.f32 %v10289, %v10466
        %v10536 = vadd.f32 %v10290, %v10470
        %v10537 = vadd.f32 %v10291, %v10472
        %v10538 = vadd.f32 %v10292, %v10474
        %v10539 = vadd.f32 %v10293, %v10476
        %v10540 = vadd.f32 %v10294, %v10480
        %v10541 = vadd.f32 %v10295, %v10482
        %v10542 = vadd.f32 %v10296, %v10484
        %v10543 = vadd.f32 %v10297, %v10486
        %v10544 = vadd.f32 %v10298, %v10490
        %v10545 = vadd.f32 %v10299, %v10492
        %v10546 = vadd.f32 %v10300, %v10494
        %v10547 = vadd.f32 %v10301, %v10496
        %v10548 = vadd.f32 %v10302, %v10500
        %v10549 = vadd.f32 %v10303, %v10502
        %v10550 = vadd.f32 %v10304, %v10504
        %v10551 = vadd.f32 %v10305, %v10506
        %v10552 = vadd.f32 %v10306, %v10510
        %v10553 = vadd.f32 %v10307, %v10512
        %v10554 = vadd.f32 %v10308, %v10514
        %v10555 = vadd.f32 %v10309, %v10516
        %v10556 = vadd.f32 %v10310, %v10520
        %v10557 = vadd.f32 %v10311, %v10522
        %v10558 = vadd.f32 %v10312, %v10524
        %v10559 = vadd.f32 %v10313, %v10526
        %v10560 = vld [vmem:[%s10317] sm:$0xe]
        %v10561 = vld [vmem:[%s10317 + $0x4] sm:$0xf]
        %v10562 = vld [vmem:[%s10317 + $0x8] sm:$0x3]
        %v10563 = vld [vmem:[%s10317 + $0xc] sm:$0xe]
        %v10564 = vld [vmem:[%s10317 + $0x10] sm:$0xf]
        %v10565 = vld [vmem:[%s10317 + $0x14] sm:$0x3]
        %v10566 = vld [vmem:[%s10317 + $0x18] sm:$0xe]
        %v10567 = vld [vmem:[%s10317 + $0x1c] sm:$0xf]
        %v10568 = vld [vmem:[%s10317 + $0x20] sm:$0x3]
        %v10569 = vld [vmem:[%s10317 + $0x24] sm:$0xe]
        %v10570 = vld [vmem:[%s10317 + $0x28] sm:$0xf]
        %v10571 = vld [vmem:[%s10317 + $0x2c] sm:$0x3]
        %v10572 = vld [vmem:[%s10317 + $0x30] sm:$0xe]
        %v10573 = vld [vmem:[%s10317 + $0x34] sm:$0xf]
        %v10574 = vld [vmem:[%s10317 + $0x38] sm:$0x3]
        %v10575 = vld [vmem:[%s10317 + $0x3c] sm:$0xe]
        %v10576 = vld [vmem:[%s10317 + $0x40] sm:$0xf]
        %v10577 = vld [vmem:[%s10317 + $0x44] sm:$0x3]
        %v10578 = vld [vmem:[%s10317 + $0x48] sm:$0xe]
        %v10579 = vld [vmem:[%s10317 + $0x4c] sm:$0xf]
        %v10580 = vld [vmem:[%s10317 + $0x50] sm:$0x3]
        %v10581 = vld [vmem:[%s10317 + $0x54] sm:$0xe]
        %v10582 = vld [vmem:[%s10317 + $0x58] sm:$0xf]
        %v10583 = vld [vmem:[%s10317 + $0x5c] sm:$0x3]
        %v10585 = vshrl.u32 %v10560, 16
        %v10587 = vrot.slane %v10585, 5
        %v10588 = vshll.u32 %v10560, 16
        %v10590 = vrot.slane %v10588, 6
        %v10591 = vor.u32 %v10587, %v10590
        %v10592 = vrot.slane %v10591, 4
        %v10594 = vshrl.u32 %v10561, 16
        %v10596 = vrot.slane %v10594, 5
        %v10597 = vshll.u32 %v10561, 16
        %v10599 = vrot.slane %v10597, 6
        %v10600 = vor.u32 %v10596, %v10599
        %v10601 = vsel %vm356, %v10592, %v10600
        %v10602 = vrot.slane %v10600, 4
        %v10604 = vshrl.u32 %v10562, 16
        %v10606 = vrot.slane %v10604, 5
        %v10607 = vshll.u32 %v10562, 16
        %v10609 = vrot.slane %v10607, 6
        %v10610 = vor.u32 %v10606, %v10609
        %v10611 = vsel %vm356, %v10602, %v10610
        %v10613 = vshrl.u32 %v10563, 16
        %v10615 = vrot.slane %v10613, 5
        %v10616 = vshll.u32 %v10563, 16
        %v10618 = vrot.slane %v10616, 6
        %v10619 = vor.u32 %v10615, %v10618
        %v10620 = vrot.slane %v10619, 4
        %v10622 = vshrl.u32 %v10564, 16
        %v10624 = vrot.slane %v10622, 5
        %v10625 = vshll.u32 %v10564, 16
        %v10627 = vrot.slane %v10625, 6
        %v10628 = vor.u32 %v10624, %v10627
        %v10629 = vsel %vm356, %v10620, %v10628
        %v10630 = vrot.slane %v10628, 4
        %v10632 = vshrl.u32 %v10565, 16
        %v10634 = vrot.slane %v10632, 5
        %v10635 = vshll.u32 %v10565, 16
        %v10637 = vrot.slane %v10635, 6
        %v10638 = vor.u32 %v10634, %v10637
        %v10639 = vsel %vm356, %v10630, %v10638
        %v10641 = vshrl.u32 %v10566, 16
        %v10643 = vrot.slane %v10641, 5
        %v10644 = vshll.u32 %v10566, 16
        %v10646 = vrot.slane %v10644, 6
        %v10647 = vor.u32 %v10643, %v10646
        %v10648 = vrot.slane %v10647, 4
        %v10650 = vshrl.u32 %v10567, 16
        %v10652 = vrot.slane %v10650, 5
        %v10653 = vshll.u32 %v10567, 16
        %v10655 = vrot.slane %v10653, 6
        %v10656 = vor.u32 %v10652, %v10655
        %v10657 = vsel %vm356, %v10648, %v10656
        %v10658 = vrot.slane %v10656, 4
        %v10660 = vshrl.u32 %v10568, 16
        %v10662 = vrot.slane %v10660, 5
        %v10663 = vshll.u32 %v10568, 16
        %v10665 = vrot.slane %v10663, 6
        %v10666 = vor.u32 %v10662, %v10665
        %v10667 = vsel %vm356, %v10658, %v10666
        %v10669 = vshrl.u32 %v10569, 16
        %v10671 = vrot.slane %v10669, 5
        %v10672 = vshll.u32 %v10569, 16
        %v10674 = vrot.slane %v10672, 6
        %v10675 = vor.u32 %v10671, %v10674
        %v10676 = vrot.slane %v10675, 4
        %v10678 = vshrl.u32 %v10570, 16
        %v10680 = vrot.slane %v10678, 5
        %v10681 = vshll.u32 %v10570, 16
        %v10683 = vrot.slane %v10681, 6
        %v10684 = vor.u32 %v10680, %v10683
        %v10685 = vsel %vm356, %v10676, %v10684
        %v10686 = vrot.slane %v10684, 4
        %v10688 = vshrl.u32 %v10571, 16
        %v10690 = vrot.slane %v10688, 5
        %v10691 = vshll.u32 %v10571, 16
        %v10693 = vrot.slane %v10691, 6
        %v10694 = vor.u32 %v10690, %v10693
        %v10695 = vsel %vm356, %v10686, %v10694
        %v10697 = vshrl.u32 %v10572, 16
        %v10699 = vrot.slane %v10697, 5
        %v10700 = vshll.u32 %v10572, 16
        %v10702 = vrot.slane %v10700, 6
        %v10703 = vor.u32 %v10699, %v10702
        %v10704 = vrot.slane %v10703, 4
        %v10706 = vshrl.u32 %v10573, 16
        %v10708 = vrot.slane %v10706, 5
        %v10709 = vshll.u32 %v10573, 16
        %v10711 = vrot.slane %v10709, 6
        %v10712 = vor.u32 %v10708, %v10711
        %v10713 = vsel %vm356, %v10704, %v10712
        %v10714 = vrot.slane %v10712, 4
        %v10716 = vshrl.u32 %v10574, 16
        %v10718 = vrot.slane %v10716, 5
        %v10719 = vshll.u32 %v10574, 16
        %v10721 = vrot.slane %v10719, 6
        %v10722 = vor.u32 %v10718, %v10721
        %v10723 = vsel %vm356, %v10714, %v10722
        %v10725 = vshrl.u32 %v10575, 16
        %v10727 = vrot.slane %v10725, 5
        %v10728 = vshll.u32 %v10575, 16
        %v10730 = vrot.slane %v10728, 6
        %v10731 = vor.u32 %v10727, %v10730
        %v10732 = vrot.slane %v10731, 4
        %v10734 = vshrl.u32 %v10576, 16
        %v10736 = vrot.slane %v10734, 5
        %v10737 = vshll.u32 %v10576, 16
        %v10739 = vrot.slane %v10737, 6
        %v10740 = vor.u32 %v10736, %v10739
        %v10741 = vsel %vm356, %v10732, %v10740
        %v10742 = vrot.slane %v10740, 4
        %v10744 = vshrl.u32 %v10577, 16
        %v10746 = vrot.slane %v10744, 5
        %v10747 = vshll.u32 %v10577, 16
        %v10749 = vrot.slane %v10747, 6
        %v10750 = vor.u32 %v10746, %v10749
        %v10751 = vsel %vm356, %v10742, %v10750
        %v10753 = vshrl.u32 %v10578, 16
        %v10755 = vrot.slane %v10753, 5
        %v10756 = vshll.u32 %v10578, 16
        %v10758 = vrot.slane %v10756, 6
        %v10759 = vor.u32 %v10755, %v10758
        %v10760 = vrot.slane %v10759, 4
        %v10762 = vshrl.u32 %v10579, 16
        %v10764 = vrot.slane %v10762, 5
        %v10765 = vshll.u32 %v10579, 16
        %v10767 = vrot.slane %v10765, 6
        %v10768 = vor.u32 %v10764, %v10767
        %v10769 = vsel %vm356, %v10760, %v10768
        %v10770 = vrot.slane %v10768, 4
        %v10772 = vshrl.u32 %v10580, 16
        %v10774 = vrot.slane %v10772, 5
        %v10775 = vshll.u32 %v10580, 16
        %v10777 = vrot.slane %v10775, 6
        %v10778 = vor.u32 %v10774, %v10777
        %v10779 = vsel %vm356, %v10770, %v10778
        %v10781 = vshrl.u32 %v10581, 16
        %v10783 = vrot.slane %v10781, 5
        %v10784 = vshll.u32 %v10581, 16
        %v10786 = vrot.slane %v10784, 6
        %v10787 = vor.u32 %v10783, %v10786
        %v10788 = vrot.slane %v10787, 4
        %v10790 = vshrl.u32 %v10582, 16
        %v10792 = vrot.slane %v10790, 5
        %v10793 = vshll.u32 %v10582, 16
        %v10795 = vrot.slane %v10793, 6
        %v10796 = vor.u32 %v10792, %v10795
        %v10797 = vsel %vm356, %v10788, %v10796
        %v10798 = vrot.slane %v10796, 4
        %v10800 = vshrl.u32 %v10583, 16
        %v10802 = vrot.slane %v10800, 5
        %v10803 = vshll.u32 %v10583, 16
        %v10805 = vrot.slane %v10803, 6
        %v10806 = vor.u32 %v10802, %v10805
        %v10807 = vsel %vm356, %v10798, %v10806
        %s10808 = scalar_lea.vmem %s3, 100
        %v10809 = vld [vmem:[%s10808] sm:$0xf]
        %v10810 = vunpack.c.l.b16 %v10601
        %v10811 = vunpack.c.l.b16 %v10611
        %v10812 = vunpack.c.l.b16 %v10629
        %v10813 = vunpack.c.l.b16 %v10639
        %v10814 = vunpack.c.l.b16 %v10657
        %v10815 = vunpack.c.l.b16 %v10667
        %v10816 = vunpack.c.l.b16 %v10685
        %v10817 = vunpack.c.l.b16 %v10695
        %v10818 = vunpack.c.l.b16 %v10713
        %v10819 = vunpack.c.l.b16 %v10723
        %v10820 = vunpack.c.l.b16 %v10741
        %v10821 = vunpack.c.l.b16 %v10751
        %v10822 = vunpack.c.l.b16 %v10769
        %v10823 = vunpack.c.l.b16 %v10779
        %v10824 = vunpack.c.l.b16 %v10797
        %v10825 = vunpack.c.l.b16 %v10807
        %v10826 = vpack.c.b16 %v10811, %v10810
        %v10827 = vpack.c.b16 %v10813, %v10812
        %v10828 = vpack.c.b16 %v10815, %v10814
        %v10829 = vpack.c.b16 %v10817, %v10816
        %v10830 = vpack.c.b16 %v10819, %v10818
        %v10831 = vpack.c.b16 %v10821, %v10820
        %v10832 = vpack.c.b16 %v10823, %v10822
        %v10833 = vpack.c.b16 %v10825, %v10824
        %v10836 = vunpack.c.l.s4 1983009808
        %v10837 = vunpack.c.0.s8 %v10836
        %v10838 = vlaneseq
        %v10839 = vshrl.u32 %v10838, 7
        %v10840 = vsub.s32 %v10837, %v10839
        %v10841 = vrot.slane %v10809, %v10840
        %v10842 = vcombine.high %v10841, %v10841
        %v10844 = vsel %vm615, %v10826, 0
        %v10847 = vsel %vm615, %v10827, 0
        %v10850 = vsel %vm615, %v10828, 0
        %v10853 = vsel %vm615, %v10829, 0
        %v10856 = vsel %vm615, %v10830, 0
        %v10859 = vsel %vm615, %v10831, 0
        %v10862 = vsel %vm615, %v10832, 0
        %v10865 = vsel %vm615, %v10833, 0
        %v10868 = vsel %vm640, %v10841, 0
        %v10871 = vsel %vm640, %v10842, 0
        %10873 = vmatprep.subr.bf16.mxu0 %v10871
        %10874 = vmatpush1.bf16.msra.mxu0 %v10868
        %10875 = vmatprep.subr.bf16.mxu0 0
        %10876 = vmatpush1.bf16.msra.mxu0 0
        %10877 = vmatprep.subr.bf16.mxu0 0
        %10878 = vmatpush1.bf16.msra.mxu0 0
        %10879 = vmatprep.subr.bf16.mxu0 0
        %10880 = vmatpush1.bf16.msra.mxu0 0
        %10881 = vmatprep.subr.bf16.mxu0 0
        %10882 = vmatpush1.bf16.msra.mxu0 0
        %10883 = vmatprep.subr.bf16.mxu0 0
        %10884 = vmatpush1.bf16.msra.mxu0 0
        %10885 = vmatprep.subr.bf16.mxu0 0
        %10886 = vmatpush1.bf16.msra.mxu0 0
        %10887 = vmatprep.subr.bf16.mxu0 0
        %10888 = vmatpush1.bf16.msra.mxu0 0
        %10889 = vmatprep.subr.bf16.mxu0 0
        %10890 = vmatpush1.bf16.msra.mxu0 0
        %10891 = vmatprep.subr.bf16.mxu0 0
        %10892 = vmatpush1.bf16.msra.mxu0 0
        %10893 = vmatprep.subr.bf16.mxu0 0
        %10894 = vmatpush1.bf16.msra.mxu0 0
        %10895 = vmatprep.subr.bf16.mxu0 0
        %10896 = vmatpush1.bf16.msra.mxu0 0
        %10897 = vmatprep.subr.bf16.mxu0 0
        %10898 = vmatpush1.bf16.msra.mxu0 0
        %10899 = vmatprep.subr.bf16.mxu0 0
        %10900 = vmatpush1.bf16.msra.mxu0 0
        %10901 = vmatprep.subr.bf16.mxu0 0
        %10902 = vmatpush1.bf16.msra.mxu0 0
        %10903 = vmatprep.subr.bf16.mxu0 0
        %10904 = vmatpush1.bf16.msra.mxu0 0
        %10905 = vmatprep.mubr.bf16.mxu0 0
        %10906 = vmatmul.mubr.bf16.gmra.mrb[0].mxu0 %v10844
        %v10907 = vpop.f32.mrb[0].mxu0
        %v10908 = vadd.f32 0.0, %v10907
        %v10909 = vpop.f32.mrb[0].mxu0
        %v10910 = vadd.f32 0.0, %v10909
        %v10911 = vpop.f32.mrb[0].mxu0
        %v10912 = vadd.f32 0.0, %v10911
        %v10913 = vpop.f32.mrb[0].mxu0
        %v10914 = vadd.f32 0.0, %v10913
        %10915 = vmatprep.mubr.bf16.mxu0 0
        %10916 = vmatmul.mubr.bf16.gmra.mrb[0].mxu0 %v10847
        %v10917 = vpop.f32.mrb[0].mxu0
        %v10918 = vadd.f32 0.0, %v10917
        %v10919 = vpop.f32.mrb[0].mxu0
        %v10920 = vadd.f32 0.0, %v10919
        %v10921 = vpop.f32.mrb[0].mxu0
        %v10922 = vadd.f32 0.0, %v10921
        %v10923 = vpop.f32.mrb[0].mxu0
        %v10924 = vadd.f32 0.0, %v10923
        %10925 = vmatprep.mubr.bf16.mxu0 0
        %10926 = vmatmul.mubr.bf16.gmra.mrb[0].mxu0 %v10850
        %v10927 = vpop.f32.mrb[0].mxu0
        %v10928 = vadd.f32 0.0, %v10927
        %v10929 = vpop.f32.mrb[0].mxu0
        %v10930 = vadd.f32 0.0, %v10929
        %v10931 = vpop.f32.mrb[0].mxu0
        %v10932 = vadd.f32 0.0, %v10931
        %v10933 = vpop.f32.mrb[0].mxu0
        %v10934 = vadd.f32 0.0, %v10933
        %10935 = vmatprep.mubr.bf16.mxu0 0
        %10936 = vmatmul.mubr.bf16.gmra.mrb[0].mxu0 %v10853
        %v10937 = vpop.f32.mrb[0].mxu0
        %v10938 = vadd.f32 0.0, %v10937
        %v10939 = vpop.f32.mrb[0].mxu0
        %v10940 = vadd.f32 0.0, %v10939
        %v10941 = vpop.f32.mrb[0].mxu0
        %v10942 = vadd.f32 0.0, %v10941
        %v10943 = vpop.f32.mrb[0].mxu0
        %v10944 = vadd.f32 0.0, %v10943
        %10945 = vmatprep.mubr.bf16.mxu0 0
        %10946 = vmatmul.mubr.bf16.gmra.mrb[0].mxu0 %v10856
        %v10947 = vpop.f32.mrb[0].mxu0
        %v10948 = vadd.f32 0.0, %v10947
        %v10949 = vpop.f32.mrb[0].mxu0
        %v10950 = vadd.f32 0.0, %v10949
        %v10951 = vpop.f32.mrb[0].mxu0
        %v10952 = vadd.f32 0.0, %v10951
        %v10953 = vpop.f32.mrb[0].mxu0
        %v10954 = vadd.f32 0.0, %v10953
        %10955 = vmatprep.mubr.bf16.mxu0 0
        %10956 = vmatmul.mubr.bf16.gmra.mrb[0].mxu0 %v10859
        %v10957 = vpop.f32.mrb[0].mxu0
        %v10958 = vadd.f32 0.0, %v10957
        %v10959 = vpop.f32.mrb[0].mxu0
        %v10960 = vadd.f32 0.0, %v10959
        %v10961 = vpop.f32.mrb[0].mxu0
        %v10962 = vadd.f32 0.0, %v10961
        %v10963 = vpop.f32.mrb[0].mxu0
        %v10964 = vadd.f32 0.0, %v10963
        %10965 = vmatprep.mubr.bf16.mxu0 0
        %10966 = vmatmul.mubr.bf16.gmra.mrb[0].mxu0 %v10862
        %v10967 = vpop.f32.mrb[0].mxu0
        %v10968 = vadd.f32 0.0, %v10967
        %v10969 = vpop.f32.mrb[0].mxu0
        %v10970 = vadd.f32 0.0, %v10969
        %v10971 = vpop.f32.mrb[0].mxu0
        %v10972 = vadd.f32 0.0, %v10971
        %v10973 = vpop.f32.mrb[0].mxu0
        %v10974 = vadd.f32 0.0, %v10973
        %10975 = vmatprep.mubr.bf16.mxu0 0
        %10976 = vmatmul.mubr.bf16.gmra.mrb[0].mxu0 %v10865
        %v10977 = vpop.f32.mrb[0].mxu0
        %v10978 = vadd.f32 0.0, %v10977
        %v10979 = vpop.f32.mrb[0].mxu0
        %v10980 = vadd.f32 0.0, %v10979
        %v10981 = vpop.f32.mrb[0].mxu0
        %v10982 = vadd.f32 0.0, %v10981
        %v10983 = vpop.f32.mrb[0].mxu0
        %v10984 = vadd.f32 0.0, %v10983
        %10985 = vdwg.mxu0
        %v10986 = vadd.f32 %v10528, %v10908
        %v10987 = vadd.f32 %v10529, %v10910
        %v10988 = vadd.f32 %v10530, %v10912
        %v10989 = vadd.f32 %v10531, %v10914
        %v10990 = vadd.f32 %v10532, %v10918
        %v10991 = vadd.f32 %v10533, %v10920
        %v10992 = vadd.f32 %v10534, %v10922
        %v10993 = vadd.f32 %v10535, %v10924
        %v10994 = vadd.f32 %v10536, %v10928
        %v10995 = vadd.f32 %v10537, %v10930
        %v10996 = vadd.f32 %v10538, %v10932
        %v10997 = vadd.f32 %v10539, %v10934
        %v10998 = vadd.f32 %v10540, %v10938
        %v10999 = vadd.f32 %v10541, %v10940
        %v11000 = vadd.f32 %v10542, %v10942
        %v11001 = vadd.f32 %v10543, %v10944
        %v11002 = vadd.f32 %v10544, %v10948
        %v11003 = vadd.f32 %v10545, %v10950
        %v11004 = vadd.f32 %v10546, %v10952
        %v11005 = vadd.f32 %v10547, %v10954
        %v11006 = vadd.f32 %v10548, %v10958
        %v11007 = vadd.f32 %v10549, %v10960
        %v11008 = vadd.f32 %v10550, %v10962
        %v11009 = vadd.f32 %v10551, %v10964
        %v11010 = vadd.f32 %v10552, %v10968
        %v11011 = vadd.f32 %v10553, %v10970
        %v11012 = vadd.f32 %v10554, %v10972
        %v11013 = vadd.f32 %v10555, %v10974
        %v11014 = vadd.f32 %v10556, %v10978
        %v11015 = vadd.f32 %v10557, %v10980
        %v11016 = vadd.f32 %v10558, %v10982
        %v11017 = vadd.f32 %v10559, %v10984
        %v11018 = vld [vmem:[%s10317] sm:$0x8]
        %v11019 = vld [vmem:[%s10317 + $0x4] sm:$0xf]
        %v11020 = vld [vmem:[%s10317 + $0x8] sm:$0x7]
        %v11021 = vld [vmem:[%s10317 + $0xc] sm:$0x8]
        %v11022 = vld [vmem:[%s10317 + $0x10] sm:$0xf]
        %v11023 = vld [vmem:[%s10317 + $0x14] sm:$0x7]
        %v11024 = vld [vmem:[%s10317 + $0x18] sm:$0x8]
        %v11025 = vld [vmem:[%s10317 + $0x1c] sm:$0xf]
        %v11026 = vld [vmem:[%s10317 + $0x20] sm:$0x7]
        %v11027 = vld [vmem:[%s10317 + $0x24] sm:$0x8]
        %v11028 = vld [vmem:[%s10317 + $0x28] sm:$0xf]
        %v11029 = vld [vmem:[%s10317 + $0x2c] sm:$0x7]
        %v11030 = vld [vmem:[%s10317 + $0x30] sm:$0x8]
        %v11031 = vld [vmem:[%s10317 + $0x34] sm:$0xf]
        %v11032 = vld [vmem:[%s10317 + $0x38] sm:$0x7]
        %v11033 = vld [vmem:[%s10317 + $0x3c] sm:$0x8]
        %v11034 = vld [vmem:[%s10317 + $0x40] sm:$0xf]
        %v11035 = vld [vmem:[%s10317 + $0x44] sm:$0x7]
        %v11036 = vld [vmem:[%s10317 + $0x48] sm:$0x8]
        %v11037 = vld [vmem:[%s10317 + $0x4c] sm:$0xf]
        %v11038 = vld [vmem:[%s10317 + $0x50] sm:$0x7]
        %v11039 = vld [vmem:[%s10317 + $0x54] sm:$0x8]
        %v11040 = vld [vmem:[%s10317 + $0x58] sm:$0xf]
        %v11041 = vld [vmem:[%s10317 + $0x5c] sm:$0x7]
        %v11066 = vrot.slane %v11018, 7
        %v11067 = vrot.slane %v11066, 4
        %v11068 = vrot.slane %v11019, 7
        %v11069 = vsel %vm9329, %v11067, %v11068
        %v11070 = vrot.slane %v11068, 4
        %v11071 = vrot.slane %v11020, 7
        %v11072 = vsel %vm9329, %v11070, %v11071
        %v11073 = vrot.slane %v11021, 7
        %v11074 = vrot.slane %v11073, 4
        %v11075 = vrot.slane %v11022, 7
        %v11076 = vsel %vm9329, %v11074, %v11075
        %v11077 = vrot.slane %v11075, 4
        %v11078 = vrot.slane %v11023, 7
        %v11079 = vsel %vm9329, %v11077, %v11078
        %v11080 = vrot.slane %v11024, 7
        %v11081 = vrot.slane %v11080, 4
        %v11082 = vrot.slane %v11025, 7
        %v11083 = vsel %vm9329, %v11081, %v11082
        %v11084 = vrot.slane %v11082, 4
        %v11085 = vrot.slane %v11026, 7
        %v11086 = vsel %vm9329, %v11084, %v11085
        %v11087 = vrot.slane %v11027, 7
        %v11088 = vrot.slane %v11087, 4
        %v11089 = vrot.slane %v11028, 7
        %v11090 = vsel %vm9329, %v11088, %v11089
        %v11091 = vrot.slane %v11089, 4
        %v11092 = vrot.slane %v11029, 7
        %v11093 = vsel %vm9329, %v11091, %v11092
        %v11094 = vrot.slane %v11030, 7
        %v11095 = vrot.slane %v11094, 4
        %v11096 = vrot.slane %v11031, 7
        %v11097 = vsel %vm9329, %v11095, %v11096
        %v11098 = vrot.slane %v11096, 4
        %v11099 = vrot.slane %v11032, 7
        %v11100 = vsel %vm9329, %v11098, %v11099
        %v11101 = vrot.slane %v11033, 7
        %v11102 = vrot.slane %v11101, 4
        %v11103 = vrot.slane %v11034, 7
        %v11104 = vsel %vm9329, %v11102, %v11103
        %v11105 = vrot.slane %v11103, 4
        %v11106 = vrot.slane %v11035, 7
        %v11107 = vsel %vm9329, %v11105, %v11106
        %v11108 = vrot.slane %v11036, 7
        %v11109 = vrot.slane %v11108, 4
        %v11110 = vrot.slane %v11037, 7
        %v11111 = vsel %vm9329, %v11109, %v11110
        %v11112 = vrot.slane %v11110, 4
        %v11113 = vrot.slane %v11038, 7
        %v11114 = vsel %vm9329, %v11112, %v11113
        %v11115 = vrot.slane %v11039, 7
        %v11116 = vrot.slane %v11115, 4
        %v11117 = vrot.slane %v11040, 7
        %v11118 = vsel %vm9329, %v11116, %v11117
        %v11119 = vrot.slane %v11117, 4
        %v11120 = vrot.slane %v11041, 7
        %v11121 = vsel %vm9329, %v11119, %v11120
        %s11122 = scalar_lea.vmem %s3, 104
        %v11123 = vld [vmem:[%s11122] sm:$0xf]
        %v11124 = vunpack.c.l.b16 %v11069
        %v11125 = vunpack.c.l.b16 %v11072
        %v11126 = vunpack.c.l.b16 %v11076
        %v11127 = vunpack.c.l.b16 %v11079
        %v11128 = vunpack.c.l.b16 %v11083
        %v11129 = vunpack.c.l.b16 %v11086
        %v11130 = vunpack.c.l.b16 %v11090
        %v11131 = vunpack.c.l.b16 %v11093
        %v11132 = vunpack.c.l.b16 %v11097
        %v11133 = vunpack.c.l.b16 %v11100
        %v11134 = vunpack.c.l.b16 %v11104
        %v11135 = vunpack.c.l.b16 %v11107
        %v11136 = vunpack.c.l.b16 %v11111
        %v11137 = vunpack.c.l.b16 %v11114
        %v11138 = vunpack.c.l.b16 %v11118
        %v11139 = vunpack.c.l.b16 %v11121
        %v11140 = vpack.c.b16 %v11125, %v11124
        %v11141 = vpack.c.b16 %v11127, %v11126
        %v11142 = vpack.c.b16 %v11129, %v11128
        %v11143 = vpack.c.b16 %v11131, %v11130
        %v11144 = vpack.c.b16 %v11133, %v11132
        %v11145 = vpack.c.b16 %v11135, %v11134
        %v11146 = vpack.c.b16 %v11137, %v11136
        %v11147 = vpack.c.b16 %v11139, %v11138
        %v11150 = vunpack.c.l.s4 1983009808
        %v11151 = vunpack.c.0.s8 %v11150
        %v11152 = vlaneseq
        %v11153 = vshrl.u32 %v11152, 7
        %v11154 = vsub.s32 %v11151, %v11153
        %v11155 = vrot.slane %v11123, %v11154
        %v11156 = vcombine.high %v11155, %v11155
        %v11158 = vsel %vm615, %v11140, 0
        %v11161 = vsel %vm615, %v11141, 0
        %v11164 = vsel %vm615, %v11142, 0
        %v11167 = vsel %vm615, %v11143, 0
        %v11170 = vsel %vm615, %v11144, 0
        %v11173 = vsel %vm615, %v11145, 0
        %v11176 = vsel %vm615, %v11146, 0
        %v11179 = vsel %vm615, %v11147, 0
        %v11182 = vsel %vm640, %v11155, 0
        %v11185 = vsel %vm640, %v11156, 0
        %11187 = vmatprep.subr.bf16.mxu0 %v11185
        %11188 = vmatpush1.bf16.msra.mxu0 %v11182
        %11189 = vmatprep.subr.bf16.mxu0 0
        %11190 = vmatpush1.bf16.msra.mxu0 0
        %11191 = vmatprep.subr.bf16.mxu0 0
        %11192 = vmatpush1.bf16.msra.mxu0 0
        %11193 = vmatprep.subr.bf16.mxu0 0
        %11194 = vmatpush1.bf16.msra.mxu0 0
        %11195 = vmatprep.subr.bf16.mxu0 0
        %11196 = vmatpush1.bf16.msra.mxu0 0
        %11197 = vmatprep.subr.bf16.mxu0 0
        %11198 = vmatpush1.bf16.msra.mxu0 0
        %11199 = vmatprep.subr.bf16.mxu0 0
        %11200 = vmatpush1.bf16.msra.mxu0 0
        %11201 = vmatprep.subr.bf16.mxu0 0
        %11202 = vmatpush1.bf16.msra.mxu0 0
        %11203 = vmatprep.subr.bf16.mxu0 0
        %11204 = vmatpush1.bf16.msra.mxu0 0
        %11205 = vmatprep.subr.bf16.mxu0 0
        %11206 = vmatpush1.bf16.msra.mxu0 0
        %11207 = vmatprep.subr.bf16.mxu0 0
        %11208 = vmatpush1.bf16.msra.mxu0 0
        %11209 = vmatprep.subr.bf16.mxu0 0
        %11210 = vmatpush1.bf16.msra.mxu0 0
        %11211 = vmatprep.subr.bf16.mxu0 0
        %11212 = vmatpush1.bf16.msra.mxu0 0
        %11213 = vmatprep.subr.bf16.mxu0 0
        %11214 = vmatpush1.bf16.msra.mxu0 0
        %11215 = vmatprep.subr.bf16.mxu0 0
        %11216 = vmatpush1.bf16.msra.mxu0 0
        %11217 = vmatprep.subr.bf16.mxu0 0
        %11218 = vmatpush1.bf16.msra.mxu0 0
        %11219 = vmatprep.mubr.bf16.mxu0 0
        %11220 = vmatmul.mubr.bf16.gmra.mrb[0].mxu0 %v11158
        %v11221 = vpop.f32.mrb[0].mxu0
        %v11222 = vadd.f32 0.0, %v11221
        %v11223 = vpop.f32.mrb[0].mxu0
        %v11224 = vadd.f32 0.0, %v11223
        %v11225 = vpop.f32.mrb[0].mxu0
        %v11226 = vadd.f32 0.0, %v11225
        %v11227 = vpop.f32.mrb[0].mxu0
        %v11228 = vadd.f32 0.0, %v11227
        %11229 = vmatprep.mubr.bf16.mxu0 0
        %11230 = vmatmul.mubr.bf16.gmra.mrb[0].mxu0 %v11161
        %v11231 = vpop.f32.mrb[0].mxu0
        %v11232 = vadd.f32 0.0, %v11231
        %v11233 = vpop.f32.mrb[0].mxu0
        %v11234 = vadd.f32 0.0, %v11233
        %v11235 = vpop.f32.mrb[0].mxu0
        %v11236 = vadd.f32 0.0, %v11235
        %v11237 = vpop.f32.mrb[0].mxu0
        %v11238 = vadd.f32 0.0, %v11237
        %11239 = vmatprep.mubr.bf16.mxu0 0
        %11240 = vmatmul.mubr.bf16.gmra.mrb[0].mxu0 %v11164
        %v11241 = vpop.f32.mrb[0].mxu0
        %v11242 = vadd.f32 0.0, %v11241
        %v11243 = vpop.f32.mrb[0].mxu0
        %v11244 = vadd.f32 0.0, %v11243
        %v11245 = vpop.f32.mrb[0].mxu0
        %v11246 = vadd.f32 0.0, %v11245
        %v11247 = vpop.f32.mrb[0].mxu0
        %v11248 = vadd.f32 0.0, %v11247
        %11249 = vmatprep.mubr.bf16.mxu0 0
        %11250 = vmatmul.mubr.bf16.gmra.mrb[0].mxu0 %v11167
        %v11251 = vpop.f32.mrb[0].mxu0
        %v11252 = vadd.f32 0.0, %v11251
        %v11253 = vpop.f32.mrb[0].mxu0
        %v11254 = vadd.f32 0.0, %v11253
        %v11255 = vpop.f32.mrb[0].mxu0
        %v11256 = vadd.f32 0.0, %v11255
        %v11257 = vpop.f32.mrb[0].mxu0
        %v11258 = vadd.f32 0.0, %v11257
        %11259 = vmatprep.mubr.bf16.mxu0 0
        %11260 = vmatmul.mubr.bf16.gmra.mrb[0].mxu0 %v11170
        %v11261 = vpop.f32.mrb[0].mxu0
        %v11262 = vadd.f32 0.0, %v11261
        %v11263 = vpop.f32.mrb[0].mxu0
        %v11264 = vadd.f32 0.0, %v11263
        %v11265 = vpop.f32.mrb[0].mxu0
        %v11266 = vadd.f32 0.0, %v11265
        %v11267 = vpop.f32.mrb[0].mxu0
        %v11268 = vadd.f32 0.0, %v11267
        %11269 = vmatprep.mubr.bf16.mxu0 0
        %11270 = vmatmul.mubr.bf16.gmra.mrb[0].mxu0 %v11173
        %v11271 = vpop.f32.mrb[0].mxu0
        %v11272 = vadd.f32 0.0, %v11271
        %v11273 = vpop.f32.mrb[0].mxu0
        %v11274 = vadd.f32 0.0, %v11273
        %v11275 = vpop.f32.mrb[0].mxu0
        %v11276 = vadd.f32 0.0, %v11275
        %v11277 = vpop.f32.mrb[0].mxu0
        %v11278 = vadd.f32 0.0, %v11277
        %11279 = vmatprep.mubr.bf16.mxu0 0
        %11280 = vmatmul.mubr.bf16.gmra.mrb[0].mxu0 %v11176
        %v11281 = vpop.f32.mrb[0].mxu0
        %v11282 = vadd.f32 0.0, %v11281
        %v11283 = vpop.f32.mrb[0].mxu0
        %v11284 = vadd.f32 0.0, %v11283
        %v11285 = vpop.f32.mrb[0].mxu0
        %v11286 = vadd.f32 0.0, %v11285
        %v11287 = vpop.f32.mrb[0].mxu0
        %v11288 = vadd.f32 0.0, %v11287
        %11289 = vmatprep.mubr.bf16.mxu0 0
        %11290 = vmatmul.mubr.bf16.gmra.mrb[0].mxu0 %v11179
        %v11291 = vpop.f32.mrb[0].mxu0
        %v11292 = vadd.f32 0.0, %v11291
        %v11293 = vpop.f32.mrb[0].mxu0
        %v11294 = vadd.f32 0.0, %v11293
        %v11295 = vpop.f32.mrb[0].mxu0
        %v11296 = vadd.f32 0.0, %v11295
        %v11297 = vpop.f32.mrb[0].mxu0
        %v11298 = vadd.f32 0.0, %v11297
        %11299 = vdwg.mxu0
        %v11300 = vadd.f32 %v10986, %v11222
        %v11301 = vadd.f32 %v10987, %v11224
        %v11302 = vadd.f32 %v10988, %v11226
        %v11303 = vadd.f32 %v10989, %v11228
        %v11304 = vadd.f32 %v10990, %v11232
        %v11305 = vadd.f32 %v10991, %v11234
        %v11306 = vadd.f32 %v10992, %v11236
        %v11307 = vadd.f32 %v10993, %v11238
        %v11308 = vadd.f32 %v10994, %v11242
        %v11309 = vadd.f32 %v10995, %v11244
        %v11310 = vadd.f32 %v10996, %v11246
        %v11311 = vadd.f32 %v10997, %v11248
        %v11312 = vadd.f32 %v10998, %v11252
        %v11313 = vadd.f32 %v10999, %v11254
        %v11314 = vadd.f32 %v11000, %v11256
        %v11315 = vadd.f32 %v11001, %v11258
        %v11316 = vadd.f32 %v11002, %v11262
        %v11317 = vadd.f32 %v11003, %v11264
        %v11318 = vadd.f32 %v11004, %v11266
        %v11319 = vadd.f32 %v11005, %v11268
        %v11320 = vadd.f32 %v11006, %v11272
        %v11321 = vadd.f32 %v11007, %v11274
        %v11322 = vadd.f32 %v11008, %v11276
        %v11323 = vadd.f32 %v11009, %v11278
        %v11324 = vadd.f32 %v11010, %v11282
        %v11325 = vadd.f32 %v11011, %v11284
        %v11326 = vadd.f32 %v11012, %v11286
        %v11327 = vadd.f32 %v11013, %v11288
        %v11328 = vadd.f32 %v11014, %v11292
        %v11329 = vadd.f32 %v11015, %v11294
        %v11330 = vadd.f32 %v11016, %v11296
        %v11331 = vadd.f32 %v11017, %v11298
        %s11332 = scalar_lea.vmem %s5, 3
        %v11333 = vld [vmem:[%s11332] ss:$8 sm:$0x3]
        %v11335 = vlaneseq
        %v11336 = vshrl.u32 %v11335, 7
        %v11337 = vsub.s32 0, %v11336
        %v11338 = vrot.slane %v11333, %v11337
        %v11339 = vlaneseq
        %v11340 = vshrl.u32 %v11339, 7
        %v11341 = vsub.s32 1, %v11340
        %v11342 = vrot.slane %v11333, %v11341
        %v11345 = vmul.f32 %v11300, %v11338
        %v11346 = vmul.f32 %v11301, %v11342
        %v11347 = vmul.f32 %v11302, %v11338
        %v11348 = vmul.f32 %v11303, %v11342
        %v11349 = vmul.f32 %v11304, %v11338
        %v11350 = vmul.f32 %v11305, %v11342
        %v11351 = vmul.f32 %v11306, %v11338
        %v11352 = vmul.f32 %v11307, %v11342
        %v11353 = vmul.f32 %v11308, %v11338
        %v11354 = vmul.f32 %v11309, %v11342
        %v11355 = vmul.f32 %v11310, %v11338
        %v11356 = vmul.f32 %v11311, %v11342
        %v11357 = vmul.f32 %v11312, %v11338
        %v11358 = vmul.f32 %v11313, %v11342
        %v11359 = vmul.f32 %v11314, %v11338
        %v11360 = vmul.f32 %v11315, %v11342
        %v11361 = vmul.f32 %v11316, %v11338
        %v11362 = vmul.f32 %v11317, %v11342
        %v11363 = vmul.f32 %v11318, %v11338
        %v11364 = vmul.f32 %v11319, %v11342
        %v11365 = vmul.f32 %v11320, %v11338
        %v11366 = vmul.f32 %v11321, %v11342
        %v11367 = vmul.f32 %v11322, %v11338
        %v11368 = vmul.f32 %v11323, %v11342
        %v11369 = vmul.f32 %v11324, %v11338
        %v11370 = vmul.f32 %v11325, %v11342
        %v11371 = vmul.f32 %v11326, %v11338
        %v11372 = vmul.f32 %v11327, %v11342
        %v11373 = vmul.f32 %v11328, %v11338
        %v11374 = vmul.f32 %v11329, %v11342
        %v11375 = vmul.f32 %v11330, %v11338
        %v11376 = vmul.f32 %v11331, %v11342
        %s11377 = scalar_lea.vmem %s6, 3
        %v11378 = vld [vmem:[%s11377] ss:$8 sm:$0x3]
        %v11380 = vlaneseq
        %v11381 = vshrl.u32 %v11380, 7
        %v11382 = vsub.s32 0, %v11381
        %v11383 = vrot.slane %v11378, %v11382
        %v11384 = vlaneseq
        %v11385 = vshrl.u32 %v11384, 7
        %v11386 = vsub.s32 1, %v11385
        %v11387 = vrot.slane %v11378, %v11386
        %v11390 = vadd.f32 %v11345, %v11383
        %v11391 = vadd.f32 %v11346, %v11387
        %v11392 = vadd.f32 %v11347, %v11383
        %v11393 = vadd.f32 %v11348, %v11387
        %v11394 = vadd.f32 %v11349, %v11383
        %v11395 = vadd.f32 %v11350, %v11387
        %v11396 = vadd.f32 %v11351, %v11383
        %v11397 = vadd.f32 %v11352, %v11387
        %v11398 = vadd.f32 %v11353, %v11383
        %v11399 = vadd.f32 %v11354, %v11387
        %v11400 = vadd.f32 %v11355, %v11383
        %v11401 = vadd.f32 %v11356, %v11387
        %v11402 = vadd.f32 %v11357, %v11383
        %v11403 = vadd.f32 %v11358, %v11387
        %v11404 = vadd.f32 %v11359, %v11383
        %v11405 = vadd.f32 %v11360, %v11387
        %v11406 = vadd.f32 %v11361, %v11383
        %v11407 = vadd.f32 %v11362, %v11387
        %v11408 = vadd.f32 %v11363, %v11383
        %v11409 = vadd.f32 %v11364, %v11387
        %v11410 = vadd.f32 %v11365, %v11383
        %v11411 = vadd.f32 %v11366, %v11387
        %v11412 = vadd.f32 %v11367, %v11383
        %v11413 = vadd.f32 %v11368, %v11387
        %v11414 = vadd.f32 %v11369, %v11383
        %v11415 = vadd.f32 %v11370, %v11387
        %v11416 = vadd.f32 %v11371, %v11383
        %v11417 = vadd.f32 %v11372, %v11387
        %v11418 = vadd.f32 %v11373, %v11383
        %v11419 = vadd.f32 %v11374, %v11387
        %v11420 = vadd.f32 %v11375, %v11383
        %v11421 = vadd.f32 %v11376, %v11387
        %v11422 = vmax.f32 %v11390, 0.0
        %v11423 = vmax.f32 %v11391, 0.0
        %v11424 = vmax.f32 %v11392, 0.0
        %v11425 = vmax.f32 %v11393, 0.0
        %v11426 = vmax.f32 %v11394, 0.0
        %v11427 = vmax.f32 %v11395, 0.0
        %v11428 = vmax.f32 %v11396, 0.0
        %v11429 = vmax.f32 %v11397, 0.0
        %v11430 = vmax.f32 %v11398, 0.0
        %v11431 = vmax.f32 %v11399, 0.0
        %v11432 = vmax.f32 %v11400, 0.0
        %v11433 = vmax.f32 %v11401, 0.0
        %v11434 = vmax.f32 %v11402, 0.0
        %v11435 = vmax.f32 %v11403, 0.0
        %v11436 = vmax.f32 %v11404, 0.0
        %v11437 = vmax.f32 %v11405, 0.0
        %v11438 = vmax.f32 %v11406, 0.0
        %v11439 = vmax.f32 %v11407, 0.0
        %v11440 = vmax.f32 %v11408, 0.0
        %v11441 = vmax.f32 %v11409, 0.0
        %v11442 = vmax.f32 %v11410, 0.0
        %v11443 = vmax.f32 %v11411, 0.0
        %v11444 = vmax.f32 %v11412, 0.0
        %v11445 = vmax.f32 %v11413, 0.0
        %v11446 = vmax.f32 %v11414, 0.0
        %v11447 = vmax.f32 %v11415, 0.0
        %v11448 = vmax.f32 %v11416, 0.0
        %v11449 = vmax.f32 %v11417, 0.0
        %v11450 = vmax.f32 %v11418, 0.0
        %v11451 = vmax.f32 %v11419, 0.0
        %v11452 = vmax.f32 %v11420, 0.0
        %v11453 = vmax.f32 %v11421, 0.0
        %v11454 = vpack.c.bf16 %v11424, %v11422
        %v11455 = vpack.c.bf16 %v11425, %v11423
        %v11456 = vpack.c.bf16 %v11428, %v11426
        %v11457 = vpack.c.bf16 %v11429, %v11427
        %v11458 = vpack.c.bf16 %v11432, %v11430
        %v11459 = vpack.c.bf16 %v11433, %v11431
        %v11460 = vpack.c.bf16 %v11436, %v11434
        %v11461 = vpack.c.bf16 %v11437, %v11435
        %v11462 = vpack.c.bf16 %v11440, %v11438
        %v11463 = vpack.c.bf16 %v11441, %v11439
        %v11464 = vpack.c.bf16 %v11444, %v11442
        %v11465 = vpack.c.bf16 %v11445, %v11443
        %v11466 = vpack.c.bf16 %v11448, %v11446
        %v11467 = vpack.c.bf16 %v11449, %v11447
        %v11468 = vpack.c.bf16 %v11452, %v11450
        %v11469 = vpack.c.bf16 %v11453, %v11451
        %s11470 = scalar_lea.vmem [#allocation2], 768
        %v11471 = vld [vmem:[%s11470] sm:$0xff]
        %v11472 = vld [vmem:[%s11470 + $0x8] sm:$0xff]
        %v11473 = vld [vmem:[%s11470 + $0x10] sm:$0xff]
        %v11474 = vld [vmem:[%s11470 + $0x18] sm:$0xff]
        %v11475 = vld [vmem:[%s11470 + $0x20] sm:$0xff]
        %v11476 = vld [vmem:[%s11470 + $0x28] sm:$0xff]
        %v11477 = vld [vmem:[%s11470 + $0x30] sm:$0xff]
        %v11478 = vld [vmem:[%s11470 + $0x38] sm:$0xff]
        %v11479 = vld [vmem:[%s11470 + $0x40] sm:$0xff]
        %v11480 = vld [vmem:[%s11470 + $0x48] sm:$0xff]
        %v11481 = vld [vmem:[%s11470 + $0x50] sm:$0xff]
        %v11482 = vld [vmem:[%s11470 + $0x58] sm:$0xff]
        %v11483 = vld [vmem:[%s11470 + $0x60] sm:$0xff]
        %v11484 = vld [vmem:[%s11470 + $0x68] sm:$0xff]
        %v11485 = vld [vmem:[%s11470 + $0x70] sm:$0xff]
        %v11486 = vld [vmem:[%s11470 + $0x78] sm:$0xff]
        %v11487 = vld [vmem:[%s11470 + $0x80] sm:$0xff]
        %v11488 = vld [vmem:[%s11470 + $0x88] sm:$0xff]
        %v11489 = vld [vmem:[%s11470 + $0x90] sm:$0xff]
        %v11490 = vld [vmem:[%s11470 + $0x98] sm:$0xff]
        %v11491 = vld [vmem:[%s11470 + $0xa0] sm:$0xff]
        %v11492 = vld [vmem:[%s11470 + $0xa8] sm:$0xff]
        %v11493 = vld [vmem:[%s11470 + $0xb0] sm:$0xff]
        %v11494 = vld [vmem:[%s11470 + $0xb8] sm:$0xff]
        %v11495 = vld [vmem:[%s11470 + $0xc0] sm:$0xff]
        %v11496 = vld [vmem:[%s11470 + $0xc8] sm:$0xff]
        %v11497 = vld [vmem:[%s11470 + $0xd0] sm:$0xff]
        %v11498 = vld [vmem:[%s11470 + $0xd8] sm:$0xff]
        %v11499 = vld [vmem:[%s11470 + $0xe0] sm:$0xff]
        %v11500 = vld [vmem:[%s11470 + $0xe8] sm:$0xff]
        %v11501 = vld [vmem:[%s11470 + $0xf0] sm:$0xff]
        %v11502 = vld [vmem:[%s11470 + $0xf8] sm:$0xff]
        %v11535 = vunpack.c.l.b16 %v11471
        %v11536 = vunpack.c.h.b16 %v11471
        %v11537 = vunpack.c.l.b16 %v11472
        %v11538 = vunpack.c.h.b16 %v11472
        %v11539 = vunpack.c.l.b16 %v11473
        %v11540 = vunpack.c.h.b16 %v11473
        %v11541 = vunpack.c.l.b16 %v11474
        %v11542 = vunpack.c.h.b16 %v11474
        %v11543 = vunpack.c.l.b16 %v11475
        %v11544 = vunpack.c.h.b16 %v11475
        %v11545 = vunpack.c.l.b16 %v11476
        %v11546 = vunpack.c.h.b16 %v11476
        %v11547 = vunpack.c.l.b16 %v11477
        %v11548 = vunpack.c.h.b16 %v11477
        %v11549 = vunpack.c.l.b16 %v11478
        %v11550 = vunpack.c.h.b16 %v11478
        %v11551 = vunpack.c.l.b16 %v11479
        %v11552 = vunpack.c.h.b16 %v11479
        %v11553 = vunpack.c.l.b16 %v11480
        %v11554 = vunpack.c.h.b16 %v11480
        %v11555 = vunpack.c.l.b16 %v11481
        %v11556 = vunpack.c.h.b16 %v11481
        %v11557 = vunpack.c.l.b16 %v11482
        %v11558 = vunpack.c.h.b16 %v11482
        %v11559 = vunpack.c.l.b16 %v11483
        %v11560 = vunpack.c.h.b16 %v11483
        %v11561 = vunpack.c.l.b16 %v11484
        %v11562 = vunpack.c.h.b16 %v11484
        %v11563 = vunpack.c.l.b16 %v11485
        %v11564 = vunpack.c.h.b16 %v11485
        %v11565 = vunpack.c.l.b16 %v11486
        %v11566 = vunpack.c.h.b16 %v11486
        %v11567 = vunpack.c.l.b16 %v11487
        %v11568 = vunpack.c.h.b16 %v11487
        %v11569 = vunpack.c.l.b16 %v11488
        %v11570 = vunpack.c.h.b16 %v11488
        %v11571 = vunpack.c.l.b16 %v11489
        %v11572 = vunpack.c.h.b16 %v11489
        %v11573 = vunpack.c.l.b16 %v11490
        %v11574 = vunpack.c.h.b16 %v11490
        %v11575 = vunpack.c.l.b16 %v11491
        %v11576 = vunpack.c.h.b16 %v11491
        %v11577 = vunpack.c.l.b16 %v11492
        %v11578 = vunpack.c.h.b16 %v11492
        %v11579 = vunpack.c.l.b16 %v11493
        %v11580 = vunpack.c.h.b16 %v11493
        %v11581 = vunpack.c.l.b16 %v11494
        %v11582 = vunpack.c.h.b16 %v11494
        %v11583 = vunpack.c.l.b16 %v11495
        %v11584 = vunpack.c.h.b16 %v11495
        %v11585 = vunpack.c.l.b16 %v11496
        %v11586 = vunpack.c.h.b16 %v11496
        %v11587 = vunpack.c.l.b16 %v11497
        %v11588 = vunpack.c.h.b16 %v11497
        %v11589 = vunpack.c.l.b16 %v11498
        %v11590 = vunpack.c.h.b16 %v11498
        %v11591 = vunpack.c.l.b16 %v11499
        %v11592 = vunpack.c.h.b16 %v11499
        %v11593 = vunpack.c.l.b16 %v11500
        %v11594 = vunpack.c.h.b16 %v11500
        %v11595 = vunpack.c.l.b16 %v11501
        %v11596 = vunpack.c.h.b16 %v11501
        %v11597 = vunpack.c.l.b16 %v11502
        %v11598 = vunpack.c.h.b16 %v11502
        %v11599 = vpack.c.b16 %v11537, %v11535
        %v11600 = vpack.c.b16 %v11538, %v11536
        %v11601 = vpack.c.b16 %v11541, %v11539
        %v11602 = vpack.c.b16 %v11542, %v11540
        %v11603 = vpack.c.b16 %v11545, %v11543
        %v11604 = vpack.c.b16 %v11546, %v11544
        %v11605 = vpack.c.b16 %v11549, %v11547
        %v11606 = vpack.c.b16 %v11550, %v11548
        %v11607 = vpack.c.b16 %v11553, %v11551
        %v11608 = vpack.c.b16 %v11554, %v11552
        %v11609 = vpack.c.b16 %v11557, %v11555
        %v11610 = vpack.c.b16 %v11558, %v11556
        %v11611 = vpack.c.b16 %v11561, %v11559
        %v11612 = vpack.c.b16 %v11562, %v11560
        %v11613 = vpack.c.b16 %v11565, %v11563
        %v11614 = vpack.c.b16 %v11566, %v11564
        %v11615 = vpack.c.b16 %v11569, %v11567
        %v11616 = vpack.c.b16 %v11570, %v11568
        %v11617 = vpack.c.b16 %v11573, %v11571
        %v11618 = vpack.c.b16 %v11574, %v11572
        %v11619 = vpack.c.b16 %v11577, %v11575
        %v11620 = vpack.c.b16 %v11578, %v11576
        %v11621 = vpack.c.b16 %v11581, %v11579
        %v11622 = vpack.c.b16 %v11582, %v11580
        %v11623 = vpack.c.b16 %v11585, %v11583
        %v11624 = vpack.c.b16 %v11586, %v11584
        %v11625 = vpack.c.b16 %v11589, %v11587
        %v11626 = vpack.c.b16 %v11590, %v11588
        %v11627 = vpack.c.b16 %v11593, %v11591
        %v11628 = vpack.c.b16 %v11594, %v11592
        %v11629 = vpack.c.b16 %v11597, %v11595
        %v11630 = vpack.c.b16 %v11598, %v11596
        %11663 = vmatprep.subr.bf16.mxu0 %v11600
        %11664 = vmatpush1.bf16.msra.mxu0 %v11599
        %11665 = vmatprep.subr.bf16.mxu0 %v11602
        %11666 = vmatpush1.bf16.msra.mxu0 %v11601
        %11667 = vmatprep.subr.bf16.mxu0 %v11604
        %11668 = vmatpush1.bf16.msra.mxu0 %v11603
        %11669 = vmatprep.subr.bf16.mxu0 %v11606
        %11670 = vmatpush1.bf16.msra.mxu0 %v11605
        %11671 = vmatprep.subr.bf16.mxu0 %v11608
        %11672 = vmatpush1.bf16.msra.mxu0 %v11607
        %11673 = vmatprep.subr.bf16.mxu0 %v11610
        %11674 = vmatpush1.bf16.msra.mxu0 %v11609
        %11675 = vmatprep.subr.bf16.mxu0 %v11612
        %11676 = vmatpush1.bf16.msra.mxu0 %v11611
        %11677 = vmatprep.subr.bf16.mxu0 %v11614
        %11678 = vmatpush1.bf16.msra.mxu0 %v11613
        %11679 = vmatprep.subr.bf16.mxu0 %v11616
        %11680 = vmatpush1.bf16.msra.mxu0 %v11615
        %11681 = vmatprep.subr.bf16.mxu0 %v11618
        %11682 = vmatpush1.bf16.msra.mxu0 %v11617
        %11683 = vmatprep.subr.bf16.mxu0 %v11620
        %11684 = vmatpush1.bf16.msra.mxu0 %v11619
        %11685 = vmatprep.subr.bf16.mxu0 %v11622
        %11686 = vmatpush1.bf16.msra.mxu0 %v11621
        %11687 = vmatprep.subr.bf16.mxu0 %v11624
        %11688 = vmatpush1.bf16.msra.mxu0 %v11623
        %11689 = vmatprep.subr.bf16.mxu0 %v11626
        %11690 = vmatpush1.bf16.msra.mxu0 %v11625
        %11691 = vmatprep.subr.bf16.mxu0 %v11628
        %11692 = vmatpush1.bf16.msra.mxu0 %v11627
        %11693 = vmatprep.subr.bf16.mxu0 %v11630
        %11694 = vmatpush1.bf16.msra.mxu0 %v11629
        %11695 = vmatprep.mubr.bf16.mxu0 %v11455
        %11696 = vmatmul.mubr.bf16.gmra.mrb[0].mxu0 %v11454
        %v11697 = vpop.f32.mrb[0].mxu0
        %v11698 = vadd.f32 0.0, %v11697
        %v11699 = vpop.f32.mrb[0].mxu0
        %v11700 = vadd.f32 0.0, %v11699
        %v11701 = vpop.f32.mrb[0].mxu0
        %v11702 = vadd.f32 0.0, %v11701
        %v11703 = vpop.f32.mrb[0].mxu0
        %v11704 = vadd.f32 0.0, %v11703
        %11705 = vmatprep.mubr.bf16.mxu0 %v11457
        %11706 = vmatmul.mubr.bf16.gmra.mrb[0].mxu0 %v11456
        %v11707 = vpop.f32.mrb[0].mxu0
        %v11708 = vadd.f32 0.0, %v11707
        %v11709 = vpop.f32.mrb[0].mxu0
        %v11710 = vadd.f32 0.0, %v11709
        %v11711 = vpop.f32.mrb[0].mxu0
        %v11712 = vadd.f32 0.0, %v11711
        %v11713 = vpop.f32.mrb[0].mxu0
        %v11714 = vadd.f32 0.0, %v11713
        %11715 = vmatprep.mubr.bf16.mxu0 %v11459
        %11716 = vmatmul.mubr.bf16.gmra.mrb[0].mxu0 %v11458
        %v11717 = vpop.f32.mrb[0].mxu0
        %v11718 = vadd.f32 0.0, %v11717
        %v11719 = vpop.f32.mrb[0].mxu0
        %v11720 = vadd.f32 0.0, %v11719
        %v11721 = vpop.f32.mrb[0].mxu0
        %v11722 = vadd.f32 0.0, %v11721
        %v11723 = vpop.f32.mrb[0].mxu0
        %v11724 = vadd.f32 0.0, %v11723
        %11725 = vmatprep.mubr.bf16.mxu0 %v11461
        %11726 = vmatmul.mubr.bf16.gmra.mrb[0].mxu0 %v11460
        %v11727 = vpop.f32.mrb[0].mxu0
        %v11728 = vadd.f32 0.0, %v11727
        %v11729 = vpop.f32.mrb[0].mxu0
        %v11730 = vadd.f32 0.0, %v11729
        %v11731 = vpop.f32.mrb[0].mxu0
        %v11732 = vadd.f32 0.0, %v11731
        %v11733 = vpop.f32.mrb[0].mxu0
        %v11734 = vadd.f32 0.0, %v11733
        %11735 = vmatprep.mubr.bf16.mxu0 %v11463
        %11736 = vmatmul.mubr.bf16.gmra.mrb[0].mxu0 %v11462
        %v11737 = vpop.f32.mrb[0].mxu0
        %v11738 = vadd.f32 0.0, %v11737
        %v11739 = vpop.f32.mrb[0].mxu0
        %v11740 = vadd.f32 0.0, %v11739
        %v11741 = vpop.f32.mrb[0].mxu0
        %v11742 = vadd.f32 0.0, %v11741
        %v11743 = vpop.f32.mrb[0].mxu0
        %v11744 = vadd.f32 0.0, %v11743
        %11745 = vmatprep.mubr.bf16.mxu0 %v11465
        %11746 = vmatmul.mubr.bf16.gmra.mrb[0].mxu0 %v11464
        %v11747 = vpop.f32.mrb[0].mxu0
        %v11748 = vadd.f32 0.0, %v11747
        %v11749 = vpop.f32.mrb[0].mxu0
        %v11750 = vadd.f32 0.0, %v11749
        %v11751 = vpop.f32.mrb[0].mxu0
        %v11752 = vadd.f32 0.0, %v11751
        %v11753 = vpop.f32.mrb[0].mxu0
        %v11754 = vadd.f32 0.0, %v11753
        %11755 = vmatprep.mubr.bf16.mxu0 %v11467
        %11756 = vmatmul.mubr.bf16.gmra.mrb[0].mxu0 %v11466
        %v11757 = vpop.f32.mrb[0].mxu0
        %v11758 = vadd.f32 0.0, %v11757
        %v11759 = vpop.f32.mrb[0].mxu0
        %v11760 = vadd.f32 0.0, %v11759
        %v11761 = vpop.f32.mrb[0].mxu0
        %v11762 = vadd.f32 0.0, %v11761
        %v11763 = vpop.f32.mrb[0].mxu0
        %v11764 = vadd.f32 0.0, %v11763
        %11765 = vmatprep.mubr.bf16.mxu0 %v11469
        %11766 = vmatmul.mubr.bf16.gmra.mrb[0].mxu0 %v11468
        %v11767 = vpop.f32.mrb[0].mxu0
        %v11768 = vadd.f32 0.0, %v11767
        %v11769 = vpop.f32.mrb[0].mxu0
        %v11770 = vadd.f32 0.0, %v11769
        %v11771 = vpop.f32.mrb[0].mxu0
        %v11772 = vadd.f32 0.0, %v11771
        %v11773 = vpop.f32.mrb[0].mxu0
        %v11774 = vadd.f32 0.0, %v11773
        %11775 = vdwg.mxu0
        %v11776 = vadd.f32 %v8616, %v11698
        %v11777 = vadd.f32 %v8617, %v11700
        %v11778 = vadd.f32 %v8618, %v11702
        %v11779 = vadd.f32 %v8619, %v11704
        %v11780 = vadd.f32 %v8620, %v11708
        %v11781 = vadd.f32 %v8621, %v11710
        %v11782 = vadd.f32 %v8622, %v11712
        %v11783 = vadd.f32 %v8623, %v11714
        %v11784 = vadd.f32 %v8624, %v11718
        %v11785 = vadd.f32 %v8625, %v11720
        %v11786 = vadd.f32 %v8626, %v11722
        %v11787 = vadd.f32 %v8627, %v11724
        %v11788 = vadd.f32 %v8628, %v11728
        %v11789 = vadd.f32 %v8629, %v11730
        %v11790 = vadd.f32 %v8630, %v11732
        %v11791 = vadd.f32 %v8631, %v11734
        %v11792 = vadd.f32 %v8632, %v11738
        %v11793 = vadd.f32 %v8633, %v11740
        %v11794 = vadd.f32 %v8634, %v11742
        %v11795 = vadd.f32 %v8635, %v11744
        %v11796 = vadd.f32 %v8636, %v11748
        %v11797 = vadd.f32 %v8637, %v11750
        %v11798 = vadd.f32 %v8638, %v11752
        %v11799 = vadd.f32 %v8639, %v11754
        %v11800 = vadd.f32 %v8640, %v11758
        %v11801 = vadd.f32 %v8641, %v11760
        %v11802 = vadd.f32 %v8642, %v11762
        %v11803 = vadd.f32 %v8643, %v11764
        %v11804 = vadd.f32 %v8644, %v11768
        %v11805 = vadd.f32 %v8645, %v11770
        %v11806 = vadd.f32 %v8646, %v11772
        %v11807 = vadd.f32 %v8647, %v11774
        %v11808 = vld [vmem:[%s322] sm:$0x3]
        %v11810 = vlaneseq
        %v11811 = vshrl.u32 %v11810, 7
        %v11812 = vsub.s32 0, %v11811
        %v11813 = vrot.slane %v11808, %v11812
        %v11814 = vlaneseq
        %v11815 = vshrl.u32 %v11814, 7
        %v11816 = vsub.s32 1, %v11815
        %v11817 = vrot.slane %v11808, %v11816
        %v11820 = vadd.f32 %v11776, %v11813
        %v11821 = vadd.f32 %v11777, %v11817
        %v11822 = vadd.f32 %v11778, %v11813
        %v11823 = vadd.f32 %v11779, %v11817
        %v11824 = vadd.f32 %v11780, %v11813
        %v11825 = vadd.f32 %v11781, %v11817
        %v11826 = vadd.f32 %v11782, %v11813
        %v11827 = vadd.f32 %v11783, %v11817
        %v11828 = vadd.f32 %v11784, %v11813
        %v11829 = vadd.f32 %v11785, %v11817
        %v11830 = vadd.f32 %v11786, %v11813
        %v11831 = vadd.f32 %v11787, %v11817
        %v11832 = vadd.f32 %v11788, %v11813
        %v11833 = vadd.f32 %v11789, %v11817
        %v11834 = vadd.f32 %v11790, %v11813
        %v11835 = vadd.f32 %v11791, %v11817
        %v11836 = vadd.f32 %v11792, %v11813
        %v11837 = vadd.f32 %v11793, %v11817
        %v11838 = vadd.f32 %v11794, %v11813
        %v11839 = vadd.f32 %v11795, %v11817
        %v11840 = vadd.f32 %v11796, %v11813
        %v11841 = vadd.f32 %v11797, %v11817
        %v11842 = vadd.f32 %v11798, %v11813
        %v11843 = vadd.f32 %v11799, %v11817
        %v11844 = vadd.f32 %v11800, %v11813
        %v11845 = vadd.f32 %v11801, %v11817
        %v11846 = vadd.f32 %v11802, %v11813
        %v11847 = vadd.f32 %v11803, %v11817
        %v11848 = vadd.f32 %v11804, %v11813
        %v11849 = vadd.f32 %v11805, %v11817
        %v11850 = vadd.f32 %v11806, %v11813
        %v11851 = vadd.f32 %v11807, %v11817
        %s11852 = scalar_lea.vmem %s5, 4
        %v11853 = vld [vmem:[%s11852] ss:$8 sm:$0x3]
        %v11855 = vlaneseq
        %v11856 = vshrl.u32 %v11855, 7
        %v11857 = vsub.s32 0, %v11856
        %v11858 = vrot.slane %v11853, %v11857
        %v11859 = vlaneseq
        %v11860 = vshrl.u32 %v11859, 7
        %v11861 = vsub.s32 1, %v11860
        %v11862 = vrot.slane %v11853, %v11861
        %v11865 = vmul.f32 %v11820, %v11858
        %v11866 = vmul.f32 %v11821, %v11862
        %v11867 = vmul.f32 %v11822, %v11858
        %v11868 = vmul.f32 %v11823, %v11862
        %v11869 = vmul.f32 %v11824, %v11858
        %v11870 = vmul.f32 %v11825, %v11862
        %v11871 = vmul.f32 %v11826, %v11858
        %v11872 = vmul.f32 %v11827, %v11862
        %v11873 = vmul.f32 %v11828, %v11858
        %v11874 = vmul.f32 %v11829, %v11862
        %v11875 = vmul.f32 %v11830, %v11858
        %v11876 = vmul.f32 %v11831, %v11862
        %v11877 = vmul.f32 %v11832, %v11858
        %v11878 = vmul.f32 %v11833, %v11862
        %v11879 = vmul.f32 %v11834, %v11858
        %v11880 = vmul.f32 %v11835, %v11862
        %v11881 = vmul.f32 %v11836, %v11858
        %v11882 = vmul.f32 %v11837, %v11862
        %v11883 = vmul.f32 %v11838, %v11858
        %v11884 = vmul.f32 %v11839, %v11862
        %v11885 = vmul.f32 %v11840, %v11858
        %v11886 = vmul.f32 %v11841, %v11862
        %v11887 = vmul.f32 %v11842, %v11858
        %v11888 = vmul.f32 %v11843, %v11862
        %v11889 = vmul.f32 %v11844, %v11858
        %v11890 = vmul.f32 %v11845, %v11862
        %v11891 = vmul.f32 %v11846, %v11858
        %v11892 = vmul.f32 %v11847, %v11862
        %v11893 = vmul.f32 %v11848, %v11858
        %v11894 = vmul.f32 %v11849, %v11862
        %v11895 = vmul.f32 %v11850, %v11858
        %v11896 = vmul.f32 %v11851, %v11862
        %s11897 = scalar_lea.vmem %s6, 4
        %v11898 = vld [vmem:[%s11897] ss:$8 sm:$0x3]
        %v11900 = vlaneseq
        %v11901 = vshrl.u32 %v11900, 7
        %v11902 = vsub.s32 0, %v11901
        %v11903 = vrot.slane %v11898, %v11902
        %v11904 = vlaneseq
        %v11905 = vshrl.u32 %v11904, 7
        %v11906 = vsub.s32 1, %v11905
        %v11907 = vrot.slane %v11898, %v11906
        %v11910 = vadd.f32 %v11865, %v11903
        %v11911 = vadd.f32 %v11866, %v11907
        %v11912 = vadd.f32 %v11867, %v11903
        %v11913 = vadd.f32 %v11868, %v11907
        %v11914 = vadd.f32 %v11869, %v11903
        %v11915 = vadd.f32 %v11870, %v11907
        %v11916 = vadd.f32 %v11871, %v11903
        %v11917 = vadd.f32 %v11872, %v11907
        %v11918 = vadd.f32 %v11873, %v11903
        %v11919 = vadd.f32 %v11874, %v11907
        %v11920 = vadd.f32 %v11875, %v11903
        %v11921 = vadd.f32 %v11876, %v11907
        %v11922 = vadd.f32 %v11877, %v11903
        %v11923 = vadd.f32 %v11878, %v11907
        %v11924 = vadd.f32 %v11879, %v11903
        %v11925 = vadd.f32 %v11880, %v11907
        %v11926 = vadd.f32 %v11881, %v11903
        %v11927 = vadd.f32 %v11882, %v11907
        %v11928 = vadd.f32 %v11883, %v11903
        %v11929 = vadd.f32 %v11884, %v11907
        %v11930 = vadd.f32 %v11885, %v11903
        %v11931 = vadd.f32 %v11886, %v11907
        %v11932 = vadd.f32 %v11887, %v11903
        %v11933 = vadd.f32 %v11888, %v11907
        %v11934 = vadd.f32 %v11889, %v11903
        %v11935 = vadd.f32 %v11890, %v11907
        %v11936 = vadd.f32 %v11891, %v11903
        %v11937 = vadd.f32 %v11892, %v11907
        %v11938 = vadd.f32 %v11893, %v11903
        %v11939 = vadd.f32 %v11894, %v11907
        %v11940 = vadd.f32 %v11895, %v11903
        %v11941 = vadd.f32 %v11896, %v11907
        %v11942 = vmax.f32 %v11910, 0.0
        %v11943 = vmax.f32 %v11911, 0.0
        %v11944 = vmax.f32 %v11912, 0.0
        %v11945 = vmax.f32 %v11913, 0.0
        %v11946 = vmax.f32 %v11914, 0.0
        %v11947 = vmax.f32 %v11915, 0.0
        %v11948 = vmax.f32 %v11916, 0.0
        %v11949 = vmax.f32 %v11917, 0.0
        %v11950 = vmax.f32 %v11918, 0.0
        %v11951 = vmax.f32 %v11919, 0.0
        %v11952 = vmax.f32 %v11920, 0.0
        %v11953 = vmax.f32 %v11921, 0.0
        %v11954 = vmax.f32 %v11922, 0.0
        %v11955 = vmax.f32 %v11923, 0.0
        %v11956 = vmax.f32 %v11924, 0.0
        %v11957 = vmax.f32 %v11925, 0.0
        %v11958 = vmax.f32 %v11926, 0.0
        %v11959 = vmax.f32 %v11927, 0.0
        %v11960 = vmax.f32 %v11928, 0.0
        %v11961 = vmax.f32 %v11929, 0.0
        %v11962 = vmax.f32 %v11930, 0.0
        %v11963 = vmax.f32 %v11931, 0.0
        %v11964 = vmax.f32 %v11932, 0.0
        %v11965 = vmax.f32 %v11933, 0.0
        %v11966 = vmax.f32 %v11934, 0.0
        %v11967 = vmax.f32 %v11935, 0.0
        %v11968 = vmax.f32 %v11936, 0.0
        %v11969 = vmax.f32 %v11937, 0.0
        %v11970 = vmax.f32 %v11938, 0.0
        %v11971 = vmax.f32 %v11939, 0.0
        %v11972 = vmax.f32 %v11940, 0.0
        %v11973 = vmax.f32 %v11941, 0.0
        %11974 = vst [vmem:[%s313] sm:$0xff] %v11942
        %11975 = vst [vmem:[%s313 + $0x8] sm:$0xff] %v11943
        %11976 = vst [vmem:[%s313 + $0x10] sm:$0xff] %v11944
        %11977 = vst [vmem:[%s313 + $0x18] sm:$0xff] %v11945
        %11978 = vst [vmem:[%s313 + $0x20] sm:$0xff] %v11946
        %11979 = vst [vmem:[%s313 + $0x28] sm:$0xff] %v11947
        %11980 = vst [vmem:[%s313 + $0x30] sm:$0xff] %v11948
        %11981 = vst [vmem:[%s313 + $0x38] sm:$0xff] %v11949
        %11982 = vst [vmem:[%s313 + $0x40] sm:$0xff] %v11950
        %11983 = vst [vmem:[%s313 + $0x48] sm:$0xff] %v11951
        %11984 = vst [vmem:[%s313 + $0x50] sm:$0xff] %v11952
        %11985 = vst [vmem:[%s313 + $0x58] sm:$0xff] %v11953
        %11986 = vst [vmem:[%s313 + $0x60] sm:$0xff] %v11954
        %11987 = vst [vmem:[%s313 + $0x68] sm:$0xff] %v11955
        %11988 = vst [vmem:[%s313 + $0x70] sm:$0xff] %v11956
        %11989 = vst [vmem:[%s313 + $0x78] sm:$0xff] %v11957
        %11990 = vst [vmem:[%s313 + $0x80] sm:$0xff] %v11958
        %11991 = vst [vmem:[%s313 + $0x88] sm:$0xff] %v11959
        %11992 = vst [vmem:[%s313 + $0x90] sm:$0xff] %v11960
        %11993 = vst [vmem:[%s313 + $0x98] sm:$0xff] %v11961
        %11994 = vst [vmem:[%s313 + $0xa0] sm:$0xff] %v11962
        %11995 = vst [vmem:[%s313 + $0xa8] sm:$0xff] %v11963
        %11996 = vst [vmem:[%s313 + $0xb0] sm:$0xff] %v11964
        %11997 = vst [vmem:[%s313 + $0xb8] sm:$0xff] %v11965
        %11998 = vst [vmem:[%s313 + $0xc0] sm:$0xff] %v11966
        %11999 = vst [vmem:[%s313 + $0xc8] sm:$0xff] %v11967
        %12000 = vst [vmem:[%s313 + $0xd0] sm:$0xff] %v11968
        %12001 = vst [vmem:[%s313 + $0xd8] sm:$0xff] %v11969
        %12002 = vst [vmem:[%s313 + $0xe0] sm:$0xff] %v11970
        %12003 = vst [vmem:[%s313 + $0xe8] sm:$0xff] %v11971
        %12004 = vst [vmem:[%s313 + $0xf0] sm:$0xff] %v11972
        %12005 = vst [vmem:[%s313 + $0xf8] sm:$0xff] %v11973
        %s12006 = sand.u32 %s201, 1
        %s12007 = scalar_lea.sflag [#allocation4], %s12006
        %s12008 = sand.u32 %s201, 1
        %s12009 = smul.addr %s12008, 256
        %s12010 = scalar_lea.vmem [#allocation5], %s12009
        // Predicated region
        $region53: #{tpu_custom_call.1} parent=47 // pred_check
          %p12011 = pneg %p211
        $region54: #{tpu_custom_call.1} parent=47 // pred_check_branch
          %12013 = sbr.rel (%p12011) target = $region56
        $region55: #{tpu_custom_call.1} parent=47 // pred_region
          %s12014 = smul.u32 8, %s27
          %s12016 = ssub.s32 4096, 4096
          %12017 = vsyncadd %s12007, %s12016
          %s12018 = smul.addr %s12014, 4
          %s12019 = smul.addr %s26, 64
          %s12020 = sadd.s32 %s12018, %s12019
          %s12021 = smul.addr %s12020, 128
          %s12022 = scalar_lea.hbm %s7, %s12021
          %s12023 = sshll.u32 %s12010, 4
          %s12024 = int_to_ptr.vmem [resolvable:$true] %s12023
          %12029 = dma.vmem_to_hbm [thread:$0]  %s12024, 4096, %s12022, %s12007, 256, 256, 16
        $region56: #{tpu_custom_call.1} parent=47 // pred_fallthru
          _
      $region48: #{tpu_custom_call.1} parent=5 // pred_fallthru
        _
      %p12030 = scmp.le.s32.totalorder 2, %s17
      // Predicated region
      $region57: #{tpu_custom_call.1} parent=5 // pred_check
        %p12031 = pneg %p12030
      $region58: #{tpu_custom_call.1} parent=5 // pred_check_branch
        %12033 = sbr.rel (%p12031) target = $region60
      $region59: #{tpu_custom_call.1} parent=5 // pred_region
        %s12034 = ssub.s32 %s17, 2
        // Predicated region
        $region61: #{tpu_custom_call.1} parent=59 // pred_check
          %p12035 = pneg %p217
        $region62: #{tpu_custom_call.1} parent=59 // pred_check_branch
          %12037 = sbr.rel (%p12035) target = $region64
        $region63: #{tpu_custom_call.1} parent=59 // pred_region
          %s12038 = sand.u32 %s202, 1
          %s12039 = scalar_lea.sflag [#allocation4], %s12038
          %s12040 = sand.u32 %s202, 1
          %s12041 = smul.addr %s12040, 256
          %s12042 = scalar_lea.vmem [#allocation5], %s12041
          %12043 = dma.done %s12039, 4096
        $region64: #{tpu_custom_call.1} parent=59 // pred_fallthru
          _
      $region60: #{tpu_custom_call.1} parent=5 // pred_fallthru
        _
    $region6: #{tpu_custom_call.1} parent=1 // loop_footer
      %s21 = sadd.s32 1, %s17
    $region7: #{tpu_custom_call.1} parent=1 // loop_footer_branch
      %16 = sbr.rel target = $region3
    $region8: #{tpu_custom_call.1} parent=1 // loop_exit
      _
    %12044 = vsyncpa [#allocation3], 1
    %s12045 = scalar_lea.sflag [#allocation3], 1
    %12046 = vsyncpa %s12045, 1
    %12047 = vsyncpa [#allocation4], 1
    %s12048 = scalar_lea.sflag [#allocation4], 1
    %12049 = vsyncpa %s12048, 1

</llo_original>
